<compile_context>
chip_gen: v7x
topology: tpu7x:2x2x1
jax: 0.10.0
libtpu: 0.0.40
codegen_flags: <defaults>
</compile_context>

<pallas_src>
import functools

import jax
import jax.numpy as jnp
from jax import lax
from jax.experimental import pallas as pl
from jax.experimental.pallas import tpu as pltpu

# Tile constants: lane-dense output (1024 lanes) and 512 rows per tile.
# f32: 512*1024*4 B = 2 MiB per tile buffer; 2 tensors x 2 buffers = 8 MiB.
_TILE_ROWS = 512
_LANES = 1024


def _stable_dropout_kernel(seed_ref, x_ref, o_ref, *, drop_prob: float,
                           tile_rows: int):
    """Elementwise dropout on one (tile_rows, lanes) VMEM tile.

    seed_ref: SMEM (1,) int32 scalar-prefetch seed.
    x_ref / o_ref: VMEM tiles of identical shape.
    """
    x = x_ref[...]
    tr, lanes = x.shape

    # Global element index of every element in this tile (distinct per tile,
    # invariant to the tiling choice).
    row0 = pl.program_id(0) * tile_rows
    rows = lax.broadcasted_iota(jnp.int32, (tr, lanes), 0) + row0
    cols = lax.broadcasted_iota(jnp.int32, (tr, lanes), 1)
    idx = (rows * lanes + cols).astype(jnp.uint32)

    # Counter-based hash (lowbias32-style mixer) of (seed, element index).
    seed = seed_ref[0].astype(jnp.uint32)
    h = idx + seed * jnp.uint32(0x9E3779B9)
    h = h ^ (h >> jnp.uint32(16))
    h = h * jnp.uint32(0x7FEB352D)
    h = h ^ (h >> jnp.uint32(15))
    h = h * jnp.uint32(0x846CA68B)
    h = h ^ (h >> jnp.uint32(16))

    # Integer threshold compare: drop with probability drop_prob.
    thresh = jnp.uint32(min(max(int(round(drop_prob * (2.0 ** 32))), 0),
                            2 ** 32 - 1))
    drop = h < thresh

    # masked_fill(mask, 0) * 1/(1-p), staying in the input dtype.
    scale = jnp.asarray(1.0 / (1.0 - drop_prob), dtype=x.dtype)
    out = jnp.where(drop, jnp.zeros_like(x), x) * scale
    o_ref[...] = out.astype(o_ref.dtype)


def stable_dropout(x: jax.Array,
                   drop_prob: float,
                   seed: int,
                   training: bool = True) -> jax.Array:
    """Forward pass of StableDropout.

    x: float array, any shape.
    drop_prob: static dropout probability in [0, 1).
    seed: int32 seed; the mask is a deterministic function of (seed, element
        index), so calling twice with the same seed reproduces the mask
        (the analogue of DropoutContext.reuse_mask).
    training: if False (or drop_prob == 0) this is the identity, exactly like
        the PyTorch module's eval path.
    """
    if (not training) or drop_prob <= 0.0:
        return x
    if drop_prob >= 1.0:
        raise ValueError("drop_prob must be < 1.0 (scale = 1/(1-p) diverges)")

    orig_shape = x.shape
    n = x.size
    block_elems = _TILE_ROWS * _LANES
    n_pad = pl.cdiv(n, block_elems) * block_elems

    x_flat = x.reshape(-1)
    if n_pad != n:
        x_flat = jnp.pad(x_flat, (0, n_pad - n))
    rows = n_pad // _LANES
    x2d = x_flat.reshape(rows, _LANES)
    num_tiles = rows // _TILE_ROWS

    seed_arr = jnp.asarray([seed], dtype=jnp.int32)
    kernel = functools.partial(_stable_dropout_kernel,
                               drop_prob=float(drop_prob),
                               tile_rows=_TILE_ROWS)

    # TODO(synk): input_output_aliases={1: 0} could drop the extra HBM
    # allocation for the output; left off to keep the wrapper reshape path
    # simple.
    out2d = pl.pallas_call(
        kernel,
        out_shape=jax.ShapeDtypeStruct((rows, _LANES), x.dtype),
        grid_spec=pltpu.PrefetchScalarGridSpec(
            num_scalar_prefetch=1,
            grid=(num_tiles,),
            in_specs=[pl.BlockSpec((_TILE_ROWS, _LANES),
                                   lambda i, seed_ref: (i, 0))],
            out_specs=pl.BlockSpec((_TILE_ROWS, _LANES),
                                   lambda i, seed_ref: (i, 0)),
        ),
        compiler_params=pltpu.CompilerParams(
            dimension_semantics=("parallel",)),
    )(seed_arr, x2d)

    out_flat = out2d.reshape(-1)
    if n_pad != n:
        out_flat = out_flat[:n]
    return out_flat.reshape(orig_shape)


if __name__ == "__main__":
    key = jax.random.PRNGKey(0)
    B, S, H = 2, 8, 32
    x = jax.random.normal(key, (B, S, H), dtype=jnp.float32)

    drop_prob = 0.1

    # Training path (dropout active).
    y_train = jax.block_until_ready(
        stable_dropout(x, drop_prob=drop_prob, seed=42, training=True))

    # Eval path (identity).
    y_eval = jax.block_until_ready(
        stable_dropout(x, drop_prob=drop_prob, seed=42, training=False))

    # Determinism: same seed -> same mask (reuse_mask analogue).
    y_again = jax.block_until_ready(
        stable_dropout(x, drop_prob=drop_prob, seed=42, training=True))

    # --- sanity checks ----------------------------------------------------
    scale = 1.0 / (1.0 - drop_prob)
    # Every output element must be either 0 (dropped) or x * scale (kept).
    is_zero = jnp.isclose(y_train, 0.0, atol=1e-7)
    is_scaled = jnp.isclose(y_train, x * scale, rtol=1e-5, atol=1e-6)
    assert bool(jnp.all(is_zero | is_scaled)), "dropout output mismatch"
    # Something was dropped and something was kept (p=0.1 over 512 elems).
    dropped = jnp.sum(jnp.logical_and(is_zero, ~is_scaled))
    kept = jnp.sum(~is_zero)
    assert int(dropped) > 0 and int(kept) > 0, "degenerate dropout mask"
    # Eval path is exact identity.
    assert bool(jnp.all(y_eval == x)), "eval path must be identity"
    # Same seed reproduces the same mask.
    assert bool(jnp.all(y_train == y_again)), "mask not deterministic"

    print("KERNEL_OK")
</pallas_src>

<mosaic_0001>
module attributes {stable_mosaic.version = 11 : i64} {
  func.func @_stable_dropout_kernel(%arg0: i32, %arg1: memref<1xi32, #tpu.memory_space<smem>>, %arg2: memref<512x1024xf32, #tpu.memory_space<vmem>>, %arg3: memref<512x1024xf32, #tpu.memory_space<vmem>>) attributes {dimension_semantics = [#tpu.dimension_semantics<parallel>], iteration_bounds = array<i64: 1>, scalar_prefetch = 1 : i64, scratch_operands = 0 : i64, tpu.core_type = #tpu.core_type<tc>, window_params = [{transform_indices = @transform_0, window_bounds = array<i64: 512, 1024>}, {transform_indices = @transform_1, window_bounds = array<i64: 512, 1024>}]} {
    %c0 = arith.constant 0 : index
    %c0_0 = arith.constant 0 : index
    %0 = vector.load %arg2[%c0, %c0_0] : memref<512x1024xf32, #tpu.memory_space<vmem>>, vector<512x1024xf32>
    %c512_i32 = arith.constant 512 : i32
    %1 = arith.muli %arg0, %c512_i32 : i32
    %2 = tpu.iota {dimensions = array<i32: 0>} : vector<512x1024xi32>
    %3 = vector.broadcast %1 : i32 to vector<512x1024xi32>
    %4 = arith.addi %2, %3 : vector<512x1024xi32>
    %5 = tpu.iota {dimensions = array<i32: 1>} : vector<512x1024xi32>
    %c1024_i32 = arith.constant 1024 : i32
    %6 = vector.broadcast %c1024_i32 : i32 to vector<512x1024xi32>
    %7 = arith.muli %4, %6 : vector<512x1024xi32>
    %8 = arith.addi %7, %5 : vector<512x1024xi32>
    %c0_1 = arith.constant 0 : index
    %9 = memref.load %arg1[%c0_1] : memref<1xi32, #tpu.memory_space<smem>>
    %c-1640531527_i32 = arith.constant -1640531527 : i32
    %10 = arith.muli %9, %c-1640531527_i32 : i32
    %11 = vector.broadcast %10 : i32 to vector<512x1024xi32>
    %12 = arith.addi %8, %11 : vector<512x1024xi32>
    %c16_i32 = arith.constant 16 : i32
    %13 = vector.broadcast %c16_i32 : i32 to vector<512x1024xi32>
    %14 = arith.shrui %12, %13 : vector<512x1024xi32>
    %15 = arith.xori %12, %14 : vector<512x1024xi32>
    %c2146121005_i32 = arith.constant 2146121005 : i32
    %16 = vector.broadcast %c2146121005_i32 : i32 to vector<512x1024xi32>
    %17 = arith.muli %15, %16 : vector<512x1024xi32>
    %c15_i32 = arith.constant 15 : i32
    %18 = vector.broadcast %c15_i32 : i32 to vector<512x1024xi32>
    %19 = arith.shrui %17, %18 : vector<512x1024xi32>
    %20 = arith.xori %17, %19 : vector<512x1024xi32>
    %c-2073254261_i32 = arith.constant -2073254261 : i32
    %21 = vector.broadcast %c-2073254261_i32 : i32 to vector<512x1024xi32>
    %22 = arith.muli %20, %21 : vector<512x1024xi32>
    %c16_i32_2 = arith.constant 16 : i32
    %23 = vector.broadcast %c16_i32_2 : i32 to vector<512x1024xi32>
    %24 = arith.shrui %22, %23 : vector<512x1024xi32>
    %25 = arith.xori %22, %24 : vector<512x1024xi32>
    %c429496730_i32 = arith.constant 429496730 : i32
    %26 = vector.broadcast %c429496730_i32 : i32 to vector<512x1024xi32>
    %27 = arith.cmpi ult, %25, %26 : vector<512x1024xi32>
    %cst = arith.constant 0.000000e+00 : f32
    %28 = vector.broadcast %cst : f32 to vector<512x1024xf32>
    %29 = arith.select %27, %28, %0 : vector<512x1024xi1>, vector<512x1024xf32>
    %cst_3 = arith.constant 1.11111116 : f32
    %30 = vector.broadcast %cst_3 : f32 to vector<512x1024xf32>
    %31 = arith.mulf %29, %30 : vector<512x1024xf32>
    %c0_4 = arith.constant 0 : index
    %c0_5 = arith.constant 0 : index
    %32 = vector.load %arg3[%c0_4, %c0_5] : memref<512x1024xf32, #tpu.memory_space<vmem>>, vector<512x1024xf32>
    tpu.vector_store %arg3[%c0_4, %c0_5], %31 {strides = array<i32>} : memref<512x1024xf32, #tpu.memory_space<vmem>>, vector<512x1024xf32>,
    return
  }
  func.func @transform_0(%arg0: i32, %arg1: memref<1xi32, #tpu.memory_space<smem>>) -> (i32, i32) {
    %c0_i32 = arith.constant 0 : i32
    %c0_i32_0 = arith.constant 0 : i32
    return %arg0, %c0_i32 : i32, i32
  }
  func.func @transform_1(%arg0: i32, %arg1: memref<1xi32, #tpu.memory_space<smem>>) -> (i32, i32) {
    %c0_i32 = arith.constant 0 : i32
    %c0_i32_0 = arith.constant 0 : i32
    return %arg0, %c0_i32 : i32, i32
  }
}

</mosaic_0001>

<llo_original>
// kernel: tpu_custom_call.1
$region0: #{tpu_custom_call.1}
  #allocation0 [shape = 'u32[]', space=smem, size = 0x4, offset = 0x4, fixed_abs, tag = 'smem constant byte address 0x4 - core index']
  #allocation1 [shape = 'u32[144,128]{1,0:T(1,128)}', space=vmem, size = 0x12000, scoped, tag = 'internal scratch']
  #allocation2 [shape = 's32[1]{0}', space=sflag, size = 0x4, scoped, tag = 'scoped memory for tpu_custom_call.1']
  #allocation3 [shape = 's32[1]{0:T(128)S(6)}', space=smem, size = 0x200, scoped, tag = 'prefetched SMEM operand 0']
  %s0 = inlined_call_operand.<no memory space> [shape: s32[1], index: 0, kind: input, shape index: {}]
  %s1 = inlined_call_operand.hbm [shape: f32[512,1024], index: 1, kind: input, shape index: {}]
  %s2 = inlined_call_operand.hbm [shape: f32[512,1024], index: 2, kind: output, shape index: {}]
  %s3 = sld [smem:[#allocation0]]
  $region18: #{tpu_custom_call.1} parent=0
    _
  %s5 = ssub.s32 1, %s3
  %s6 = scalar_select 0, %s5, %s3
  %7 = sst [smem:[#allocation3]] %s0
  $region1: #{tpu_custom_call.1} parent=0
    #allocation4 [shape = 'u8[2097152]{0}', space=vmem, size = 0x200000, scoped, tag = 'input window, operand 1, single buffered']
    #allocation5 [shape = 's32[1]{0}', space=sflag, size = 0x4, scoped, tag = 'scoped memory for tpu_custom_call.1']
    #allocation6 [shape = 's32[1]{0}', space=sflag, size = 0x4, scoped, tag = 'scoped memory for tpu_custom_call.1']
    #allocation7 [shape = 'u8[2097152]{0}', space=vmem, size = 0x200000, scoped, tag = 'output window, operand 0, single buffered']
    %8 = vsyncpa [#allocation5], 0
    %9 = vsyncpa [#allocation6], 0
    // Predicated region
    $region2: #{tpu_custom_call.1} parent=1 // pred_check
      _
    $region3: #{tpu_custom_call.1} parent=1 // pred_check_branch
      %11 = sbr.rel (0) target = $region5
    $region4: #{tpu_custom_call.1} parent=1 // pred_region
      %s13 = ssub.s32 65536, 65536
      %14 = vsyncadd [#allocation5], %s13
      %s15 = sshll.u32 [#allocation4], 4
      %s16 = int_to_ptr.vmem [resolvable:$true] %s15
      %21 = dma.hbm_to_vmem [thread:$0]  %s1, 65536, %s16, [#allocation5], 1024, 1024, 64
    $region5: #{tpu_custom_call.1} parent=1 // pred_fallthru
      _
    // Predicated region
    $region6: #{tpu_custom_call.1} parent=1 // pred_check
      _
    $region7: #{tpu_custom_call.1} parent=1 // pred_check_branch
      %23 = sbr.rel (0) target = $region9
    $region8: #{tpu_custom_call.1} parent=1 // pred_region
      %24 = dma.done [#allocation5], 65536
    $region9: #{tpu_custom_call.1} parent=1 // pred_fallthru
      _
    %v25 = vld [vmem:[#allocation4] sm:$0xff]
    %v26 = vld [vmem:[#allocation4 + $0x8] sm:$0xff]
    %v27 = vld [vmem:[#allocation4 + $0x10] sm:$0xff]
    %v28 = vld [vmem:[#allocation4 + $0x18] sm:$0xff]
    %v29 = vld [vmem:[#allocation4 + $0x20] sm:$0xff]
    %v30 = vld [vmem:[#allocation4 + $0x28] sm:$0xff]
    %v31 = vld [vmem:[#allocation4 + $0x30] sm:$0xff]
    %v32 = vld [vmem:[#allocation4 + $0x38] sm:$0xff]
    %v33 = vld [vmem:[#allocation4 + $0x40] sm:$0xff]
    %v34 = vld [vmem:[#allocation4 + $0x48] sm:$0xff]
    %v35 = vld [vmem:[#allocation4 + $0x50] sm:$0xff]
    %v36 = vld [vmem:[#allocation4 + $0x58] sm:$0xff]
    %v37 = vld [vmem:[#allocation4 + $0x60] sm:$0xff]
    %v38 = vld [vmem:[#allocation4 + $0x68] sm:$0xff]
    %v39 = vld [vmem:[#allocation4 + $0x70] sm:$0xff]
    %v40 = vld [vmem:[#allocation4 + $0x78] sm:$0xff]
    %v41 = vld [vmem:[#allocation4 + $0x80] sm:$0xff]
    %v42 = vld [vmem:[#allocation4 + $0x88] sm:$0xff]
    %v43 = vld [vmem:[#allocation4 + $0x90] sm:$0xff]
    %v44 = vld [vmem:[#allocation4 + $0x98] sm:$0xff]
    %v45 = vld [vmem:[#allocation4 + $0xa0] sm:$0xff]
    %v46 = vld [vmem:[#allocation4 + $0xa8] sm:$0xff]
    %v47 = vld [vmem:[#allocation4 + $0xb0] sm:$0xff]
    %v48 = vld [vmem:[#allocation4 + $0xb8] sm:$0xff]
    %v49 = vld [vmem:[#allocation4 + $0xc0] sm:$0xff]
    %v50 = vld [vmem:[#allocation4 + $0xc8] sm:$0xff]
    %v51 = vld [vmem:[#allocation4 + $0xd0] sm:$0xff]
    %v52 = vld [vmem:[#allocation4 + $0xd8] sm:$0xff]
    %v53 = vld [vmem:[#allocation4 + $0xe0] sm:$0xff]
    %v54 = vld [vmem:[#allocation4 + $0xe8] sm:$0xff]
    %v55 = vld [vmem:[#allocation4 + $0xf0] sm:$0xff]
    %v56 = vld [vmem:[#allocation4 + $0xf8] sm:$0xff]
    %v57 = vld [vmem:[#allocation4 + $0x100] sm:$0xff]
    %v58 = vld [vmem:[#allocation4 + $0x108] sm:$0xff]
    %v59 = vld [vmem:[#allocation4 + $0x110] sm:$0xff]
    %v60 = vld [vmem:[#allocation4 + $0x118] sm:$0xff]
    %v61 = vld [vmem:[#allocation4 + $0x120] sm:$0xff]
    %v62 = vld [vmem:[#allocation4 + $0x128] sm:$0xff]
    %v63 = vld [vmem:[#allocation4 + $0x130] sm:$0xff]
    %v64 = vld [vmem:[#allocation4 + $0x138] sm:$0xff]
    %v65 = vld [vmem:[#allocation4 + $0x140] sm:$0xff]
    %v66 = vld [vmem:[#allocation4 + $0x148] sm:$0xff]
    %v67 = vld [vmem:[#allocation4 + $0x150] sm:$0xff]
    %v68 = vld [vmem:[#allocation4 + $0x158] sm:$0xff]
    %v69 = vld [vmem:[#allocation4 + $0x160] sm:$0xff]
    %v70 = vld [vmem:[#allocation4 + $0x168] sm:$0xff]
    %v71 = vld [vmem:[#allocation4 + $0x170] sm:$0xff]
    %v72 = vld [vmem:[#allocation4 + $0x178] sm:$0xff]
    %v73 = vld [vmem:[#allocation4 + $0x180] sm:$0xff]
    %v74 = vld [vmem:[#allocation4 + $0x188] sm:$0xff]
    %v75 = vld [vmem:[#allocation4 + $0x190] sm:$0xff]
    %v76 = vld [vmem:[#allocation4 + $0x198] sm:$0xff]
    %v77 = vld [vmem:[#allocation4 + $0x1a0] sm:$0xff]
    %v78 = vld [vmem:[#allocation4 + $0x1a8] sm:$0xff]
    %v79 = vld [vmem:[#allocation4 + $0x1b0] sm:$0xff]
    %v80 = vld [vmem:[#allocation4 + $0x1b8] sm:$0xff]
    %v81 = vld [vmem:[#allocation4 + $0x1c0] sm:$0xff]
    %v82 = vld [vmem:[#allocation4 + $0x1c8] sm:$0xff]
    %v83 = vld [vmem:[#allocation4 + $0x1d0] sm:$0xff]
    %v84 = vld [vmem:[#allocation4 + $0x1d8] sm:$0xff]
    %v85 = vld [vmem:[#allocation4 + $0x1e0] sm:$0xff]
    %v86 = vld [vmem:[#allocation4 + $0x1e8] sm:$0xff]
    %v87 = vld [vmem:[#allocation4 + $0x1f0] sm:$0xff]
    %v88 = vld [vmem:[#allocation4 + $0x1f8] sm:$0xff]
    %v89 = vld [vmem:[#allocation4 + $0x200] sm:$0xff]
    %v90 = vld [vmem:[#allocation4 + $0x208] sm:$0xff]
    %v91 = vld [vmem:[#allocation4 + $0x210] sm:$0xff]
    %v92 = vld [vmem:[#allocation4 + $0x218] sm:$0xff]
    %v93 = vld [vmem:[#allocation4 + $0x220] sm:$0xff]
    %v94 = vld [vmem:[#allocation4 + $0x228] sm:$0xff]
    %v95 = vld [vmem:[#allocation4 + $0x230] sm:$0xff]
    %v96 = vld [vmem:[#allocation4 + $0x238] sm:$0xff]
    %v97 = vld [vmem:[#allocation4 + $0x240] sm:$0xff]
    %v98 = vld [vmem:[#allocation4 + $0x248] sm:$0xff]
    %v99 = vld [vmem:[#allocation4 + $0x250] sm:$0xff]
    %v100 = vld [vmem:[#allocation4 + $0x258] sm:$0xff]
    %v101 = vld [vmem:[#allocation4 + $0x260] sm:$0xff]
    %v102 = vld [vmem:[#allocation4 + $0x268] sm:$0xff]
    %v103 = vld [vmem:[#allocation4 + $0x270] sm:$0xff]
    %v104 = vld [vmem:[#allocation4 + $0x278] sm:$0xff]
    %v105 = vld [vmem:[#allocation4 + $0x280] sm:$0xff]
    %v106 = vld [vmem:[#allocation4 + $0x288] sm:$0xff]
    %v107 = vld [vmem:[#allocation4 + $0x290] sm:$0xff]
    %v108 = vld [vmem:[#allocation4 + $0x298] sm:$0xff]
    %v109 = vld [vmem:[#allocation4 + $0x2a0] sm:$0xff]
    %v110 = vld [vmem:[#allocation4 + $0x2a8] sm:$0xff]
    %v111 = vld [vmem:[#allocation4 + $0x2b0] sm:$0xff]
    %v112 = vld [vmem:[#allocation4 + $0x2b8] sm:$0xff]
    %v113 = vld [vmem:[#allocation4 + $0x2c0] sm:$0xff]
    %v114 = vld [vmem:[#allocation4 + $0x2c8] sm:$0xff]
    %v115 = vld [vmem:[#allocation4 + $0x2d0] sm:$0xff]
    %v116 = vld [vmem:[#allocation4 + $0x2d8] sm:$0xff]
    %v117 = vld [vmem:[#allocation4 + $0x2e0] sm:$0xff]
    %v118 = vld [vmem:[#allocation4 + $0x2e8] sm:$0xff]
    %v119 = vld [vmem:[#allocation4 + $0x2f0] sm:$0xff]
    %v120 = vld [vmem:[#allocation4 + $0x2f8] sm:$0xff]
    %v121 = vld [vmem:[#allocation4 + $0x300] sm:$0xff]
    %v122 = vld [vmem:[#allocation4 + $0x308] sm:$0xff]
    %v123 = vld [vmem:[#allocation4 + $0x310] sm:$0xff]
    %v124 = vld [vmem:[#allocation4 + $0x318] sm:$0xff]
    %v125 = vld [vmem:[#allocation4 + $0x320] sm:$0xff]
    %v126 = vld [vmem:[#allocation4 + $0x328] sm:$0xff]
    %v127 = vld [vmem:[#allocation4 + $0x330] sm:$0xff]
    %v128 = vld [vmem:[#allocation4 + $0x338] sm:$0xff]
    %v129 = vld [vmem:[#allocation4 + $0x340] sm:$0xff]
    %v130 = vld [vmem:[#allocation4 + $0x348] sm:$0xff]
    %v131 = vld [vmem:[#allocation4 + $0x350] sm:$0xff]
    %v132 = vld [vmem:[#allocation4 + $0x358] sm:$0xff]
    %v133 = vld [vmem:[#allocation4 + $0x360] sm:$0xff]
    %v134 = vld [vmem:[#allocation4 + $0x368] sm:$0xff]
    %v135 = vld [vmem:[#allocation4 + $0x370] sm:$0xff]
    %v136 = vld [vmem:[#allocation4 + $0x378] sm:$0xff]
    %v137 = vld [vmem:[#allocation4 + $0x380] sm:$0xff]
    %v138 = vld [vmem:[#allocation4 + $0x388] sm:$0xff]
    %v139 = vld [vmem:[#allocation4 + $0x390] sm:$0xff]
    %v140 = vld [vmem:[#allocation4 + $0x398] sm:$0xff]
    %v141 = vld [vmem:[#allocation4 + $0x3a0] sm:$0xff]
    %v142 = vld [vmem:[#allocation4 + $0x3a8] sm:$0xff]
    %v143 = vld [vmem:[#allocation4 + $0x3b0] sm:$0xff]
    %v144 = vld [vmem:[#allocation4 + $0x3b8] sm:$0xff]
    %v145 = vld [vmem:[#allocation4 + $0x3c0] sm:$0xff]
    %v146 = vld [vmem:[#allocation4 + $0x3c8] sm:$0xff]
    %v147 = vld [vmem:[#allocation4 + $0x3d0] sm:$0xff]
    %v148 = vld [vmem:[#allocation4 + $0x3d8] sm:$0xff]
    %v149 = vld [vmem:[#allocation4 + $0x3e0] sm:$0xff]
    %v150 = vld [vmem:[#allocation4 + $0x3e8] sm:$0xff]
    %v151 = vld [vmem:[#allocation4 + $0x3f0] sm:$0xff]
    %v152 = vld [vmem:[#allocation4 + $0x3f8] sm:$0xff]
    %v153 = vld [vmem:[#allocation4 + $0x400] sm:$0xff]
    %v154 = vld [vmem:[#allocation4 + $0x408] sm:$0xff]
    %v155 = vld [vmem:[#allocation4 + $0x410] sm:$0xff]
    %v156 = vld [vmem:[#allocation4 + $0x418] sm:$0xff]
    %v157 = vld [vmem:[#allocation4 + $0x420] sm:$0xff]
    %v158 = vld [vmem:[#allocation4 + $0x428] sm:$0xff]
    %v159 = vld [vmem:[#allocation4 + $0x430] sm:$0xff]
    %v160 = vld [vmem:[#allocation4 + $0x438] sm:$0xff]
    %v161 = vld [vmem:[#allocation4 + $0x440] sm:$0xff]
    %v162 = vld [vmem:[#allocation4 + $0x448] sm:$0xff]
    %v163 = vld [vmem:[#allocation4 + $0x450] sm:$0xff]
    %v164 = vld [vmem:[#allocation4 + $0x458] sm:$0xff]
    %v165 = vld [vmem:[#allocation4 + $0x460] sm:$0xff]
    %v166 = vld [vmem:[#allocation4 + $0x468] sm:$0xff]
    %v167 = vld [vmem:[#allocation4 + $0x470] sm:$0xff]
    %v168 = vld [vmem:[#allocation4 + $0x478] sm:$0xff]
    %v169 = vld [vmem:[#allocation4 + $0x480] sm:$0xff]
    %v170 = vld [vmem:[#allocation4 + $0x488] sm:$0xff]
    %v171 = vld [vmem:[#allocation4 + $0x490] sm:$0xff]
    %v172 = vld [vmem:[#allocation4 + $0x498] sm:$0xff]
    %v173 = vld [vmem:[#allocation4 + $0x4a0] sm:$0xff]
    %v174 = vld [vmem:[#allocation4 + $0x4a8] sm:$0xff]
    %v175 = vld [vmem:[#allocation4 + $0x4b0] sm:$0xff]
    %v176 = vld [vmem:[#allocation4 + $0x4b8] sm:$0xff]
    %v177 = vld [vmem:[#allocation4 + $0x4c0] sm:$0xff]
    %v178 = vld [vmem:[#allocation4 + $0x4c8] sm:$0xff]
    %v179 = vld [vmem:[#allocation4 + $0x4d0] sm:$0xff]
    %v180 = vld [vmem:[#allocation4 + $0x4d8] sm:$0xff]
    %v181 = vld [vmem:[#allocation4 + $0x4e0] sm:$0xff]
    %v182 = vld [vmem:[#allocation4 + $0x4e8] sm:$0xff]
    %v183 = vld [vmem:[#allocation4 + $0x4f0] sm:$0xff]
    %v184 = vld [vmem:[#allocation4 + $0x4f8] sm:$0xff]
    %v185 = vld [vmem:[#allocation4 + $0x500] sm:$0xff]
    %v186 = vld [vmem:[#allocation4 + $0x508] sm:$0xff]
    %v187 = vld [vmem:[#allocation4 + $0x510] sm:$0xff]
    %v188 = vld [vmem:[#allocation4 + $0x518] sm:$0xff]
    %v189 = vld [vmem:[#allocation4 + $0x520] sm:$0xff]
    %v190 = vld [vmem:[#allocation4 + $0x528] sm:$0xff]
    %v191 = vld [vmem:[#allocation4 + $0x530] sm:$0xff]
    %v192 = vld [vmem:[#allocation4 + $0x538] sm:$0xff]
    %v193 = vld [vmem:[#allocation4 + $0x540] sm:$0xff]
    %v194 = vld [vmem:[#allocation4 + $0x548] sm:$0xff]
    %v195 = vld [vmem:[#allocation4 + $0x550] sm:$0xff]
    %v196 = vld [vmem:[#allocation4 + $0x558] sm:$0xff]
    %v197 = vld [vmem:[#allocation4 + $0x560] sm:$0xff]
    %v198 = vld [vmem:[#allocation4 + $0x568] sm:$0xff]
    %v199 = vld [vmem:[#allocation4 + $0x570] sm:$0xff]
    %v200 = vld [vmem:[#allocation4 + $0x578] sm:$0xff]
    %v201 = vld [vmem:[#allocation4 + $0x580] sm:$0xff]
    %v202 = vld [vmem:[#allocation4 + $0x588] sm:$0xff]
    %v203 = vld [vmem:[#allocation4 + $0x590] sm:$0xff]
    %v204 = vld [vmem:[#allocation4 + $0x598] sm:$0xff]
    %v205 = vld [vmem:[#allocation4 + $0x5a0] sm:$0xff]
    %v206 = vld [vmem:[#allocation4 + $0x5a8] sm:$0xff]
    %v207 = vld [vmem:[#allocation4 + $0x5b0] sm:$0xff]
    %v208 = vld [vmem:[#allocation4 + $0x5b8] sm:$0xff]
    %v209 = vld [vmem:[#allocation4 + $0x5c0] sm:$0xff]
    %v210 = vld [vmem:[#allocation4 + $0x5c8] sm:$0xff]
    %v211 = vld [vmem:[#allocation4 + $0x5d0] sm:$0xff]
    %v212 = vld [vmem:[#allocation4 + $0x5d8] sm:$0xff]
    %v213 = vld [vmem:[#allocation4 + $0x5e0] sm:$0xff]
    %v214 = vld [vmem:[#allocation4 + $0x5e8] sm:$0xff]
    %v215 = vld [vmem:[#allocation4 + $0x5f0] sm:$0xff]
    %v216 = vld [vmem:[#allocation4 + $0x5f8] sm:$0xff]
    %v217 = vld [vmem:[#allocation4 + $0x600] sm:$0xff]
    %v218 = vld [vmem:[#allocation4 + $0x608] sm:$0xff]
    %v219 = vld [vmem:[#allocation4 + $0x610] sm:$0xff]
    %v220 = vld [vmem:[#allocation4 + $0x618] sm:$0xff]
    %v221 = vld [vmem:[#allocation4 + $0x620] sm:$0xff]
    %v222 = vld [vmem:[#allocation4 + $0x628] sm:$0xff]
    %v223 = vld [vmem:[#allocation4 + $0x630] sm:$0xff]
    %v224 = vld [vmem:[#allocation4 + $0x638] sm:$0xff]
    %v225 = vld [vmem:[#allocation4 + $0x640] sm:$0xff]
    %v226 = vld [vmem:[#allocation4 + $0x648] sm:$0xff]
    %v227 = vld [vmem:[#allocation4 + $0x650] sm:$0xff]
    %v228 = vld [vmem:[#allocation4 + $0x658] sm:$0xff]
    %v229 = vld [vmem:[#allocation4 + $0x660] sm:$0xff]
    %v230 = vld [vmem:[#allocation4 + $0x668] sm:$0xff]
    %v231 = vld [vmem:[#allocation4 + $0x670] sm:$0xff]
    %v232 = vld [vmem:[#allocation4 + $0x678] sm:$0xff]
    %v233 = vld [vmem:[#allocation4 + $0x680] sm:$0xff]
    %v234 = vld [vmem:[#allocation4 + $0x688] sm:$0xff]
    %v235 = vld [vmem:[#allocation4 + $0x690] sm:$0xff]
    %v236 = vld [vmem:[#allocation4 + $0x698] sm:$0xff]
    %v237 = vld [vmem:[#allocation4 + $0x6a0] sm:$0xff]
    %v238 = vld [vmem:[#allocation4 + $0x6a8] sm:$0xff]
    %v239 = vld [vmem:[#allocation4 + $0x6b0] sm:$0xff]
    %v240 = vld [vmem:[#allocation4 + $0x6b8] sm:$0xff]
    %v241 = vld [vmem:[#allocation4 + $0x6c0] sm:$0xff]
    %v242 = vld [vmem:[#allocation4 + $0x6c8] sm:$0xff]
    %v243 = vld [vmem:[#allocation4 + $0x6d0] sm:$0xff]
    %v244 = vld [vmem:[#allocation4 + $0x6d8] sm:$0xff]
    %v245 = vld [vmem:[#allocation4 + $0x6e0] sm:$0xff]
    %v246 = vld [vmem:[#allocation4 + $0x6e8] sm:$0xff]
    %v247 = vld [vmem:[#allocation4 + $0x6f0] sm:$0xff]
    %v248 = vld [vmem:[#allocation4 + $0x6f8] sm:$0xff]
    %v249 = vld [vmem:[#allocation4 + $0x700] sm:$0xff]
    %v250 = vld [vmem:[#allocation4 + $0x708] sm:$0xff]
    %v251 = vld [vmem:[#allocation4 + $0x710] sm:$0xff]
    %v252 = vld [vmem:[#allocation4 + $0x718] sm:$0xff]
    %v253 = vld [vmem:[#allocation4 + $0x720] sm:$0xff]
    %v254 = vld [vmem:[#allocation4 + $0x728] sm:$0xff]
    %v255 = vld [vmem:[#allocation4 + $0x730] sm:$0xff]
    %v256 = vld [vmem:[#allocation4 + $0x738] sm:$0xff]
    %v257 = vld [vmem:[#allocation4 + $0x740] sm:$0xff]
    %v258 = vld [vmem:[#allocation4 + $0x748] sm:$0xff]
    %v259 = vld [vmem:[#allocation4 + $0x750] sm:$0xff]
    %v260 = vld [vmem:[#allocation4 + $0x758] sm:$0xff]
    %v261 = vld [vmem:[#allocation4 + $0x760] sm:$0xff]
    %v262 = vld [vmem:[#allocation4 + $0x768] sm:$0xff]
    %v263 = vld [vmem:[#allocation4 + $0x770] sm:$0xff]
    %v264 = vld [vmem:[#allocation4 + $0x778] sm:$0xff]
    %v265 = vld [vmem:[#allocation4 + $0x780] sm:$0xff]
    %v266 = vld [vmem:[#allocation4 + $0x788] sm:$0xff]
    %v267 = vld [vmem:[#allocation4 + $0x790] sm:$0xff]
    %v268 = vld [vmem:[#allocation4 + $0x798] sm:$0xff]
    %v269 = vld [vmem:[#allocation4 + $0x7a0] sm:$0xff]
    %v270 = vld [vmem:[#allocation4 + $0x7a8] sm:$0xff]
    %v271 = vld [vmem:[#allocation4 + $0x7b0] sm:$0xff]
    %v272 = vld [vmem:[#allocation4 + $0x7b8] sm:$0xff]
    %v273 = vld [vmem:[#allocation4 + $0x7c0] sm:$0xff]
    %v274 = vld [vmem:[#allocation4 + $0x7c8] sm:$0xff]
    %v275 = vld [vmem:[#allocation4 + $0x7d0] sm:$0xff]
    %v276 = vld [vmem:[#allocation4 + $0x7d8] sm:$0xff]
    %v277 = vld [vmem:[#allocation4 + $0x7e0] sm:$0xff]
    %v278 = vld [vmem:[#allocation4 + $0x7e8] sm:$0xff]
    %v279 = vld [vmem:[#allocation4 + $0x7f0] sm:$0xff]
    %v280 = vld [vmem:[#allocation4 + $0x7f8] sm:$0xff]
    %v281 = vld [vmem:[#allocation4 + $0x800] sm:$0xff]
    %v282 = vld [vmem:[#allocation4 + $0x808] sm:$0xff]
    %v283 = vld [vmem:[#allocation4 + $0x810] sm:$0xff]
    %v284 = vld [vmem:[#allocation4 + $0x818] sm:$0xff]
    %v285 = vld [vmem:[#allocation4 + $0x820] sm:$0xff]
    %v286 = vld [vmem:[#allocation4 + $0x828] sm:$0xff]
    %v287 = vld [vmem:[#allocation4 + $0x830] sm:$0xff]
    %v288 = vld [vmem:[#allocation4 + $0x838] sm:$0xff]
    %v289 = vld [vmem:[#allocation4 + $0x840] sm:$0xff]
    %v290 = vld [vmem:[#allocation4 + $0x848] sm:$0xff]
    %v291 = vld [vmem:[#allocation4 + $0x850] sm:$0xff]
    %v292 = vld [vmem:[#allocation4 + $0x858] sm:$0xff]
    %v293 = vld [vmem:[#allocation4 + $0x860] sm:$0xff]
    %v294 = vld [vmem:[#allocation4 + $0x868] sm:$0xff]
    %v295 = vld [vmem:[#allocation4 + $0x870] sm:$0xff]
    %v296 = vld [vmem:[#allocation4 + $0x878] sm:$0xff]
    %v297 = vld [vmem:[#allocation4 + $0x880] sm:$0xff]
    %v298 = vld [vmem:[#allocation4 + $0x888] sm:$0xff]
    %v299 = vld [vmem:[#allocation4 + $0x890] sm:$0xff]
    %v300 = vld [vmem:[#allocation4 + $0x898] sm:$0xff]
    %v301 = vld [vmem:[#allocation4 + $0x8a0] sm:$0xff]
    %v302 = vld [vmem:[#allocation4 + $0x8a8] sm:$0xff]
    %v303 = vld [vmem:[#allocation4 + $0x8b0] sm:$0xff]
    %v304 = vld [vmem:[#allocation4 + $0x8b8] sm:$0xff]
    %v305 = vld [vmem:[#allocation4 + $0x8c0] sm:$0xff]
    %v306 = vld [vmem:[#allocation4 + $0x8c8] sm:$0xff]
    %v307 = vld [vmem:[#allocation4 + $0x8d0] sm:$0xff]
    %v308 = vld [vmem:[#allocation4 + $0x8d8] sm:$0xff]
    %v309 = vld [vmem:[#allocation4 + $0x8e0] sm:$0xff]
    %v310 = vld [vmem:[#allocation4 + $0x8e8] sm:$0xff]
    %v311 = vld [vmem:[#allocation4 + $0x8f0] sm:$0xff]
    %v312 = vld [vmem:[#allocation4 + $0x8f8] sm:$0xff]
    %v313 = vld [vmem:[#allocation4 + $0x900] sm:$0xff]
    %v314 = vld [vmem:[#allocation4 + $0x908] sm:$0xff]
    %v315 = vld [vmem:[#allocation4 + $0x910] sm:$0xff]
    %v316 = vld [vmem:[#allocation4 + $0x918] sm:$0xff]
    %v317 = vld [vmem:[#allocation4 + $0x920] sm:$0xff]
    %v318 = vld [vmem:[#allocation4 + $0x928] sm:$0xff]
    %v319 = vld [vmem:[#allocation4 + $0x930] sm:$0xff]
    %v320 = vld [vmem:[#allocation4 + $0x938] sm:$0xff]
    %v321 = vld [vmem:[#allocation4 + $0x940] sm:$0xff]
    %v322 = vld [vmem:[#allocation4 + $0x948] sm:$0xff]
    %v323 = vld [vmem:[#allocation4 + $0x950] sm:$0xff]
    %v324 = vld [vmem:[#allocation4 + $0x958] sm:$0xff]
    %v325 = vld [vmem:[#allocation4 + $0x960] sm:$0xff]
    %v326 = vld [vmem:[#allocation4 + $0x968] sm:$0xff]
    %v327 = vld [vmem:[#allocation4 + $0x970] sm:$0xff]
    %v328 = vld [vmem:[#allocation4 + $0x978] sm:$0xff]
    %v329 = vld [vmem:[#allocation4 + $0x980] sm:$0xff]
    %v330 = vld [vmem:[#allocation4 + $0x988] sm:$0xff]
    %v331 = vld [vmem:[#allocation4 + $0x990] sm:$0xff]
    %v332 = vld [vmem:[#allocation4 + $0x998] sm:$0xff]
    %v333 = vld [vmem:[#allocation4 + $0x9a0] sm:$0xff]
    %v334 = vld [vmem:[#allocation4 + $0x9a8] sm:$0xff]
    %v335 = vld [vmem:[#allocation4 + $0x9b0] sm:$0xff]
    %v336 = vld [vmem:[#allocation4 + $0x9b8] sm:$0xff]
    %v337 = vld [vmem:[#allocation4 + $0x9c0] sm:$0xff]
    %v338 = vld [vmem:[#allocation4 + $0x9c8] sm:$0xff]
    %v339 = vld [vmem:[#allocation4 + $0x9d0] sm:$0xff]
    %v340 = vld [vmem:[#allocation4 + $0x9d8] sm:$0xff]
    %v341 = vld [vmem:[#allocation4 + $0x9e0] sm:$0xff]
    %v342 = vld [vmem:[#allocation4 + $0x9e8] sm:$0xff]
    %v343 = vld [vmem:[#allocation4 + $0x9f0] sm:$0xff]
    %v344 = vld [vmem:[#allocation4 + $0x9f8] sm:$0xff]
    %v345 = vld [vmem:[#allocation4 + $0xa00] sm:$0xff]
    %v346 = vld [vmem:[#allocation4 + $0xa08] sm:$0xff]
    %v347 = vld [vmem:[#allocation4 + $0xa10] sm:$0xff]
    %v348 = vld [vmem:[#allocation4 + $0xa18] sm:$0xff]
    %v349 = vld [vmem:[#allocation4 + $0xa20] sm:$0xff]
    %v350 = vld [vmem:[#allocation4 + $0xa28] sm:$0xff]
    %v351 = vld [vmem:[#allocation4 + $0xa30] sm:$0xff]
    %v352 = vld [vmem:[#allocation4 + $0xa38] sm:$0xff]
    %v353 = vld [vmem:[#allocation4 + $0xa40] sm:$0xff]
    %v354 = vld [vmem:[#allocation4 + $0xa48] sm:$0xff]
    %v355 = vld [vmem:[#allocation4 + $0xa50] sm:$0xff]
    %v356 = vld [vmem:[#allocation4 + $0xa58] sm:$0xff]
    %v357 = vld [vmem:[#allocation4 + $0xa60] sm:$0xff]
    %v358 = vld [vmem:[#allocation4 + $0xa68] sm:$0xff]
    %v359 = vld [vmem:[#allocation4 + $0xa70] sm:$0xff]
    %v360 = vld [vmem:[#allocation4 + $0xa78] sm:$0xff]
    %v361 = vld [vmem:[#allocation4 + $0xa80] sm:$0xff]
    %v362 = vld [vmem:[#allocation4 + $0xa88] sm:$0xff]
    %v363 = vld [vmem:[#allocation4 + $0xa90] sm:$0xff]
    %v364 = vld [vmem:[#allocation4 + $0xa98] sm:$0xff]
    %v365 = vld [vmem:[#allocation4 + $0xaa0] sm:$0xff]
    %v366 = vld [vmem:[#allocation4 + $0xaa8] sm:$0xff]
    %v367 = vld [vmem:[#allocation4 + $0xab0] sm:$0xff]
    %v368 = vld [vmem:[#allocation4 + $0xab8] sm:$0xff]
    %v369 = vld [vmem:[#allocation4 + $0xac0] sm:$0xff]
    %v370 = vld [vmem:[#allocation4 + $0xac8] sm:$0xff]
    %v371 = vld [vmem:[#allocation4 + $0xad0] sm:$0xff]
    %v372 = vld [vmem:[#allocation4 + $0xad8] sm:$0xff]
    %v373 = vld [vmem:[#allocation4 + $0xae0] sm:$0xff]
    %v374 = vld [vmem:[#allocation4 + $0xae8] sm:$0xff]
    %v375 = vld [vmem:[#allocation4 + $0xaf0] sm:$0xff]
    %v376 = vld [vmem:[#allocation4 + $0xaf8] sm:$0xff]
    %v377 = vld [vmem:[#allocation4 + $0xb00] sm:$0xff]
    %v378 = vld [vmem:[#allocation4 + $0xb08] sm:$0xff]
    %v379 = vld [vmem:[#allocation4 + $0xb10] sm:$0xff]
    %v380 = vld [vmem:[#allocation4 + $0xb18] sm:$0xff]
    %v381 = vld [vmem:[#allocation4 + $0xb20] sm:$0xff]
    %v382 = vld [vmem:[#allocation4 + $0xb28] sm:$0xff]
    %v383 = vld [vmem:[#allocation4 + $0xb30] sm:$0xff]
    %v384 = vld [vmem:[#allocation4 + $0xb38] sm:$0xff]
    %v385 = vld [vmem:[#allocation4 + $0xb40] sm:$0xff]
    %v386 = vld [vmem:[#allocation4 + $0xb48] sm:$0xff]
    %v387 = vld [vmem:[#allocation4 + $0xb50] sm:$0xff]
    %v388 = vld [vmem:[#allocation4 + $0xb58] sm:$0xff]
    %v389 = vld [vmem:[#allocation4 + $0xb60] sm:$0xff]
    %v390 = vld [vmem:[#allocation4 + $0xb68] sm:$0xff]
    %v391 = vld [vmem:[#allocation4 + $0xb70] sm:$0xff]
    %v392 = vld [vmem:[#allocation4 + $0xb78] sm:$0xff]
    %v393 = vld [vmem:[#allocation4 + $0xb80] sm:$0xff]
    %v394 = vld [vmem:[#allocation4 + $0xb88] sm:$0xff]
    %v395 = vld [vmem:[#allocation4 + $0xb90] sm:$0xff]
    %v396 = vld [vmem:[#allocation4 + $0xb98] sm:$0xff]
    %v397 = vld [vmem:[#allocation4 + $0xba0] sm:$0xff]
    %v398 = vld [vmem:[#allocation4 + $0xba8] sm:$0xff]
    %v399 = vld [vmem:[#allocation4 + $0xbb0] sm:$0xff]
    %v400 = vld [vmem:[#allocation4 + $0xbb8] sm:$0xff]
    %v401 = vld [vmem:[#allocation4 + $0xbc0] sm:$0xff]
    %v402 = vld [vmem:[#allocation4 + $0xbc8] sm:$0xff]
    %v403 = vld [vmem:[#allocation4 + $0xbd0] sm:$0xff]
    %v404 = vld [vmem:[#allocation4 + $0xbd8] sm:$0xff]
    %v405 = vld [vmem:[#allocation4 + $0xbe0] sm:$0xff]
    %v406 = vld [vmem:[#allocation4 + $0xbe8] sm:$0xff]
    %v407 = vld [vmem:[#allocation4 + $0xbf0] sm:$0xff]
    %v408 = vld [vmem:[#allocation4 + $0xbf8] sm:$0xff]
    %v409 = vld [vmem:[#allocation4 + $0xc00] sm:$0xff]
    %v410 = vld [vmem:[#allocation4 + $0xc08] sm:$0xff]
    %v411 = vld [vmem:[#allocation4 + $0xc10] sm:$0xff]
    %v412 = vld [vmem:[#allocation4 + $0xc18] sm:$0xff]
    %v413 = vld [vmem:[#allocation4 + $0xc20] sm:$0xff]
    %v414 = vld [vmem:[#allocation4 + $0xc28] sm:$0xff]
    %v415 = vld [vmem:[#allocation4 + $0xc30] sm:$0xff]
    %v416 = vld [vmem:[#allocation4 + $0xc38] sm:$0xff]
    %v417 = vld [vmem:[#allocation4 + $0xc40] sm:$0xff]
    %v418 = vld [vmem:[#allocation4 + $0xc48] sm:$0xff]
    %v419 = vld [vmem:[#allocation4 + $0xc50] sm:$0xff]
    %v420 = vld [vmem:[#allocation4 + $0xc58] sm:$0xff]
    %v421 = vld [vmem:[#allocation4 + $0xc60] sm:$0xff]
    %v422 = vld [vmem:[#allocation4 + $0xc68] sm:$0xff]
    %v423 = vld [vmem:[#allocation4 + $0xc70] sm:$0xff]
    %v424 = vld [vmem:[#allocation4 + $0xc78] sm:$0xff]
    %v425 = vld [vmem:[#allocation4 + $0xc80] sm:$0xff]
    %v426 = vld [vmem:[#allocation4 + $0xc88] sm:$0xff]
    %v427 = vld [vmem:[#allocation4 + $0xc90] sm:$0xff]
    %v428 = vld [vmem:[#allocation4 + $0xc98] sm:$0xff]
    %v429 = vld [vmem:[#allocation4 + $0xca0] sm:$0xff]
    %v430 = vld [vmem:[#allocation4 + $0xca8] sm:$0xff]
    %v431 = vld [vmem:[#allocation4 + $0xcb0] sm:$0xff]
    %v432 = vld [vmem:[#allocation4 + $0xcb8] sm:$0xff]
    %v433 = vld [vmem:[#allocation4 + $0xcc0] sm:$0xff]
    %v434 = vld [vmem:[#allocation4 + $0xcc8] sm:$0xff]
    %v435 = vld [vmem:[#allocation4 + $0xcd0] sm:$0xff]
    %v436 = vld [vmem:[#allocation4 + $0xcd8] sm:$0xff]
    %v437 = vld [vmem:[#allocation4 + $0xce0] sm:$0xff]
    %v438 = vld [vmem:[#allocation4 + $0xce8] sm:$0xff]
    %v439 = vld [vmem:[#allocation4 + $0xcf0] sm:$0xff]
    %v440 = vld [vmem:[#allocation4 + $0xcf8] sm:$0xff]
    %v441 = vld [vmem:[#allocation4 + $0xd00] sm:$0xff]
    %v442 = vld [vmem:[#allocation4 + $0xd08] sm:$0xff]
    %v443 = vld [vmem:[#allocation4 + $0xd10] sm:$0xff]
    %v444 = vld [vmem:[#allocation4 + $0xd18] sm:$0xff]
    %v445 = vld [vmem:[#allocation4 + $0xd20] sm:$0xff]
    %v446 = vld [vmem:[#allocation4 + $0xd28] sm:$0xff]
    %v447 = vld [vmem:[#allocation4 + $0xd30] sm:$0xff]
    %v448 = vld [vmem:[#allocation4 + $0xd38] sm:$0xff]
    %v449 = vld [vmem:[#allocation4 + $0xd40] sm:$0xff]
    %v450 = vld [vmem:[#allocation4 + $0xd48] sm:$0xff]
    %v451 = vld [vmem:[#allocation4 + $0xd50] sm:$0xff]
    %v452 = vld [vmem:[#allocation4 + $0xd58] sm:$0xff]
    %v453 = vld [vmem:[#allocation4 + $0xd60] sm:$0xff]
    %v454 = vld [vmem:[#allocation4 + $0xd68] sm:$0xff]
    %v455 = vld [vmem:[#allocation4 + $0xd70] sm:$0xff]
    %v456 = vld [vmem:[#allocation4 + $0xd78] sm:$0xff]
    %v457 = vld [vmem:[#allocation4 + $0xd80] sm:$0xff]
    %v458 = vld [vmem:[#allocation4 + $0xd88] sm:$0xff]
    %v459 = vld [vmem:[#allocation4 + $0xd90] sm:$0xff]
    %v460 = vld [vmem:[#allocation4 + $0xd98] sm:$0xff]
    %v461 = vld [vmem:[#allocation4 + $0xda0] sm:$0xff]
    %v462 = vld [vmem:[#allocation4 + $0xda8] sm:$0xff]
    %v463 = vld [vmem:[#allocation4 + $0xdb0] sm:$0xff]
    %v464 = vld [vmem:[#allocation4 + $0xdb8] sm:$0xff]
    %v465 = vld [vmem:[#allocation4 + $0xdc0] sm:$0xff]
    %v466 = vld [vmem:[#allocation4 + $0xdc8] sm:$0xff]
    %v467 = vld [vmem:[#allocation4 + $0xdd0] sm:$0xff]
    %v468 = vld [vmem:[#allocation4 + $0xdd8] sm:$0xff]
    %v469 = vld [vmem:[#allocation4 + $0xde0] sm:$0xff]
    %v470 = vld [vmem:[#allocation4 + $0xde8] sm:$0xff]
    %v471 = vld [vmem:[#allocation4 + $0xdf0] sm:$0xff]
    %v472 = vld [vmem:[#allocation4 + $0xdf8] sm:$0xff]
    %v473 = vld [vmem:[#allocation4 + $0xe00] sm:$0xff]
    %v474 = vld [vmem:[#allocation4 + $0xe08] sm:$0xff]
    %v475 = vld [vmem:[#allocation4 + $0xe10] sm:$0xff]
    %v476 = vld [vmem:[#allocation4 + $0xe18] sm:$0xff]
    %v477 = vld [vmem:[#allocation4 + $0xe20] sm:$0xff]
    %v478 = vld [vmem:[#allocation4 + $0xe28] sm:$0xff]
    %v479 = vld [vmem:[#allocation4 + $0xe30] sm:$0xff]
    %v480 = vld [vmem:[#allocation4 + $0xe38] sm:$0xff]
    %v481 = vld [vmem:[#allocation4 + $0xe40] sm:$0xff]
    %v482 = vld [vmem:[#allocation4 + $0xe48] sm:$0xff]
    %v483 = vld [vmem:[#allocation4 + $0xe50] sm:$0xff]
    %v484 = vld [vmem:[#allocation4 + $0xe58] sm:$0xff]
    %v485 = vld [vmem:[#allocation4 + $0xe60] sm:$0xff]
    %v486 = vld [vmem:[#allocation4 + $0xe68] sm:$0xff]
    %v487 = vld [vmem:[#allocation4 + $0xe70] sm:$0xff]
    %v488 = vld [vmem:[#allocation4 + $0xe78] sm:$0xff]
    %v489 = vld [vmem:[#allocation4 + $0xe80] sm:$0xff]
    %v490 = vld [vmem:[#allocation4 + $0xe88] sm:$0xff]
    %v491 = vld [vmem:[#allocation4 + $0xe90] sm:$0xff]
    %v492 = vld [vmem:[#allocation4 + $0xe98] sm:$0xff]
    %v493 = vld [vmem:[#allocation4 + $0xea0] sm:$0xff]
    %v494 = vld [vmem:[#allocation4 + $0xea8] sm:$0xff]
    %v495 = vld [vmem:[#allocation4 + $0xeb0] sm:$0xff]
    %v496 = vld [vmem:[#allocation4 + $0xeb8] sm:$0xff]
    %v497 = vld [vmem:[#allocation4 + $0xec0] sm:$0xff]
    %v498 = vld [vmem:[#allocation4 + $0xec8] sm:$0xff]
    %v499 = vld [vmem:[#allocation4 + $0xed0] sm:$0xff]
    %v500 = vld [vmem:[#allocation4 + $0xed8] sm:$0xff]
    %v501 = vld [vmem:[#allocation4 + $0xee0] sm:$0xff]
    %v502 = vld [vmem:[#allocation4 + $0xee8] sm:$0xff]
    %v503 = vld [vmem:[#allocation4 + $0xef0] sm:$0xff]
    %v504 = vld [vmem:[#allocation4 + $0xef8] sm:$0xff]
    %v505 = vld [vmem:[#allocation4 + $0xf00] sm:$0xff]
    %v506 = vld [vmem:[#allocation4 + $0xf08] sm:$0xff]
    %v507 = vld [vmem:[#allocation4 + $0xf10] sm:$0xff]
    %v508 = vld [vmem:[#allocation4 + $0xf18] sm:$0xff]
    %v509 = vld [vmem:[#allocation4 + $0xf20] sm:$0xff]
    %v510 = vld [vmem:[#allocation4 + $0xf28] sm:$0xff]
    %v511 = vld [vmem:[#allocation4 + $0xf30] sm:$0xff]
    %v512 = vld [vmem:[#allocation4 + $0xf38] sm:$0xff]
    %v513 = vld [vmem:[#allocation4 + $0xf40] sm:$0xff]
    %v514 = vld [vmem:[#allocation4 + $0xf48] sm:$0xff]
    %v515 = vld [vmem:[#allocation4 + $0xf50] sm:$0xff]
    %v516 = vld [vmem:[#allocation4 + $0xf58] sm:$0xff]
    %v517 = vld [vmem:[#allocation4 + $0xf60] sm:$0xff]
    %v518 = vld [vmem:[#allocation4 + $0xf68] sm:$0xff]
    %v519 = vld [vmem:[#allocation4 + $0xf70] sm:$0xff]
    %v520 = vld [vmem:[#allocation4 + $0xf78] sm:$0xff]
    %v521 = vld [vmem:[#allocation4 + $0xf80] sm:$0xff]
    %v522 = vld [vmem:[#allocation4 + $0xf88] sm:$0xff]
    %v523 = vld [vmem:[#allocation4 + $0xf90] sm:$0xff]
    %v524 = vld [vmem:[#allocation4 + $0xf98] sm:$0xff]
    %v525 = vld [vmem:[#allocation4 + $0xfa0] sm:$0xff]
    %v526 = vld [vmem:[#allocation4 + $0xfa8] sm:$0xff]
    %v527 = vld [vmem:[#allocation4 + $0xfb0] sm:$0xff]
    %v528 = vld [vmem:[#allocation4 + $0xfb8] sm:$0xff]
    %v529 = vld [vmem:[#allocation4 + $0xfc0] sm:$0xff]
    %v530 = vld [vmem:[#allocation4 + $0xfc8] sm:$0xff]
    %v531 = vld [vmem:[#allocation4 + $0xfd0] sm:$0xff]
    %v532 = vld [vmem:[#allocation4 + $0xfd8] sm:$0xff]
    %v533 = vld [vmem:[#allocation4 + $0xfe0] sm:$0xff]
    %v534 = vld [vmem:[#allocation4 + $0xfe8] sm:$0xff]
    %v535 = vld [vmem:[#allocation4 + $0xff0] sm:$0xff]
    %v536 = vld [vmem:[#allocation4 + $0xff8] sm:$0xff]
    %s537 = smul.u32 0, 512
    %v538 = vlaneseq
    %v539 = vshrl.u32 %v538, 7
    %v540 = vadd.s32 %v539, 8
    %v541 = vadd.s32 %v539, 16
    %v542 = vadd.s32 %v539, 24
    %v543 = vadd.s32 %v539, 32
    %v544 = vadd.s32 %v539, 40
    %v545 = vadd.s32 %v539, 48
    %v546 = vadd.s32 %v539, 56
    %v547 = vadd.s32 %v539, 64
    %v548 = vadd.s32 %v539, 72
    %v549 = vadd.s32 %v539, 80
    %v550 = vadd.s32 %v539, 88
    %v551 = vadd.s32 %v539, 96
    %v552 = vadd.s32 %v539, 104
    %v553 = vadd.s32 %v539, 112
    %v554 = vadd.s32 %v539, 120
    %v555 = vadd.s32 %v539, 128
    %v556 = vadd.s32 %v539, 136
    %v557 = vadd.s32 %v539, 144
    %v558 = vadd.s32 %v539, 152
    %v559 = vadd.s32 %v539, 160
    %v560 = vadd.s32 %v539, 168
    %v561 = vadd.s32 %v539, 176
    %v562 = vadd.s32 %v539, 184
    %v563 = vadd.s32 %v539, 192
    %v564 = vadd.s32 %v539, 200
    %v565 = vadd.s32 %v539, 208
    %v566 = vadd.s32 %v539, 216
    %v567 = vadd.s32 %v539, 224
    %v568 = vadd.s32 %v539, 232
    %v569 = vadd.s32 %v539, 240
    %v570 = vadd.s32 %v539, 248
    %v571 = vadd.s32 %v539, 256
    %v572 = vadd.s32 %v539, 264
    %v573 = vadd.s32 %v539, 272
    %v574 = vadd.s32 %v539, 280
    %v575 = vadd.s32 %v539, 288
    %v576 = vadd.s32 %v539, 296
    %v577 = vadd.s32 %v539, 304
    %v578 = vadd.s32 %v539, 312
    %v579 = vadd.s32 %v539, 320
    %v580 = vadd.s32 %v539, 328
    %v581 = vadd.s32 %v539, 336
    %v582 = vadd.s32 %v539, 344
    %v583 = vadd.s32 %v539, 352
    %v584 = vadd.s32 %v539, 360
    %v585 = vadd.s32 %v539, 368
    %v586 = vadd.s32 %v539, 376
    %v587 = vadd.s32 %v539, 384
    %v588 = vadd.s32 %v539, 392
    %v589 = vadd.s32 %v539, 400
    %v590 = vadd.s32 %v539, 408
    %v591 = vadd.s32 %v539, 416
    %v592 = vadd.s32 %v539, 424
    %v593 = vadd.s32 %v539, 432
    %v594 = vadd.s32 %v539, 440
    %v595 = vadd.s32 %v539, 448
    %v596 = vadd.s32 %v539, 456
    %v597 = vadd.s32 %v539, 464
    %v598 = vadd.s32 %v539, 472
    %v599 = vadd.s32 %v539, 480
    %v600 = vadd.s32 %v539, 488
    %v601 = vadd.s32 %v539, 496
    %v602 = vadd.s32 %v539, 504
    %v603 = vstv %s537
    %v604 = vadd.s32 %v539, %v603
    %v605 = vadd.s32 %v540, %v603
    %v606 = vadd.s32 %v541, %v603
    %v607 = vadd.s32 %v542, %v603
    %v608 = vadd.s32 %v543, %v603
    %v609 = vadd.s32 %v544, %v603
    %v610 = vadd.s32 %v545, %v603
    %v611 = vadd.s32 %v546, %v603
    %v612 = vadd.s32 %v547, %v603
    %v613 = vadd.s32 %v548, %v603
    %v614 = vadd.s32 %v549, %v603
    %v615 = vadd.s32 %v550, %v603
    %v616 = vadd.s32 %v551, %v603
    %v617 = vadd.s32 %v552, %v603
    %v618 = vadd.s32 %v553, %v603
    %v619 = vadd.s32 %v554, %v603
    %v620 = vadd.s32 %v555, %v603
    %v621 = vadd.s32 %v556, %v603
    %v622 = vadd.s32 %v557, %v603
    %v623 = vadd.s32 %v558, %v603
    %v624 = vadd.s32 %v559, %v603
    %v625 = vadd.s32 %v560, %v603
    %v626 = vadd.s32 %v561, %v603
    %v627 = vadd.s32 %v562, %v603
    %v628 = vadd.s32 %v563, %v603
    %v629 = vadd.s32 %v564, %v603
    %v630 = vadd.s32 %v565, %v603
    %v631 = vadd.s32 %v566, %v603
    %v632 = vadd.s32 %v567, %v603
    %v633 = vadd.s32 %v568, %v603
    %v634 = vadd.s32 %v569, %v603
    %v635 = vadd.s32 %v570, %v603
    %v636 = vadd.s32 %v571, %v603
    %v637 = vadd.s32 %v572, %v603
    %v638 = vadd.s32 %v573, %v603
    %v639 = vadd.s32 %v574, %v603
    %v640 = vadd.s32 %v575, %v603
    %v641 = vadd.s32 %v576, %v603
    %v642 = vadd.s32 %v577, %v603
    %v643 = vadd.s32 %v578, %v603
    %v644 = vadd.s32 %v579, %v603
    %v645 = vadd.s32 %v580, %v603
    %v646 = vadd.s32 %v581, %v603
    %v647 = vadd.s32 %v582, %v603
    %v648 = vadd.s32 %v583, %v603
    %v649 = vadd.s32 %v584, %v603
    %v650 = vadd.s32 %v585, %v603
    %v651 = vadd.s32 %v586, %v603
    %v652 = vadd.s32 %v587, %v603
    %v653 = vadd.s32 %v588, %v603
    %v654 = vadd.s32 %v589, %v603
    %v655 = vadd.s32 %v590, %v603
    %v656 = vadd.s32 %v591, %v603
    %v657 = vadd.s32 %v592, %v603
    %v658 = vadd.s32 %v593, %v603
    %v659 = vadd.s32 %v594, %v603
    %v660 = vadd.s32 %v595, %v603
    %v661 = vadd.s32 %v596, %v603
    %v662 = vadd.s32 %v597, %v603
    %v663 = vadd.s32 %v598, %v603
    %v664 = vadd.s32 %v599, %v603
    %v665 = vadd.s32 %v600, %v603
    %v666 = vadd.s32 %v601, %v603
    %v667 = vadd.s32 %v602, %v603
    %v668 = vlaneseq
    %v669 = vand.u32 %v668, 127
    %v670 = vadd.s32 %v669, 128
    %v671 = vadd.s32 %v669, 256
    %v672 = vadd.s32 %v669, 384
    %v673 = vadd.s32 %v669, 512
    %v674 = vadd.s32 %v669, 640
    %v675 = vadd.s32 %v669, 768
    %v676 = vadd.s32 %v669, 896
    %v677 = vmul.u32 %v604, 1024
    %v678 = vmul.u32 %v605, 1024
    %v679 = vmul.u32 %v606, 1024
    %v680 = vmul.u32 %v607, 1024
    %v681 = vmul.u32 %v608, 1024
    %v682 = vmul.u32 %v609, 1024
    %v683 = vmul.u32 %v610, 1024
    %v684 = vmul.u32 %v611, 1024
    %v685 = vmul.u32 %v612, 1024
    %v686 = vmul.u32 %v613, 1024
    %v687 = vmul.u32 %v614, 1024
    %v688 = vmul.u32 %v615, 1024
    %v689 = vmul.u32 %v616, 1024
    %v690 = vmul.u32 %v617, 1024
    %v691 = vmul.u32 %v618, 1024
    %v692 = vmul.u32 %v619, 1024
    %v693 = vmul.u32 %v620, 1024
    %v694 = vmul.u32 %v621, 1024
    %v695 = vmul.u32 %v622, 1024
    %v696 = vmul.u32 %v623, 1024
    %v697 = vmul.u32 %v624, 1024
    %v698 = vmul.u32 %v625, 1024
    %v699 = vmul.u32 %v626, 1024
    %v700 = vmul.u32 %v627, 1024
    %v701 = vmul.u32 %v628, 1024
    %v702 = vmul.u32 %v629, 1024
    %v703 = vmul.u32 %v630, 1024
    %v704 = vmul.u32 %v631, 1024
    %v705 = vmul.u32 %v632, 1024
    %v706 = vmul.u32 %v633, 1024
    %v707 = vmul.u32 %v634, 1024
    %v708 = vmul.u32 %v635, 1024
    %v709 = vmul.u32 %v636, 1024
    %v710 = vmul.u32 %v637, 1024
    %v711 = vmul.u32 %v638, 1024
    %v712 = vmul.u32 %v639, 1024
    %v713 = vmul.u32 %v640, 1024
    %v714 = vmul.u32 %v641, 1024
    %v715 = vmul.u32 %v642, 1024
    %v716 = vmul.u32 %v643, 1024
    %v717 = vmul.u32 %v644, 1024
    %v718 = vmul.u32 %v645, 1024
    %v719 = vmul.u32 %v646, 1024
    %v720 = vmul.u32 %v647, 1024
    %v721 = vmul.u32 %v648, 1024
    %v722 = vmul.u32 %v649, 1024
    %v723 = vmul.u32 %v650, 1024
    %v724 = vmul.u32 %v651, 1024
    %v725 = vmul.u32 %v652, 1024
    %v726 = vmul.u32 %v653, 1024
    %v727 = vmul.u32 %v654, 1024
    %v728 = vmul.u32 %v655, 1024
    %v729 = vmul.u32 %v656, 1024
    %v730 = vmul.u32 %v657, 1024
    %v731 = vmul.u32 %v658, 1024
    %v732 = vmul.u32 %v659, 1024
    %v733 = vmul.u32 %v660, 1024
    %v734 = vmul.u32 %v661, 1024
    %v735 = vmul.u32 %v662, 1024
    %v736 = vmul.u32 %v663, 1024
    %v737 = vmul.u32 %v664, 1024
    %v738 = vmul.u32 %v665, 1024
    %v739 = vmul.u32 %v666, 1024
    %v740 = vmul.u32 %v667, 1024
    %v741 = vadd.s32 %v677, %v669
    %v742 = vadd.s32 %v677, %v670
    %v743 = vadd.s32 %v677, %v671
    %v744 = vadd.s32 %v677, %v672
    %v745 = vadd.s32 %v677, %v673
    %v746 = vadd.s32 %v677, %v674
    %v747 = vadd.s32 %v677, %v675
    %v748 = vadd.s32 %v677, %v676
    %v749 = vadd.s32 %v678, %v669
    %v750 = vadd.s32 %v678, %v670
    %v751 = vadd.s32 %v678, %v671
    %v752 = vadd.s32 %v678, %v672
    %v753 = vadd.s32 %v678, %v673
    %v754 = vadd.s32 %v678, %v674
    %v755 = vadd.s32 %v678, %v675
    %v756 = vadd.s32 %v678, %v676
    %v757 = vadd.s32 %v679, %v669
    %v758 = vadd.s32 %v679, %v670
    %v759 = vadd.s32 %v679, %v671
    %v760 = vadd.s32 %v679, %v672
    %v761 = vadd.s32 %v679, %v673
    %v762 = vadd.s32 %v679, %v674
    %v763 = vadd.s32 %v679, %v675
    %v764 = vadd.s32 %v679, %v676
    %v765 = vadd.s32 %v680, %v669
    %v766 = vadd.s32 %v680, %v670
    %v767 = vadd.s32 %v680, %v671
    %v768 = vadd.s32 %v680, %v672
    %v769 = vadd.s32 %v680, %v673
    %v770 = vadd.s32 %v680, %v674
    %v771 = vadd.s32 %v680, %v675
    %v772 = vadd.s32 %v680, %v676
    %v773 = vadd.s32 %v681, %v669
    %v774 = vadd.s32 %v681, %v670
    %v775 = vadd.s32 %v681, %v671
    %v776 = vadd.s32 %v681, %v672
    %v777 = vadd.s32 %v681, %v673
    %v778 = vadd.s32 %v681, %v674
    %v779 = vadd.s32 %v681, %v675
    %v780 = vadd.s32 %v681, %v676
    %v781 = vadd.s32 %v682, %v669
    %v782 = vadd.s32 %v682, %v670
    %v783 = vadd.s32 %v682, %v671
    %v784 = vadd.s32 %v682, %v672
    %v785 = vadd.s32 %v682, %v673
    %v786 = vadd.s32 %v682, %v674
    %v787 = vadd.s32 %v682, %v675
    %v788 = vadd.s32 %v682, %v676
    %v789 = vadd.s32 %v683, %v669
    %v790 = vadd.s32 %v683, %v670
    %v791 = vadd.s32 %v683, %v671
    %v792 = vadd.s32 %v683, %v672
    %v793 = vadd.s32 %v683, %v673
    %v794 = vadd.s32 %v683, %v674
    %v795 = vadd.s32 %v683, %v675
    %v796 = vadd.s32 %v683, %v676
    %v797 = vadd.s32 %v684, %v669
    %v798 = vadd.s32 %v684, %v670
    %v799 = vadd.s32 %v684, %v671
    %v800 = vadd.s32 %v684, %v672
    %v801 = vadd.s32 %v684, %v673
    %v802 = vadd.s32 %v684, %v674
    %v803 = vadd.s32 %v684, %v675
    %v804 = vadd.s32 %v684, %v676
    %v805 = vadd.s32 %v685, %v669
    %v806 = vadd.s32 %v685, %v670
    %v807 = vadd.s32 %v685, %v671
    %v808 = vadd.s32 %v685, %v672
    %v809 = vadd.s32 %v685, %v673
    %v810 = vadd.s32 %v685, %v674
    %v811 = vadd.s32 %v685, %v675
    %v812 = vadd.s32 %v685, %v676
    %v813 = vadd.s32 %v686, %v669
    %v814 = vadd.s32 %v686, %v670
    %v815 = vadd.s32 %v686, %v671
    %v816 = vadd.s32 %v686, %v672
    %v817 = vadd.s32 %v686, %v673
    %v818 = vadd.s32 %v686, %v674
    %v819 = vadd.s32 %v686, %v675
    %v820 = vadd.s32 %v686, %v676
    %v821 = vadd.s32 %v687, %v669
    %v822 = vadd.s32 %v687, %v670
    %v823 = vadd.s32 %v687, %v671
    %v824 = vadd.s32 %v687, %v672
    %v825 = vadd.s32 %v687, %v673
    %v826 = vadd.s32 %v687, %v674
    %v827 = vadd.s32 %v687, %v675
    %v828 = vadd.s32 %v687, %v676
    %v829 = vadd.s32 %v688, %v669
    %v830 = vadd.s32 %v688, %v670
    %v831 = vadd.s32 %v688, %v671
    %v832 = vadd.s32 %v688, %v672
    %v833 = vadd.s32 %v688, %v673
    %v834 = vadd.s32 %v688, %v674
    %v835 = vadd.s32 %v688, %v675
    %v836 = vadd.s32 %v688, %v676
    %v837 = vadd.s32 %v689, %v669
    %v838 = vadd.s32 %v689, %v670
    %v839 = vadd.s32 %v689, %v671
    %v840 = vadd.s32 %v689, %v672
    %v841 = vadd.s32 %v689, %v673
    %v842 = vadd.s32 %v689, %v674
    %v843 = vadd.s32 %v689, %v675
    %v844 = vadd.s32 %v689, %v676
    %v845 = vadd.s32 %v690, %v669
    %v846 = vadd.s32 %v690, %v670
    %v847 = vadd.s32 %v690, %v671
    %v848 = vadd.s32 %v690, %v672
    %v849 = vadd.s32 %v690, %v673
    %v850 = vadd.s32 %v690, %v674
    %v851 = vadd.s32 %v690, %v675
    %v852 = vadd.s32 %v690, %v676
    %v853 = vadd.s32 %v691, %v669
    %v854 = vadd.s32 %v691, %v670
    %v855 = vadd.s32 %v691, %v671
    %v856 = vadd.s32 %v691, %v672
    %v857 = vadd.s32 %v691, %v673
    %v858 = vadd.s32 %v691, %v674
    %v859 = vadd.s32 %v691, %v675
    %v860 = vadd.s32 %v691, %v676
    %v861 = vadd.s32 %v692, %v669
    %v862 = vadd.s32 %v692, %v670
    %v863 = vadd.s32 %v692, %v671
    %v864 = vadd.s32 %v692, %v672
    %v865 = vadd.s32 %v692, %v673
    %v866 = vadd.s32 %v692, %v674
    %v867 = vadd.s32 %v692, %v675
    %v868 = vadd.s32 %v692, %v676
    %v869 = vadd.s32 %v693, %v669
    %v870 = vadd.s32 %v693, %v670
    %v871 = vadd.s32 %v693, %v671
    %v872 = vadd.s32 %v693, %v672
    %v873 = vadd.s32 %v693, %v673
    %v874 = vadd.s32 %v693, %v674
    %v875 = vadd.s32 %v693, %v675
    %v876 = vadd.s32 %v693, %v676
    %v877 = vadd.s32 %v694, %v669
    %v878 = vadd.s32 %v694, %v670
    %v879 = vadd.s32 %v694, %v671
    %v880 = vadd.s32 %v694, %v672
    %v881 = vadd.s32 %v694, %v673
    %v882 = vadd.s32 %v694, %v674
    %v883 = vadd.s32 %v694, %v675
    %v884 = vadd.s32 %v694, %v676
    %v885 = vadd.s32 %v695, %v669
    %v886 = vadd.s32 %v695, %v670
    %v887 = vadd.s32 %v695, %v671
    %v888 = vadd.s32 %v695, %v672
    %v889 = vadd.s32 %v695, %v673
    %v890 = vadd.s32 %v695, %v674
    %v891 = vadd.s32 %v695, %v675
    %v892 = vadd.s32 %v695, %v676
    %v893 = vadd.s32 %v696, %v669
    %v894 = vadd.s32 %v696, %v670
    %v895 = vadd.s32 %v696, %v671
    %v896 = vadd.s32 %v696, %v672
    %v897 = vadd.s32 %v696, %v673
    %v898 = vadd.s32 %v696, %v674
    %v899 = vadd.s32 %v696, %v675
    %v900 = vadd.s32 %v696, %v676
    %v901 = vadd.s32 %v697, %v669
    %v902 = vadd.s32 %v697, %v670
    %v903 = vadd.s32 %v697, %v671
    %v904 = vadd.s32 %v697, %v672
    %v905 = vadd.s32 %v697, %v673
    %v906 = vadd.s32 %v697, %v674
    %v907 = vadd.s32 %v697, %v675
    %v908 = vadd.s32 %v697, %v676
    %v909 = vadd.s32 %v698, %v669
    %v910 = vadd.s32 %v698, %v670
    %v911 = vadd.s32 %v698, %v671
    %v912 = vadd.s32 %v698, %v672
    %v913 = vadd.s32 %v698, %v673
    %v914 = vadd.s32 %v698, %v674
    %v915 = vadd.s32 %v698, %v675
    %v916 = vadd.s32 %v698, %v676
    %v917 = vadd.s32 %v699, %v669
    %v918 = vadd.s32 %v699, %v670
    %v919 = vadd.s32 %v699, %v671
    %v920 = vadd.s32 %v699, %v672
    %v921 = vadd.s32 %v699, %v673
    %v922 = vadd.s32 %v699, %v674
    %v923 = vadd.s32 %v699, %v675
    %v924 = vadd.s32 %v699, %v676
    %v925 = vadd.s32 %v700, %v669
    %v926 = vadd.s32 %v700, %v670
    %v927 = vadd.s32 %v700, %v671
    %v928 = vadd.s32 %v700, %v672
    %v929 = vadd.s32 %v700, %v673
    %v930 = vadd.s32 %v700, %v674
    %v931 = vadd.s32 %v700, %v675
    %v932 = vadd.s32 %v700, %v676
    %v933 = vadd.s32 %v701, %v669
    %v934 = vadd.s32 %v701, %v670
    %v935 = vadd.s32 %v701, %v671
    %v936 = vadd.s32 %v701, %v672
    %v937 = vadd.s32 %v701, %v673
    %v938 = vadd.s32 %v701, %v674
    %v939 = vadd.s32 %v701, %v675
    %v940 = vadd.s32 %v701, %v676
    %v941 = vadd.s32 %v702, %v669
    %v942 = vadd.s32 %v702, %v670
    %v943 = vadd.s32 %v702, %v671
    %v944 = vadd.s32 %v702, %v672
    %v945 = vadd.s32 %v702, %v673
    %v946 = vadd.s32 %v702, %v674
    %v947 = vadd.s32 %v702, %v675
    %v948 = vadd.s32 %v702, %v676
    %v949 = vadd.s32 %v703, %v669
    %v950 = vadd.s32 %v703, %v670
    %v951 = vadd.s32 %v703, %v671
    %v952 = vadd.s32 %v703, %v672
    %v953 = vadd.s32 %v703, %v673
    %v954 = vadd.s32 %v703, %v674
    %v955 = vadd.s32 %v703, %v675
    %v956 = vadd.s32 %v703, %v676
    %v957 = vadd.s32 %v704, %v669
    %v958 = vadd.s32 %v704, %v670
    %v959 = vadd.s32 %v704, %v671
    %v960 = vadd.s32 %v704, %v672
    %v961 = vadd.s32 %v704, %v673
    %v962 = vadd.s32 %v704, %v674
    %v963 = vadd.s32 %v704, %v675
    %v964 = vadd.s32 %v704, %v676
    %v965 = vadd.s32 %v705, %v669
    %v966 = vadd.s32 %v705, %v670
    %v967 = vadd.s32 %v705, %v671
    %v968 = vadd.s32 %v705, %v672
    %v969 = vadd.s32 %v705, %v673
    %v970 = vadd.s32 %v705, %v674
    %v971 = vadd.s32 %v705, %v675
    %v972 = vadd.s32 %v705, %v676
    %v973 = vadd.s32 %v706, %v669
    %v974 = vadd.s32 %v706, %v670
    %v975 = vadd.s32 %v706, %v671
    %v976 = vadd.s32 %v706, %v672
    %v977 = vadd.s32 %v706, %v673
    %v978 = vadd.s32 %v706, %v674
    %v979 = vadd.s32 %v706, %v675
    %v980 = vadd.s32 %v706, %v676
    %v981 = vadd.s32 %v707, %v669
    %v982 = vadd.s32 %v707, %v670
    %v983 = vadd.s32 %v707, %v671
    %v984 = vadd.s32 %v707, %v672
    %v985 = vadd.s32 %v707, %v673
    %v986 = vadd.s32 %v707, %v674
    %v987 = vadd.s32 %v707, %v675
    %v988 = vadd.s32 %v707, %v676
    %v989 = vadd.s32 %v708, %v669
    %v990 = vadd.s32 %v708, %v670
    %v991 = vadd.s32 %v708, %v671
    %v992 = vadd.s32 %v708, %v672
    %v993 = vadd.s32 %v708, %v673
    %v994 = vadd.s32 %v708, %v674
    %v995 = vadd.s32 %v708, %v675
    %v996 = vadd.s32 %v708, %v676
    %v997 = vadd.s32 %v709, %v669
    %v998 = vadd.s32 %v709, %v670
    %v999 = vadd.s32 %v709, %v671
    %v1000 = vadd.s32 %v709, %v672
    %v1001 = vadd.s32 %v709, %v673
    %v1002 = vadd.s32 %v709, %v674
    %v1003 = vadd.s32 %v709, %v675
    %v1004 = vadd.s32 %v709, %v676
    %v1005 = vadd.s32 %v710, %v669
    %v1006 = vadd.s32 %v710, %v670
    %v1007 = vadd.s32 %v710, %v671
    %v1008 = vadd.s32 %v710, %v672
    %v1009 = vadd.s32 %v710, %v673
    %v1010 = vadd.s32 %v710, %v674
    %v1011 = vadd.s32 %v710, %v675
    %v1012 = vadd.s32 %v710, %v676
    %v1013 = vadd.s32 %v711, %v669
    %v1014 = vadd.s32 %v711, %v670
    %v1015 = vadd.s32 %v711, %v671
    %v1016 = vadd.s32 %v711, %v672
    %v1017 = vadd.s32 %v711, %v673
    %v1018 = vadd.s32 %v711, %v674
    %v1019 = vadd.s32 %v711, %v675
    %v1020 = vadd.s32 %v711, %v676
    %v1021 = vadd.s32 %v712, %v669
    %v1022 = vadd.s32 %v712, %v670
    %v1023 = vadd.s32 %v712, %v671
    %v1024 = vadd.s32 %v712, %v672
    %v1025 = vadd.s32 %v712, %v673
    %v1026 = vadd.s32 %v712, %v674
    %v1027 = vadd.s32 %v712, %v675
    %v1028 = vadd.s32 %v712, %v676
    %v1029 = vadd.s32 %v713, %v669
    %v1030 = vadd.s32 %v713, %v670
    %v1031 = vadd.s32 %v713, %v671
    %v1032 = vadd.s32 %v713, %v672
    %v1033 = vadd.s32 %v713, %v673
    %v1034 = vadd.s32 %v713, %v674
    %v1035 = vadd.s32 %v713, %v675
    %v1036 = vadd.s32 %v713, %v676
    %v1037 = vadd.s32 %v714, %v669
    %v1038 = vadd.s32 %v714, %v670
    %v1039 = vadd.s32 %v714, %v671
    %v1040 = vadd.s32 %v714, %v672
    %v1041 = vadd.s32 %v714, %v673
    %v1042 = vadd.s32 %v714, %v674
    %v1043 = vadd.s32 %v714, %v675
    %v1044 = vadd.s32 %v714, %v676
    %v1045 = vadd.s32 %v715, %v669
    %v1046 = vadd.s32 %v715, %v670
    %v1047 = vadd.s32 %v715, %v671
    %v1048 = vadd.s32 %v715, %v672
    %v1049 = vadd.s32 %v715, %v673
    %v1050 = vadd.s32 %v715, %v674
    %v1051 = vadd.s32 %v715, %v675
    %v1052 = vadd.s32 %v715, %v676
    %v1053 = vadd.s32 %v716, %v669
    %v1054 = vadd.s32 %v716, %v670
    %v1055 = vadd.s32 %v716, %v671
    %v1056 = vadd.s32 %v716, %v672
    %v1057 = vadd.s32 %v716, %v673
    %v1058 = vadd.s32 %v716, %v674
    %v1059 = vadd.s32 %v716, %v675
    %v1060 = vadd.s32 %v716, %v676
    %v1061 = vadd.s32 %v717, %v669
    %v1062 = vadd.s32 %v717, %v670
    %v1063 = vadd.s32 %v717, %v671
    %v1064 = vadd.s32 %v717, %v672
    %v1065 = vadd.s32 %v717, %v673
    %v1066 = vadd.s32 %v717, %v674
    %v1067 = vadd.s32 %v717, %v675
    %v1068 = vadd.s32 %v717, %v676
    %v1069 = vadd.s32 %v718, %v669
    %v1070 = vadd.s32 %v718, %v670
    %v1071 = vadd.s32 %v718, %v671
    %v1072 = vadd.s32 %v718, %v672
    %v1073 = vadd.s32 %v718, %v673
    %v1074 = vadd.s32 %v718, %v674
    %v1075 = vadd.s32 %v718, %v675
    %v1076 = vadd.s32 %v718, %v676
    %v1077 = vadd.s32 %v719, %v669
    %v1078 = vadd.s32 %v719, %v670
    %v1079 = vadd.s32 %v719, %v671
    %v1080 = vadd.s32 %v719, %v672
    %v1081 = vadd.s32 %v719, %v673
    %v1082 = vadd.s32 %v719, %v674
    %v1083 = vadd.s32 %v719, %v675
    %v1084 = vadd.s32 %v719, %v676
    %v1085 = vadd.s32 %v720, %v669
    %v1086 = vadd.s32 %v720, %v670
    %v1087 = vadd.s32 %v720, %v671
    %v1088 = vadd.s32 %v720, %v672
    %v1089 = vadd.s32 %v720, %v673
    %v1090 = vadd.s32 %v720, %v674
    %v1091 = vadd.s32 %v720, %v675
    %v1092 = vadd.s32 %v720, %v676
    %v1093 = vadd.s32 %v721, %v669
    %v1094 = vadd.s32 %v721, %v670
    %v1095 = vadd.s32 %v721, %v671
    %v1096 = vadd.s32 %v721, %v672
    %v1097 = vadd.s32 %v721, %v673
    %v1098 = vadd.s32 %v721, %v674
    %v1099 = vadd.s32 %v721, %v675
    %v1100 = vadd.s32 %v721, %v676
    %v1101 = vadd.s32 %v722, %v669
    %v1102 = vadd.s32 %v722, %v670
    %v1103 = vadd.s32 %v722, %v671
    %v1104 = vadd.s32 %v722, %v672
    %v1105 = vadd.s32 %v722, %v673
    %v1106 = vadd.s32 %v722, %v674
    %v1107 = vadd.s32 %v722, %v675
    %v1108 = vadd.s32 %v722, %v676
    %v1109 = vadd.s32 %v723, %v669
    %v1110 = vadd.s32 %v723, %v670
    %v1111 = vadd.s32 %v723, %v671
    %v1112 = vadd.s32 %v723, %v672
    %v1113 = vadd.s32 %v723, %v673
    %v1114 = vadd.s32 %v723, %v674
    %v1115 = vadd.s32 %v723, %v675
    %v1116 = vadd.s32 %v723, %v676
    %v1117 = vadd.s32 %v724, %v669
    %v1118 = vadd.s32 %v724, %v670
    %v1119 = vadd.s32 %v724, %v671
    %v1120 = vadd.s32 %v724, %v672
    %v1121 = vadd.s32 %v724, %v673
    %v1122 = vadd.s32 %v724, %v674
    %v1123 = vadd.s32 %v724, %v675
    %v1124 = vadd.s32 %v724, %v676
    %v1125 = vadd.s32 %v725, %v669
    %v1126 = vadd.s32 %v725, %v670
    %v1127 = vadd.s32 %v725, %v671
    %v1128 = vadd.s32 %v725, %v672
    %v1129 = vadd.s32 %v725, %v673
    %v1130 = vadd.s32 %v725, %v674
    %v1131 = vadd.s32 %v725, %v675
    %v1132 = vadd.s32 %v725, %v676
    %v1133 = vadd.s32 %v726, %v669
    %v1134 = vadd.s32 %v726, %v670
    %v1135 = vadd.s32 %v726, %v671
    %v1136 = vadd.s32 %v726, %v672
    %v1137 = vadd.s32 %v726, %v673
    %v1138 = vadd.s32 %v726, %v674
    %v1139 = vadd.s32 %v726, %v675
    %v1140 = vadd.s32 %v726, %v676
    %v1141 = vadd.s32 %v727, %v669
    %v1142 = vadd.s32 %v727, %v670
    %v1143 = vadd.s32 %v727, %v671
    %v1144 = vadd.s32 %v727, %v672
    %v1145 = vadd.s32 %v727, %v673
    %v1146 = vadd.s32 %v727, %v674
    %v1147 = vadd.s32 %v727, %v675
    %v1148 = vadd.s32 %v727, %v676
    %v1149 = vadd.s32 %v728, %v669
    %v1150 = vadd.s32 %v728, %v670
    %v1151 = vadd.s32 %v728, %v671
    %v1152 = vadd.s32 %v728, %v672
    %v1153 = vadd.s32 %v728, %v673
    %v1154 = vadd.s32 %v728, %v674
    %v1155 = vadd.s32 %v728, %v675
    %v1156 = vadd.s32 %v728, %v676
    %v1157 = vadd.s32 %v729, %v669
    %v1158 = vadd.s32 %v729, %v670
    %v1159 = vadd.s32 %v729, %v671
    %v1160 = vadd.s32 %v729, %v672
    %v1161 = vadd.s32 %v729, %v673
    %v1162 = vadd.s32 %v729, %v674
    %v1163 = vadd.s32 %v729, %v675
    %v1164 = vadd.s32 %v729, %v676
    %v1165 = vadd.s32 %v730, %v669
    %v1166 = vadd.s32 %v730, %v670
    %v1167 = vadd.s32 %v730, %v671
    %v1168 = vadd.s32 %v730, %v672
    %v1169 = vadd.s32 %v730, %v673
    %v1170 = vadd.s32 %v730, %v674
    %v1171 = vadd.s32 %v730, %v675
    %v1172 = vadd.s32 %v730, %v676
    %v1173 = vadd.s32 %v731, %v669
    %v1174 = vadd.s32 %v731, %v670
    %v1175 = vadd.s32 %v731, %v671
    %v1176 = vadd.s32 %v731, %v672
    %v1177 = vadd.s32 %v731, %v673
    %v1178 = vadd.s32 %v731, %v674
    %v1179 = vadd.s32 %v731, %v675
    %v1180 = vadd.s32 %v731, %v676
    %v1181 = vadd.s32 %v732, %v669
    %v1182 = vadd.s32 %v732, %v670
    %v1183 = vadd.s32 %v732, %v671
    %v1184 = vadd.s32 %v732, %v672
    %v1185 = vadd.s32 %v732, %v673
    %v1186 = vadd.s32 %v732, %v674
    %v1187 = vadd.s32 %v732, %v675
    %v1188 = vadd.s32 %v732, %v676
    %v1189 = vadd.s32 %v733, %v669
    %v1190 = vadd.s32 %v733, %v670
    %v1191 = vadd.s32 %v733, %v671
    %v1192 = vadd.s32 %v733, %v672
    %v1193 = vadd.s32 %v733, %v673
    %v1194 = vadd.s32 %v733, %v674
    %v1195 = vadd.s32 %v733, %v675
    %v1196 = vadd.s32 %v733, %v676
    %v1197 = vadd.s32 %v734, %v669
    %v1198 = vadd.s32 %v734, %v670
    %v1199 = vadd.s32 %v734, %v671
    %v1200 = vadd.s32 %v734, %v672
    %v1201 = vadd.s32 %v734, %v673
    %v1202 = vadd.s32 %v734, %v674
    %v1203 = vadd.s32 %v734, %v675
    %v1204 = vadd.s32 %v734, %v676
    %v1205 = vadd.s32 %v735, %v669
    %v1206 = vadd.s32 %v735, %v670
    %v1207 = vadd.s32 %v735, %v671
    %v1208 = vadd.s32 %v735, %v672
    %v1209 = vadd.s32 %v735, %v673
    %v1210 = vadd.s32 %v735, %v674
    %v1211 = vadd.s32 %v735, %v675
    %v1212 = vadd.s32 %v735, %v676
    %v1213 = vadd.s32 %v736, %v669
    %v1214 = vadd.s32 %v736, %v670
    %v1215 = vadd.s32 %v736, %v671
    %v1216 = vadd.s32 %v736, %v672
    %v1217 = vadd.s32 %v736, %v673
    %v1218 = vadd.s32 %v736, %v674
    %v1219 = vadd.s32 %v736, %v675
    %v1220 = vadd.s32 %v736, %v676
    %v1221 = vadd.s32 %v737, %v669
    %v1222 = vadd.s32 %v737, %v670
    %v1223 = vadd.s32 %v737, %v671
    %v1224 = vadd.s32 %v737, %v672
    %v1225 = vadd.s32 %v737, %v673
    %v1226 = vadd.s32 %v737, %v674
    %v1227 = vadd.s32 %v737, %v675
    %v1228 = vadd.s32 %v737, %v676
    %v1229 = vadd.s32 %v738, %v669
    %v1230 = vadd.s32 %v738, %v670
    %v1231 = vadd.s32 %v738, %v671
    %v1232 = vadd.s32 %v738, %v672
    %v1233 = vadd.s32 %v738, %v673
    %v1234 = vadd.s32 %v738, %v674
    %v1235 = vadd.s32 %v738, %v675
    %v1236 = vadd.s32 %v738, %v676
    %v1237 = vadd.s32 %v739, %v669
    %v1238 = vadd.s32 %v739, %v670
    %v1239 = vadd.s32 %v739, %v671
    %v1240 = vadd.s32 %v739, %v672
    %v1241 = vadd.s32 %v739, %v673
    %v1242 = vadd.s32 %v739, %v674
    %v1243 = vadd.s32 %v739, %v675
    %v1244 = vadd.s32 %v739, %v676
    %v1245 = vadd.s32 %v740, %v669
    %v1246 = vadd.s32 %v740, %v670
    %v1247 = vadd.s32 %v740, %v671
    %v1248 = vadd.s32 %v740, %v672
    %v1249 = vadd.s32 %v740, %v673
    %v1250 = vadd.s32 %v740, %v674
    %v1251 = vadd.s32 %v740, %v675
    %v1252 = vadd.s32 %v740, %v676
    %s1253 = sld [smem:[#allocation3]]
    %s1254 = smul.u32 %s1253, 2654435769
    %v1255 = vstv %s1254
    %v1256 = vadd.s32 %v741, %v1255
    %v1257 = vadd.s32 %v742, %v1255
    %v1258 = vadd.s32 %v743, %v1255
    %v1259 = vadd.s32 %v744, %v1255
    %v1260 = vadd.s32 %v745, %v1255
    %v1261 = vadd.s32 %v746, %v1255
    %v1262 = vadd.s32 %v747, %v1255
    %v1263 = vadd.s32 %v748, %v1255
    %v1264 = vadd.s32 %v749, %v1255
    %v1265 = vadd.s32 %v750, %v1255
    %v1266 = vadd.s32 %v751, %v1255
    %v1267 = vadd.s32 %v752, %v1255
    %v1268 = vadd.s32 %v753, %v1255
    %v1269 = vadd.s32 %v754, %v1255
    %v1270 = vadd.s32 %v755, %v1255
    %v1271 = vadd.s32 %v756, %v1255
    %v1272 = vadd.s32 %v757, %v1255
    %v1273 = vadd.s32 %v758, %v1255
    %v1274 = vadd.s32 %v759, %v1255
    %v1275 = vadd.s32 %v760, %v1255
    %v1276 = vadd.s32 %v761, %v1255
    %v1277 = vadd.s32 %v762, %v1255
    %v1278 = vadd.s32 %v763, %v1255
    %v1279 = vadd.s32 %v764, %v1255
    %v1280 = vadd.s32 %v765, %v1255
    %v1281 = vadd.s32 %v766, %v1255
    %v1282 = vadd.s32 %v767, %v1255
    %v1283 = vadd.s32 %v768, %v1255
    %v1284 = vadd.s32 %v769, %v1255
    %v1285 = vadd.s32 %v770, %v1255
    %v1286 = vadd.s32 %v771, %v1255
    %v1287 = vadd.s32 %v772, %v1255
    %v1288 = vadd.s32 %v773, %v1255
    %v1289 = vadd.s32 %v774, %v1255
    %v1290 = vadd.s32 %v775, %v1255
    %v1291 = vadd.s32 %v776, %v1255
    %v1292 = vadd.s32 %v777, %v1255
    %v1293 = vadd.s32 %v778, %v1255
    %v1294 = vadd.s32 %v779, %v1255
    %v1295 = vadd.s32 %v780, %v1255
    %v1296 = vadd.s32 %v781, %v1255
    %v1297 = vadd.s32 %v782, %v1255
    %v1298 = vadd.s32 %v783, %v1255
    %v1299 = vadd.s32 %v784, %v1255
    %v1300 = vadd.s32 %v785, %v1255
    %v1301 = vadd.s32 %v786, %v1255
    %v1302 = vadd.s32 %v787, %v1255
    %v1303 = vadd.s32 %v788, %v1255
    %v1304 = vadd.s32 %v789, %v1255
    %v1305 = vadd.s32 %v790, %v1255
    %v1306 = vadd.s32 %v791, %v1255
    %v1307 = vadd.s32 %v792, %v1255
    %v1308 = vadd.s32 %v793, %v1255
    %v1309 = vadd.s32 %v794, %v1255
    %v1310 = vadd.s32 %v795, %v1255
    %v1311 = vadd.s32 %v796, %v1255
    %v1312 = vadd.s32 %v797, %v1255
    %v1313 = vadd.s32 %v798, %v1255
    %v1314 = vadd.s32 %v799, %v1255
    %v1315 = vadd.s32 %v800, %v1255
    %v1316 = vadd.s32 %v801, %v1255
    %v1317 = vadd.s32 %v802, %v1255
    %v1318 = vadd.s32 %v803, %v1255
    %v1319 = vadd.s32 %v804, %v1255
    %v1320 = vadd.s32 %v805, %v1255
    %v1321 = vadd.s32 %v806, %v1255
    %v1322 = vadd.s32 %v807, %v1255
    %v1323 = vadd.s32 %v808, %v1255
    %v1324 = vadd.s32 %v809, %v1255
    %v1325 = vadd.s32 %v810, %v1255
    %v1326 = vadd.s32 %v811, %v1255
    %v1327 = vadd.s32 %v812, %v1255
    %v1328 = vadd.s32 %v813, %v1255
    %v1329 = vadd.s32 %v814, %v1255
    %v1330 = vadd.s32 %v815, %v1255
    %v1331 = vadd.s32 %v816, %v1255
    %v1332 = vadd.s32 %v817, %v1255
    %v1333 = vadd.s32 %v818, %v1255
    %v1334 = vadd.s32 %v819, %v1255
    %v1335 = vadd.s32 %v820, %v1255
    %v1336 = vadd.s32 %v821, %v1255
    %v1337 = vadd.s32 %v822, %v1255
    %v1338 = vadd.s32 %v823, %v1255
    %v1339 = vadd.s32 %v824, %v1255
    %v1340 = vadd.s32 %v825, %v1255
    %v1341 = vadd.s32 %v826, %v1255
    %v1342 = vadd.s32 %v827, %v1255
    %v1343 = vadd.s32 %v828, %v1255
    %v1344 = vadd.s32 %v829, %v1255
    %v1345 = vadd.s32 %v830, %v1255
    %v1346 = vadd.s32 %v831, %v1255
    %v1347 = vadd.s32 %v832, %v1255
    %v1348 = vadd.s32 %v833, %v1255
    %v1349 = vadd.s32 %v834, %v1255
    %v1350 = vadd.s32 %v835, %v1255
    %v1351 = vadd.s32 %v836, %v1255
    %v1352 = vadd.s32 %v837, %v1255
    %v1353 = vadd.s32 %v838, %v1255
    %v1354 = vadd.s32 %v839, %v1255
    %v1355 = vadd.s32 %v840, %v1255
    %v1356 = vadd.s32 %v841, %v1255
    %v1357 = vadd.s32 %v842, %v1255
    %v1358 = vadd.s32 %v843, %v1255
    %v1359 = vadd.s32 %v844, %v1255
    %v1360 = vadd.s32 %v845, %v1255
    %v1361 = vadd.s32 %v846, %v1255
    %v1362 = vadd.s32 %v847, %v1255
    %v1363 = vadd.s32 %v848, %v1255
    %v1364 = vadd.s32 %v849, %v1255
    %v1365 = vadd.s32 %v850, %v1255
    %v1366 = vadd.s32 %v851, %v1255
    %v1367 = vadd.s32 %v852, %v1255
    %v1368 = vadd.s32 %v853, %v1255
    %v1369 = vadd.s32 %v854, %v1255
    %v1370 = vadd.s32 %v855, %v1255
    %v1371 = vadd.s32 %v856, %v1255
    %v1372 = vadd.s32 %v857, %v1255
    %v1373 = vadd.s32 %v858, %v1255
    %v1374 = vadd.s32 %v859, %v1255
    %v1375 = vadd.s32 %v860, %v1255
    %v1376 = vadd.s32 %v861, %v1255
    %v1377 = vadd.s32 %v862, %v1255
    %v1378 = vadd.s32 %v863, %v1255
    %v1379 = vadd.s32 %v864, %v1255
    %v1380 = vadd.s32 %v865, %v1255
    %v1381 = vadd.s32 %v866, %v1255
    %v1382 = vadd.s32 %v867, %v1255
    %v1383 = vadd.s32 %v868, %v1255
    %v1384 = vadd.s32 %v869, %v1255
    %v1385 = vadd.s32 %v870, %v1255
    %v1386 = vadd.s32 %v871, %v1255
    %v1387 = vadd.s32 %v872, %v1255
    %v1388 = vadd.s32 %v873, %v1255
    %v1389 = vadd.s32 %v874, %v1255
    %v1390 = vadd.s32 %v875, %v1255
    %v1391 = vadd.s32 %v876, %v1255
    %v1392 = vadd.s32 %v877, %v1255
    %v1393 = vadd.s32 %v878, %v1255
    %v1394 = vadd.s32 %v879, %v1255
    %v1395 = vadd.s32 %v880, %v1255
    %v1396 = vadd.s32 %v881, %v1255
    %v1397 = vadd.s32 %v882, %v1255
    %v1398 = vadd.s32 %v883, %v1255
    %v1399 = vadd.s32 %v884, %v1255
    %v1400 = vadd.s32 %v885, %v1255
    %v1401 = vadd.s32 %v886, %v1255
    %v1402 = vadd.s32 %v887, %v1255
    %v1403 = vadd.s32 %v888, %v1255
    %v1404 = vadd.s32 %v889, %v1255
    %v1405 = vadd.s32 %v890, %v1255
    %v1406 = vadd.s32 %v891, %v1255
    %v1407 = vadd.s32 %v892, %v1255
    %v1408 = vadd.s32 %v893, %v1255
    %v1409 = vadd.s32 %v894, %v1255
    %v1410 = vadd.s32 %v895, %v1255
    %v1411 = vadd.s32 %v896, %v1255
    %v1412 = vadd.s32 %v897, %v1255
    %v1413 = vadd.s32 %v898, %v1255
    %v1414 = vadd.s32 %v899, %v1255
    %v1415 = vadd.s32 %v900, %v1255
    %v1416 = vadd.s32 %v901, %v1255
    %v1417 = vadd.s32 %v902, %v1255
    %v1418 = vadd.s32 %v903, %v1255
    %v1419 = vadd.s32 %v904, %v1255
    %v1420 = vadd.s32 %v905, %v1255
    %v1421 = vadd.s32 %v906, %v1255
    %v1422 = vadd.s32 %v907, %v1255
    %v1423 = vadd.s32 %v908, %v1255
    %v1424 = vadd.s32 %v909, %v1255
    %v1425 = vadd.s32 %v910, %v1255
    %v1426 = vadd.s32 %v911, %v1255
    %v1427 = vadd.s32 %v912, %v1255
    %v1428 = vadd.s32 %v913, %v1255
    %v1429 = vadd.s32 %v914, %v1255
    %v1430 = vadd.s32 %v915, %v1255
    %v1431 = vadd.s32 %v916, %v1255
    %v1432 = vadd.s32 %v917, %v1255
    %v1433 = vadd.s32 %v918, %v1255
    %v1434 = vadd.s32 %v919, %v1255
    %v1435 = vadd.s32 %v920, %v1255
    %v1436 = vadd.s32 %v921, %v1255
    %v1437 = vadd.s32 %v922, %v1255
    %v1438 = vadd.s32 %v923, %v1255
    %v1439 = vadd.s32 %v924, %v1255
    %v1440 = vadd.s32 %v925, %v1255
    %v1441 = vadd.s32 %v926, %v1255
    %v1442 = vadd.s32 %v927, %v1255
    %v1443 = vadd.s32 %v928, %v1255
    %v1444 = vadd.s32 %v929, %v1255
    %v1445 = vadd.s32 %v930, %v1255
    %v1446 = vadd.s32 %v931, %v1255
    %v1447 = vadd.s32 %v932, %v1255
    %v1448 = vadd.s32 %v933, %v1255
    %v1449 = vadd.s32 %v934, %v1255
    %v1450 = vadd.s32 %v935, %v1255
    %v1451 = vadd.s32 %v936, %v1255
    %v1452 = vadd.s32 %v937, %v1255
    %v1453 = vadd.s32 %v938, %v1255
    %v1454 = vadd.s32 %v939, %v1255
    %v1455 = vadd.s32 %v940, %v1255
    %v1456 = vadd.s32 %v941, %v1255
    %v1457 = vadd.s32 %v942, %v1255
    %v1458 = vadd.s32 %v943, %v1255
    %v1459 = vadd.s32 %v944, %v1255
    %v1460 = vadd.s32 %v945, %v1255
    %v1461 = vadd.s32 %v946, %v1255
    %v1462 = vadd.s32 %v947, %v1255
    %v1463 = vadd.s32 %v948, %v1255
    %v1464 = vadd.s32 %v949, %v1255
    %v1465 = vadd.s32 %v950, %v1255
    %v1466 = vadd.s32 %v951, %v1255
    %v1467 = vadd.s32 %v952, %v1255
    %v1468 = vadd.s32 %v953, %v1255
    %v1469 = vadd.s32 %v954, %v1255
    %v1470 = vadd.s32 %v955, %v1255
    %v1471 = vadd.s32 %v956, %v1255
    %v1472 = vadd.s32 %v957, %v1255
    %v1473 = vadd.s32 %v958, %v1255
    %v1474 = vadd.s32 %v959, %v1255
    %v1475 = vadd.s32 %v960, %v1255
    %v1476 = vadd.s32 %v961, %v1255
    %v1477 = vadd.s32 %v962, %v1255
    %v1478 = vadd.s32 %v963, %v1255
    %v1479 = vadd.s32 %v964, %v1255
    %v1480 = vadd.s32 %v965, %v1255
    %v1481 = vadd.s32 %v966, %v1255
    %v1482 = vadd.s32 %v967, %v1255
    %v1483 = vadd.s32 %v968, %v1255
    %v1484 = vadd.s32 %v969, %v1255
    %v1485 = vadd.s32 %v970, %v1255
    %v1486 = vadd.s32 %v971, %v1255
    %v1487 = vadd.s32 %v972, %v1255
    %v1488 = vadd.s32 %v973, %v1255
    %v1489 = vadd.s32 %v974, %v1255
    %v1490 = vadd.s32 %v975, %v1255
    %v1491 = vadd.s32 %v976, %v1255
    %v1492 = vadd.s32 %v977, %v1255
    %v1493 = vadd.s32 %v978, %v1255
    %v1494 = vadd.s32 %v979, %v1255
    %v1495 = vadd.s32 %v980, %v1255
    %v1496 = vadd.s32 %v981, %v1255
    %v1497 = vadd.s32 %v982, %v1255
    %v1498 = vadd.s32 %v983, %v1255
    %v1499 = vadd.s32 %v984, %v1255
    %v1500 = vadd.s32 %v985, %v1255
    %v1501 = vadd.s32 %v986, %v1255
    %v1502 = vadd.s32 %v987, %v1255
    %v1503 = vadd.s32 %v988, %v1255
    %v1504 = vadd.s32 %v989, %v1255
    %v1505 = vadd.s32 %v990, %v1255
    %v1506 = vadd.s32 %v991, %v1255
    %v1507 = vadd.s32 %v992, %v1255
    %v1508 = vadd.s32 %v993, %v1255
    %v1509 = vadd.s32 %v994, %v1255
    %v1510 = vadd.s32 %v995, %v1255
    %v1511 = vadd.s32 %v996, %v1255
    %v1512 = vadd.s32 %v997, %v1255
    %v1513 = vadd.s32 %v998, %v1255
    %v1514 = vadd.s32 %v999, %v1255
    %v1515 = vadd.s32 %v1000, %v1255
    %v1516 = vadd.s32 %v1001, %v1255
    %v1517 = vadd.s32 %v1002, %v1255
    %v1518 = vadd.s32 %v1003, %v1255
    %v1519 = vadd.s32 %v1004, %v1255
    %v1520 = vadd.s32 %v1005, %v1255
    %v1521 = vadd.s32 %v1006, %v1255
    %v1522 = vadd.s32 %v1007, %v1255
    %v1523 = vadd.s32 %v1008, %v1255
    %v1524 = vadd.s32 %v1009, %v1255
    %v1525 = vadd.s32 %v1010, %v1255
    %v1526 = vadd.s32 %v1011, %v1255
    %v1527 = vadd.s32 %v1012, %v1255
    %v1528 = vadd.s32 %v1013, %v1255
    %v1529 = vadd.s32 %v1014, %v1255
    %v1530 = vadd.s32 %v1015, %v1255
    %v1531 = vadd.s32 %v1016, %v1255
    %v1532 = vadd.s32 %v1017, %v1255
    %v1533 = vadd.s32 %v1018, %v1255
    %v1534 = vadd.s32 %v1019, %v1255
    %v1535 = vadd.s32 %v1020, %v1255
    %v1536 = vadd.s32 %v1021, %v1255
    %v1537 = vadd.s32 %v1022, %v1255
    %v1538 = vadd.s32 %v1023, %v1255
    %v1539 = vadd.s32 %v1024, %v1255
    %v1540 = vadd.s32 %v1025, %v1255
    %v1541 = vadd.s32 %v1026, %v1255
    %v1542 = vadd.s32 %v1027, %v1255
    %v1543 = vadd.s32 %v1028, %v1255
    %v1544 = vadd.s32 %v1029, %v1255
    %v1545 = vadd.s32 %v1030, %v1255
    %v1546 = vadd.s32 %v1031, %v1255
    %v1547 = vadd.s32 %v1032, %v1255
    %v1548 = vadd.s32 %v1033, %v1255
    %v1549 = vadd.s32 %v1034, %v1255
    %v1550 = vadd.s32 %v1035, %v1255
    %v1551 = vadd.s32 %v1036, %v1255
    %v1552 = vadd.s32 %v1037, %v1255
    %v1553 = vadd.s32 %v1038, %v1255
    %v1554 = vadd.s32 %v1039, %v1255
    %v1555 = vadd.s32 %v1040, %v1255
    %v1556 = vadd.s32 %v1041, %v1255
    %v1557 = vadd.s32 %v1042, %v1255
    %v1558 = vadd.s32 %v1043, %v1255
    %v1559 = vadd.s32 %v1044, %v1255
    %v1560 = vadd.s32 %v1045, %v1255
    %v1561 = vadd.s32 %v1046, %v1255
    %v1562 = vadd.s32 %v1047, %v1255
    %v1563 = vadd.s32 %v1048, %v1255
    %v1564 = vadd.s32 %v1049, %v1255
    %v1565 = vadd.s32 %v1050, %v1255
    %v1566 = vadd.s32 %v1051, %v1255
    %v1567 = vadd.s32 %v1052, %v1255
    %v1568 = vadd.s32 %v1053, %v1255
    %v1569 = vadd.s32 %v1054, %v1255
    %v1570 = vadd.s32 %v1055, %v1255
    %v1571 = vadd.s32 %v1056, %v1255
    %v1572 = vadd.s32 %v1057, %v1255
    %v1573 = vadd.s32 %v1058, %v1255
    %v1574 = vadd.s32 %v1059, %v1255
    %v1575 = vadd.s32 %v1060, %v1255
    %v1576 = vadd.s32 %v1061, %v1255
    %v1577 = vadd.s32 %v1062, %v1255
    %v1578 = vadd.s32 %v1063, %v1255
    %v1579 = vadd.s32 %v1064, %v1255
    %v1580 = vadd.s32 %v1065, %v1255
    %v1581 = vadd.s32 %v1066, %v1255
    %v1582 = vadd.s32 %v1067, %v1255
    %v1583 = vadd.s32 %v1068, %v1255
    %v1584 = vadd.s32 %v1069, %v1255
    %v1585 = vadd.s32 %v1070, %v1255
    %v1586 = vadd.s32 %v1071, %v1255
    %v1587 = vadd.s32 %v1072, %v1255
    %v1588 = vadd.s32 %v1073, %v1255
    %v1589 = vadd.s32 %v1074, %v1255
    %v1590 = vadd.s32 %v1075, %v1255
    %v1591 = vadd.s32 %v1076, %v1255
    %v1592 = vadd.s32 %v1077, %v1255
    %v1593 = vadd.s32 %v1078, %v1255
    %v1594 = vadd.s32 %v1079, %v1255
    %v1595 = vadd.s32 %v1080, %v1255
    %v1596 = vadd.s32 %v1081, %v1255
    %v1597 = vadd.s32 %v1082, %v1255
    %v1598 = vadd.s32 %v1083, %v1255
    %v1599 = vadd.s32 %v1084, %v1255
    %v1600 = vadd.s32 %v1085, %v1255
    %v1601 = vadd.s32 %v1086, %v1255
    %v1602 = vadd.s32 %v1087, %v1255
    %v1603 = vadd.s32 %v1088, %v1255
    %v1604 = vadd.s32 %v1089, %v1255
    %v1605 = vadd.s32 %v1090, %v1255
    %v1606 = vadd.s32 %v1091, %v1255
    %v1607 = vadd.s32 %v1092, %v1255
    %v1608 = vadd.s32 %v1093, %v1255
    %v1609 = vadd.s32 %v1094, %v1255
    %v1610 = vadd.s32 %v1095, %v1255
    %v1611 = vadd.s32 %v1096, %v1255
    %v1612 = vadd.s32 %v1097, %v1255
    %v1613 = vadd.s32 %v1098, %v1255
    %v1614 = vadd.s32 %v1099, %v1255
    %v1615 = vadd.s32 %v1100, %v1255
    %v1616 = vadd.s32 %v1101, %v1255
    %v1617 = vadd.s32 %v1102, %v1255
    %v1618 = vadd.s32 %v1103, %v1255
    %v1619 = vadd.s32 %v1104, %v1255
    %v1620 = vadd.s32 %v1105, %v1255
    %v1621 = vadd.s32 %v1106, %v1255
    %v1622 = vadd.s32 %v1107, %v1255
    %v1623 = vadd.s32 %v1108, %v1255
    %v1624 = vadd.s32 %v1109, %v1255
    %v1625 = vadd.s32 %v1110, %v1255
    %v1626 = vadd.s32 %v1111, %v1255
    %v1627 = vadd.s32 %v1112, %v1255
    %v1628 = vadd.s32 %v1113, %v1255
    %v1629 = vadd.s32 %v1114, %v1255
    %v1630 = vadd.s32 %v1115, %v1255
    %v1631 = vadd.s32 %v1116, %v1255
    %v1632 = vadd.s32 %v1117, %v1255
    %v1633 = vadd.s32 %v1118, %v1255
    %v1634 = vadd.s32 %v1119, %v1255
    %v1635 = vadd.s32 %v1120, %v1255
    %v1636 = vadd.s32 %v1121, %v1255
    %v1637 = vadd.s32 %v1122, %v1255
    %v1638 = vadd.s32 %v1123, %v1255
    %v1639 = vadd.s32 %v1124, %v1255
    %v1640 = vadd.s32 %v1125, %v1255
    %v1641 = vadd.s32 %v1126, %v1255
    %v1642 = vadd.s32 %v1127, %v1255
    %v1643 = vadd.s32 %v1128, %v1255
    %v1644 = vadd.s32 %v1129, %v1255
    %v1645 = vadd.s32 %v1130, %v1255
    %v1646 = vadd.s32 %v1131, %v1255
    %v1647 = vadd.s32 %v1132, %v1255
    %v1648 = vadd.s32 %v1133, %v1255
    %v1649 = vadd.s32 %v1134, %v1255
    %v1650 = vadd.s32 %v1135, %v1255
    %v1651 = vadd.s32 %v1136, %v1255
    %v1652 = vadd.s32 %v1137, %v1255
    %v1653 = vadd.s32 %v1138, %v1255
    %v1654 = vadd.s32 %v1139, %v1255
    %v1655 = vadd.s32 %v1140, %v1255
    %v1656 = vadd.s32 %v1141, %v1255
    %v1657 = vadd.s32 %v1142, %v1255
    %v1658 = vadd.s32 %v1143, %v1255
    %v1659 = vadd.s32 %v1144, %v1255
    %v1660 = vadd.s32 %v1145, %v1255
    %v1661 = vadd.s32 %v1146, %v1255
    %v1662 = vadd.s32 %v1147, %v1255
    %v1663 = vadd.s32 %v1148, %v1255
    %v1664 = vadd.s32 %v1149, %v1255
    %v1665 = vadd.s32 %v1150, %v1255
    %v1666 = vadd.s32 %v1151, %v1255
    %v1667 = vadd.s32 %v1152, %v1255
    %v1668 = vadd.s32 %v1153, %v1255
    %v1669 = vadd.s32 %v1154, %v1255
    %v1670 = vadd.s32 %v1155, %v1255
    %v1671 = vadd.s32 %v1156, %v1255
    %v1672 = vadd.s32 %v1157, %v1255
    %v1673 = vadd.s32 %v1158, %v1255
    %v1674 = vadd.s32 %v1159, %v1255
    %v1675 = vadd.s32 %v1160, %v1255
    %v1676 = vadd.s32 %v1161, %v1255
    %v1677 = vadd.s32 %v1162, %v1255
    %v1678 = vadd.s32 %v1163, %v1255
    %v1679 = vadd.s32 %v1164, %v1255
    %v1680 = vadd.s32 %v1165, %v1255
    %v1681 = vadd.s32 %v1166, %v1255
    %v1682 = vadd.s32 %v1167, %v1255
    %v1683 = vadd.s32 %v1168, %v1255
    %v1684 = vadd.s32 %v1169, %v1255
    %v1685 = vadd.s32 %v1170, %v1255
    %v1686 = vadd.s32 %v1171, %v1255
    %v1687 = vadd.s32 %v1172, %v1255
    %v1688 = vadd.s32 %v1173, %v1255
    %v1689 = vadd.s32 %v1174, %v1255
    %v1690 = vadd.s32 %v1175, %v1255
    %v1691 = vadd.s32 %v1176, %v1255
    %v1692 = vadd.s32 %v1177, %v1255
    %v1693 = vadd.s32 %v1178, %v1255
    %v1694 = vadd.s32 %v1179, %v1255
    %v1695 = vadd.s32 %v1180, %v1255
    %v1696 = vadd.s32 %v1181, %v1255
    %v1697 = vadd.s32 %v1182, %v1255
    %v1698 = vadd.s32 %v1183, %v1255
    %v1699 = vadd.s32 %v1184, %v1255
    %v1700 = vadd.s32 %v1185, %v1255
    %v1701 = vadd.s32 %v1186, %v1255
    %v1702 = vadd.s32 %v1187, %v1255
    %v1703 = vadd.s32 %v1188, %v1255
    %v1704 = vadd.s32 %v1189, %v1255
    %v1705 = vadd.s32 %v1190, %v1255
    %v1706 = vadd.s32 %v1191, %v1255
    %v1707 = vadd.s32 %v1192, %v1255
    %v1708 = vadd.s32 %v1193, %v1255
    %v1709 = vadd.s32 %v1194, %v1255
    %v1710 = vadd.s32 %v1195, %v1255
    %v1711 = vadd.s32 %v1196, %v1255
    %v1712 = vadd.s32 %v1197, %v1255
    %v1713 = vadd.s32 %v1198, %v1255
    %v1714 = vadd.s32 %v1199, %v1255
    %v1715 = vadd.s32 %v1200, %v1255
    %v1716 = vadd.s32 %v1201, %v1255
    %v1717 = vadd.s32 %v1202, %v1255
    %v1718 = vadd.s32 %v1203, %v1255
    %v1719 = vadd.s32 %v1204, %v1255
    %v1720 = vadd.s32 %v1205, %v1255
    %v1721 = vadd.s32 %v1206, %v1255
    %v1722 = vadd.s32 %v1207, %v1255
    %v1723 = vadd.s32 %v1208, %v1255
    %v1724 = vadd.s32 %v1209, %v1255
    %v1725 = vadd.s32 %v1210, %v1255
    %v1726 = vadd.s32 %v1211, %v1255
    %v1727 = vadd.s32 %v1212, %v1255
    %v1728 = vadd.s32 %v1213, %v1255
    %v1729 = vadd.s32 %v1214, %v1255
    %v1730 = vadd.s32 %v1215, %v1255
    %v1731 = vadd.s32 %v1216, %v1255
    %v1732 = vadd.s32 %v1217, %v1255
    %v1733 = vadd.s32 %v1218, %v1255
    %v1734 = vadd.s32 %v1219, %v1255
    %v1735 = vadd.s32 %v1220, %v1255
    %v1736 = vadd.s32 %v1221, %v1255
    %v1737 = vadd.s32 %v1222, %v1255
    %v1738 = vadd.s32 %v1223, %v1255
    %v1739 = vadd.s32 %v1224, %v1255
    %v1740 = vadd.s32 %v1225, %v1255
    %v1741 = vadd.s32 %v1226, %v1255
    %v1742 = vadd.s32 %v1227, %v1255
    %v1743 = vadd.s32 %v1228, %v1255
    %v1744 = vadd.s32 %v1229, %v1255
    %v1745 = vadd.s32 %v1230, %v1255
    %v1746 = vadd.s32 %v1231, %v1255
    %v1747 = vadd.s32 %v1232, %v1255
    %v1748 = vadd.s32 %v1233, %v1255
    %v1749 = vadd.s32 %v1234, %v1255
    %v1750 = vadd.s32 %v1235, %v1255
    %v1751 = vadd.s32 %v1236, %v1255
    %v1752 = vadd.s32 %v1237, %v1255
    %v1753 = vadd.s32 %v1238, %v1255
    %v1754 = vadd.s32 %v1239, %v1255
    %v1755 = vadd.s32 %v1240, %v1255
    %v1756 = vadd.s32 %v1241, %v1255
    %v1757 = vadd.s32 %v1242, %v1255
    %v1758 = vadd.s32 %v1243, %v1255
    %v1759 = vadd.s32 %v1244, %v1255
    %v1760 = vadd.s32 %v1245, %v1255
    %v1761 = vadd.s32 %v1246, %v1255
    %v1762 = vadd.s32 %v1247, %v1255
    %v1763 = vadd.s32 %v1248, %v1255
    %v1764 = vadd.s32 %v1249, %v1255
    %v1765 = vadd.s32 %v1250, %v1255
    %v1766 = vadd.s32 %v1251, %v1255
    %v1767 = vadd.s32 %v1252, %v1255
    %v1768 = vshrl.u32 %v1256, 16
    %v1769 = vshrl.u32 %v1257, 16
    %v1770 = vshrl.u32 %v1258, 16
    %v1771 = vshrl.u32 %v1259, 16
    %v1772 = vshrl.u32 %v1260, 16
    %v1773 = vshrl.u32 %v1261, 16
    %v1774 = vshrl.u32 %v1262, 16
    %v1775 = vshrl.u32 %v1263, 16
    %v1776 = vshrl.u32 %v1264, 16
    %v1777 = vshrl.u32 %v1265, 16
    %v1778 = vshrl.u32 %v1266, 16
    %v1779 = vshrl.u32 %v1267, 16
    %v1780 = vshrl.u32 %v1268, 16
    %v1781 = vshrl.u32 %v1269, 16
    %v1782 = vshrl.u32 %v1270, 16
    %v1783 = vshrl.u32 %v1271, 16
    %v1784 = vshrl.u32 %v1272, 16
    %v1785 = vshrl.u32 %v1273, 16
    %v1786 = vshrl.u32 %v1274, 16
    %v1787 = vshrl.u32 %v1275, 16
    %v1788 = vshrl.u32 %v1276, 16
    %v1789 = vshrl.u32 %v1277, 16
    %v1790 = vshrl.u32 %v1278, 16
    %v1791 = vshrl.u32 %v1279, 16
    %v1792 = vshrl.u32 %v1280, 16
    %v1793 = vshrl.u32 %v1281, 16
    %v1794 = vshrl.u32 %v1282, 16
    %v1795 = vshrl.u32 %v1283, 16
    %v1796 = vshrl.u32 %v1284, 16
    %v1797 = vshrl.u32 %v1285, 16
    %v1798 = vshrl.u32 %v1286, 16
    %v1799 = vshrl.u32 %v1287, 16
    %v1800 = vshrl.u32 %v1288, 16
    %v1801 = vshrl.u32 %v1289, 16
    %v1802 = vshrl.u32 %v1290, 16
    %v1803 = vshrl.u32 %v1291, 16
    %v1804 = vshrl.u32 %v1292, 16
    %v1805 = vshrl.u32 %v1293, 16
    %v1806 = vshrl.u32 %v1294, 16
    %v1807 = vshrl.u32 %v1295, 16
    %v1808 = vshrl.u32 %v1296, 16
    %v1809 = vshrl.u32 %v1297, 16
    %v1810 = vshrl.u32 %v1298, 16
    %v1811 = vshrl.u32 %v1299, 16
    %v1812 = vshrl.u32 %v1300, 16
    %v1813 = vshrl.u32 %v1301, 16
    %v1814 = vshrl.u32 %v1302, 16
    %v1815 = vshrl.u32 %v1303, 16
    %v1816 = vshrl.u32 %v1304, 16
    %v1817 = vshrl.u32 %v1305, 16
    %v1818 = vshrl.u32 %v1306, 16
    %v1819 = vshrl.u32 %v1307, 16
    %v1820 = vshrl.u32 %v1308, 16
    %v1821 = vshrl.u32 %v1309, 16
    %v1822 = vshrl.u32 %v1310, 16
    %v1823 = vshrl.u32 %v1311, 16
    %v1824 = vshrl.u32 %v1312, 16
    %v1825 = vshrl.u32 %v1313, 16
    %v1826 = vshrl.u32 %v1314, 16
    %v1827 = vshrl.u32 %v1315, 16
    %v1828 = vshrl.u32 %v1316, 16
    %v1829 = vshrl.u32 %v1317, 16
    %v1830 = vshrl.u32 %v1318, 16
    %v1831 = vshrl.u32 %v1319, 16
    %v1832 = vshrl.u32 %v1320, 16
    %v1833 = vshrl.u32 %v1321, 16
    %v1834 = vshrl.u32 %v1322, 16
    %v1835 = vshrl.u32 %v1323, 16
    %v1836 = vshrl.u32 %v1324, 16
    %v1837 = vshrl.u32 %v1325, 16
    %v1838 = vshrl.u32 %v1326, 16
    %v1839 = vshrl.u32 %v1327, 16
    %v1840 = vshrl.u32 %v1328, 16
    %v1841 = vshrl.u32 %v1329, 16
    %v1842 = vshrl.u32 %v1330, 16
    %v1843 = vshrl.u32 %v1331, 16
    %v1844 = vshrl.u32 %v1332, 16
    %v1845 = vshrl.u32 %v1333, 16
    %v1846 = vshrl.u32 %v1334, 16
    %v1847 = vshrl.u32 %v1335, 16
    %v1848 = vshrl.u32 %v1336, 16
    %v1849 = vshrl.u32 %v1337, 16
    %v1850 = vshrl.u32 %v1338, 16
    %v1851 = vshrl.u32 %v1339, 16
    %v1852 = vshrl.u32 %v1340, 16
    %v1853 = vshrl.u32 %v1341, 16
    %v1854 = vshrl.u32 %v1342, 16
    %v1855 = vshrl.u32 %v1343, 16
    %v1856 = vshrl.u32 %v1344, 16
    %v1857 = vshrl.u32 %v1345, 16
    %v1858 = vshrl.u32 %v1346, 16
    %v1859 = vshrl.u32 %v1347, 16
    %v1860 = vshrl.u32 %v1348, 16
    %v1861 = vshrl.u32 %v1349, 16
    %v1862 = vshrl.u32 %v1350, 16
    %v1863 = vshrl.u32 %v1351, 16
    %v1864 = vshrl.u32 %v1352, 16
    %v1865 = vshrl.u32 %v1353, 16
    %v1866 = vshrl.u32 %v1354, 16
    %v1867 = vshrl.u32 %v1355, 16
    %v1868 = vshrl.u32 %v1356, 16
    %v1869 = vshrl.u32 %v1357, 16
    %v1870 = vshrl.u32 %v1358, 16
    %v1871 = vshrl.u32 %v1359, 16
    %v1872 = vshrl.u32 %v1360, 16
    %v1873 = vshrl.u32 %v1361, 16
    %v1874 = vshrl.u32 %v1362, 16
    %v1875 = vshrl.u32 %v1363, 16
    %v1876 = vshrl.u32 %v1364, 16
    %v1877 = vshrl.u32 %v1365, 16
    %v1878 = vshrl.u32 %v1366, 16
    %v1879 = vshrl.u32 %v1367, 16
    %v1880 = vshrl.u32 %v1368, 16
    %v1881 = vshrl.u32 %v1369, 16
    %v1882 = vshrl.u32 %v1370, 16
    %v1883 = vshrl.u32 %v1371, 16
    %v1884 = vshrl.u32 %v1372, 16
    %v1885 = vshrl.u32 %v1373, 16
    %v1886 = vshrl.u32 %v1374, 16
    %v1887 = vshrl.u32 %v1375, 16
    %v1888 = vshrl.u32 %v1376, 16
    %v1889 = vshrl.u32 %v1377, 16
    %v1890 = vshrl.u32 %v1378, 16
    %v1891 = vshrl.u32 %v1379, 16
    %v1892 = vshrl.u32 %v1380, 16
    %v1893 = vshrl.u32 %v1381, 16
    %v1894 = vshrl.u32 %v1382, 16
    %v1895 = vshrl.u32 %v1383, 16
    %v1896 = vshrl.u32 %v1384, 16
    %v1897 = vshrl.u32 %v1385, 16
    %v1898 = vshrl.u32 %v1386, 16
    %v1899 = vshrl.u32 %v1387, 16
    %v1900 = vshrl.u32 %v1388, 16
    %v1901 = vshrl.u32 %v1389, 16
    %v1902 = vshrl.u32 %v1390, 16
    %v1903 = vshrl.u32 %v1391, 16
    %v1904 = vshrl.u32 %v1392, 16
    %v1905 = vshrl.u32 %v1393, 16
    %v1906 = vshrl.u32 %v1394, 16
    %v1907 = vshrl.u32 %v1395, 16
    %v1908 = vshrl.u32 %v1396, 16
    %v1909 = vshrl.u32 %v1397, 16
    %v1910 = vshrl.u32 %v1398, 16
    %v1911 = vshrl.u32 %v1399, 16
    %v1912 = vshrl.u32 %v1400, 16
    %v1913 = vshrl.u32 %v1401, 16
    %v1914 = vshrl.u32 %v1402, 16
    %v1915 = vshrl.u32 %v1403, 16
    %v1916 = vshrl.u32 %v1404, 16
    %v1917 = vshrl.u32 %v1405, 16
    %v1918 = vshrl.u32 %v1406, 16
    %v1919 = vshrl.u32 %v1407, 16
    %v1920 = vshrl.u32 %v1408, 16
    %v1921 = vshrl.u32 %v1409, 16
    %v1922 = vshrl.u32 %v1410, 16
    %v1923 = vshrl.u32 %v1411, 16
    %v1924 = vshrl.u32 %v1412, 16
    %v1925 = vshrl.u32 %v1413, 16
    %v1926 = vshrl.u32 %v1414, 16
    %v1927 = vshrl.u32 %v1415, 16
    %v1928 = vshrl.u32 %v1416, 16
    %v1929 = vshrl.u32 %v1417, 16
    %v1930 = vshrl.u32 %v1418, 16
    %v1931 = vshrl.u32 %v1419, 16
    %v1932 = vshrl.u32 %v1420, 16
    %v1933 = vshrl.u32 %v1421, 16
    %v1934 = vshrl.u32 %v1422, 16
    %v1935 = vshrl.u32 %v1423, 16
    %v1936 = vshrl.u32 %v1424, 16
    %v1937 = vshrl.u32 %v1425, 16
    %v1938 = vshrl.u32 %v1426, 16
    %v1939 = vshrl.u32 %v1427, 16
    %v1940 = vshrl.u32 %v1428, 16
    %v1941 = vshrl.u32 %v1429, 16
    %v1942 = vshrl.u32 %v1430, 16
    %v1943 = vshrl.u32 %v1431, 16
    %v1944 = vshrl.u32 %v1432, 16
    %v1945 = vshrl.u32 %v1433, 16
    %v1946 = vshrl.u32 %v1434, 16
    %v1947 = vshrl.u32 %v1435, 16
    %v1948 = vshrl.u32 %v1436, 16
    %v1949 = vshrl.u32 %v1437, 16
    %v1950 = vshrl.u32 %v1438, 16
    %v1951 = vshrl.u32 %v1439, 16
    %v1952 = vshrl.u32 %v1440, 16
    %v1953 = vshrl.u32 %v1441, 16
    %v1954 = vshrl.u32 %v1442, 16
    %v1955 = vshrl.u32 %v1443, 16
    %v1956 = vshrl.u32 %v1444, 16
    %v1957 = vshrl.u32 %v1445, 16
    %v1958 = vshrl.u32 %v1446, 16
    %v1959 = vshrl.u32 %v1447, 16
    %v1960 = vshrl.u32 %v1448, 16
    %v1961 = vshrl.u32 %v1449, 16
    %v1962 = vshrl.u32 %v1450, 16
    %v1963 = vshrl.u32 %v1451, 16
    %v1964 = vshrl.u32 %v1452, 16
    %v1965 = vshrl.u32 %v1453, 16
    %v1966 = vshrl.u32 %v1454, 16
    %v1967 = vshrl.u32 %v1455, 16
    %v1968 = vshrl.u32 %v1456, 16
    %v1969 = vshrl.u32 %v1457, 16
    %v1970 = vshrl.u32 %v1458, 16
    %v1971 = vshrl.u32 %v1459, 16
    %v1972 = vshrl.u32 %v1460, 16
    %v1973 = vshrl.u32 %v1461, 16
    %v1974 = vshrl.u32 %v1462, 16
    %v1975 = vshrl.u32 %v1463, 16
    %v1976 = vshrl.u32 %v1464, 16
    %v1977 = vshrl.u32 %v1465, 16
    %v1978 = vshrl.u32 %v1466, 16
    %v1979 = vshrl.u32 %v1467, 16
    %v1980 = vshrl.u32 %v1468, 16
    %v1981 = vshrl.u32 %v1469, 16
    %v1982 = vshrl.u32 %v1470, 16
    %v1983 = vshrl.u32 %v1471, 16
    %v1984 = vshrl.u32 %v1472, 16
    %v1985 = vshrl.u32 %v1473, 16
    %v1986 = vshrl.u32 %v1474, 16
    %v1987 = vshrl.u32 %v1475, 16
    %v1988 = vshrl.u32 %v1476, 16
    %v1989 = vshrl.u32 %v1477, 16
    %v1990 = vshrl.u32 %v1478, 16
    %v1991 = vshrl.u32 %v1479, 16
    %v1992 = vshrl.u32 %v1480, 16
    %v1993 = vshrl.u32 %v1481, 16
    %v1994 = vshrl.u32 %v1482, 16
    %v1995 = vshrl.u32 %v1483, 16
    %v1996 = vshrl.u32 %v1484, 16
    %v1997 = vshrl.u32 %v1485, 16
    %v1998 = vshrl.u32 %v1486, 16
    %v1999 = vshrl.u32 %v1487, 16
    %v2000 = vshrl.u32 %v1488, 16
    %v2001 = vshrl.u32 %v1489, 16
    %v2002 = vshrl.u32 %v1490, 16
    %v2003 = vshrl.u32 %v1491, 16
    %v2004 = vshrl.u32 %v1492, 16
    %v2005 = vshrl.u32 %v1493, 16
    %v2006 = vshrl.u32 %v1494, 16
    %v2007 = vshrl.u32 %v1495, 16
    %v2008 = vshrl.u32 %v1496, 16
    %v2009 = vshrl.u32 %v1497, 16
    %v2010 = vshrl.u32 %v1498, 16
    %v2011 = vshrl.u32 %v1499, 16
    %v2012 = vshrl.u32 %v1500, 16
    %v2013 = vshrl.u32 %v1501, 16
    %v2014 = vshrl.u32 %v1502, 16
    %v2015 = vshrl.u32 %v1503, 16
    %v2016 = vshrl.u32 %v1504, 16
    %v2017 = vshrl.u32 %v1505, 16
    %v2018 = vshrl.u32 %v1506, 16
    %v2019 = vshrl.u32 %v1507, 16
    %v2020 = vshrl.u32 %v1508, 16
    %v2021 = vshrl.u32 %v1509, 16
    %v2022 = vshrl.u32 %v1510, 16
    %v2023 = vshrl.u32 %v1511, 16
    %v2024 = vshrl.u32 %v1512, 16
    %v2025 = vshrl.u32 %v1513, 16
    %v2026 = vshrl.u32 %v1514, 16
    %v2027 = vshrl.u32 %v1515, 16
    %v2028 = vshrl.u32 %v1516, 16
    %v2029 = vshrl.u32 %v1517, 16
    %v2030 = vshrl.u32 %v1518, 16
    %v2031 = vshrl.u32 %v1519, 16
    %v2032 = vshrl.u32 %v1520, 16
    %v2033 = vshrl.u32 %v1521, 16
    %v2034 = vshrl.u32 %v1522, 16
    %v2035 = vshrl.u32 %v1523, 16
    %v2036 = vshrl.u32 %v1524, 16
    %v2037 = vshrl.u32 %v1525, 16
    %v2038 = vshrl.u32 %v1526, 16
    %v2039 = vshrl.u32 %v1527, 16
    %v2040 = vshrl.u32 %v1528, 16
    %v2041 = vshrl.u32 %v1529, 16
    %v2042 = vshrl.u32 %v1530, 16
    %v2043 = vshrl.u32 %v1531, 16
    %v2044 = vshrl.u32 %v1532, 16
    %v2045 = vshrl.u32 %v1533, 16
    %v2046 = vshrl.u32 %v1534, 16
    %v2047 = vshrl.u32 %v1535, 16
    %v2048 = vshrl.u32 %v1536, 16
    %v2049 = vshrl.u32 %v1537, 16
    %v2050 = vshrl.u32 %v1538, 16
    %v2051 = vshrl.u32 %v1539, 16
    %v2052 = vshrl.u32 %v1540, 16
    %v2053 = vshrl.u32 %v1541, 16
    %v2054 = vshrl.u32 %v1542, 16
    %v2055 = vshrl.u32 %v1543, 16
    %v2056 = vshrl.u32 %v1544, 16
    %v2057 = vshrl.u32 %v1545, 16
    %v2058 = vshrl.u32 %v1546, 16
    %v2059 = vshrl.u32 %v1547, 16
    %v2060 = vshrl.u32 %v1548, 16
    %v2061 = vshrl.u32 %v1549, 16
    %v2062 = vshrl.u32 %v1550, 16
    %v2063 = vshrl.u32 %v1551, 16
    %v2064 = vshrl.u32 %v1552, 16
    %v2065 = vshrl.u32 %v1553, 16
    %v2066 = vshrl.u32 %v1554, 16
    %v2067 = vshrl.u32 %v1555, 16
    %v2068 = vshrl.u32 %v1556, 16
    %v2069 = vshrl.u32 %v1557, 16
    %v2070 = vshrl.u32 %v1558, 16
    %v2071 = vshrl.u32 %v1559, 16
    %v2072 = vshrl.u32 %v1560, 16
    %v2073 = vshrl.u32 %v1561, 16
    %v2074 = vshrl.u32 %v1562, 16
    %v2075 = vshrl.u32 %v1563, 16
    %v2076 = vshrl.u32 %v1564, 16
    %v2077 = vshrl.u32 %v1565, 16
    %v2078 = vshrl.u32 %v1566, 16
    %v2079 = vshrl.u32 %v1567, 16
    %v2080 = vshrl.u32 %v1568, 16
    %v2081 = vshrl.u32 %v1569, 16
    %v2082 = vshrl.u32 %v1570, 16
    %v2083 = vshrl.u32 %v1571, 16
    %v2084 = vshrl.u32 %v1572, 16
    %v2085 = vshrl.u32 %v1573, 16
    %v2086 = vshrl.u32 %v1574, 16
    %v2087 = vshrl.u32 %v1575, 16
    %v2088 = vshrl.u32 %v1576, 16
    %v2089 = vshrl.u32 %v1577, 16
    %v2090 = vshrl.u32 %v1578, 16
    %v2091 = vshrl.u32 %v1579, 16
    %v2092 = vshrl.u32 %v1580, 16
    %v2093 = vshrl.u32 %v1581, 16
    %v2094 = vshrl.u32 %v1582, 16
    %v2095 = vshrl.u32 %v1583, 16
    %v2096 = vshrl.u32 %v1584, 16
    %v2097 = vshrl.u32 %v1585, 16
    %v2098 = vshrl.u32 %v1586, 16
    %v2099 = vshrl.u32 %v1587, 16
    %v2100 = vshrl.u32 %v1588, 16
    %v2101 = vshrl.u32 %v1589, 16
    %v2102 = vshrl.u32 %v1590, 16
    %v2103 = vshrl.u32 %v1591, 16
    %v2104 = vshrl.u32 %v1592, 16
    %v2105 = vshrl.u32 %v1593, 16
    %v2106 = vshrl.u32 %v1594, 16
    %v2107 = vshrl.u32 %v1595, 16
    %v2108 = vshrl.u32 %v1596, 16
    %v2109 = vshrl.u32 %v1597, 16
    %v2110 = vshrl.u32 %v1598, 16
    %v2111 = vshrl.u32 %v1599, 16
    %v2112 = vshrl.u32 %v1600, 16
    %v2113 = vshrl.u32 %v1601, 16
    %v2114 = vshrl.u32 %v1602, 16
    %v2115 = vshrl.u32 %v1603, 16
    %v2116 = vshrl.u32 %v1604, 16
    %v2117 = vshrl.u32 %v1605, 16
    %v2118 = vshrl.u32 %v1606, 16
    %v2119 = vshrl.u32 %v1607, 16
    %v2120 = vshrl.u32 %v1608, 16
    %v2121 = vshrl.u32 %v1609, 16
    %v2122 = vshrl.u32 %v1610, 16
    %v2123 = vshrl.u32 %v1611, 16
    %v2124 = vshrl.u32 %v1612, 16
    %v2125 = vshrl.u32 %v1613, 16
    %v2126 = vshrl.u32 %v1614, 16
    %v2127 = vshrl.u32 %v1615, 16
    %v2128 = vshrl.u32 %v1616, 16
    %v2129 = vshrl.u32 %v1617, 16
    %v2130 = vshrl.u32 %v1618, 16
    %v2131 = vshrl.u32 %v1619, 16
    %v2132 = vshrl.u32 %v1620, 16
    %v2133 = vshrl.u32 %v1621, 16
    %v2134 = vshrl.u32 %v1622, 16
    %v2135 = vshrl.u32 %v1623, 16
    %v2136 = vshrl.u32 %v1624, 16
    %v2137 = vshrl.u32 %v1625, 16
    %v2138 = vshrl.u32 %v1626, 16
    %v2139 = vshrl.u32 %v1627, 16
    %v2140 = vshrl.u32 %v1628, 16
    %v2141 = vshrl.u32 %v1629, 16
    %v2142 = vshrl.u32 %v1630, 16
    %v2143 = vshrl.u32 %v1631, 16
    %v2144 = vshrl.u32 %v1632, 16
    %v2145 = vshrl.u32 %v1633, 16
    %v2146 = vshrl.u32 %v1634, 16
    %v2147 = vshrl.u32 %v1635, 16
    %v2148 = vshrl.u32 %v1636, 16
    %v2149 = vshrl.u32 %v1637, 16
    %v2150 = vshrl.u32 %v1638, 16
    %v2151 = vshrl.u32 %v1639, 16
    %v2152 = vshrl.u32 %v1640, 16
    %v2153 = vshrl.u32 %v1641, 16
    %v2154 = vshrl.u32 %v1642, 16
    %v2155 = vshrl.u32 %v1643, 16
    %v2156 = vshrl.u32 %v1644, 16
    %v2157 = vshrl.u32 %v1645, 16
    %v2158 = vshrl.u32 %v1646, 16
    %v2159 = vshrl.u32 %v1647, 16
    %v2160 = vshrl.u32 %v1648, 16
    %v2161 = vshrl.u32 %v1649, 16
    %v2162 = vshrl.u32 %v1650, 16
    %v2163 = vshrl.u32 %v1651, 16
    %v2164 = vshrl.u32 %v1652, 16
    %v2165 = vshrl.u32 %v1653, 16
    %v2166 = vshrl.u32 %v1654, 16
    %v2167 = vshrl.u32 %v1655, 16
    %v2168 = vshrl.u32 %v1656, 16
    %v2169 = vshrl.u32 %v1657, 16
    %v2170 = vshrl.u32 %v1658, 16
    %v2171 = vshrl.u32 %v1659, 16
    %v2172 = vshrl.u32 %v1660, 16
    %v2173 = vshrl.u32 %v1661, 16
    %v2174 = vshrl.u32 %v1662, 16
    %v2175 = vshrl.u32 %v1663, 16
    %v2176 = vshrl.u32 %v1664, 16
    %v2177 = vshrl.u32 %v1665, 16
    %v2178 = vshrl.u32 %v1666, 16
    %v2179 = vshrl.u32 %v1667, 16
    %v2180 = vshrl.u32 %v1668, 16
    %v2181 = vshrl.u32 %v1669, 16
    %v2182 = vshrl.u32 %v1670, 16
    %v2183 = vshrl.u32 %v1671, 16
    %v2184 = vshrl.u32 %v1672, 16
    %v2185 = vshrl.u32 %v1673, 16
    %v2186 = vshrl.u32 %v1674, 16
    %v2187 = vshrl.u32 %v1675, 16
    %v2188 = vshrl.u32 %v1676, 16
    %v2189 = vshrl.u32 %v1677, 16
    %v2190 = vshrl.u32 %v1678, 16
    %v2191 = vshrl.u32 %v1679, 16
    %v2192 = vshrl.u32 %v1680, 16
    %v2193 = vshrl.u32 %v1681, 16
    %v2194 = vshrl.u32 %v1682, 16
    %v2195 = vshrl.u32 %v1683, 16
    %v2196 = vshrl.u32 %v1684, 16
    %v2197 = vshrl.u32 %v1685, 16
    %v2198 = vshrl.u32 %v1686, 16
    %v2199 = vshrl.u32 %v1687, 16
    %v2200 = vshrl.u32 %v1688, 16
    %v2201 = vshrl.u32 %v1689, 16
    %v2202 = vshrl.u32 %v1690, 16
    %v2203 = vshrl.u32 %v1691, 16
    %v2204 = vshrl.u32 %v1692, 16
    %v2205 = vshrl.u32 %v1693, 16
    %v2206 = vshrl.u32 %v1694, 16
    %v2207 = vshrl.u32 %v1695, 16
    %v2208 = vshrl.u32 %v1696, 16
    %v2209 = vshrl.u32 %v1697, 16
    %v2210 = vshrl.u32 %v1698, 16
    %v2211 = vshrl.u32 %v1699, 16
    %v2212 = vshrl.u32 %v1700, 16
    %v2213 = vshrl.u32 %v1701, 16
    %v2214 = vshrl.u32 %v1702, 16
    %v2215 = vshrl.u32 %v1703, 16
    %v2216 = vshrl.u32 %v1704, 16
    %v2217 = vshrl.u32 %v1705, 16
    %v2218 = vshrl.u32 %v1706, 16
    %v2219 = vshrl.u32 %v1707, 16
    %v2220 = vshrl.u32 %v1708, 16
    %v2221 = vshrl.u32 %v1709, 16
    %v2222 = vshrl.u32 %v1710, 16
    %v2223 = vshrl.u32 %v1711, 16
    %v2224 = vshrl.u32 %v1712, 16
    %v2225 = vshrl.u32 %v1713, 16
    %v2226 = vshrl.u32 %v1714, 16
    %v2227 = vshrl.u32 %v1715, 16
    %v2228 = vshrl.u32 %v1716, 16
    %v2229 = vshrl.u32 %v1717, 16
    %v2230 = vshrl.u32 %v1718, 16
    %v2231 = vshrl.u32 %v1719, 16
    %v2232 = vshrl.u32 %v1720, 16
    %v2233 = vshrl.u32 %v1721, 16
    %v2234 = vshrl.u32 %v1722, 16
    %v2235 = vshrl.u32 %v1723, 16
    %v2236 = vshrl.u32 %v1724, 16
    %v2237 = vshrl.u32 %v1725, 16
    %v2238 = vshrl.u32 %v1726, 16
    %v2239 = vshrl.u32 %v1727, 16
    %v2240 = vshrl.u32 %v1728, 16
    %v2241 = vshrl.u32 %v1729, 16
    %v2242 = vshrl.u32 %v1730, 16
    %v2243 = vshrl.u32 %v1731, 16
    %v2244 = vshrl.u32 %v1732, 16
    %v2245 = vshrl.u32 %v1733, 16
    %v2246 = vshrl.u32 %v1734, 16
    %v2247 = vshrl.u32 %v1735, 16
    %v2248 = vshrl.u32 %v1736, 16
    %v2249 = vshrl.u32 %v1737, 16
    %v2250 = vshrl.u32 %v1738, 16
    %v2251 = vshrl.u32 %v1739, 16
    %v2252 = vshrl.u32 %v1740, 16
    %v2253 = vshrl.u32 %v1741, 16
    %v2254 = vshrl.u32 %v1742, 16
    %v2255 = vshrl.u32 %v1743, 16
    %v2256 = vshrl.u32 %v1744, 16
    %v2257 = vshrl.u32 %v1745, 16
    %v2258 = vshrl.u32 %v1746, 16
    %v2259 = vshrl.u32 %v1747, 16
    %v2260 = vshrl.u32 %v1748, 16
    %v2261 = vshrl.u32 %v1749, 16
    %v2262 = vshrl.u32 %v1750, 16
    %v2263 = vshrl.u32 %v1751, 16
    %v2264 = vshrl.u32 %v1752, 16
    %v2265 = vshrl.u32 %v1753, 16
    %v2266 = vshrl.u32 %v1754, 16
    %v2267 = vshrl.u32 %v1755, 16
    %v2268 = vshrl.u32 %v1756, 16
    %v2269 = vshrl.u32 %v1757, 16
    %v2270 = vshrl.u32 %v1758, 16
    %v2271 = vshrl.u32 %v1759, 16
    %v2272 = vshrl.u32 %v1760, 16
    %v2273 = vshrl.u32 %v1761, 16
    %v2274 = vshrl.u32 %v1762, 16
    %v2275 = vshrl.u32 %v1763, 16
    %v2276 = vshrl.u32 %v1764, 16
    %v2277 = vshrl.u32 %v1765, 16
    %v2278 = vshrl.u32 %v1766, 16
    %v2279 = vshrl.u32 %v1767, 16
    %v2280 = vxor.u32 %v1256, %v1768
    %v2281 = vxor.u32 %v1257, %v1769
    %v2282 = vxor.u32 %v1258, %v1770
    %v2283 = vxor.u32 %v1259, %v1771
    %v2284 = vxor.u32 %v1260, %v1772
    %v2285 = vxor.u32 %v1261, %v1773
    %v2286 = vxor.u32 %v1262, %v1774
    %v2287 = vxor.u32 %v1263, %v1775
    %v2288 = vxor.u32 %v1264, %v1776
    %v2289 = vxor.u32 %v1265, %v1777
    %v2290 = vxor.u32 %v1266, %v1778
    %v2291 = vxor.u32 %v1267, %v1779
    %v2292 = vxor.u32 %v1268, %v1780
    %v2293 = vxor.u32 %v1269, %v1781
    %v2294 = vxor.u32 %v1270, %v1782
    %v2295 = vxor.u32 %v1271, %v1783
    %v2296 = vxor.u32 %v1272, %v1784
    %v2297 = vxor.u32 %v1273, %v1785
    %v2298 = vxor.u32 %v1274, %v1786
    %v2299 = vxor.u32 %v1275, %v1787
    %v2300 = vxor.u32 %v1276, %v1788
    %v2301 = vxor.u32 %v1277, %v1789
    %v2302 = vxor.u32 %v1278, %v1790
    %v2303 = vxor.u32 %v1279, %v1791
    %v2304 = vxor.u32 %v1280, %v1792
    %v2305 = vxor.u32 %v1281, %v1793
    %v2306 = vxor.u32 %v1282, %v1794
    %v2307 = vxor.u32 %v1283, %v1795
    %v2308 = vxor.u32 %v1284, %v1796
    %v2309 = vxor.u32 %v1285, %v1797
    %v2310 = vxor.u32 %v1286, %v1798
    %v2311 = vxor.u32 %v1287, %v1799
    %v2312 = vxor.u32 %v1288, %v1800
    %v2313 = vxor.u32 %v1289, %v1801
    %v2314 = vxor.u32 %v1290, %v1802
    %v2315 = vxor.u32 %v1291, %v1803
    %v2316 = vxor.u32 %v1292, %v1804
    %v2317 = vxor.u32 %v1293, %v1805
    %v2318 = vxor.u32 %v1294, %v1806
    %v2319 = vxor.u32 %v1295, %v1807
    %v2320 = vxor.u32 %v1296, %v1808
    %v2321 = vxor.u32 %v1297, %v1809
    %v2322 = vxor.u32 %v1298, %v1810
    %v2323 = vxor.u32 %v1299, %v1811
    %v2324 = vxor.u32 %v1300, %v1812
    %v2325 = vxor.u32 %v1301, %v1813
    %v2326 = vxor.u32 %v1302, %v1814
    %v2327 = vxor.u32 %v1303, %v1815
    %v2328 = vxor.u32 %v1304, %v1816
    %v2329 = vxor.u32 %v1305, %v1817
    %v2330 = vxor.u32 %v1306, %v1818
    %v2331 = vxor.u32 %v1307, %v1819
    %v2332 = vxor.u32 %v1308, %v1820
    %v2333 = vxor.u32 %v1309, %v1821
    %v2334 = vxor.u32 %v1310, %v1822
    %v2335 = vxor.u32 %v1311, %v1823
    %v2336 = vxor.u32 %v1312, %v1824
    %v2337 = vxor.u32 %v1313, %v1825
    %v2338 = vxor.u32 %v1314, %v1826
    %v2339 = vxor.u32 %v1315, %v1827
    %v2340 = vxor.u32 %v1316, %v1828
    %v2341 = vxor.u32 %v1317, %v1829
    %v2342 = vxor.u32 %v1318, %v1830
    %v2343 = vxor.u32 %v1319, %v1831
    %v2344 = vxor.u32 %v1320, %v1832
    %v2345 = vxor.u32 %v1321, %v1833
    %v2346 = vxor.u32 %v1322, %v1834
    %v2347 = vxor.u32 %v1323, %v1835
    %v2348 = vxor.u32 %v1324, %v1836
    %v2349 = vxor.u32 %v1325, %v1837
    %v2350 = vxor.u32 %v1326, %v1838
    %v2351 = vxor.u32 %v1327, %v1839
    %v2352 = vxor.u32 %v1328, %v1840
    %v2353 = vxor.u32 %v1329, %v1841
    %v2354 = vxor.u32 %v1330, %v1842
    %v2355 = vxor.u32 %v1331, %v1843
    %v2356 = vxor.u32 %v1332, %v1844
    %v2357 = vxor.u32 %v1333, %v1845
    %v2358 = vxor.u32 %v1334, %v1846
    %v2359 = vxor.u32 %v1335, %v1847
    %v2360 = vxor.u32 %v1336, %v1848
    %v2361 = vxor.u32 %v1337, %v1849
    %v2362 = vxor.u32 %v1338, %v1850
    %v2363 = vxor.u32 %v1339, %v1851
    %v2364 = vxor.u32 %v1340, %v1852
    %v2365 = vxor.u32 %v1341, %v1853
    %v2366 = vxor.u32 %v1342, %v1854
    %v2367 = vxor.u32 %v1343, %v1855
    %v2368 = vxor.u32 %v1344, %v1856
    %v2369 = vxor.u32 %v1345, %v1857
    %v2370 = vxor.u32 %v1346, %v1858
    %v2371 = vxor.u32 %v1347, %v1859
    %v2372 = vxor.u32 %v1348, %v1860
    %v2373 = vxor.u32 %v1349, %v1861
    %v2374 = vxor.u32 %v1350, %v1862
    %v2375 = vxor.u32 %v1351, %v1863
    %v2376 = vxor.u32 %v1352, %v1864
    %v2377 = vxor.u32 %v1353, %v1865
    %v2378 = vxor.u32 %v1354, %v1866
    %v2379 = vxor.u32 %v1355, %v1867
    %v2380 = vxor.u32 %v1356, %v1868
    %v2381 = vxor.u32 %v1357, %v1869
    %v2382 = vxor.u32 %v1358, %v1870
    %v2383 = vxor.u32 %v1359, %v1871
    %v2384 = vxor.u32 %v1360, %v1872
    %v2385 = vxor.u32 %v1361, %v1873
    %v2386 = vxor.u32 %v1362, %v1874
    %v2387 = vxor.u32 %v1363, %v1875
    %v2388 = vxor.u32 %v1364, %v1876
    %v2389 = vxor.u32 %v1365, %v1877
    %v2390 = vxor.u32 %v1366, %v1878
    %v2391 = vxor.u32 %v1367, %v1879
    %v2392 = vxor.u32 %v1368, %v1880
    %v2393 = vxor.u32 %v1369, %v1881
    %v2394 = vxor.u32 %v1370, %v1882
    %v2395 = vxor.u32 %v1371, %v1883
    %v2396 = vxor.u32 %v1372, %v1884
    %v2397 = vxor.u32 %v1373, %v1885
    %v2398 = vxor.u32 %v1374, %v1886
    %v2399 = vxor.u32 %v1375, %v1887
    %v2400 = vxor.u32 %v1376, %v1888
    %v2401 = vxor.u32 %v1377, %v1889
    %v2402 = vxor.u32 %v1378, %v1890
    %v2403 = vxor.u32 %v1379, %v1891
    %v2404 = vxor.u32 %v1380, %v1892
    %v2405 = vxor.u32 %v1381, %v1893
    %v2406 = vxor.u32 %v1382, %v1894
    %v2407 = vxor.u32 %v1383, %v1895
    %v2408 = vxor.u32 %v1384, %v1896
    %v2409 = vxor.u32 %v1385, %v1897
    %v2410 = vxor.u32 %v1386, %v1898
    %v2411 = vxor.u32 %v1387, %v1899
    %v2412 = vxor.u32 %v1388, %v1900
    %v2413 = vxor.u32 %v1389, %v1901
    %v2414 = vxor.u32 %v1390, %v1902
    %v2415 = vxor.u32 %v1391, %v1903
    %v2416 = vxor.u32 %v1392, %v1904
    %v2417 = vxor.u32 %v1393, %v1905
    %v2418 = vxor.u32 %v1394, %v1906
    %v2419 = vxor.u32 %v1395, %v1907
    %v2420 = vxor.u32 %v1396, %v1908
    %v2421 = vxor.u32 %v1397, %v1909
    %v2422 = vxor.u32 %v1398, %v1910
    %v2423 = vxor.u32 %v1399, %v1911
    %v2424 = vxor.u32 %v1400, %v1912
    %v2425 = vxor.u32 %v1401, %v1913
    %v2426 = vxor.u32 %v1402, %v1914
    %v2427 = vxor.u32 %v1403, %v1915
    %v2428 = vxor.u32 %v1404, %v1916
    %v2429 = vxor.u32 %v1405, %v1917
    %v2430 = vxor.u32 %v1406, %v1918
    %v2431 = vxor.u32 %v1407, %v1919
    %v2432 = vxor.u32 %v1408, %v1920
    %v2433 = vxor.u32 %v1409, %v1921
    %v2434 = vxor.u32 %v1410, %v1922
    %v2435 = vxor.u32 %v1411, %v1923
    %v2436 = vxor.u32 %v1412, %v1924
    %v2437 = vxor.u32 %v1413, %v1925
    %v2438 = vxor.u32 %v1414, %v1926
    %v2439 = vxor.u32 %v1415, %v1927
    %v2440 = vxor.u32 %v1416, %v1928
    %v2441 = vxor.u32 %v1417, %v1929
    %v2442 = vxor.u32 %v1418, %v1930
    %v2443 = vxor.u32 %v1419, %v1931
    %v2444 = vxor.u32 %v1420, %v1932
    %v2445 = vxor.u32 %v1421, %v1933
    %v2446 = vxor.u32 %v1422, %v1934
    %v2447 = vxor.u32 %v1423, %v1935
    %v2448 = vxor.u32 %v1424, %v1936
    %v2449 = vxor.u32 %v1425, %v1937
    %v2450 = vxor.u32 %v1426, %v1938
    %v2451 = vxor.u32 %v1427, %v1939
    %v2452 = vxor.u32 %v1428, %v1940
    %v2453 = vxor.u32 %v1429, %v1941
    %v2454 = vxor.u32 %v1430, %v1942
    %v2455 = vxor.u32 %v1431, %v1943
    %v2456 = vxor.u32 %v1432, %v1944
    %v2457 = vxor.u32 %v1433, %v1945
    %v2458 = vxor.u32 %v1434, %v1946
    %v2459 = vxor.u32 %v1435, %v1947
    %v2460 = vxor.u32 %v1436, %v1948
    %v2461 = vxor.u32 %v1437, %v1949
    %v2462 = vxor.u32 %v1438, %v1950
    %v2463 = vxor.u32 %v1439, %v1951
    %v2464 = vxor.u32 %v1440, %v1952
    %v2465 = vxor.u32 %v1441, %v1953
    %v2466 = vxor.u32 %v1442, %v1954
    %v2467 = vxor.u32 %v1443, %v1955
    %v2468 = vxor.u32 %v1444, %v1956
    %v2469 = vxor.u32 %v1445, %v1957
    %v2470 = vxor.u32 %v1446, %v1958
    %v2471 = vxor.u32 %v1447, %v1959
    %v2472 = vxor.u32 %v1448, %v1960
    %v2473 = vxor.u32 %v1449, %v1961
    %v2474 = vxor.u32 %v1450, %v1962
    %v2475 = vxor.u32 %v1451, %v1963
    %v2476 = vxor.u32 %v1452, %v1964
    %v2477 = vxor.u32 %v1453, %v1965
    %v2478 = vxor.u32 %v1454, %v1966
    %v2479 = vxor.u32 %v1455, %v1967
    %v2480 = vxor.u32 %v1456, %v1968
    %v2481 = vxor.u32 %v1457, %v1969
    %v2482 = vxor.u32 %v1458, %v1970
    %v2483 = vxor.u32 %v1459, %v1971
    %v2484 = vxor.u32 %v1460, %v1972
    %v2485 = vxor.u32 %v1461, %v1973
    %v2486 = vxor.u32 %v1462, %v1974
    %v2487 = vxor.u32 %v1463, %v1975
    %v2488 = vxor.u32 %v1464, %v1976
    %v2489 = vxor.u32 %v1465, %v1977
    %v2490 = vxor.u32 %v1466, %v1978
    %v2491 = vxor.u32 %v1467, %v1979
    %v2492 = vxor.u32 %v1468, %v1980
    %v2493 = vxor.u32 %v1469, %v1981
    %v2494 = vxor.u32 %v1470, %v1982
    %v2495 = vxor.u32 %v1471, %v1983
    %v2496 = vxor.u32 %v1472, %v1984
    %v2497 = vxor.u32 %v1473, %v1985
    %v2498 = vxor.u32 %v1474, %v1986
    %v2499 = vxor.u32 %v1475, %v1987
    %v2500 = vxor.u32 %v1476, %v1988
    %v2501 = vxor.u32 %v1477, %v1989
    %v2502 = vxor.u32 %v1478, %v1990
    %v2503 = vxor.u32 %v1479, %v1991
    %v2504 = vxor.u32 %v1480, %v1992
    %v2505 = vxor.u32 %v1481, %v1993
    %v2506 = vxor.u32 %v1482, %v1994
    %v2507 = vxor.u32 %v1483, %v1995
    %v2508 = vxor.u32 %v1484, %v1996
    %v2509 = vxor.u32 %v1485, %v1997
    %v2510 = vxor.u32 %v1486, %v1998
    %v2511 = vxor.u32 %v1487, %v1999
    %v2512 = vxor.u32 %v1488, %v2000
    %v2513 = vxor.u32 %v1489, %v2001
    %v2514 = vxor.u32 %v1490, %v2002
    %v2515 = vxor.u32 %v1491, %v2003
    %v2516 = vxor.u32 %v1492, %v2004
    %v2517 = vxor.u32 %v1493, %v2005
    %v2518 = vxor.u32 %v1494, %v2006
    %v2519 = vxor.u32 %v1495, %v2007
    %v2520 = vxor.u32 %v1496, %v2008
    %v2521 = vxor.u32 %v1497, %v2009
    %v2522 = vxor.u32 %v1498, %v2010
    %v2523 = vxor.u32 %v1499, %v2011
    %v2524 = vxor.u32 %v1500, %v2012
    %v2525 = vxor.u32 %v1501, %v2013
    %v2526 = vxor.u32 %v1502, %v2014
    %v2527 = vxor.u32 %v1503, %v2015
    %v2528 = vxor.u32 %v1504, %v2016
    %v2529 = vxor.u32 %v1505, %v2017
    %v2530 = vxor.u32 %v1506, %v2018
    %v2531 = vxor.u32 %v1507, %v2019
    %v2532 = vxor.u32 %v1508, %v2020
    %v2533 = vxor.u32 %v1509, %v2021
    %v2534 = vxor.u32 %v1510, %v2022
    %v2535 = vxor.u32 %v1511, %v2023
    %v2536 = vxor.u32 %v1512, %v2024
    %v2537 = vxor.u32 %v1513, %v2025
    %v2538 = vxor.u32 %v1514, %v2026
    %v2539 = vxor.u32 %v1515, %v2027
    %v2540 = vxor.u32 %v1516, %v2028
    %v2541 = vxor.u32 %v1517, %v2029
    %v2542 = vxor.u32 %v1518, %v2030
    %v2543 = vxor.u32 %v1519, %v2031
    %v2544 = vxor.u32 %v1520, %v2032
    %v2545 = vxor.u32 %v1521, %v2033
    %v2546 = vxor.u32 %v1522, %v2034
    %v2547 = vxor.u32 %v1523, %v2035
    %v2548 = vxor.u32 %v1524, %v2036
    %v2549 = vxor.u32 %v1525, %v2037
    %v2550 = vxor.u32 %v1526, %v2038
    %v2551 = vxor.u32 %v1527, %v2039
    %v2552 = vxor.u32 %v1528, %v2040
    %v2553 = vxor.u32 %v1529, %v2041
    %v2554 = vxor.u32 %v1530, %v2042
    %v2555 = vxor.u32 %v1531, %v2043
    %v2556 = vxor.u32 %v1532, %v2044
    %v2557 = vxor.u32 %v1533, %v2045
    %v2558 = vxor.u32 %v1534, %v2046
    %v2559 = vxor.u32 %v1535, %v2047
    %v2560 = vxor.u32 %v1536, %v2048
    %v2561 = vxor.u32 %v1537, %v2049
    %v2562 = vxor.u32 %v1538, %v2050
    %v2563 = vxor.u32 %v1539, %v2051
    %v2564 = vxor.u32 %v1540, %v2052
    %v2565 = vxor.u32 %v1541, %v2053
    %v2566 = vxor.u32 %v1542, %v2054
    %v2567 = vxor.u32 %v1543, %v2055
    %v2568 = vxor.u32 %v1544, %v2056
    %v2569 = vxor.u32 %v1545, %v2057
    %v2570 = vxor.u32 %v1546, %v2058
    %v2571 = vxor.u32 %v1547, %v2059
    %v2572 = vxor.u32 %v1548, %v2060
    %v2573 = vxor.u32 %v1549, %v2061
    %v2574 = vxor.u32 %v1550, %v2062
    %v2575 = vxor.u32 %v1551, %v2063
    %v2576 = vxor.u32 %v1552, %v2064
    %v2577 = vxor.u32 %v1553, %v2065
    %v2578 = vxor.u32 %v1554, %v2066
    %v2579 = vxor.u32 %v1555, %v2067
    %v2580 = vxor.u32 %v1556, %v2068
    %v2581 = vxor.u32 %v1557, %v2069
    %v2582 = vxor.u32 %v1558, %v2070
    %v2583 = vxor.u32 %v1559, %v2071
    %v2584 = vxor.u32 %v1560, %v2072
    %v2585 = vxor.u32 %v1561, %v2073
    %v2586 = vxor.u32 %v1562, %v2074
    %v2587 = vxor.u32 %v1563, %v2075
    %v2588 = vxor.u32 %v1564, %v2076
    %v2589 = vxor.u32 %v1565, %v2077
    %v2590 = vxor.u32 %v1566, %v2078
    %v2591 = vxor.u32 %v1567, %v2079
    %v2592 = vxor.u32 %v1568, %v2080
    %v2593 = vxor.u32 %v1569, %v2081
    %v2594 = vxor.u32 %v1570, %v2082
    %v2595 = vxor.u32 %v1571, %v2083
    %v2596 = vxor.u32 %v1572, %v2084
    %v2597 = vxor.u32 %v1573, %v2085
    %v2598 = vxor.u32 %v1574, %v2086
    %v2599 = vxor.u32 %v1575, %v2087
    %v2600 = vxor.u32 %v1576, %v2088
    %v2601 = vxor.u32 %v1577, %v2089
    %v2602 = vxor.u32 %v1578, %v2090
    %v2603 = vxor.u32 %v1579, %v2091
    %v2604 = vxor.u32 %v1580, %v2092
    %v2605 = vxor.u32 %v1581, %v2093
    %v2606 = vxor.u32 %v1582, %v2094
    %v2607 = vxor.u32 %v1583, %v2095
    %v2608 = vxor.u32 %v1584, %v2096
    %v2609 = vxor.u32 %v1585, %v2097
    %v2610 = vxor.u32 %v1586, %v2098
    %v2611 = vxor.u32 %v1587, %v2099
    %v2612 = vxor.u32 %v1588, %v2100
    %v2613 = vxor.u32 %v1589, %v2101
    %v2614 = vxor.u32 %v1590, %v2102
    %v2615 = vxor.u32 %v1591, %v2103
    %v2616 = vxor.u32 %v1592, %v2104
    %v2617 = vxor.u32 %v1593, %v2105
    %v2618 = vxor.u32 %v1594, %v2106
    %v2619 = vxor.u32 %v1595, %v2107
    %v2620 = vxor.u32 %v1596, %v2108
    %v2621 = vxor.u32 %v1597, %v2109
    %v2622 = vxor.u32 %v1598, %v2110
    %v2623 = vxor.u32 %v1599, %v2111
    %v2624 = vxor.u32 %v1600, %v2112
    %v2625 = vxor.u32 %v1601, %v2113
    %v2626 = vxor.u32 %v1602, %v2114
    %v2627 = vxor.u32 %v1603, %v2115
    %v2628 = vxor.u32 %v1604, %v2116
    %v2629 = vxor.u32 %v1605, %v2117
    %v2630 = vxor.u32 %v1606, %v2118
    %v2631 = vxor.u32 %v1607, %v2119
    %v2632 = vxor.u32 %v1608, %v2120
    %v2633 = vxor.u32 %v1609, %v2121
    %v2634 = vxor.u32 %v1610, %v2122
    %v2635 = vxor.u32 %v1611, %v2123
    %v2636 = vxor.u32 %v1612, %v2124
    %v2637 = vxor.u32 %v1613, %v2125
    %v2638 = vxor.u32 %v1614, %v2126
    %v2639 = vxor.u32 %v1615, %v2127
    %v2640 = vxor.u32 %v1616, %v2128
    %v2641 = vxor.u32 %v1617, %v2129
    %v2642 = vxor.u32 %v1618, %v2130
    %v2643 = vxor.u32 %v1619, %v2131
    %v2644 = vxor.u32 %v1620, %v2132
    %v2645 = vxor.u32 %v1621, %v2133
    %v2646 = vxor.u32 %v1622, %v2134
    %v2647 = vxor.u32 %v1623, %v2135
    %v2648 = vxor.u32 %v1624, %v2136
    %v2649 = vxor.u32 %v1625, %v2137
    %v2650 = vxor.u32 %v1626, %v2138
    %v2651 = vxor.u32 %v1627, %v2139
    %v2652 = vxor.u32 %v1628, %v2140
    %v2653 = vxor.u32 %v1629, %v2141
    %v2654 = vxor.u32 %v1630, %v2142
    %v2655 = vxor.u32 %v1631, %v2143
    %v2656 = vxor.u32 %v1632, %v2144
    %v2657 = vxor.u32 %v1633, %v2145
    %v2658 = vxor.u32 %v1634, %v2146
    %v2659 = vxor.u32 %v1635, %v2147
    %v2660 = vxor.u32 %v1636, %v2148
    %v2661 = vxor.u32 %v1637, %v2149
    %v2662 = vxor.u32 %v1638, %v2150
    %v2663 = vxor.u32 %v1639, %v2151
    %v2664 = vxor.u32 %v1640, %v2152
    %v2665 = vxor.u32 %v1641, %v2153
    %v2666 = vxor.u32 %v1642, %v2154
    %v2667 = vxor.u32 %v1643, %v2155
    %v2668 = vxor.u32 %v1644, %v2156
    %v2669 = vxor.u32 %v1645, %v2157
    %v2670 = vxor.u32 %v1646, %v2158
    %v2671 = vxor.u32 %v1647, %v2159
    %v2672 = vxor.u32 %v1648, %v2160
    %v2673 = vxor.u32 %v1649, %v2161
    %v2674 = vxor.u32 %v1650, %v2162
    %v2675 = vxor.u32 %v1651, %v2163
    %v2676 = vxor.u32 %v1652, %v2164
    %v2677 = vxor.u32 %v1653, %v2165
    %v2678 = vxor.u32 %v1654, %v2166
    %v2679 = vxor.u32 %v1655, %v2167
    %v2680 = vxor.u32 %v1656, %v2168
    %v2681 = vxor.u32 %v1657, %v2169
    %v2682 = vxor.u32 %v1658, %v2170
    %v2683 = vxor.u32 %v1659, %v2171
    %v2684 = vxor.u32 %v1660, %v2172
    %v2685 = vxor.u32 %v1661, %v2173
    %v2686 = vxor.u32 %v1662, %v2174
    %v2687 = vxor.u32 %v1663, %v2175
    %v2688 = vxor.u32 %v1664, %v2176
    %v2689 = vxor.u32 %v1665, %v2177
    %v2690 = vxor.u32 %v1666, %v2178
    %v2691 = vxor.u32 %v1667, %v2179
    %v2692 = vxor.u32 %v1668, %v2180
    %v2693 = vxor.u32 %v1669, %v2181
    %v2694 = vxor.u32 %v1670, %v2182
    %v2695 = vxor.u32 %v1671, %v2183
    %v2696 = vxor.u32 %v1672, %v2184
    %v2697 = vxor.u32 %v1673, %v2185
    %v2698 = vxor.u32 %v1674, %v2186
    %v2699 = vxor.u32 %v1675, %v2187
    %v2700 = vxor.u32 %v1676, %v2188
    %v2701 = vxor.u32 %v1677, %v2189
    %v2702 = vxor.u32 %v1678, %v2190
    %v2703 = vxor.u32 %v1679, %v2191
    %v2704 = vxor.u32 %v1680, %v2192
    %v2705 = vxor.u32 %v1681, %v2193
    %v2706 = vxor.u32 %v1682, %v2194
    %v2707 = vxor.u32 %v1683, %v2195
    %v2708 = vxor.u32 %v1684, %v2196
    %v2709 = vxor.u32 %v1685, %v2197
    %v2710 = vxor.u32 %v1686, %v2198
    %v2711 = vxor.u32 %v1687, %v2199
    %v2712 = vxor.u32 %v1688, %v2200
    %v2713 = vxor.u32 %v1689, %v2201
    %v2714 = vxor.u32 %v1690, %v2202
    %v2715 = vxor.u32 %v1691, %v2203
    %v2716 = vxor.u32 %v1692, %v2204
    %v2717 = vxor.u32 %v1693, %v2205
    %v2718 = vxor.u32 %v1694, %v2206
    %v2719 = vxor.u32 %v1695, %v2207
    %v2720 = vxor.u32 %v1696, %v2208
    %v2721 = vxor.u32 %v1697, %v2209
    %v2722 = vxor.u32 %v1698, %v2210
    %v2723 = vxor.u32 %v1699, %v2211
    %v2724 = vxor.u32 %v1700, %v2212
    %v2725 = vxor.u32 %v1701, %v2213
    %v2726 = vxor.u32 %v1702, %v2214
    %v2727 = vxor.u32 %v1703, %v2215
    %v2728 = vxor.u32 %v1704, %v2216
    %v2729 = vxor.u32 %v1705, %v2217
    %v2730 = vxor.u32 %v1706, %v2218
    %v2731 = vxor.u32 %v1707, %v2219
    %v2732 = vxor.u32 %v1708, %v2220
    %v2733 = vxor.u32 %v1709, %v2221
    %v2734 = vxor.u32 %v1710, %v2222
    %v2735 = vxor.u32 %v1711, %v2223
    %v2736 = vxor.u32 %v1712, %v2224
    %v2737 = vxor.u32 %v1713, %v2225
    %v2738 = vxor.u32 %v1714, %v2226
    %v2739 = vxor.u32 %v1715, %v2227
    %v2740 = vxor.u32 %v1716, %v2228
    %v2741 = vxor.u32 %v1717, %v2229
    %v2742 = vxor.u32 %v1718, %v2230
    %v2743 = vxor.u32 %v1719, %v2231
    %v2744 = vxor.u32 %v1720, %v2232
    %v2745 = vxor.u32 %v1721, %v2233
    %v2746 = vxor.u32 %v1722, %v2234
    %v2747 = vxor.u32 %v1723, %v2235
    %v2748 = vxor.u32 %v1724, %v2236
    %v2749 = vxor.u32 %v1725, %v2237
    %v2750 = vxor.u32 %v1726, %v2238
    %v2751 = vxor.u32 %v1727, %v2239
    %v2752 = vxor.u32 %v1728, %v2240
    %v2753 = vxor.u32 %v1729, %v2241
    %v2754 = vxor.u32 %v1730, %v2242
    %v2755 = vxor.u32 %v1731, %v2243
    %v2756 = vxor.u32 %v1732, %v2244
    %v2757 = vxor.u32 %v1733, %v2245
    %v2758 = vxor.u32 %v1734, %v2246
    %v2759 = vxor.u32 %v1735, %v2247
    %v2760 = vxor.u32 %v1736, %v2248
    %v2761 = vxor.u32 %v1737, %v2249
    %v2762 = vxor.u32 %v1738, %v2250
    %v2763 = vxor.u32 %v1739, %v2251
    %v2764 = vxor.u32 %v1740, %v2252
    %v2765 = vxor.u32 %v1741, %v2253
    %v2766 = vxor.u32 %v1742, %v2254
    %v2767 = vxor.u32 %v1743, %v2255
    %v2768 = vxor.u32 %v1744, %v2256
    %v2769 = vxor.u32 %v1745, %v2257
    %v2770 = vxor.u32 %v1746, %v2258
    %v2771 = vxor.u32 %v1747, %v2259
    %v2772 = vxor.u32 %v1748, %v2260
    %v2773 = vxor.u32 %v1749, %v2261
    %v2774 = vxor.u32 %v1750, %v2262
    %v2775 = vxor.u32 %v1751, %v2263
    %v2776 = vxor.u32 %v1752, %v2264
    %v2777 = vxor.u32 %v1753, %v2265
    %v2778 = vxor.u32 %v1754, %v2266
    %v2779 = vxor.u32 %v1755, %v2267
    %v2780 = vxor.u32 %v1756, %v2268
    %v2781 = vxor.u32 %v1757, %v2269
    %v2782 = vxor.u32 %v1758, %v2270
    %v2783 = vxor.u32 %v1759, %v2271
    %v2784 = vxor.u32 %v1760, %v2272
    %v2785 = vxor.u32 %v1761, %v2273
    %v2786 = vxor.u32 %v1762, %v2274
    %v2787 = vxor.u32 %v1763, %v2275
    %v2788 = vxor.u32 %v1764, %v2276
    %v2789 = vxor.u32 %v1765, %v2277
    %v2790 = vxor.u32 %v1766, %v2278
    %v2791 = vxor.u32 %v1767, %v2279
    %v2792 = vmul.u32 %v2280, 2146121005
    %v2793 = vmul.u32 %v2281, 2146121005
    %v2794 = vmul.u32 %v2282, 2146121005
    %v2795 = vmul.u32 %v2283, 2146121005
    %v2796 = vmul.u32 %v2284, 2146121005
    %v2797 = vmul.u32 %v2285, 2146121005
    %v2798 = vmul.u32 %v2286, 2146121005
    %v2799 = vmul.u32 %v2287, 2146121005
    %v2800 = vmul.u32 %v2288, 2146121005
    %v2801 = vmul.u32 %v2289, 2146121005
    %v2802 = vmul.u32 %v2290, 2146121005
    %v2803 = vmul.u32 %v2291, 2146121005
    %v2804 = vmul.u32 %v2292, 2146121005
    %v2805 = vmul.u32 %v2293, 2146121005
    %v2806 = vmul.u32 %v2294, 2146121005
    %v2807 = vmul.u32 %v2295, 2146121005
    %v2808 = vmul.u32 %v2296, 2146121005
    %v2809 = vmul.u32 %v2297, 2146121005
    %v2810 = vmul.u32 %v2298, 2146121005
    %v2811 = vmul.u32 %v2299, 2146121005
    %v2812 = vmul.u32 %v2300, 2146121005
    %v2813 = vmul.u32 %v2301, 2146121005
    %v2814 = vmul.u32 %v2302, 2146121005
    %v2815 = vmul.u32 %v2303, 2146121005
    %v2816 = vmul.u32 %v2304, 2146121005
    %v2817 = vmul.u32 %v2305, 2146121005
    %v2818 = vmul.u32 %v2306, 2146121005
    %v2819 = vmul.u32 %v2307, 2146121005
    %v2820 = vmul.u32 %v2308, 2146121005
    %v2821 = vmul.u32 %v2309, 2146121005
    %v2822 = vmul.u32 %v2310, 2146121005
    %v2823 = vmul.u32 %v2311, 2146121005
    %v2824 = vmul.u32 %v2312, 2146121005
    %v2825 = vmul.u32 %v2313, 2146121005
    %v2826 = vmul.u32 %v2314, 2146121005
    %v2827 = vmul.u32 %v2315, 2146121005
    %v2828 = vmul.u32 %v2316, 2146121005
    %v2829 = vmul.u32 %v2317, 2146121005
    %v2830 = vmul.u32 %v2318, 2146121005
    %v2831 = vmul.u32 %v2319, 2146121005
    %v2832 = vmul.u32 %v2320, 2146121005
    %v2833 = vmul.u32 %v2321, 2146121005
    %v2834 = vmul.u32 %v2322, 2146121005
    %v2835 = vmul.u32 %v2323, 2146121005
    %v2836 = vmul.u32 %v2324, 2146121005
    %v2837 = vmul.u32 %v2325, 2146121005
    %v2838 = vmul.u32 %v2326, 2146121005
    %v2839 = vmul.u32 %v2327, 2146121005
    %v2840 = vmul.u32 %v2328, 2146121005
    %v2841 = vmul.u32 %v2329, 2146121005
    %v2842 = vmul.u32 %v2330, 2146121005
    %v2843 = vmul.u32 %v2331, 2146121005
    %v2844 = vmul.u32 %v2332, 2146121005
    %v2845 = vmul.u32 %v2333, 2146121005
    %v2846 = vmul.u32 %v2334, 2146121005
    %v2847 = vmul.u32 %v2335, 2146121005
    %v2848 = vmul.u32 %v2336, 2146121005
    %v2849 = vmul.u32 %v2337, 2146121005
    %v2850 = vmul.u32 %v2338, 2146121005
    %v2851 = vmul.u32 %v2339, 2146121005
    %v2852 = vmul.u32 %v2340, 2146121005
    %v2853 = vmul.u32 %v2341, 2146121005
    %v2854 = vmul.u32 %v2342, 2146121005
    %v2855 = vmul.u32 %v2343, 2146121005
    %v2856 = vmul.u32 %v2344, 2146121005
    %v2857 = vmul.u32 %v2345, 2146121005
    %v2858 = vmul.u32 %v2346, 2146121005
    %v2859 = vmul.u32 %v2347, 2146121005
    %v2860 = vmul.u32 %v2348, 2146121005
    %v2861 = vmul.u32 %v2349, 2146121005
    %v2862 = vmul.u32 %v2350, 2146121005
    %v2863 = vmul.u32 %v2351, 2146121005
    %v2864 = vmul.u32 %v2352, 2146121005
    %v2865 = vmul.u32 %v2353, 2146121005
    %v2866 = vmul.u32 %v2354, 2146121005
    %v2867 = vmul.u32 %v2355, 2146121005
    %v2868 = vmul.u32 %v2356, 2146121005
    %v2869 = vmul.u32 %v2357, 2146121005
    %v2870 = vmul.u32 %v2358, 2146121005
    %v2871 = vmul.u32 %v2359, 2146121005
    %v2872 = vmul.u32 %v2360, 2146121005
    %v2873 = vmul.u32 %v2361, 2146121005
    %v2874 = vmul.u32 %v2362, 2146121005
    %v2875 = vmul.u32 %v2363, 2146121005
    %v2876 = vmul.u32 %v2364, 2146121005
    %v2877 = vmul.u32 %v2365, 2146121005
    %v2878 = vmul.u32 %v2366, 2146121005
    %v2879 = vmul.u32 %v2367, 2146121005
    %v2880 = vmul.u32 %v2368, 2146121005
    %v2881 = vmul.u32 %v2369, 2146121005
    %v2882 = vmul.u32 %v2370, 2146121005
    %v2883 = vmul.u32 %v2371, 2146121005
    %v2884 = vmul.u32 %v2372, 2146121005
    %v2885 = vmul.u32 %v2373, 2146121005
    %v2886 = vmul.u32 %v2374, 2146121005
    %v2887 = vmul.u32 %v2375, 2146121005
    %v2888 = vmul.u32 %v2376, 2146121005
    %v2889 = vmul.u32 %v2377, 2146121005
    %v2890 = vmul.u32 %v2378, 2146121005
    %v2891 = vmul.u32 %v2379, 2146121005
    %v2892 = vmul.u32 %v2380, 2146121005
    %v2893 = vmul.u32 %v2381, 2146121005
    %v2894 = vmul.u32 %v2382, 2146121005
    %v2895 = vmul.u32 %v2383, 2146121005
    %v2896 = vmul.u32 %v2384, 2146121005
    %v2897 = vmul.u32 %v2385, 2146121005
    %v2898 = vmul.u32 %v2386, 2146121005
    %v2899 = vmul.u32 %v2387, 2146121005
    %v2900 = vmul.u32 %v2388, 2146121005
    %v2901 = vmul.u32 %v2389, 2146121005
    %v2902 = vmul.u32 %v2390, 2146121005
    %v2903 = vmul.u32 %v2391, 2146121005
    %v2904 = vmul.u32 %v2392, 2146121005
    %v2905 = vmul.u32 %v2393, 2146121005
    %v2906 = vmul.u32 %v2394, 2146121005
    %v2907 = vmul.u32 %v2395, 2146121005
    %v2908 = vmul.u32 %v2396, 2146121005
    %v2909 = vmul.u32 %v2397, 2146121005
    %v2910 = vmul.u32 %v2398, 2146121005
    %v2911 = vmul.u32 %v2399, 2146121005
    %v2912 = vmul.u32 %v2400, 2146121005
    %v2913 = vmul.u32 %v2401, 2146121005
    %v2914 = vmul.u32 %v2402, 2146121005
    %v2915 = vmul.u32 %v2403, 2146121005
    %v2916 = vmul.u32 %v2404, 2146121005
    %v2917 = vmul.u32 %v2405, 2146121005
    %v2918 = vmul.u32 %v2406, 2146121005
    %v2919 = vmul.u32 %v2407, 2146121005
    %v2920 = vmul.u32 %v2408, 2146121005
    %v2921 = vmul.u32 %v2409, 2146121005
    %v2922 = vmul.u32 %v2410, 2146121005
    %v2923 = vmul.u32 %v2411, 2146121005
    %v2924 = vmul.u32 %v2412, 2146121005
    %v2925 = vmul.u32 %v2413, 2146121005
    %v2926 = vmul.u32 %v2414, 2146121005
    %v2927 = vmul.u32 %v2415, 2146121005
    %v2928 = vmul.u32 %v2416, 2146121005
    %v2929 = vmul.u32 %v2417, 2146121005
    %v2930 = vmul.u32 %v2418, 2146121005
    %v2931 = vmul.u32 %v2419, 2146121005
    %v2932 = vmul.u32 %v2420, 2146121005
    %v2933 = vmul.u32 %v2421, 2146121005
    %v2934 = vmul.u32 %v2422, 2146121005
    %v2935 = vmul.u32 %v2423, 2146121005
    %v2936 = vmul.u32 %v2424, 2146121005
    %v2937 = vmul.u32 %v2425, 2146121005
    %v2938 = vmul.u32 %v2426, 2146121005
    %v2939 = vmul.u32 %v2427, 2146121005
    %v2940 = vmul.u32 %v2428, 2146121005
    %v2941 = vmul.u32 %v2429, 2146121005
    %v2942 = vmul.u32 %v2430, 2146121005
    %v2943 = vmul.u32 %v2431, 2146121005
    %v2944 = vmul.u32 %v2432, 2146121005
    %v2945 = vmul.u32 %v2433, 2146121005
    %v2946 = vmul.u32 %v2434, 2146121005
    %v2947 = vmul.u32 %v2435, 2146121005
    %v2948 = vmul.u32 %v2436, 2146121005
    %v2949 = vmul.u32 %v2437, 2146121005
    %v2950 = vmul.u32 %v2438, 2146121005
    %v2951 = vmul.u32 %v2439, 2146121005
    %v2952 = vmul.u32 %v2440, 2146121005
    %v2953 = vmul.u32 %v2441, 2146121005
    %v2954 = vmul.u32 %v2442, 2146121005
    %v2955 = vmul.u32 %v2443, 2146121005
    %v2956 = vmul.u32 %v2444, 2146121005
    %v2957 = vmul.u32 %v2445, 2146121005
    %v2958 = vmul.u32 %v2446, 2146121005
    %v2959 = vmul.u32 %v2447, 2146121005
    %v2960 = vmul.u32 %v2448, 2146121005
    %v2961 = vmul.u32 %v2449, 2146121005
    %v2962 = vmul.u32 %v2450, 2146121005
    %v2963 = vmul.u32 %v2451, 2146121005
    %v2964 = vmul.u32 %v2452, 2146121005
    %v2965 = vmul.u32 %v2453, 2146121005
    %v2966 = vmul.u32 %v2454, 2146121005
    %v2967 = vmul.u32 %v2455, 2146121005
    %v2968 = vmul.u32 %v2456, 2146121005
    %v2969 = vmul.u32 %v2457, 2146121005
    %v2970 = vmul.u32 %v2458, 2146121005
    %v2971 = vmul.u32 %v2459, 2146121005
    %v2972 = vmul.u32 %v2460, 2146121005
    %v2973 = vmul.u32 %v2461, 2146121005
    %v2974 = vmul.u32 %v2462, 2146121005
    %v2975 = vmul.u32 %v2463, 2146121005
    %v2976 = vmul.u32 %v2464, 2146121005
    %v2977 = vmul.u32 %v2465, 2146121005
    %v2978 = vmul.u32 %v2466, 2146121005
    %v2979 = vmul.u32 %v2467, 2146121005
    %v2980 = vmul.u32 %v2468, 2146121005
    %v2981 = vmul.u32 %v2469, 2146121005
    %v2982 = vmul.u32 %v2470, 2146121005
    %v2983 = vmul.u32 %v2471, 2146121005
    %v2984 = vmul.u32 %v2472, 2146121005
    %v2985 = vmul.u32 %v2473, 2146121005
    %v2986 = vmul.u32 %v2474, 2146121005
    %v2987 = vmul.u32 %v2475, 2146121005
    %v2988 = vmul.u32 %v2476, 2146121005
    %v2989 = vmul.u32 %v2477, 2146121005
    %v2990 = vmul.u32 %v2478, 2146121005
    %v2991 = vmul.u32 %v2479, 2146121005
    %v2992 = vmul.u32 %v2480, 2146121005
    %v2993 = vmul.u32 %v2481, 2146121005
    %v2994 = vmul.u32 %v2482, 2146121005
    %v2995 = vmul.u32 %v2483, 2146121005
    %v2996 = vmul.u32 %v2484, 2146121005
    %v2997 = vmul.u32 %v2485, 2146121005
    %v2998 = vmul.u32 %v2486, 2146121005
    %v2999 = vmul.u32 %v2487, 2146121005
    %v3000 = vmul.u32 %v2488, 2146121005
    %v3001 = vmul.u32 %v2489, 2146121005
    %v3002 = vmul.u32 %v2490, 2146121005
    %v3003 = vmul.u32 %v2491, 2146121005
    %v3004 = vmul.u32 %v2492, 2146121005
    %v3005 = vmul.u32 %v2493, 2146121005
    %v3006 = vmul.u32 %v2494, 2146121005
    %v3007 = vmul.u32 %v2495, 2146121005
    %v3008 = vmul.u32 %v2496, 2146121005
    %v3009 = vmul.u32 %v2497, 2146121005
    %v3010 = vmul.u32 %v2498, 2146121005
    %v3011 = vmul.u32 %v2499, 2146121005
    %v3012 = vmul.u32 %v2500, 2146121005
    %v3013 = vmul.u32 %v2501, 2146121005
    %v3014 = vmul.u32 %v2502, 2146121005
    %v3015 = vmul.u32 %v2503, 2146121005
    %v3016 = vmul.u32 %v2504, 2146121005
    %v3017 = vmul.u32 %v2505, 2146121005
    %v3018 = vmul.u32 %v2506, 2146121005
    %v3019 = vmul.u32 %v2507, 2146121005
    %v3020 = vmul.u32 %v2508, 2146121005
    %v3021 = vmul.u32 %v2509, 2146121005
    %v3022 = vmul.u32 %v2510, 2146121005
    %v3023 = vmul.u32 %v2511, 2146121005
    %v3024 = vmul.u32 %v2512, 2146121005
    %v3025 = vmul.u32 %v2513, 2146121005
    %v3026 = vmul.u32 %v2514, 2146121005
    %v3027 = vmul.u32 %v2515, 2146121005
    %v3028 = vmul.u32 %v2516, 2146121005
    %v3029 = vmul.u32 %v2517, 2146121005
    %v3030 = vmul.u32 %v2518, 2146121005
    %v3031 = vmul.u32 %v2519, 2146121005
    %v3032 = vmul.u32 %v2520, 2146121005
    %v3033 = vmul.u32 %v2521, 2146121005
    %v3034 = vmul.u32 %v2522, 2146121005
    %v3035 = vmul.u32 %v2523, 2146121005
    %v3036 = vmul.u32 %v2524, 2146121005
    %v3037 = vmul.u32 %v2525, 2146121005
    %v3038 = vmul.u32 %v2526, 2146121005
    %v3039 = vmul.u32 %v2527, 2146121005
    %v3040 = vmul.u32 %v2528, 2146121005
    %v3041 = vmul.u32 %v2529, 2146121005
    %v3042 = vmul.u32 %v2530, 2146121005
    %v3043 = vmul.u32 %v2531, 2146121005
    %v3044 = vmul.u32 %v2532, 2146121005
    %v3045 = vmul.u32 %v2533, 2146121005
    %v3046 = vmul.u32 %v2534, 2146121005
    %v3047 = vmul.u32 %v2535, 2146121005
    %v3048 = vmul.u32 %v2536, 2146121005
    %v3049 = vmul.u32 %v2537, 2146121005
    %v3050 = vmul.u32 %v2538, 2146121005
    %v3051 = vmul.u32 %v2539, 2146121005
    %v3052 = vmul.u32 %v2540, 2146121005
    %v3053 = vmul.u32 %v2541, 2146121005
    %v3054 = vmul.u32 %v2542, 2146121005
    %v3055 = vmul.u32 %v2543, 2146121005
    %v3056 = vmul.u32 %v2544, 2146121005
    %v3057 = vmul.u32 %v2545, 2146121005
    %v3058 = vmul.u32 %v2546, 2146121005
    %v3059 = vmul.u32 %v2547, 2146121005
    %v3060 = vmul.u32 %v2548, 2146121005
    %v3061 = vmul.u32 %v2549, 2146121005
    %v3062 = vmul.u32 %v2550, 2146121005
    %v3063 = vmul.u32 %v2551, 2146121005
    %v3064 = vmul.u32 %v2552, 2146121005
    %v3065 = vmul.u32 %v2553, 2146121005
    %v3066 = vmul.u32 %v2554, 2146121005
    %v3067 = vmul.u32 %v2555, 2146121005
    %v3068 = vmul.u32 %v2556, 2146121005
    %v3069 = vmul.u32 %v2557, 2146121005
    %v3070 = vmul.u32 %v2558, 2146121005
    %v3071 = vmul.u32 %v2559, 2146121005
    %v3072 = vmul.u32 %v2560, 2146121005
    %v3073 = vmul.u32 %v2561, 2146121005
    %v3074 = vmul.u32 %v2562, 2146121005
    %v3075 = vmul.u32 %v2563, 2146121005
    %v3076 = vmul.u32 %v2564, 2146121005
    %v3077 = vmul.u32 %v2565, 2146121005
    %v3078 = vmul.u32 %v2566, 2146121005
    %v3079 = vmul.u32 %v2567, 2146121005
    %v3080 = vmul.u32 %v2568, 2146121005
    %v3081 = vmul.u32 %v2569, 2146121005
    %v3082 = vmul.u32 %v2570, 2146121005
    %v3083 = vmul.u32 %v2571, 2146121005
    %v3084 = vmul.u32 %v2572, 2146121005
    %v3085 = vmul.u32 %v2573, 2146121005
    %v3086 = vmul.u32 %v2574, 2146121005
    %v3087 = vmul.u32 %v2575, 2146121005
    %v3088 = vmul.u32 %v2576, 2146121005
    %v3089 = vmul.u32 %v2577, 2146121005
    %v3090 = vmul.u32 %v2578, 2146121005
    %v3091 = vmul.u32 %v2579, 2146121005
    %v3092 = vmul.u32 %v2580, 2146121005
    %v3093 = vmul.u32 %v2581, 2146121005
    %v3094 = vmul.u32 %v2582, 2146121005
    %v3095 = vmul.u32 %v2583, 2146121005
    %v3096 = vmul.u32 %v2584, 2146121005
    %v3097 = vmul.u32 %v2585, 2146121005
    %v3098 = vmul.u32 %v2586, 2146121005
    %v3099 = vmul.u32 %v2587, 2146121005
    %v3100 = vmul.u32 %v2588, 2146121005
    %v3101 = vmul.u32 %v2589, 2146121005
    %v3102 = vmul.u32 %v2590, 2146121005
    %v3103 = vmul.u32 %v2591, 2146121005
    %v3104 = vmul.u32 %v2592, 2146121005
    %v3105 = vmul.u32 %v2593, 2146121005
    %v3106 = vmul.u32 %v2594, 2146121005
    %v3107 = vmul.u32 %v2595, 2146121005
    %v3108 = vmul.u32 %v2596, 2146121005
    %v3109 = vmul.u32 %v2597, 2146121005
    %v3110 = vmul.u32 %v2598, 2146121005
    %v3111 = vmul.u32 %v2599, 2146121005
    %v3112 = vmul.u32 %v2600, 2146121005
    %v3113 = vmul.u32 %v2601, 2146121005
    %v3114 = vmul.u32 %v2602, 2146121005
    %v3115 = vmul.u32 %v2603, 2146121005
    %v3116 = vmul.u32 %v2604, 2146121005
    %v3117 = vmul.u32 %v2605, 2146121005
    %v3118 = vmul.u32 %v2606, 2146121005
    %v3119 = vmul.u32 %v2607, 2146121005
    %v3120 = vmul.u32 %v2608, 2146121005
    %v3121 = vmul.u32 %v2609, 2146121005
    %v3122 = vmul.u32 %v2610, 2146121005
    %v3123 = vmul.u32 %v2611, 2146121005
    %v3124 = vmul.u32 %v2612, 2146121005
    %v3125 = vmul.u32 %v2613, 2146121005
    %v3126 = vmul.u32 %v2614, 2146121005
    %v3127 = vmul.u32 %v2615, 2146121005
    %v3128 = vmul.u32 %v2616, 2146121005
    %v3129 = vmul.u32 %v2617, 2146121005
    %v3130 = vmul.u32 %v2618, 2146121005
    %v3131 = vmul.u32 %v2619, 2146121005
    %v3132 = vmul.u32 %v2620, 2146121005
    %v3133 = vmul.u32 %v2621, 2146121005
    %v3134 = vmul.u32 %v2622, 2146121005
    %v3135 = vmul.u32 %v2623, 2146121005
    %v3136 = vmul.u32 %v2624, 2146121005
    %v3137 = vmul.u32 %v2625, 2146121005
    %v3138 = vmul.u32 %v2626, 2146121005
    %v3139 = vmul.u32 %v2627, 2146121005
    %v3140 = vmul.u32 %v2628, 2146121005
    %v3141 = vmul.u32 %v2629, 2146121005
    %v3142 = vmul.u32 %v2630, 2146121005
    %v3143 = vmul.u32 %v2631, 2146121005
    %v3144 = vmul.u32 %v2632, 2146121005
    %v3145 = vmul.u32 %v2633, 2146121005
    %v3146 = vmul.u32 %v2634, 2146121005
    %v3147 = vmul.u32 %v2635, 2146121005
    %v3148 = vmul.u32 %v2636, 2146121005
    %v3149 = vmul.u32 %v2637, 2146121005
    %v3150 = vmul.u32 %v2638, 2146121005
    %v3151 = vmul.u32 %v2639, 2146121005
    %v3152 = vmul.u32 %v2640, 2146121005
    %v3153 = vmul.u32 %v2641, 2146121005
    %v3154 = vmul.u32 %v2642, 2146121005
    %v3155 = vmul.u32 %v2643, 2146121005
    %v3156 = vmul.u32 %v2644, 2146121005
    %v3157 = vmul.u32 %v2645, 2146121005
    %v3158 = vmul.u32 %v2646, 2146121005
    %v3159 = vmul.u32 %v2647, 2146121005
    %v3160 = vmul.u32 %v2648, 2146121005
    %v3161 = vmul.u32 %v2649, 2146121005
    %v3162 = vmul.u32 %v2650, 2146121005
    %v3163 = vmul.u32 %v2651, 2146121005
    %v3164 = vmul.u32 %v2652, 2146121005
    %v3165 = vmul.u32 %v2653, 2146121005
    %v3166 = vmul.u32 %v2654, 2146121005
    %v3167 = vmul.u32 %v2655, 2146121005
    %v3168 = vmul.u32 %v2656, 2146121005
    %v3169 = vmul.u32 %v2657, 2146121005
    %v3170 = vmul.u32 %v2658, 2146121005
    %v3171 = vmul.u32 %v2659, 2146121005
    %v3172 = vmul.u32 %v2660, 2146121005
    %v3173 = vmul.u32 %v2661, 2146121005
    %v3174 = vmul.u32 %v2662, 2146121005
    %v3175 = vmul.u32 %v2663, 2146121005
    %v3176 = vmul.u32 %v2664, 2146121005
    %v3177 = vmul.u32 %v2665, 2146121005
    %v3178 = vmul.u32 %v2666, 2146121005
    %v3179 = vmul.u32 %v2667, 2146121005
    %v3180 = vmul.u32 %v2668, 2146121005
    %v3181 = vmul.u32 %v2669, 2146121005
    %v3182 = vmul.u32 %v2670, 2146121005
    %v3183 = vmul.u32 %v2671, 2146121005
    %v3184 = vmul.u32 %v2672, 2146121005
    %v3185 = vmul.u32 %v2673, 2146121005
    %v3186 = vmul.u32 %v2674, 2146121005
    %v3187 = vmul.u32 %v2675, 2146121005
    %v3188 = vmul.u32 %v2676, 2146121005
    %v3189 = vmul.u32 %v2677, 2146121005
    %v3190 = vmul.u32 %v2678, 2146121005
    %v3191 = vmul.u32 %v2679, 2146121005
    %v3192 = vmul.u32 %v2680, 2146121005
    %v3193 = vmul.u32 %v2681, 2146121005
    %v3194 = vmul.u32 %v2682, 2146121005
    %v3195 = vmul.u32 %v2683, 2146121005
    %v3196 = vmul.u32 %v2684, 2146121005
    %v3197 = vmul.u32 %v2685, 2146121005
    %v3198 = vmul.u32 %v2686, 2146121005
    %v3199 = vmul.u32 %v2687, 2146121005
    %v3200 = vmul.u32 %v2688, 2146121005
    %v3201 = vmul.u32 %v2689, 2146121005
    %v3202 = vmul.u32 %v2690, 2146121005
    %v3203 = vmul.u32 %v2691, 2146121005
    %v3204 = vmul.u32 %v2692, 2146121005
    %v3205 = vmul.u32 %v2693, 2146121005
    %v3206 = vmul.u32 %v2694, 2146121005
    %v3207 = vmul.u32 %v2695, 2146121005
    %v3208 = vmul.u32 %v2696, 2146121005
    %v3209 = vmul.u32 %v2697, 2146121005
    %v3210 = vmul.u32 %v2698, 2146121005
    %v3211 = vmul.u32 %v2699, 2146121005
    %v3212 = vmul.u32 %v2700, 2146121005
    %v3213 = vmul.u32 %v2701, 2146121005
    %v3214 = vmul.u32 %v2702, 2146121005
    %v3215 = vmul.u32 %v2703, 2146121005
    %v3216 = vmul.u32 %v2704, 2146121005
    %v3217 = vmul.u32 %v2705, 2146121005
    %v3218 = vmul.u32 %v2706, 2146121005
    %v3219 = vmul.u32 %v2707, 2146121005
    %v3220 = vmul.u32 %v2708, 2146121005
    %v3221 = vmul.u32 %v2709, 2146121005
    %v3222 = vmul.u32 %v2710, 2146121005
    %v3223 = vmul.u32 %v2711, 2146121005
    %v3224 = vmul.u32 %v2712, 2146121005
    %v3225 = vmul.u32 %v2713, 2146121005
    %v3226 = vmul.u32 %v2714, 2146121005
    %v3227 = vmul.u32 %v2715, 2146121005
    %v3228 = vmul.u32 %v2716, 2146121005
    %v3229 = vmul.u32 %v2717, 2146121005
    %v3230 = vmul.u32 %v2718, 2146121005
    %v3231 = vmul.u32 %v2719, 2146121005
    %v3232 = vmul.u32 %v2720, 2146121005
    %v3233 = vmul.u32 %v2721, 2146121005
    %v3234 = vmul.u32 %v2722, 2146121005
    %v3235 = vmul.u32 %v2723, 2146121005
    %v3236 = vmul.u32 %v2724, 2146121005
    %v3237 = vmul.u32 %v2725, 2146121005
    %v3238 = vmul.u32 %v2726, 2146121005
    %v3239 = vmul.u32 %v2727, 2146121005
    %v3240 = vmul.u32 %v2728, 2146121005
    %v3241 = vmul.u32 %v2729, 2146121005
    %v3242 = vmul.u32 %v2730, 2146121005
    %v3243 = vmul.u32 %v2731, 2146121005
    %v3244 = vmul.u32 %v2732, 2146121005
    %v3245 = vmul.u32 %v2733, 2146121005
    %v3246 = vmul.u32 %v2734, 2146121005
    %v3247 = vmul.u32 %v2735, 2146121005
    %v3248 = vmul.u32 %v2736, 2146121005
    %v3249 = vmul.u32 %v2737, 2146121005
    %v3250 = vmul.u32 %v2738, 2146121005
    %v3251 = vmul.u32 %v2739, 2146121005
    %v3252 = vmul.u32 %v2740, 2146121005
    %v3253 = vmul.u32 %v2741, 2146121005
    %v3254 = vmul.u32 %v2742, 2146121005
    %v3255 = vmul.u32 %v2743, 2146121005
    %v3256 = vmul.u32 %v2744, 2146121005
    %v3257 = vmul.u32 %v2745, 2146121005
    %v3258 = vmul.u32 %v2746, 2146121005
    %v3259 = vmul.u32 %v2747, 2146121005
    %v3260 = vmul.u32 %v2748, 2146121005
    %v3261 = vmul.u32 %v2749, 2146121005
    %v3262 = vmul.u32 %v2750, 2146121005
    %v3263 = vmul.u32 %v2751, 2146121005
    %v3264 = vmul.u32 %v2752, 2146121005
    %v3265 = vmul.u32 %v2753, 2146121005
    %v3266 = vmul.u32 %v2754, 2146121005
    %v3267 = vmul.u32 %v2755, 2146121005
    %v3268 = vmul.u32 %v2756, 2146121005
    %v3269 = vmul.u32 %v2757, 2146121005
    %v3270 = vmul.u32 %v2758, 2146121005
    %v3271 = vmul.u32 %v2759, 2146121005
    %v3272 = vmul.u32 %v2760, 2146121005
    %v3273 = vmul.u32 %v2761, 2146121005
    %v3274 = vmul.u32 %v2762, 2146121005
    %v3275 = vmul.u32 %v2763, 2146121005
    %v3276 = vmul.u32 %v2764, 2146121005
    %v3277 = vmul.u32 %v2765, 2146121005
    %v3278 = vmul.u32 %v2766, 2146121005
    %v3279 = vmul.u32 %v2767, 2146121005
    %v3280 = vmul.u32 %v2768, 2146121005
    %v3281 = vmul.u32 %v2769, 2146121005
    %v3282 = vmul.u32 %v2770, 2146121005
    %v3283 = vmul.u32 %v2771, 2146121005
    %v3284 = vmul.u32 %v2772, 2146121005
    %v3285 = vmul.u32 %v2773, 2146121005
    %v3286 = vmul.u32 %v2774, 2146121005
    %v3287 = vmul.u32 %v2775, 2146121005
    %v3288 = vmul.u32 %v2776, 2146121005
    %v3289 = vmul.u32 %v2777, 2146121005
    %v3290 = vmul.u32 %v2778, 2146121005
    %v3291 = vmul.u32 %v2779, 2146121005
    %v3292 = vmul.u32 %v2780, 2146121005
    %v3293 = vmul.u32 %v2781, 2146121005
    %v3294 = vmul.u32 %v2782, 2146121005
    %v3295 = vmul.u32 %v2783, 2146121005
    %v3296 = vmul.u32 %v2784, 2146121005
    %v3297 = vmul.u32 %v2785, 2146121005
    %v3298 = vmul.u32 %v2786, 2146121005
    %v3299 = vmul.u32 %v2787, 2146121005
    %v3300 = vmul.u32 %v2788, 2146121005
    %v3301 = vmul.u32 %v2789, 2146121005
    %v3302 = vmul.u32 %v2790, 2146121005
    %v3303 = vmul.u32 %v2791, 2146121005
    %v3304 = vshrl.u32 %v2792, 15
    %v3305 = vshrl.u32 %v2793, 15
    %v3306 = vshrl.u32 %v2794, 15
    %v3307 = vshrl.u32 %v2795, 15
    %v3308 = vshrl.u32 %v2796, 15
    %v3309 = vshrl.u32 %v2797, 15
    %v3310 = vshrl.u32 %v2798, 15
    %v3311 = vshrl.u32 %v2799, 15
    %v3312 = vshrl.u32 %v2800, 15
    %v3313 = vshrl.u32 %v2801, 15
    %v3314 = vshrl.u32 %v2802, 15
    %v3315 = vshrl.u32 %v2803, 15
    %v3316 = vshrl.u32 %v2804, 15
    %v3317 = vshrl.u32 %v2805, 15
    %v3318 = vshrl.u32 %v2806, 15
    %v3319 = vshrl.u32 %v2807, 15
    %v3320 = vshrl.u32 %v2808, 15
    %v3321 = vshrl.u32 %v2809, 15
    %v3322 = vshrl.u32 %v2810, 15
    %v3323 = vshrl.u32 %v2811, 15
    %v3324 = vshrl.u32 %v2812, 15
    %v3325 = vshrl.u32 %v2813, 15
    %v3326 = vshrl.u32 %v2814, 15
    %v3327 = vshrl.u32 %v2815, 15
    %v3328 = vshrl.u32 %v2816, 15
    %v3329 = vshrl.u32 %v2817, 15
    %v3330 = vshrl.u32 %v2818, 15
    %v3331 = vshrl.u32 %v2819, 15
    %v3332 = vshrl.u32 %v2820, 15
    %v3333 = vshrl.u32 %v2821, 15
    %v3334 = vshrl.u32 %v2822, 15
    %v3335 = vshrl.u32 %v2823, 15
    %v3336 = vshrl.u32 %v2824, 15
    %v3337 = vshrl.u32 %v2825, 15
    %v3338 = vshrl.u32 %v2826, 15
    %v3339 = vshrl.u32 %v2827, 15
    %v3340 = vshrl.u32 %v2828, 15
    %v3341 = vshrl.u32 %v2829, 15
    %v3342 = vshrl.u32 %v2830, 15
    %v3343 = vshrl.u32 %v2831, 15
    %v3344 = vshrl.u32 %v2832, 15
    %v3345 = vshrl.u32 %v2833, 15
    %v3346 = vshrl.u32 %v2834, 15
    %v3347 = vshrl.u32 %v2835, 15
    %v3348 = vshrl.u32 %v2836, 15
    %v3349 = vshrl.u32 %v2837, 15
    %v3350 = vshrl.u32 %v2838, 15
    %v3351 = vshrl.u32 %v2839, 15
    %v3352 = vshrl.u32 %v2840, 15
    %v3353 = vshrl.u32 %v2841, 15
    %v3354 = vshrl.u32 %v2842, 15
    %v3355 = vshrl.u32 %v2843, 15
    %v3356 = vshrl.u32 %v2844, 15
    %v3357 = vshrl.u32 %v2845, 15
    %v3358 = vshrl.u32 %v2846, 15
    %v3359 = vshrl.u32 %v2847, 15
    %v3360 = vshrl.u32 %v2848, 15
    %v3361 = vshrl.u32 %v2849, 15
    %v3362 = vshrl.u32 %v2850, 15
    %v3363 = vshrl.u32 %v2851, 15
    %v3364 = vshrl.u32 %v2852, 15
    %v3365 = vshrl.u32 %v2853, 15
    %v3366 = vshrl.u32 %v2854, 15
    %v3367 = vshrl.u32 %v2855, 15
    %v3368 = vshrl.u32 %v2856, 15
    %v3369 = vshrl.u32 %v2857, 15
    %v3370 = vshrl.u32 %v2858, 15
    %v3371 = vshrl.u32 %v2859, 15
    %v3372 = vshrl.u32 %v2860, 15
    %v3373 = vshrl.u32 %v2861, 15
    %v3374 = vshrl.u32 %v2862, 15
    %v3375 = vshrl.u32 %v2863, 15
    %v3376 = vshrl.u32 %v2864, 15
    %v3377 = vshrl.u32 %v2865, 15
    %v3378 = vshrl.u32 %v2866, 15
    %v3379 = vshrl.u32 %v2867, 15
    %v3380 = vshrl.u32 %v2868, 15
    %v3381 = vshrl.u32 %v2869, 15
    %v3382 = vshrl.u32 %v2870, 15
    %v3383 = vshrl.u32 %v2871, 15
    %v3384 = vshrl.u32 %v2872, 15
    %v3385 = vshrl.u32 %v2873, 15
    %v3386 = vshrl.u32 %v2874, 15
    %v3387 = vshrl.u32 %v2875, 15
    %v3388 = vshrl.u32 %v2876, 15
    %v3389 = vshrl.u32 %v2877, 15
    %v3390 = vshrl.u32 %v2878, 15
    %v3391 = vshrl.u32 %v2879, 15
    %v3392 = vshrl.u32 %v2880, 15
    %v3393 = vshrl.u32 %v2881, 15
    %v3394 = vshrl.u32 %v2882, 15
    %v3395 = vshrl.u32 %v2883, 15
    %v3396 = vshrl.u32 %v2884, 15
    %v3397 = vshrl.u32 %v2885, 15
    %v3398 = vshrl.u32 %v2886, 15
    %v3399 = vshrl.u32 %v2887, 15
    %v3400 = vshrl.u32 %v2888, 15
    %v3401 = vshrl.u32 %v2889, 15
    %v3402 = vshrl.u32 %v2890, 15
    %v3403 = vshrl.u32 %v2891, 15
    %v3404 = vshrl.u32 %v2892, 15
    %v3405 = vshrl.u32 %v2893, 15
    %v3406 = vshrl.u32 %v2894, 15
    %v3407 = vshrl.u32 %v2895, 15
    %v3408 = vshrl.u32 %v2896, 15
    %v3409 = vshrl.u32 %v2897, 15
    %v3410 = vshrl.u32 %v2898, 15
    %v3411 = vshrl.u32 %v2899, 15
    %v3412 = vshrl.u32 %v2900, 15
    %v3413 = vshrl.u32 %v2901, 15
    %v3414 = vshrl.u32 %v2902, 15
    %v3415 = vshrl.u32 %v2903, 15
    %v3416 = vshrl.u32 %v2904, 15
    %v3417 = vshrl.u32 %v2905, 15
    %v3418 = vshrl.u32 %v2906, 15
    %v3419 = vshrl.u32 %v2907, 15
    %v3420 = vshrl.u32 %v2908, 15
    %v3421 = vshrl.u32 %v2909, 15
    %v3422 = vshrl.u32 %v2910, 15
    %v3423 = vshrl.u32 %v2911, 15
    %v3424 = vshrl.u32 %v2912, 15
    %v3425 = vshrl.u32 %v2913, 15
    %v3426 = vshrl.u32 %v2914, 15
    %v3427 = vshrl.u32 %v2915, 15
    %v3428 = vshrl.u32 %v2916, 15
    %v3429 = vshrl.u32 %v2917, 15
    %v3430 = vshrl.u32 %v2918, 15
    %v3431 = vshrl.u32 %v2919, 15
    %v3432 = vshrl.u32 %v2920, 15
    %v3433 = vshrl.u32 %v2921, 15
    %v3434 = vshrl.u32 %v2922, 15
    %v3435 = vshrl.u32 %v2923, 15
    %v3436 = vshrl.u32 %v2924, 15
    %v3437 = vshrl.u32 %v2925, 15
    %v3438 = vshrl.u32 %v2926, 15
    %v3439 = vshrl.u32 %v2927, 15
    %v3440 = vshrl.u32 %v2928, 15
    %v3441 = vshrl.u32 %v2929, 15
    %v3442 = vshrl.u32 %v2930, 15
    %v3443 = vshrl.u32 %v2931, 15
    %v3444 = vshrl.u32 %v2932, 15
    %v3445 = vshrl.u32 %v2933, 15
    %v3446 = vshrl.u32 %v2934, 15
    %v3447 = vshrl.u32 %v2935, 15
    %v3448 = vshrl.u32 %v2936, 15
    %v3449 = vshrl.u32 %v2937, 15
    %v3450 = vshrl.u32 %v2938, 15
    %v3451 = vshrl.u32 %v2939, 15
    %v3452 = vshrl.u32 %v2940, 15
    %v3453 = vshrl.u32 %v2941, 15
    %v3454 = vshrl.u32 %v2942, 15
    %v3455 = vshrl.u32 %v2943, 15
    %v3456 = vshrl.u32 %v2944, 15
    %v3457 = vshrl.u32 %v2945, 15
    %v3458 = vshrl.u32 %v2946, 15
    %v3459 = vshrl.u32 %v2947, 15
    %v3460 = vshrl.u32 %v2948, 15
    %v3461 = vshrl.u32 %v2949, 15
    %v3462 = vshrl.u32 %v2950, 15
    %v3463 = vshrl.u32 %v2951, 15
    %v3464 = vshrl.u32 %v2952, 15
    %v3465 = vshrl.u32 %v2953, 15
    %v3466 = vshrl.u32 %v2954, 15
    %v3467 = vshrl.u32 %v2955, 15
    %v3468 = vshrl.u32 %v2956, 15
    %v3469 = vshrl.u32 %v2957, 15
    %v3470 = vshrl.u32 %v2958, 15
    %v3471 = vshrl.u32 %v2959, 15
    %v3472 = vshrl.u32 %v2960, 15
    %v3473 = vshrl.u32 %v2961, 15
    %v3474 = vshrl.u32 %v2962, 15
    %v3475 = vshrl.u32 %v2963, 15
    %v3476 = vshrl.u32 %v2964, 15
    %v3477 = vshrl.u32 %v2965, 15
    %v3478 = vshrl.u32 %v2966, 15
    %v3479 = vshrl.u32 %v2967, 15
    %v3480 = vshrl.u32 %v2968, 15
    %v3481 = vshrl.u32 %v2969, 15
    %v3482 = vshrl.u32 %v2970, 15
    %v3483 = vshrl.u32 %v2971, 15
    %v3484 = vshrl.u32 %v2972, 15
    %v3485 = vshrl.u32 %v2973, 15
    %v3486 = vshrl.u32 %v2974, 15
    %v3487 = vshrl.u32 %v2975, 15
    %v3488 = vshrl.u32 %v2976, 15
    %v3489 = vshrl.u32 %v2977, 15
    %v3490 = vshrl.u32 %v2978, 15
    %v3491 = vshrl.u32 %v2979, 15
    %v3492 = vshrl.u32 %v2980, 15
    %v3493 = vshrl.u32 %v2981, 15
    %v3494 = vshrl.u32 %v2982, 15
    %v3495 = vshrl.u32 %v2983, 15
    %v3496 = vshrl.u32 %v2984, 15
    %v3497 = vshrl.u32 %v2985, 15
    %v3498 = vshrl.u32 %v2986, 15
    %v3499 = vshrl.u32 %v2987, 15
    %v3500 = vshrl.u32 %v2988, 15
    %v3501 = vshrl.u32 %v2989, 15
    %v3502 = vshrl.u32 %v2990, 15
    %v3503 = vshrl.u32 %v2991, 15
    %v3504 = vshrl.u32 %v2992, 15
    %v3505 = vshrl.u32 %v2993, 15
    %v3506 = vshrl.u32 %v2994, 15
    %v3507 = vshrl.u32 %v2995, 15
    %v3508 = vshrl.u32 %v2996, 15
    %v3509 = vshrl.u32 %v2997, 15
    %v3510 = vshrl.u32 %v2998, 15
    %v3511 = vshrl.u32 %v2999, 15
    %v3512 = vshrl.u32 %v3000, 15
    %v3513 = vshrl.u32 %v3001, 15
    %v3514 = vshrl.u32 %v3002, 15
    %v3515 = vshrl.u32 %v3003, 15
    %v3516 = vshrl.u32 %v3004, 15
    %v3517 = vshrl.u32 %v3005, 15
    %v3518 = vshrl.u32 %v3006, 15
    %v3519 = vshrl.u32 %v3007, 15
    %v3520 = vshrl.u32 %v3008, 15
    %v3521 = vshrl.u32 %v3009, 15
    %v3522 = vshrl.u32 %v3010, 15
    %v3523 = vshrl.u32 %v3011, 15
    %v3524 = vshrl.u32 %v3012, 15
    %v3525 = vshrl.u32 %v3013, 15
    %v3526 = vshrl.u32 %v3014, 15
    %v3527 = vshrl.u32 %v3015, 15
    %v3528 = vshrl.u32 %v3016, 15
    %v3529 = vshrl.u32 %v3017, 15
    %v3530 = vshrl.u32 %v3018, 15
    %v3531 = vshrl.u32 %v3019, 15
    %v3532 = vshrl.u32 %v3020, 15
    %v3533 = vshrl.u32 %v3021, 15
    %v3534 = vshrl.u32 %v3022, 15
    %v3535 = vshrl.u32 %v3023, 15
    %v3536 = vshrl.u32 %v3024, 15
    %v3537 = vshrl.u32 %v3025, 15
    %v3538 = vshrl.u32 %v3026, 15
    %v3539 = vshrl.u32 %v3027, 15
    %v3540 = vshrl.u32 %v3028, 15
    %v3541 = vshrl.u32 %v3029, 15
    %v3542 = vshrl.u32 %v3030, 15
    %v3543 = vshrl.u32 %v3031, 15
    %v3544 = vshrl.u32 %v3032, 15
    %v3545 = vshrl.u32 %v3033, 15
    %v3546 = vshrl.u32 %v3034, 15
    %v3547 = vshrl.u32 %v3035, 15
    %v3548 = vshrl.u32 %v3036, 15
    %v3549 = vshrl.u32 %v3037, 15
    %v3550 = vshrl.u32 %v3038, 15
    %v3551 = vshrl.u32 %v3039, 15
    %v3552 = vshrl.u32 %v3040, 15
    %v3553 = vshrl.u32 %v3041, 15
    %v3554 = vshrl.u32 %v3042, 15
    %v3555 = vshrl.u32 %v3043, 15
    %v3556 = vshrl.u32 %v3044, 15
    %v3557 = vshrl.u32 %v3045, 15
    %v3558 = vshrl.u32 %v3046, 15
    %v3559 = vshrl.u32 %v3047, 15
    %v3560 = vshrl.u32 %v3048, 15
    %v3561 = vshrl.u32 %v3049, 15
    %v3562 = vshrl.u32 %v3050, 15
    %v3563 = vshrl.u32 %v3051, 15
    %v3564 = vshrl.u32 %v3052, 15
    %v3565 = vshrl.u32 %v3053, 15
    %v3566 = vshrl.u32 %v3054, 15
    %v3567 = vshrl.u32 %v3055, 15
    %v3568 = vshrl.u32 %v3056, 15
    %v3569 = vshrl.u32 %v3057, 15
    %v3570 = vshrl.u32 %v3058, 15
    %v3571 = vshrl.u32 %v3059, 15
    %v3572 = vshrl.u32 %v3060, 15
    %v3573 = vshrl.u32 %v3061, 15
    %v3574 = vshrl.u32 %v3062, 15
    %v3575 = vshrl.u32 %v3063, 15
    %v3576 = vshrl.u32 %v3064, 15
    %v3577 = vshrl.u32 %v3065, 15
    %v3578 = vshrl.u32 %v3066, 15
    %v3579 = vshrl.u32 %v3067, 15
    %v3580 = vshrl.u32 %v3068, 15
    %v3581 = vshrl.u32 %v3069, 15
    %v3582 = vshrl.u32 %v3070, 15
    %v3583 = vshrl.u32 %v3071, 15
    %v3584 = vshrl.u32 %v3072, 15
    %v3585 = vshrl.u32 %v3073, 15
    %v3586 = vshrl.u32 %v3074, 15
    %v3587 = vshrl.u32 %v3075, 15
    %v3588 = vshrl.u32 %v3076, 15
    %v3589 = vshrl.u32 %v3077, 15
    %v3590 = vshrl.u32 %v3078, 15
    %v3591 = vshrl.u32 %v3079, 15
    %v3592 = vshrl.u32 %v3080, 15
    %v3593 = vshrl.u32 %v3081, 15
    %v3594 = vshrl.u32 %v3082, 15
    %v3595 = vshrl.u32 %v3083, 15
    %v3596 = vshrl.u32 %v3084, 15
    %v3597 = vshrl.u32 %v3085, 15
    %v3598 = vshrl.u32 %v3086, 15
    %v3599 = vshrl.u32 %v3087, 15
    %v3600 = vshrl.u32 %v3088, 15
    %v3601 = vshrl.u32 %v3089, 15
    %v3602 = vshrl.u32 %v3090, 15
    %v3603 = vshrl.u32 %v3091, 15
    %v3604 = vshrl.u32 %v3092, 15
    %v3605 = vshrl.u32 %v3093, 15
    %v3606 = vshrl.u32 %v3094, 15
    %v3607 = vshrl.u32 %v3095, 15
    %v3608 = vshrl.u32 %v3096, 15
    %v3609 = vshrl.u32 %v3097, 15
    %v3610 = vshrl.u32 %v3098, 15
    %v3611 = vshrl.u32 %v3099, 15
    %v3612 = vshrl.u32 %v3100, 15
    %v3613 = vshrl.u32 %v3101, 15
    %v3614 = vshrl.u32 %v3102, 15
    %v3615 = vshrl.u32 %v3103, 15
    %v3616 = vshrl.u32 %v3104, 15
    %v3617 = vshrl.u32 %v3105, 15
    %v3618 = vshrl.u32 %v3106, 15
    %v3619 = vshrl.u32 %v3107, 15
    %v3620 = vshrl.u32 %v3108, 15
    %v3621 = vshrl.u32 %v3109, 15
    %v3622 = vshrl.u32 %v3110, 15
    %v3623 = vshrl.u32 %v3111, 15
    %v3624 = vshrl.u32 %v3112, 15
    %v3625 = vshrl.u32 %v3113, 15
    %v3626 = vshrl.u32 %v3114, 15
    %v3627 = vshrl.u32 %v3115, 15
    %v3628 = vshrl.u32 %v3116, 15
    %v3629 = vshrl.u32 %v3117, 15
    %v3630 = vshrl.u32 %v3118, 15
    %v3631 = vshrl.u32 %v3119, 15
    %v3632 = vshrl.u32 %v3120, 15
    %v3633 = vshrl.u32 %v3121, 15
    %v3634 = vshrl.u32 %v3122, 15
    %v3635 = vshrl.u32 %v3123, 15
    %v3636 = vshrl.u32 %v3124, 15
    %v3637 = vshrl.u32 %v3125, 15
    %v3638 = vshrl.u32 %v3126, 15
    %v3639 = vshrl.u32 %v3127, 15
    %v3640 = vshrl.u32 %v3128, 15
    %v3641 = vshrl.u32 %v3129, 15
    %v3642 = vshrl.u32 %v3130, 15
    %v3643 = vshrl.u32 %v3131, 15
    %v3644 = vshrl.u32 %v3132, 15
    %v3645 = vshrl.u32 %v3133, 15
    %v3646 = vshrl.u32 %v3134, 15
    %v3647 = vshrl.u32 %v3135, 15
    %v3648 = vshrl.u32 %v3136, 15
    %v3649 = vshrl.u32 %v3137, 15
    %v3650 = vshrl.u32 %v3138, 15
    %v3651 = vshrl.u32 %v3139, 15
    %v3652 = vshrl.u32 %v3140, 15
    %v3653 = vshrl.u32 %v3141, 15
    %v3654 = vshrl.u32 %v3142, 15
    %v3655 = vshrl.u32 %v3143, 15
    %v3656 = vshrl.u32 %v3144, 15
    %v3657 = vshrl.u32 %v3145, 15
    %v3658 = vshrl.u32 %v3146, 15
    %v3659 = vshrl.u32 %v3147, 15
    %v3660 = vshrl.u32 %v3148, 15
    %v3661 = vshrl.u32 %v3149, 15
    %v3662 = vshrl.u32 %v3150, 15
    %v3663 = vshrl.u32 %v3151, 15
    %v3664 = vshrl.u32 %v3152, 15
    %v3665 = vshrl.u32 %v3153, 15
    %v3666 = vshrl.u32 %v3154, 15
    %v3667 = vshrl.u32 %v3155, 15
    %v3668 = vshrl.u32 %v3156, 15
    %v3669 = vshrl.u32 %v3157, 15
    %v3670 = vshrl.u32 %v3158, 15
    %v3671 = vshrl.u32 %v3159, 15
    %v3672 = vshrl.u32 %v3160, 15
    %v3673 = vshrl.u32 %v3161, 15
    %v3674 = vshrl.u32 %v3162, 15
    %v3675 = vshrl.u32 %v3163, 15
    %v3676 = vshrl.u32 %v3164, 15
    %v3677 = vshrl.u32 %v3165, 15
    %v3678 = vshrl.u32 %v3166, 15
    %v3679 = vshrl.u32 %v3167, 15
    %v3680 = vshrl.u32 %v3168, 15
    %v3681 = vshrl.u32 %v3169, 15
    %v3682 = vshrl.u32 %v3170, 15
    %v3683 = vshrl.u32 %v3171, 15
    %v3684 = vshrl.u32 %v3172, 15
    %v3685 = vshrl.u32 %v3173, 15
    %v3686 = vshrl.u32 %v3174, 15
    %v3687 = vshrl.u32 %v3175, 15
    %v3688 = vshrl.u32 %v3176, 15
    %v3689 = vshrl.u32 %v3177, 15
    %v3690 = vshrl.u32 %v3178, 15
    %v3691 = vshrl.u32 %v3179, 15
    %v3692 = vshrl.u32 %v3180, 15
    %v3693 = vshrl.u32 %v3181, 15
    %v3694 = vshrl.u32 %v3182, 15
    %v3695 = vshrl.u32 %v3183, 15
    %v3696 = vshrl.u32 %v3184, 15
    %v3697 = vshrl.u32 %v3185, 15
    %v3698 = vshrl.u32 %v3186, 15
    %v3699 = vshrl.u32 %v3187, 15
    %v3700 = vshrl.u32 %v3188, 15
    %v3701 = vshrl.u32 %v3189, 15
    %v3702 = vshrl.u32 %v3190, 15
    %v3703 = vshrl.u32 %v3191, 15
    %v3704 = vshrl.u32 %v3192, 15
    %v3705 = vshrl.u32 %v3193, 15
    %v3706 = vshrl.u32 %v3194, 15
    %v3707 = vshrl.u32 %v3195, 15
    %v3708 = vshrl.u32 %v3196, 15
    %v3709 = vshrl.u32 %v3197, 15
    %v3710 = vshrl.u32 %v3198, 15
    %v3711 = vshrl.u32 %v3199, 15
    %v3712 = vshrl.u32 %v3200, 15
    %v3713 = vshrl.u32 %v3201, 15
    %v3714 = vshrl.u32 %v3202, 15
    %v3715 = vshrl.u32 %v3203, 15
    %v3716 = vshrl.u32 %v3204, 15
    %v3717 = vshrl.u32 %v3205, 15
    %v3718 = vshrl.u32 %v3206, 15
    %v3719 = vshrl.u32 %v3207, 15
    %v3720 = vshrl.u32 %v3208, 15
    %v3721 = vshrl.u32 %v3209, 15
    %v3722 = vshrl.u32 %v3210, 15
    %v3723 = vshrl.u32 %v3211, 15
    %v3724 = vshrl.u32 %v3212, 15
    %v3725 = vshrl.u32 %v3213, 15
    %v3726 = vshrl.u32 %v3214, 15
    %v3727 = vshrl.u32 %v3215, 15
    %v3728 = vshrl.u32 %v3216, 15
    %v3729 = vshrl.u32 %v3217, 15
    %v3730 = vshrl.u32 %v3218, 15
    %v3731 = vshrl.u32 %v3219, 15
    %v3732 = vshrl.u32 %v3220, 15
    %v3733 = vshrl.u32 %v3221, 15
    %v3734 = vshrl.u32 %v3222, 15
    %v3735 = vshrl.u32 %v3223, 15
    %v3736 = vshrl.u32 %v3224, 15
    %v3737 = vshrl.u32 %v3225, 15
    %v3738 = vshrl.u32 %v3226, 15
    %v3739 = vshrl.u32 %v3227, 15
    %v3740 = vshrl.u32 %v3228, 15
    %v3741 = vshrl.u32 %v3229, 15
    %v3742 = vshrl.u32 %v3230, 15
    %v3743 = vshrl.u32 %v3231, 15
    %v3744 = vshrl.u32 %v3232, 15
    %v3745 = vshrl.u32 %v3233, 15
    %v3746 = vshrl.u32 %v3234, 15
    %v3747 = vshrl.u32 %v3235, 15
    %v3748 = vshrl.u32 %v3236, 15
    %v3749 = vshrl.u32 %v3237, 15
    %v3750 = vshrl.u32 %v3238, 15
    %v3751 = vshrl.u32 %v3239, 15
    %v3752 = vshrl.u32 %v3240, 15
    %v3753 = vshrl.u32 %v3241, 15
    %v3754 = vshrl.u32 %v3242, 15
    %v3755 = vshrl.u32 %v3243, 15
    %v3756 = vshrl.u32 %v3244, 15
    %v3757 = vshrl.u32 %v3245, 15
    %v3758 = vshrl.u32 %v3246, 15
    %v3759 = vshrl.u32 %v3247, 15
    %v3760 = vshrl.u32 %v3248, 15
    %v3761 = vshrl.u32 %v3249, 15
    %v3762 = vshrl.u32 %v3250, 15
    %v3763 = vshrl.u32 %v3251, 15
    %v3764 = vshrl.u32 %v3252, 15
    %v3765 = vshrl.u32 %v3253, 15
    %v3766 = vshrl.u32 %v3254, 15
    %v3767 = vshrl.u32 %v3255, 15
    %v3768 = vshrl.u32 %v3256, 15
    %v3769 = vshrl.u32 %v3257, 15
    %v3770 = vshrl.u32 %v3258, 15
    %v3771 = vshrl.u32 %v3259, 15
    %v3772 = vshrl.u32 %v3260, 15
    %v3773 = vshrl.u32 %v3261, 15
    %v3774 = vshrl.u32 %v3262, 15
    %v3775 = vshrl.u32 %v3263, 15
    %v3776 = vshrl.u32 %v3264, 15
    %v3777 = vshrl.u32 %v3265, 15
    %v3778 = vshrl.u32 %v3266, 15
    %v3779 = vshrl.u32 %v3267, 15
    %v3780 = vshrl.u32 %v3268, 15
    %v3781 = vshrl.u32 %v3269, 15
    %v3782 = vshrl.u32 %v3270, 15
    %v3783 = vshrl.u32 %v3271, 15
    %v3784 = vshrl.u32 %v3272, 15
    %v3785 = vshrl.u32 %v3273, 15
    %v3786 = vshrl.u32 %v3274, 15
    %v3787 = vshrl.u32 %v3275, 15
    %v3788 = vshrl.u32 %v3276, 15
    %v3789 = vshrl.u32 %v3277, 15
    %v3790 = vshrl.u32 %v3278, 15
    %v3791 = vshrl.u32 %v3279, 15
    %v3792 = vshrl.u32 %v3280, 15
    %v3793 = vshrl.u32 %v3281, 15
    %v3794 = vshrl.u32 %v3282, 15
    %v3795 = vshrl.u32 %v3283, 15
    %v3796 = vshrl.u32 %v3284, 15
    %v3797 = vshrl.u32 %v3285, 15
    %v3798 = vshrl.u32 %v3286, 15
    %v3799 = vshrl.u32 %v3287, 15
    %v3800 = vshrl.u32 %v3288, 15
    %v3801 = vshrl.u32 %v3289, 15
    %v3802 = vshrl.u32 %v3290, 15
    %v3803 = vshrl.u32 %v3291, 15
    %v3804 = vshrl.u32 %v3292, 15
    %v3805 = vshrl.u32 %v3293, 15
    %v3806 = vshrl.u32 %v3294, 15
    %v3807 = vshrl.u32 %v3295, 15
    %v3808 = vshrl.u32 %v3296, 15
    %v3809 = vshrl.u32 %v3297, 15
    %v3810 = vshrl.u32 %v3298, 15
    %v3811 = vshrl.u32 %v3299, 15
    %v3812 = vshrl.u32 %v3300, 15
    %v3813 = vshrl.u32 %v3301, 15
    %v3814 = vshrl.u32 %v3302, 15
    %v3815 = vshrl.u32 %v3303, 15
    %v3816 = vxor.u32 %v2792, %v3304
    %v3817 = vxor.u32 %v2793, %v3305
    %v3818 = vxor.u32 %v2794, %v3306
    %v3819 = vxor.u32 %v2795, %v3307
    %v3820 = vxor.u32 %v2796, %v3308
    %v3821 = vxor.u32 %v2797, %v3309
    %v3822 = vxor.u32 %v2798, %v3310
    %v3823 = vxor.u32 %v2799, %v3311
    %v3824 = vxor.u32 %v2800, %v3312
    %v3825 = vxor.u32 %v2801, %v3313
    %v3826 = vxor.u32 %v2802, %v3314
    %v3827 = vxor.u32 %v2803, %v3315
    %v3828 = vxor.u32 %v2804, %v3316
    %v3829 = vxor.u32 %v2805, %v3317
    %v3830 = vxor.u32 %v2806, %v3318
    %v3831 = vxor.u32 %v2807, %v3319
    %v3832 = vxor.u32 %v2808, %v3320
    %v3833 = vxor.u32 %v2809, %v3321
    %v3834 = vxor.u32 %v2810, %v3322
    %v3835 = vxor.u32 %v2811, %v3323
    %v3836 = vxor.u32 %v2812, %v3324
    %v3837 = vxor.u32 %v2813, %v3325
    %v3838 = vxor.u32 %v2814, %v3326
    %v3839 = vxor.u32 %v2815, %v3327
    %v3840 = vxor.u32 %v2816, %v3328
    %v3841 = vxor.u32 %v2817, %v3329
    %v3842 = vxor.u32 %v2818, %v3330
    %v3843 = vxor.u32 %v2819, %v3331
    %v3844 = vxor.u32 %v2820, %v3332
    %v3845 = vxor.u32 %v2821, %v3333
    %v3846 = vxor.u32 %v2822, %v3334
    %v3847 = vxor.u32 %v2823, %v3335
    %v3848 = vxor.u32 %v2824, %v3336
    %v3849 = vxor.u32 %v2825, %v3337
    %v3850 = vxor.u32 %v2826, %v3338
    %v3851 = vxor.u32 %v2827, %v3339
    %v3852 = vxor.u32 %v2828, %v3340
    %v3853 = vxor.u32 %v2829, %v3341
    %v3854 = vxor.u32 %v2830, %v3342
    %v3855 = vxor.u32 %v2831, %v3343
    %v3856 = vxor.u32 %v2832, %v3344
    %v3857 = vxor.u32 %v2833, %v3345
    %v3858 = vxor.u32 %v2834, %v3346
    %v3859 = vxor.u32 %v2835, %v3347
    %v3860 = vxor.u32 %v2836, %v3348
    %v3861 = vxor.u32 %v2837, %v3349
    %v3862 = vxor.u32 %v2838, %v3350
    %v3863 = vxor.u32 %v2839, %v3351
    %v3864 = vxor.u32 %v2840, %v3352
    %v3865 = vxor.u32 %v2841, %v3353
    %v3866 = vxor.u32 %v2842, %v3354
    %v3867 = vxor.u32 %v2843, %v3355
    %v3868 = vxor.u32 %v2844, %v3356
    %v3869 = vxor.u32 %v2845, %v3357
    %v3870 = vxor.u32 %v2846, %v3358
    %v3871 = vxor.u32 %v2847, %v3359
    %v3872 = vxor.u32 %v2848, %v3360
    %v3873 = vxor.u32 %v2849, %v3361
    %v3874 = vxor.u32 %v2850, %v3362
    %v3875 = vxor.u32 %v2851, %v3363
    %v3876 = vxor.u32 %v2852, %v3364
    %v3877 = vxor.u32 %v2853, %v3365
    %v3878 = vxor.u32 %v2854, %v3366
    %v3879 = vxor.u32 %v2855, %v3367
    %v3880 = vxor.u32 %v2856, %v3368
    %v3881 = vxor.u32 %v2857, %v3369
    %v3882 = vxor.u32 %v2858, %v3370
    %v3883 = vxor.u32 %v2859, %v3371
    %v3884 = vxor.u32 %v2860, %v3372
    %v3885 = vxor.u32 %v2861, %v3373
    %v3886 = vxor.u32 %v2862, %v3374
    %v3887 = vxor.u32 %v2863, %v3375
    %v3888 = vxor.u32 %v2864, %v3376
    %v3889 = vxor.u32 %v2865, %v3377
    %v3890 = vxor.u32 %v2866, %v3378
    %v3891 = vxor.u32 %v2867, %v3379
    %v3892 = vxor.u32 %v2868, %v3380
    %v3893 = vxor.u32 %v2869, %v3381
    %v3894 = vxor.u32 %v2870, %v3382
    %v3895 = vxor.u32 %v2871, %v3383
    %v3896 = vxor.u32 %v2872, %v3384
    %v3897 = vxor.u32 %v2873, %v3385
    %v3898 = vxor.u32 %v2874, %v3386
    %v3899 = vxor.u32 %v2875, %v3387
    %v3900 = vxor.u32 %v2876, %v3388
    %v3901 = vxor.u32 %v2877, %v3389
    %v3902 = vxor.u32 %v2878, %v3390
    %v3903 = vxor.u32 %v2879, %v3391
    %v3904 = vxor.u32 %v2880, %v3392
    %v3905 = vxor.u32 %v2881, %v3393
    %v3906 = vxor.u32 %v2882, %v3394
    %v3907 = vxor.u32 %v2883, %v3395
    %v3908 = vxor.u32 %v2884, %v3396
    %v3909 = vxor.u32 %v2885, %v3397
    %v3910 = vxor.u32 %v2886, %v3398
    %v3911 = vxor.u32 %v2887, %v3399
    %v3912 = vxor.u32 %v2888, %v3400
    %v3913 = vxor.u32 %v2889, %v3401
    %v3914 = vxor.u32 %v2890, %v3402
    %v3915 = vxor.u32 %v2891, %v3403
    %v3916 = vxor.u32 %v2892, %v3404
    %v3917 = vxor.u32 %v2893, %v3405
    %v3918 = vxor.u32 %v2894, %v3406
    %v3919 = vxor.u32 %v2895, %v3407
    %v3920 = vxor.u32 %v2896, %v3408
    %v3921 = vxor.u32 %v2897, %v3409
    %v3922 = vxor.u32 %v2898, %v3410
    %v3923 = vxor.u32 %v2899, %v3411
    %v3924 = vxor.u32 %v2900, %v3412
    %v3925 = vxor.u32 %v2901, %v3413
    %v3926 = vxor.u32 %v2902, %v3414
    %v3927 = vxor.u32 %v2903, %v3415
    %v3928 = vxor.u32 %v2904, %v3416
    %v3929 = vxor.u32 %v2905, %v3417
    %v3930 = vxor.u32 %v2906, %v3418
    %v3931 = vxor.u32 %v2907, %v3419
    %v3932 = vxor.u32 %v2908, %v3420
    %v3933 = vxor.u32 %v2909, %v3421
    %v3934 = vxor.u32 %v2910, %v3422
    %v3935 = vxor.u32 %v2911, %v3423
    %v3936 = vxor.u32 %v2912, %v3424
    %v3937 = vxor.u32 %v2913, %v3425
    %v3938 = vxor.u32 %v2914, %v3426
    %v3939 = vxor.u32 %v2915, %v3427
    %v3940 = vxor.u32 %v2916, %v3428
    %v3941 = vxor.u32 %v2917, %v3429
    %v3942 = vxor.u32 %v2918, %v3430
    %v3943 = vxor.u32 %v2919, %v3431
    %v3944 = vxor.u32 %v2920, %v3432
    %v3945 = vxor.u32 %v2921, %v3433
    %v3946 = vxor.u32 %v2922, %v3434
    %v3947 = vxor.u32 %v2923, %v3435
    %v3948 = vxor.u32 %v2924, %v3436
    %v3949 = vxor.u32 %v2925, %v3437
    %v3950 = vxor.u32 %v2926, %v3438
    %v3951 = vxor.u32 %v2927, %v3439
    %v3952 = vxor.u32 %v2928, %v3440
    %v3953 = vxor.u32 %v2929, %v3441
    %v3954 = vxor.u32 %v2930, %v3442
    %v3955 = vxor.u32 %v2931, %v3443
    %v3956 = vxor.u32 %v2932, %v3444
    %v3957 = vxor.u32 %v2933, %v3445
    %v3958 = vxor.u32 %v2934, %v3446
    %v3959 = vxor.u32 %v2935, %v3447
    %v3960 = vxor.u32 %v2936, %v3448
    %v3961 = vxor.u32 %v2937, %v3449
    %v3962 = vxor.u32 %v2938, %v3450
    %v3963 = vxor.u32 %v2939, %v3451
    %v3964 = vxor.u32 %v2940, %v3452
    %v3965 = vxor.u32 %v2941, %v3453
    %v3966 = vxor.u32 %v2942, %v3454
    %v3967 = vxor.u32 %v2943, %v3455
    %v3968 = vxor.u32 %v2944, %v3456
    %v3969 = vxor.u32 %v2945, %v3457
    %v3970 = vxor.u32 %v2946, %v3458
    %v3971 = vxor.u32 %v2947, %v3459
    %v3972 = vxor.u32 %v2948, %v3460
    %v3973 = vxor.u32 %v2949, %v3461
    %v3974 = vxor.u32 %v2950, %v3462
    %v3975 = vxor.u32 %v2951, %v3463
    %v3976 = vxor.u32 %v2952, %v3464
    %v3977 = vxor.u32 %v2953, %v3465
    %v3978 = vxor.u32 %v2954, %v3466
    %v3979 = vxor.u32 %v2955, %v3467
    %v3980 = vxor.u32 %v2956, %v3468
    %v3981 = vxor.u32 %v2957, %v3469
    %v3982 = vxor.u32 %v2958, %v3470
    %v3983 = vxor.u32 %v2959, %v3471
    %v3984 = vxor.u32 %v2960, %v3472
    %v3985 = vxor.u32 %v2961, %v3473
    %v3986 = vxor.u32 %v2962, %v3474
    %v3987 = vxor.u32 %v2963, %v3475
    %v3988 = vxor.u32 %v2964, %v3476
    %v3989 = vxor.u32 %v2965, %v3477
    %v3990 = vxor.u32 %v2966, %v3478
    %v3991 = vxor.u32 %v2967, %v3479
    %v3992 = vxor.u32 %v2968, %v3480
    %v3993 = vxor.u32 %v2969, %v3481
    %v3994 = vxor.u32 %v2970, %v3482
    %v3995 = vxor.u32 %v2971, %v3483
    %v3996 = vxor.u32 %v2972, %v3484
    %v3997 = vxor.u32 %v2973, %v3485
    %v3998 = vxor.u32 %v2974, %v3486
    %v3999 = vxor.u32 %v2975, %v3487
    %v4000 = vxor.u32 %v2976, %v3488
    %v4001 = vxor.u32 %v2977, %v3489
    %v4002 = vxor.u32 %v2978, %v3490
    %v4003 = vxor.u32 %v2979, %v3491
    %v4004 = vxor.u32 %v2980, %v3492
    %v4005 = vxor.u32 %v2981, %v3493
    %v4006 = vxor.u32 %v2982, %v3494
    %v4007 = vxor.u32 %v2983, %v3495
    %v4008 = vxor.u32 %v2984, %v3496
    %v4009 = vxor.u32 %v2985, %v3497
    %v4010 = vxor.u32 %v2986, %v3498
    %v4011 = vxor.u32 %v2987, %v3499
    %v4012 = vxor.u32 %v2988, %v3500
    %v4013 = vxor.u32 %v2989, %v3501
    %v4014 = vxor.u32 %v2990, %v3502
    %v4015 = vxor.u32 %v2991, %v3503
    %v4016 = vxor.u32 %v2992, %v3504
    %v4017 = vxor.u32 %v2993, %v3505
    %v4018 = vxor.u32 %v2994, %v3506
    %v4019 = vxor.u32 %v2995, %v3507
    %v4020 = vxor.u32 %v2996, %v3508
    %v4021 = vxor.u32 %v2997, %v3509
    %v4022 = vxor.u32 %v2998, %v3510
    %v4023 = vxor.u32 %v2999, %v3511
    %v4024 = vxor.u32 %v3000, %v3512
    %v4025 = vxor.u32 %v3001, %v3513
    %v4026 = vxor.u32 %v3002, %v3514
    %v4027 = vxor.u32 %v3003, %v3515
    %v4028 = vxor.u32 %v3004, %v3516
    %v4029 = vxor.u32 %v3005, %v3517
    %v4030 = vxor.u32 %v3006, %v3518
    %v4031 = vxor.u32 %v3007, %v3519
    %v4032 = vxor.u32 %v3008, %v3520
    %v4033 = vxor.u32 %v3009, %v3521
    %v4034 = vxor.u32 %v3010, %v3522
    %v4035 = vxor.u32 %v3011, %v3523
    %v4036 = vxor.u32 %v3012, %v3524
    %v4037 = vxor.u32 %v3013, %v3525
    %v4038 = vxor.u32 %v3014, %v3526
    %v4039 = vxor.u32 %v3015, %v3527
    %v4040 = vxor.u32 %v3016, %v3528
    %v4041 = vxor.u32 %v3017, %v3529
    %v4042 = vxor.u32 %v3018, %v3530
    %v4043 = vxor.u32 %v3019, %v3531
    %v4044 = vxor.u32 %v3020, %v3532
    %v4045 = vxor.u32 %v3021, %v3533
    %v4046 = vxor.u32 %v3022, %v3534
    %v4047 = vxor.u32 %v3023, %v3535
    %v4048 = vxor.u32 %v3024, %v3536
    %v4049 = vxor.u32 %v3025, %v3537
    %v4050 = vxor.u32 %v3026, %v3538
    %v4051 = vxor.u32 %v3027, %v3539
    %v4052 = vxor.u32 %v3028, %v3540
    %v4053 = vxor.u32 %v3029, %v3541
    %v4054 = vxor.u32 %v3030, %v3542
    %v4055 = vxor.u32 %v3031, %v3543
    %v4056 = vxor.u32 %v3032, %v3544
    %v4057 = vxor.u32 %v3033, %v3545
    %v4058 = vxor.u32 %v3034, %v3546
    %v4059 = vxor.u32 %v3035, %v3547
    %v4060 = vxor.u32 %v3036, %v3548
    %v4061 = vxor.u32 %v3037, %v3549
    %v4062 = vxor.u32 %v3038, %v3550
    %v4063 = vxor.u32 %v3039, %v3551
    %v4064 = vxor.u32 %v3040, %v3552
    %v4065 = vxor.u32 %v3041, %v3553
    %v4066 = vxor.u32 %v3042, %v3554
    %v4067 = vxor.u32 %v3043, %v3555
    %v4068 = vxor.u32 %v3044, %v3556
    %v4069 = vxor.u32 %v3045, %v3557
    %v4070 = vxor.u32 %v3046, %v3558
    %v4071 = vxor.u32 %v3047, %v3559
    %v4072 = vxor.u32 %v3048, %v3560
    %v4073 = vxor.u32 %v3049, %v3561
    %v4074 = vxor.u32 %v3050, %v3562
    %v4075 = vxor.u32 %v3051, %v3563
    %v4076 = vxor.u32 %v3052, %v3564
    %v4077 = vxor.u32 %v3053, %v3565
    %v4078 = vxor.u32 %v3054, %v3566
    %v4079 = vxor.u32 %v3055, %v3567
    %v4080 = vxor.u32 %v3056, %v3568
    %v4081 = vxor.u32 %v3057, %v3569
    %v4082 = vxor.u32 %v3058, %v3570
    %v4083 = vxor.u32 %v3059, %v3571
    %v4084 = vxor.u32 %v3060, %v3572
    %v4085 = vxor.u32 %v3061, %v3573
    %v4086 = vxor.u32 %v3062, %v3574
    %v4087 = vxor.u32 %v3063, %v3575
    %v4088 = vxor.u32 %v3064, %v3576
    %v4089 = vxor.u32 %v3065, %v3577
    %v4090 = vxor.u32 %v3066, %v3578
    %v4091 = vxor.u32 %v3067, %v3579
    %v4092 = vxor.u32 %v3068, %v3580
    %v4093 = vxor.u32 %v3069, %v3581
    %v4094 = vxor.u32 %v3070, %v3582
    %v4095 = vxor.u32 %v3071, %v3583
    %v4096 = vxor.u32 %v3072, %v3584
    %v4097 = vxor.u32 %v3073, %v3585
    %v4098 = vxor.u32 %v3074, %v3586
    %v4099 = vxor.u32 %v3075, %v3587
    %v4100 = vxor.u32 %v3076, %v3588
    %v4101 = vxor.u32 %v3077, %v3589
    %v4102 = vxor.u32 %v3078, %v3590
    %v4103 = vxor.u32 %v3079, %v3591
    %v4104 = vxor.u32 %v3080, %v3592
    %v4105 = vxor.u32 %v3081, %v3593
    %v4106 = vxor.u32 %v3082, %v3594
    %v4107 = vxor.u32 %v3083, %v3595
    %v4108 = vxor.u32 %v3084, %v3596
    %v4109 = vxor.u32 %v3085, %v3597
    %v4110 = vxor.u32 %v3086, %v3598
    %v4111 = vxor.u32 %v3087, %v3599
    %v4112 = vxor.u32 %v3088, %v3600
    %v4113 = vxor.u32 %v3089, %v3601
    %v4114 = vxor.u32 %v3090, %v3602
    %v4115 = vxor.u32 %v3091, %v3603
    %v4116 = vxor.u32 %v3092, %v3604
    %v4117 = vxor.u32 %v3093, %v3605
    %v4118 = vxor.u32 %v3094, %v3606
    %v4119 = vxor.u32 %v3095, %v3607
    %v4120 = vxor.u32 %v3096, %v3608
    %v4121 = vxor.u32 %v3097, %v3609
    %v4122 = vxor.u32 %v3098, %v3610
    %v4123 = vxor.u32 %v3099, %v3611
    %v4124 = vxor.u32 %v3100, %v3612
    %v4125 = vxor.u32 %v3101, %v3613
    %v4126 = vxor.u32 %v3102, %v3614
    %v4127 = vxor.u32 %v3103, %v3615
    %v4128 = vxor.u32 %v3104, %v3616
    %v4129 = vxor.u32 %v3105, %v3617
    %v4130 = vxor.u32 %v3106, %v3618
    %v4131 = vxor.u32 %v3107, %v3619
    %v4132 = vxor.u32 %v3108, %v3620
    %v4133 = vxor.u32 %v3109, %v3621
    %v4134 = vxor.u32 %v3110, %v3622
    %v4135 = vxor.u32 %v3111, %v3623
    %v4136 = vxor.u32 %v3112, %v3624
    %v4137 = vxor.u32 %v3113, %v3625
    %v4138 = vxor.u32 %v3114, %v3626
    %v4139 = vxor.u32 %v3115, %v3627
    %v4140 = vxor.u32 %v3116, %v3628
    %v4141 = vxor.u32 %v3117, %v3629
    %v4142 = vxor.u32 %v3118, %v3630
    %v4143 = vxor.u32 %v3119, %v3631
    %v4144 = vxor.u32 %v3120, %v3632
    %v4145 = vxor.u32 %v3121, %v3633
    %v4146 = vxor.u32 %v3122, %v3634
    %v4147 = vxor.u32 %v3123, %v3635
    %v4148 = vxor.u32 %v3124, %v3636
    %v4149 = vxor.u32 %v3125, %v3637
    %v4150 = vxor.u32 %v3126, %v3638
    %v4151 = vxor.u32 %v3127, %v3639
    %v4152 = vxor.u32 %v3128, %v3640
    %v4153 = vxor.u32 %v3129, %v3641
    %v4154 = vxor.u32 %v3130, %v3642
    %v4155 = vxor.u32 %v3131, %v3643
    %v4156 = vxor.u32 %v3132, %v3644
    %v4157 = vxor.u32 %v3133, %v3645
    %v4158 = vxor.u32 %v3134, %v3646
    %v4159 = vxor.u32 %v3135, %v3647
    %v4160 = vxor.u32 %v3136, %v3648
    %v4161 = vxor.u32 %v3137, %v3649
    %v4162 = vxor.u32 %v3138, %v3650
    %v4163 = vxor.u32 %v3139, %v3651
    %v4164 = vxor.u32 %v3140, %v3652
    %v4165 = vxor.u32 %v3141, %v3653
    %v4166 = vxor.u32 %v3142, %v3654
    %v4167 = vxor.u32 %v3143, %v3655
    %v4168 = vxor.u32 %v3144, %v3656
    %v4169 = vxor.u32 %v3145, %v3657
    %v4170 = vxor.u32 %v3146, %v3658
    %v4171 = vxor.u32 %v3147, %v3659
    %v4172 = vxor.u32 %v3148, %v3660
    %v4173 = vxor.u32 %v3149, %v3661
    %v4174 = vxor.u32 %v3150, %v3662
    %v4175 = vxor.u32 %v3151, %v3663
    %v4176 = vxor.u32 %v3152, %v3664
    %v4177 = vxor.u32 %v3153, %v3665
    %v4178 = vxor.u32 %v3154, %v3666
    %v4179 = vxor.u32 %v3155, %v3667
    %v4180 = vxor.u32 %v3156, %v3668
    %v4181 = vxor.u32 %v3157, %v3669
    %v4182 = vxor.u32 %v3158, %v3670
    %v4183 = vxor.u32 %v3159, %v3671
    %v4184 = vxor.u32 %v3160, %v3672
    %v4185 = vxor.u32 %v3161, %v3673
    %v4186 = vxor.u32 %v3162, %v3674
    %v4187 = vxor.u32 %v3163, %v3675
    %v4188 = vxor.u32 %v3164, %v3676
    %v4189 = vxor.u32 %v3165, %v3677
    %v4190 = vxor.u32 %v3166, %v3678
    %v4191 = vxor.u32 %v3167, %v3679
    %v4192 = vxor.u32 %v3168, %v3680
    %v4193 = vxor.u32 %v3169, %v3681
    %v4194 = vxor.u32 %v3170, %v3682
    %v4195 = vxor.u32 %v3171, %v3683
    %v4196 = vxor.u32 %v3172, %v3684
    %v4197 = vxor.u32 %v3173, %v3685
    %v4198 = vxor.u32 %v3174, %v3686
    %v4199 = vxor.u32 %v3175, %v3687
    %v4200 = vxor.u32 %v3176, %v3688
    %v4201 = vxor.u32 %v3177, %v3689
    %v4202 = vxor.u32 %v3178, %v3690
    %v4203 = vxor.u32 %v3179, %v3691
    %v4204 = vxor.u32 %v3180, %v3692
    %v4205 = vxor.u32 %v3181, %v3693
    %v4206 = vxor.u32 %v3182, %v3694
    %v4207 = vxor.u32 %v3183, %v3695
    %v4208 = vxor.u32 %v3184, %v3696
    %v4209 = vxor.u32 %v3185, %v3697
    %v4210 = vxor.u32 %v3186, %v3698
    %v4211 = vxor.u32 %v3187, %v3699
    %v4212 = vxor.u32 %v3188, %v3700
    %v4213 = vxor.u32 %v3189, %v3701
    %v4214 = vxor.u32 %v3190, %v3702
    %v4215 = vxor.u32 %v3191, %v3703
    %v4216 = vxor.u32 %v3192, %v3704
    %v4217 = vxor.u32 %v3193, %v3705
    %v4218 = vxor.u32 %v3194, %v3706
    %v4219 = vxor.u32 %v3195, %v3707
    %v4220 = vxor.u32 %v3196, %v3708
    %v4221 = vxor.u32 %v3197, %v3709
    %v4222 = vxor.u32 %v3198, %v3710
    %v4223 = vxor.u32 %v3199, %v3711
    %v4224 = vxor.u32 %v3200, %v3712
    %v4225 = vxor.u32 %v3201, %v3713
    %v4226 = vxor.u32 %v3202, %v3714
    %v4227 = vxor.u32 %v3203, %v3715
    %v4228 = vxor.u32 %v3204, %v3716
    %v4229 = vxor.u32 %v3205, %v3717
    %v4230 = vxor.u32 %v3206, %v3718
    %v4231 = vxor.u32 %v3207, %v3719
    %v4232 = vxor.u32 %v3208, %v3720
    %v4233 = vxor.u32 %v3209, %v3721
    %v4234 = vxor.u32 %v3210, %v3722
    %v4235 = vxor.u32 %v3211, %v3723
    %v4236 = vxor.u32 %v3212, %v3724
    %v4237 = vxor.u32 %v3213, %v3725
    %v4238 = vxor.u32 %v3214, %v3726
    %v4239 = vxor.u32 %v3215, %v3727
    %v4240 = vxor.u32 %v3216, %v3728
    %v4241 = vxor.u32 %v3217, %v3729
    %v4242 = vxor.u32 %v3218, %v3730
    %v4243 = vxor.u32 %v3219, %v3731
    %v4244 = vxor.u32 %v3220, %v3732
    %v4245 = vxor.u32 %v3221, %v3733
    %v4246 = vxor.u32 %v3222, %v3734
    %v4247 = vxor.u32 %v3223, %v3735
    %v4248 = vxor.u32 %v3224, %v3736
    %v4249 = vxor.u32 %v3225, %v3737
    %v4250 = vxor.u32 %v3226, %v3738
    %v4251 = vxor.u32 %v3227, %v3739
    %v4252 = vxor.u32 %v3228, %v3740
    %v4253 = vxor.u32 %v3229, %v3741
    %v4254 = vxor.u32 %v3230, %v3742
    %v4255 = vxor.u32 %v3231, %v3743
    %v4256 = vxor.u32 %v3232, %v3744
    %v4257 = vxor.u32 %v3233, %v3745
    %v4258 = vxor.u32 %v3234, %v3746
    %v4259 = vxor.u32 %v3235, %v3747
    %v4260 = vxor.u32 %v3236, %v3748
    %v4261 = vxor.u32 %v3237, %v3749
    %v4262 = vxor.u32 %v3238, %v3750
    %v4263 = vxor.u32 %v3239, %v3751
    %v4264 = vxor.u32 %v3240, %v3752
    %v4265 = vxor.u32 %v3241, %v3753
    %v4266 = vxor.u32 %v3242, %v3754
    %v4267 = vxor.u32 %v3243, %v3755
    %v4268 = vxor.u32 %v3244, %v3756
    %v4269 = vxor.u32 %v3245, %v3757
    %v4270 = vxor.u32 %v3246, %v3758
    %v4271 = vxor.u32 %v3247, %v3759
    %v4272 = vxor.u32 %v3248, %v3760
    %v4273 = vxor.u32 %v3249, %v3761
    %v4274 = vxor.u32 %v3250, %v3762
    %v4275 = vxor.u32 %v3251, %v3763
    %v4276 = vxor.u32 %v3252, %v3764
    %v4277 = vxor.u32 %v3253, %v3765
    %v4278 = vxor.u32 %v3254, %v3766
    %v4279 = vxor.u32 %v3255, %v3767
    %v4280 = vxor.u32 %v3256, %v3768
    %v4281 = vxor.u32 %v3257, %v3769
    %v4282 = vxor.u32 %v3258, %v3770
    %v4283 = vxor.u32 %v3259, %v3771
    %v4284 = vxor.u32 %v3260, %v3772
    %v4285 = vxor.u32 %v3261, %v3773
    %v4286 = vxor.u32 %v3262, %v3774
    %v4287 = vxor.u32 %v3263, %v3775
    %v4288 = vxor.u32 %v3264, %v3776
    %v4289 = vxor.u32 %v3265, %v3777
    %v4290 = vxor.u32 %v3266, %v3778
    %v4291 = vxor.u32 %v3267, %v3779
    %v4292 = vxor.u32 %v3268, %v3780
    %v4293 = vxor.u32 %v3269, %v3781
    %v4294 = vxor.u32 %v3270, %v3782
    %v4295 = vxor.u32 %v3271, %v3783
    %v4296 = vxor.u32 %v3272, %v3784
    %v4297 = vxor.u32 %v3273, %v3785
    %v4298 = vxor.u32 %v3274, %v3786
    %v4299 = vxor.u32 %v3275, %v3787
    %v4300 = vxor.u32 %v3276, %v3788
    %v4301 = vxor.u32 %v3277, %v3789
    %v4302 = vxor.u32 %v3278, %v3790
    %v4303 = vxor.u32 %v3279, %v3791
    %v4304 = vxor.u32 %v3280, %v3792
    %v4305 = vxor.u32 %v3281, %v3793
    %v4306 = vxor.u32 %v3282, %v3794
    %v4307 = vxor.u32 %v3283, %v3795
    %v4308 = vxor.u32 %v3284, %v3796
    %v4309 = vxor.u32 %v3285, %v3797
    %v4310 = vxor.u32 %v3286, %v3798
    %v4311 = vxor.u32 %v3287, %v3799
    %v4312 = vxor.u32 %v3288, %v3800
    %v4313 = vxor.u32 %v3289, %v3801
    %v4314 = vxor.u32 %v3290, %v3802
    %v4315 = vxor.u32 %v3291, %v3803
    %v4316 = vxor.u32 %v3292, %v3804
    %v4317 = vxor.u32 %v3293, %v3805
    %v4318 = vxor.u32 %v3294, %v3806
    %v4319 = vxor.u32 %v3295, %v3807
    %v4320 = vxor.u32 %v3296, %v3808
    %v4321 = vxor.u32 %v3297, %v3809
    %v4322 = vxor.u32 %v3298, %v3810
    %v4323 = vxor.u32 %v3299, %v3811
    %v4324 = vxor.u32 %v3300, %v3812
    %v4325 = vxor.u32 %v3301, %v3813
    %v4326 = vxor.u32 %v3302, %v3814
    %v4327 = vxor.u32 %v3303, %v3815
    %v4328 = vmul.u32 %v3816, 2221713035
    %v4329 = vmul.u32 %v3817, 2221713035
    %v4330 = vmul.u32 %v3818, 2221713035
    %v4331 = vmul.u32 %v3819, 2221713035
    %v4332 = vmul.u32 %v3820, 2221713035
    %v4333 = vmul.u32 %v3821, 2221713035
    %v4334 = vmul.u32 %v3822, 2221713035
    %v4335 = vmul.u32 %v3823, 2221713035
    %v4336 = vmul.u32 %v3824, 2221713035
    %v4337 = vmul.u32 %v3825, 2221713035
    %v4338 = vmul.u32 %v3826, 2221713035
    %v4339 = vmul.u32 %v3827, 2221713035
    %v4340 = vmul.u32 %v3828, 2221713035
    %v4341 = vmul.u32 %v3829, 2221713035
    %v4342 = vmul.u32 %v3830, 2221713035
    %v4343 = vmul.u32 %v3831, 2221713035
    %v4344 = vmul.u32 %v3832, 2221713035
    %v4345 = vmul.u32 %v3833, 2221713035
    %v4346 = vmul.u32 %v3834, 2221713035
    %v4347 = vmul.u32 %v3835, 2221713035
    %v4348 = vmul.u32 %v3836, 2221713035
    %v4349 = vmul.u32 %v3837, 2221713035
    %v4350 = vmul.u32 %v3838, 2221713035
    %v4351 = vmul.u32 %v3839, 2221713035
    %v4352 = vmul.u32 %v3840, 2221713035
    %v4353 = vmul.u32 %v3841, 2221713035
    %v4354 = vmul.u32 %v3842, 2221713035
    %v4355 = vmul.u32 %v3843, 2221713035
    %v4356 = vmul.u32 %v3844, 2221713035
    %v4357 = vmul.u32 %v3845, 2221713035
    %v4358 = vmul.u32 %v3846, 2221713035
    %v4359 = vmul.u32 %v3847, 2221713035
    %v4360 = vmul.u32 %v3848, 2221713035
    %v4361 = vmul.u32 %v3849, 2221713035
    %v4362 = vmul.u32 %v3850, 2221713035
    %v4363 = vmul.u32 %v3851, 2221713035
    %v4364 = vmul.u32 %v3852, 2221713035
    %v4365 = vmul.u32 %v3853, 2221713035
    %v4366 = vmul.u32 %v3854, 2221713035
    %v4367 = vmul.u32 %v3855, 2221713035
    %v4368 = vmul.u32 %v3856, 2221713035
    %v4369 = vmul.u32 %v3857, 2221713035
    %v4370 = vmul.u32 %v3858, 2221713035
    %v4371 = vmul.u32 %v3859, 2221713035
    %v4372 = vmul.u32 %v3860, 2221713035
    %v4373 = vmul.u32 %v3861, 2221713035
    %v4374 = vmul.u32 %v3862, 2221713035
    %v4375 = vmul.u32 %v3863, 2221713035
    %v4376 = vmul.u32 %v3864, 2221713035
    %v4377 = vmul.u32 %v3865, 2221713035
    %v4378 = vmul.u32 %v3866, 2221713035
    %v4379 = vmul.u32 %v3867, 2221713035
    %v4380 = vmul.u32 %v3868, 2221713035
    %v4381 = vmul.u32 %v3869, 2221713035
    %v4382 = vmul.u32 %v3870, 2221713035
    %v4383 = vmul.u32 %v3871, 2221713035
    %v4384 = vmul.u32 %v3872, 2221713035
    %v4385 = vmul.u32 %v3873, 2221713035
    %v4386 = vmul.u32 %v3874, 2221713035
    %v4387 = vmul.u32 %v3875, 2221713035
    %v4388 = vmul.u32 %v3876, 2221713035
    %v4389 = vmul.u32 %v3877, 2221713035
    %v4390 = vmul.u32 %v3878, 2221713035
    %v4391 = vmul.u32 %v3879, 2221713035
    %v4392 = vmul.u32 %v3880, 2221713035
    %v4393 = vmul.u32 %v3881, 2221713035
    %v4394 = vmul.u32 %v3882, 2221713035
    %v4395 = vmul.u32 %v3883, 2221713035
    %v4396 = vmul.u32 %v3884, 2221713035
    %v4397 = vmul.u32 %v3885, 2221713035
    %v4398 = vmul.u32 %v3886, 2221713035
    %v4399 = vmul.u32 %v3887, 2221713035
    %v4400 = vmul.u32 %v3888, 2221713035
    %v4401 = vmul.u32 %v3889, 2221713035
    %v4402 = vmul.u32 %v3890, 2221713035
    %v4403 = vmul.u32 %v3891, 2221713035
    %v4404 = vmul.u32 %v3892, 2221713035
    %v4405 = vmul.u32 %v3893, 2221713035
    %v4406 = vmul.u32 %v3894, 2221713035
    %v4407 = vmul.u32 %v3895, 2221713035
    %v4408 = vmul.u32 %v3896, 2221713035
    %v4409 = vmul.u32 %v3897, 2221713035
    %v4410 = vmul.u32 %v3898, 2221713035
    %v4411 = vmul.u32 %v3899, 2221713035
    %v4412 = vmul.u32 %v3900, 2221713035
    %v4413 = vmul.u32 %v3901, 2221713035
    %v4414 = vmul.u32 %v3902, 2221713035
    %v4415 = vmul.u32 %v3903, 2221713035
    %v4416 = vmul.u32 %v3904, 2221713035
    %v4417 = vmul.u32 %v3905, 2221713035
    %v4418 = vmul.u32 %v3906, 2221713035
    %v4419 = vmul.u32 %v3907, 2221713035
    %v4420 = vmul.u32 %v3908, 2221713035
    %v4421 = vmul.u32 %v3909, 2221713035
    %v4422 = vmul.u32 %v3910, 2221713035
    %v4423 = vmul.u32 %v3911, 2221713035
    %v4424 = vmul.u32 %v3912, 2221713035
    %v4425 = vmul.u32 %v3913, 2221713035
    %v4426 = vmul.u32 %v3914, 2221713035
    %v4427 = vmul.u32 %v3915, 2221713035
    %v4428 = vmul.u32 %v3916, 2221713035
    %v4429 = vmul.u32 %v3917, 2221713035
    %v4430 = vmul.u32 %v3918, 2221713035
    %v4431 = vmul.u32 %v3919, 2221713035
    %v4432 = vmul.u32 %v3920, 2221713035
    %v4433 = vmul.u32 %v3921, 2221713035
    %v4434 = vmul.u32 %v3922, 2221713035
    %v4435 = vmul.u32 %v3923, 2221713035
    %v4436 = vmul.u32 %v3924, 2221713035
    %v4437 = vmul.u32 %v3925, 2221713035
    %v4438 = vmul.u32 %v3926, 2221713035
    %v4439 = vmul.u32 %v3927, 2221713035
    %v4440 = vmul.u32 %v3928, 2221713035
    %v4441 = vmul.u32 %v3929, 2221713035
    %v4442 = vmul.u32 %v3930, 2221713035
    %v4443 = vmul.u32 %v3931, 2221713035
    %v4444 = vmul.u32 %v3932, 2221713035
    %v4445 = vmul.u32 %v3933, 2221713035
    %v4446 = vmul.u32 %v3934, 2221713035
    %v4447 = vmul.u32 %v3935, 2221713035
    %v4448 = vmul.u32 %v3936, 2221713035
    %v4449 = vmul.u32 %v3937, 2221713035
    %v4450 = vmul.u32 %v3938, 2221713035
    %v4451 = vmul.u32 %v3939, 2221713035
    %v4452 = vmul.u32 %v3940, 2221713035
    %v4453 = vmul.u32 %v3941, 2221713035
    %v4454 = vmul.u32 %v3942, 2221713035
    %v4455 = vmul.u32 %v3943, 2221713035
    %v4456 = vmul.u32 %v3944, 2221713035
    %v4457 = vmul.u32 %v3945, 2221713035
    %v4458 = vmul.u32 %v3946, 2221713035
    %v4459 = vmul.u32 %v3947, 2221713035
    %v4460 = vmul.u32 %v3948, 2221713035
    %v4461 = vmul.u32 %v3949, 2221713035
    %v4462 = vmul.u32 %v3950, 2221713035
    %v4463 = vmul.u32 %v3951, 2221713035
    %v4464 = vmul.u32 %v3952, 2221713035
    %v4465 = vmul.u32 %v3953, 2221713035
    %v4466 = vmul.u32 %v3954, 2221713035
    %v4467 = vmul.u32 %v3955, 2221713035
    %v4468 = vmul.u32 %v3956, 2221713035
    %v4469 = vmul.u32 %v3957, 2221713035
    %v4470 = vmul.u32 %v3958, 2221713035
    %v4471 = vmul.u32 %v3959, 2221713035
    %v4472 = vmul.u32 %v3960, 2221713035
    %v4473 = vmul.u32 %v3961, 2221713035
    %v4474 = vmul.u32 %v3962, 2221713035
    %v4475 = vmul.u32 %v3963, 2221713035
    %v4476 = vmul.u32 %v3964, 2221713035
    %v4477 = vmul.u32 %v3965, 2221713035
    %v4478 = vmul.u32 %v3966, 2221713035
    %v4479 = vmul.u32 %v3967, 2221713035
    %v4480 = vmul.u32 %v3968, 2221713035
    %v4481 = vmul.u32 %v3969, 2221713035
    %v4482 = vmul.u32 %v3970, 2221713035
    %v4483 = vmul.u32 %v3971, 2221713035
    %v4484 = vmul.u32 %v3972, 2221713035
    %v4485 = vmul.u32 %v3973, 2221713035
    %v4486 = vmul.u32 %v3974, 2221713035
    %v4487 = vmul.u32 %v3975, 2221713035
    %v4488 = vmul.u32 %v3976, 2221713035
    %v4489 = vmul.u32 %v3977, 2221713035
    %v4490 = vmul.u32 %v3978, 2221713035
    %v4491 = vmul.u32 %v3979, 2221713035
    %v4492 = vmul.u32 %v3980, 2221713035
    %v4493 = vmul.u32 %v3981, 2221713035
    %v4494 = vmul.u32 %v3982, 2221713035
    %v4495 = vmul.u32 %v3983, 2221713035
    %v4496 = vmul.u32 %v3984, 2221713035
    %v4497 = vmul.u32 %v3985, 2221713035
    %v4498 = vmul.u32 %v3986, 2221713035
    %v4499 = vmul.u32 %v3987, 2221713035
    %v4500 = vmul.u32 %v3988, 2221713035
    %v4501 = vmul.u32 %v3989, 2221713035
    %v4502 = vmul.u32 %v3990, 2221713035
    %v4503 = vmul.u32 %v3991, 2221713035
    %v4504 = vmul.u32 %v3992, 2221713035
    %v4505 = vmul.u32 %v3993, 2221713035
    %v4506 = vmul.u32 %v3994, 2221713035
    %v4507 = vmul.u32 %v3995, 2221713035
    %v4508 = vmul.u32 %v3996, 2221713035
    %v4509 = vmul.u32 %v3997, 2221713035
    %v4510 = vmul.u32 %v3998, 2221713035
    %v4511 = vmul.u32 %v3999, 2221713035
    %v4512 = vmul.u32 %v4000, 2221713035
    %v4513 = vmul.u32 %v4001, 2221713035
    %v4514 = vmul.u32 %v4002, 2221713035
    %v4515 = vmul.u32 %v4003, 2221713035
    %v4516 = vmul.u32 %v4004, 2221713035
    %v4517 = vmul.u32 %v4005, 2221713035
    %v4518 = vmul.u32 %v4006, 2221713035
    %v4519 = vmul.u32 %v4007, 2221713035
    %v4520 = vmul.u32 %v4008, 2221713035
    %v4521 = vmul.u32 %v4009, 2221713035
    %v4522 = vmul.u32 %v4010, 2221713035
    %v4523 = vmul.u32 %v4011, 2221713035
    %v4524 = vmul.u32 %v4012, 2221713035
    %v4525 = vmul.u32 %v4013, 2221713035
    %v4526 = vmul.u32 %v4014, 2221713035
    %v4527 = vmul.u32 %v4015, 2221713035
    %v4528 = vmul.u32 %v4016, 2221713035
    %v4529 = vmul.u32 %v4017, 2221713035
    %v4530 = vmul.u32 %v4018, 2221713035
    %v4531 = vmul.u32 %v4019, 2221713035
    %v4532 = vmul.u32 %v4020, 2221713035
    %v4533 = vmul.u32 %v4021, 2221713035
    %v4534 = vmul.u32 %v4022, 2221713035
    %v4535 = vmul.u32 %v4023, 2221713035
    %v4536 = vmul.u32 %v4024, 2221713035
    %v4537 = vmul.u32 %v4025, 2221713035
    %v4538 = vmul.u32 %v4026, 2221713035
    %v4539 = vmul.u32 %v4027, 2221713035
    %v4540 = vmul.u32 %v4028, 2221713035
    %v4541 = vmul.u32 %v4029, 2221713035
    %v4542 = vmul.u32 %v4030, 2221713035
    %v4543 = vmul.u32 %v4031, 2221713035
    %v4544 = vmul.u32 %v4032, 2221713035
    %v4545 = vmul.u32 %v4033, 2221713035
    %v4546 = vmul.u32 %v4034, 2221713035
    %v4547 = vmul.u32 %v4035, 2221713035
    %v4548 = vmul.u32 %v4036, 2221713035
    %v4549 = vmul.u32 %v4037, 2221713035
    %v4550 = vmul.u32 %v4038, 2221713035
    %v4551 = vmul.u32 %v4039, 2221713035
    %v4552 = vmul.u32 %v4040, 2221713035
    %v4553 = vmul.u32 %v4041, 2221713035
    %v4554 = vmul.u32 %v4042, 2221713035
    %v4555 = vmul.u32 %v4043, 2221713035
    %v4556 = vmul.u32 %v4044, 2221713035
    %v4557 = vmul.u32 %v4045, 2221713035
    %v4558 = vmul.u32 %v4046, 2221713035
    %v4559 = vmul.u32 %v4047, 2221713035
    %v4560 = vmul.u32 %v4048, 2221713035
    %v4561 = vmul.u32 %v4049, 2221713035
    %v4562 = vmul.u32 %v4050, 2221713035
    %v4563 = vmul.u32 %v4051, 2221713035
    %v4564 = vmul.u32 %v4052, 2221713035
    %v4565 = vmul.u32 %v4053, 2221713035
    %v4566 = vmul.u32 %v4054, 2221713035
    %v4567 = vmul.u32 %v4055, 2221713035
    %v4568 = vmul.u32 %v4056, 2221713035
    %v4569 = vmul.u32 %v4057, 2221713035
    %v4570 = vmul.u32 %v4058, 2221713035
    %v4571 = vmul.u32 %v4059, 2221713035
    %v4572 = vmul.u32 %v4060, 2221713035
    %v4573 = vmul.u32 %v4061, 2221713035
    %v4574 = vmul.u32 %v4062, 2221713035
    %v4575 = vmul.u32 %v4063, 2221713035
    %v4576 = vmul.u32 %v4064, 2221713035
    %v4577 = vmul.u32 %v4065, 2221713035
    %v4578 = vmul.u32 %v4066, 2221713035
    %v4579 = vmul.u32 %v4067, 2221713035
    %v4580 = vmul.u32 %v4068, 2221713035
    %v4581 = vmul.u32 %v4069, 2221713035
    %v4582 = vmul.u32 %v4070, 2221713035
    %v4583 = vmul.u32 %v4071, 2221713035
    %v4584 = vmul.u32 %v4072, 2221713035
    %v4585 = vmul.u32 %v4073, 2221713035
    %v4586 = vmul.u32 %v4074, 2221713035
    %v4587 = vmul.u32 %v4075, 2221713035
    %v4588 = vmul.u32 %v4076, 2221713035
    %v4589 = vmul.u32 %v4077, 2221713035
    %v4590 = vmul.u32 %v4078, 2221713035
    %v4591 = vmul.u32 %v4079, 2221713035
    %v4592 = vmul.u32 %v4080, 2221713035
    %v4593 = vmul.u32 %v4081, 2221713035
    %v4594 = vmul.u32 %v4082, 2221713035
    %v4595 = vmul.u32 %v4083, 2221713035
    %v4596 = vmul.u32 %v4084, 2221713035
    %v4597 = vmul.u32 %v4085, 2221713035
    %v4598 = vmul.u32 %v4086, 2221713035
    %v4599 = vmul.u32 %v4087, 2221713035
    %v4600 = vmul.u32 %v4088, 2221713035
    %v4601 = vmul.u32 %v4089, 2221713035
    %v4602 = vmul.u32 %v4090, 2221713035
    %v4603 = vmul.u32 %v4091, 2221713035
    %v4604 = vmul.u32 %v4092, 2221713035
    %v4605 = vmul.u32 %v4093, 2221713035
    %v4606 = vmul.u32 %v4094, 2221713035
    %v4607 = vmul.u32 %v4095, 2221713035
    %v4608 = vmul.u32 %v4096, 2221713035
    %v4609 = vmul.u32 %v4097, 2221713035
    %v4610 = vmul.u32 %v4098, 2221713035
    %v4611 = vmul.u32 %v4099, 2221713035
    %v4612 = vmul.u32 %v4100, 2221713035
    %v4613 = vmul.u32 %v4101, 2221713035
    %v4614 = vmul.u32 %v4102, 2221713035
    %v4615 = vmul.u32 %v4103, 2221713035
    %v4616 = vmul.u32 %v4104, 2221713035
    %v4617 = vmul.u32 %v4105, 2221713035
    %v4618 = vmul.u32 %v4106, 2221713035
    %v4619 = vmul.u32 %v4107, 2221713035
    %v4620 = vmul.u32 %v4108, 2221713035
    %v4621 = vmul.u32 %v4109, 2221713035
    %v4622 = vmul.u32 %v4110, 2221713035
    %v4623 = vmul.u32 %v4111, 2221713035
    %v4624 = vmul.u32 %v4112, 2221713035
    %v4625 = vmul.u32 %v4113, 2221713035
    %v4626 = vmul.u32 %v4114, 2221713035
    %v4627 = vmul.u32 %v4115, 2221713035
    %v4628 = vmul.u32 %v4116, 2221713035
    %v4629 = vmul.u32 %v4117, 2221713035
    %v4630 = vmul.u32 %v4118, 2221713035
    %v4631 = vmul.u32 %v4119, 2221713035
    %v4632 = vmul.u32 %v4120, 2221713035
    %v4633 = vmul.u32 %v4121, 2221713035
    %v4634 = vmul.u32 %v4122, 2221713035
    %v4635 = vmul.u32 %v4123, 2221713035
    %v4636 = vmul.u32 %v4124, 2221713035
    %v4637 = vmul.u32 %v4125, 2221713035
    %v4638 = vmul.u32 %v4126, 2221713035
    %v4639 = vmul.u32 %v4127, 2221713035
    %v4640 = vmul.u32 %v4128, 2221713035
    %v4641 = vmul.u32 %v4129, 2221713035
    %v4642 = vmul.u32 %v4130, 2221713035
    %v4643 = vmul.u32 %v4131, 2221713035
    %v4644 = vmul.u32 %v4132, 2221713035
    %v4645 = vmul.u32 %v4133, 2221713035
    %v4646 = vmul.u32 %v4134, 2221713035
    %v4647 = vmul.u32 %v4135, 2221713035
    %v4648 = vmul.u32 %v4136, 2221713035
    %v4649 = vmul.u32 %v4137, 2221713035
    %v4650 = vmul.u32 %v4138, 2221713035
    %v4651 = vmul.u32 %v4139, 2221713035
    %v4652 = vmul.u32 %v4140, 2221713035
    %v4653 = vmul.u32 %v4141, 2221713035
    %v4654 = vmul.u32 %v4142, 2221713035
    %v4655 = vmul.u32 %v4143, 2221713035
    %v4656 = vmul.u32 %v4144, 2221713035
    %v4657 = vmul.u32 %v4145, 2221713035
    %v4658 = vmul.u32 %v4146, 2221713035
    %v4659 = vmul.u32 %v4147, 2221713035
    %v4660 = vmul.u32 %v4148, 2221713035
    %v4661 = vmul.u32 %v4149, 2221713035
    %v4662 = vmul.u32 %v4150, 2221713035
    %v4663 = vmul.u32 %v4151, 2221713035
    %v4664 = vmul.u32 %v4152, 2221713035
    %v4665 = vmul.u32 %v4153, 2221713035
    %v4666 = vmul.u32 %v4154, 2221713035
    %v4667 = vmul.u32 %v4155, 2221713035
    %v4668 = vmul.u32 %v4156, 2221713035
    %v4669 = vmul.u32 %v4157, 2221713035
    %v4670 = vmul.u32 %v4158, 2221713035
    %v4671 = vmul.u32 %v4159, 2221713035
    %v4672 = vmul.u32 %v4160, 2221713035
    %v4673 = vmul.u32 %v4161, 2221713035
    %v4674 = vmul.u32 %v4162, 2221713035
    %v4675 = vmul.u32 %v4163, 2221713035
    %v4676 = vmul.u32 %v4164, 2221713035
    %v4677 = vmul.u32 %v4165, 2221713035
    %v4678 = vmul.u32 %v4166, 2221713035
    %v4679 = vmul.u32 %v4167, 2221713035
    %v4680 = vmul.u32 %v4168, 2221713035
    %v4681 = vmul.u32 %v4169, 2221713035
    %v4682 = vmul.u32 %v4170, 2221713035
    %v4683 = vmul.u32 %v4171, 2221713035
    %v4684 = vmul.u32 %v4172, 2221713035
    %v4685 = vmul.u32 %v4173, 2221713035
    %v4686 = vmul.u32 %v4174, 2221713035
    %v4687 = vmul.u32 %v4175, 2221713035
    %v4688 = vmul.u32 %v4176, 2221713035
    %v4689 = vmul.u32 %v4177, 2221713035
    %v4690 = vmul.u32 %v4178, 2221713035
    %v4691 = vmul.u32 %v4179, 2221713035
    %v4692 = vmul.u32 %v4180, 2221713035
    %v4693 = vmul.u32 %v4181, 2221713035
    %v4694 = vmul.u32 %v4182, 2221713035
    %v4695 = vmul.u32 %v4183, 2221713035
    %v4696 = vmul.u32 %v4184, 2221713035
    %v4697 = vmul.u32 %v4185, 2221713035
    %v4698 = vmul.u32 %v4186, 2221713035
    %v4699 = vmul.u32 %v4187, 2221713035
    %v4700 = vmul.u32 %v4188, 2221713035
    %v4701 = vmul.u32 %v4189, 2221713035
    %v4702 = vmul.u32 %v4190, 2221713035
    %v4703 = vmul.u32 %v4191, 2221713035
    %v4704 = vmul.u32 %v4192, 2221713035
    %v4705 = vmul.u32 %v4193, 2221713035
    %v4706 = vmul.u32 %v4194, 2221713035
    %v4707 = vmul.u32 %v4195, 2221713035
    %v4708 = vmul.u32 %v4196, 2221713035
    %v4709 = vmul.u32 %v4197, 2221713035
    %v4710 = vmul.u32 %v4198, 2221713035
    %v4711 = vmul.u32 %v4199, 2221713035
    %v4712 = vmul.u32 %v4200, 2221713035
    %v4713 = vmul.u32 %v4201, 2221713035
    %v4714 = vmul.u32 %v4202, 2221713035
    %v4715 = vmul.u32 %v4203, 2221713035
    %v4716 = vmul.u32 %v4204, 2221713035
    %v4717 = vmul.u32 %v4205, 2221713035
    %v4718 = vmul.u32 %v4206, 2221713035
    %v4719 = vmul.u32 %v4207, 2221713035
    %v4720 = vmul.u32 %v4208, 2221713035
    %v4721 = vmul.u32 %v4209, 2221713035
    %v4722 = vmul.u32 %v4210, 2221713035
    %v4723 = vmul.u32 %v4211, 2221713035
    %v4724 = vmul.u32 %v4212, 2221713035
    %v4725 = vmul.u32 %v4213, 2221713035
    %v4726 = vmul.u32 %v4214, 2221713035
    %v4727 = vmul.u32 %v4215, 2221713035
    %v4728 = vmul.u32 %v4216, 2221713035
    %v4729 = vmul.u32 %v4217, 2221713035
    %v4730 = vmul.u32 %v4218, 2221713035
    %v4731 = vmul.u32 %v4219, 2221713035
    %v4732 = vmul.u32 %v4220, 2221713035
    %v4733 = vmul.u32 %v4221, 2221713035
    %v4734 = vmul.u32 %v4222, 2221713035
    %v4735 = vmul.u32 %v4223, 2221713035
    %v4736 = vmul.u32 %v4224, 2221713035
    %v4737 = vmul.u32 %v4225, 2221713035
    %v4738 = vmul.u32 %v4226, 2221713035
    %v4739 = vmul.u32 %v4227, 2221713035
    %v4740 = vmul.u32 %v4228, 2221713035
    %v4741 = vmul.u32 %v4229, 2221713035
    %v4742 = vmul.u32 %v4230, 2221713035
    %v4743 = vmul.u32 %v4231, 2221713035
    %v4744 = vmul.u32 %v4232, 2221713035
    %v4745 = vmul.u32 %v4233, 2221713035
    %v4746 = vmul.u32 %v4234, 2221713035
    %v4747 = vmul.u32 %v4235, 2221713035
    %v4748 = vmul.u32 %v4236, 2221713035
    %v4749 = vmul.u32 %v4237, 2221713035
    %v4750 = vmul.u32 %v4238, 2221713035
    %v4751 = vmul.u32 %v4239, 2221713035
    %v4752 = vmul.u32 %v4240, 2221713035
    %v4753 = vmul.u32 %v4241, 2221713035
    %v4754 = vmul.u32 %v4242, 2221713035
    %v4755 = vmul.u32 %v4243, 2221713035
    %v4756 = vmul.u32 %v4244, 2221713035
    %v4757 = vmul.u32 %v4245, 2221713035
    %v4758 = vmul.u32 %v4246, 2221713035
    %v4759 = vmul.u32 %v4247, 2221713035
    %v4760 = vmul.u32 %v4248, 2221713035
    %v4761 = vmul.u32 %v4249, 2221713035
    %v4762 = vmul.u32 %v4250, 2221713035
    %v4763 = vmul.u32 %v4251, 2221713035
    %v4764 = vmul.u32 %v4252, 2221713035
    %v4765 = vmul.u32 %v4253, 2221713035
    %v4766 = vmul.u32 %v4254, 2221713035
    %v4767 = vmul.u32 %v4255, 2221713035
    %v4768 = vmul.u32 %v4256, 2221713035
    %v4769 = vmul.u32 %v4257, 2221713035
    %v4770 = vmul.u32 %v4258, 2221713035
    %v4771 = vmul.u32 %v4259, 2221713035
    %v4772 = vmul.u32 %v4260, 2221713035
    %v4773 = vmul.u32 %v4261, 2221713035
    %v4774 = vmul.u32 %v4262, 2221713035
    %v4775 = vmul.u32 %v4263, 2221713035
    %v4776 = vmul.u32 %v4264, 2221713035
    %v4777 = vmul.u32 %v4265, 2221713035
    %v4778 = vmul.u32 %v4266, 2221713035
    %v4779 = vmul.u32 %v4267, 2221713035
    %v4780 = vmul.u32 %v4268, 2221713035
    %v4781 = vmul.u32 %v4269, 2221713035
    %v4782 = vmul.u32 %v4270, 2221713035
    %v4783 = vmul.u32 %v4271, 2221713035
    %v4784 = vmul.u32 %v4272, 2221713035
    %v4785 = vmul.u32 %v4273, 2221713035
    %v4786 = vmul.u32 %v4274, 2221713035
    %v4787 = vmul.u32 %v4275, 2221713035
    %v4788 = vmul.u32 %v4276, 2221713035
    %v4789 = vmul.u32 %v4277, 2221713035
    %v4790 = vmul.u32 %v4278, 2221713035
    %v4791 = vmul.u32 %v4279, 2221713035
    %v4792 = vmul.u32 %v4280, 2221713035
    %v4793 = vmul.u32 %v4281, 2221713035
    %v4794 = vmul.u32 %v4282, 2221713035
    %v4795 = vmul.u32 %v4283, 2221713035
    %v4796 = vmul.u32 %v4284, 2221713035
    %v4797 = vmul.u32 %v4285, 2221713035
    %v4798 = vmul.u32 %v4286, 2221713035
    %v4799 = vmul.u32 %v4287, 2221713035
    %v4800 = vmul.u32 %v4288, 2221713035
    %v4801 = vmul.u32 %v4289, 2221713035
    %v4802 = vmul.u32 %v4290, 2221713035
    %v4803 = vmul.u32 %v4291, 2221713035
    %v4804 = vmul.u32 %v4292, 2221713035
    %v4805 = vmul.u32 %v4293, 2221713035
    %v4806 = vmul.u32 %v4294, 2221713035
    %v4807 = vmul.u32 %v4295, 2221713035
    %v4808 = vmul.u32 %v4296, 2221713035
    %v4809 = vmul.u32 %v4297, 2221713035
    %v4810 = vmul.u32 %v4298, 2221713035
    %v4811 = vmul.u32 %v4299, 2221713035
    %v4812 = vmul.u32 %v4300, 2221713035
    %v4813 = vmul.u32 %v4301, 2221713035
    %v4814 = vmul.u32 %v4302, 2221713035
    %v4815 = vmul.u32 %v4303, 2221713035
    %v4816 = vmul.u32 %v4304, 2221713035
    %v4817 = vmul.u32 %v4305, 2221713035
    %v4818 = vmul.u32 %v4306, 2221713035
    %v4819 = vmul.u32 %v4307, 2221713035
    %v4820 = vmul.u32 %v4308, 2221713035
    %v4821 = vmul.u32 %v4309, 2221713035
    %v4822 = vmul.u32 %v4310, 2221713035
    %v4823 = vmul.u32 %v4311, 2221713035
    %v4824 = vmul.u32 %v4312, 2221713035
    %v4825 = vmul.u32 %v4313, 2221713035
    %v4826 = vmul.u32 %v4314, 2221713035
    %v4827 = vmul.u32 %v4315, 2221713035
    %v4828 = vmul.u32 %v4316, 2221713035
    %v4829 = vmul.u32 %v4317, 2221713035
    %v4830 = vmul.u32 %v4318, 2221713035
    %v4831 = vmul.u32 %v4319, 2221713035
    %v4832 = vmul.u32 %v4320, 2221713035
    %v4833 = vmul.u32 %v4321, 2221713035
    %v4834 = vmul.u32 %v4322, 2221713035
    %v4835 = vmul.u32 %v4323, 2221713035
    %v4836 = vmul.u32 %v4324, 2221713035
    %v4837 = vmul.u32 %v4325, 2221713035
    %v4838 = vmul.u32 %v4326, 2221713035
    %v4839 = vmul.u32 %v4327, 2221713035
    %v4840 = vshrl.u32 %v4328, 16
    %v4841 = vshrl.u32 %v4329, 16
    %v4842 = vshrl.u32 %v4330, 16
    %v4843 = vshrl.u32 %v4331, 16
    %v4844 = vshrl.u32 %v4332, 16
    %v4845 = vshrl.u32 %v4333, 16
    %v4846 = vshrl.u32 %v4334, 16
    %v4847 = vshrl.u32 %v4335, 16
    %v4848 = vshrl.u32 %v4336, 16
    %v4849 = vshrl.u32 %v4337, 16
    %v4850 = vshrl.u32 %v4338, 16
    %v4851 = vshrl.u32 %v4339, 16
    %v4852 = vshrl.u32 %v4340, 16
    %v4853 = vshrl.u32 %v4341, 16
    %v4854 = vshrl.u32 %v4342, 16
    %v4855 = vshrl.u32 %v4343, 16
    %v4856 = vshrl.u32 %v4344, 16
    %v4857 = vshrl.u32 %v4345, 16
    %v4858 = vshrl.u32 %v4346, 16
    %v4859 = vshrl.u32 %v4347, 16
    %v4860 = vshrl.u32 %v4348, 16
    %v4861 = vshrl.u32 %v4349, 16
    %v4862 = vshrl.u32 %v4350, 16
    %v4863 = vshrl.u32 %v4351, 16
    %v4864 = vshrl.u32 %v4352, 16
    %v4865 = vshrl.u32 %v4353, 16
    %v4866 = vshrl.u32 %v4354, 16
    %v4867 = vshrl.u32 %v4355, 16
    %v4868 = vshrl.u32 %v4356, 16
    %v4869 = vshrl.u32 %v4357, 16
    %v4870 = vshrl.u32 %v4358, 16
    %v4871 = vshrl.u32 %v4359, 16
    %v4872 = vshrl.u32 %v4360, 16
    %v4873 = vshrl.u32 %v4361, 16
    %v4874 = vshrl.u32 %v4362, 16
    %v4875 = vshrl.u32 %v4363, 16
    %v4876 = vshrl.u32 %v4364, 16
    %v4877 = vshrl.u32 %v4365, 16
    %v4878 = vshrl.u32 %v4366, 16
    %v4879 = vshrl.u32 %v4367, 16
    %v4880 = vshrl.u32 %v4368, 16
    %v4881 = vshrl.u32 %v4369, 16
    %v4882 = vshrl.u32 %v4370, 16
    %v4883 = vshrl.u32 %v4371, 16
    %v4884 = vshrl.u32 %v4372, 16
    %v4885 = vshrl.u32 %v4373, 16
    %v4886 = vshrl.u32 %v4374, 16
    %v4887 = vshrl.u32 %v4375, 16
    %v4888 = vshrl.u32 %v4376, 16
    %v4889 = vshrl.u32 %v4377, 16
    %v4890 = vshrl.u32 %v4378, 16
    %v4891 = vshrl.u32 %v4379, 16
    %v4892 = vshrl.u32 %v4380, 16
    %v4893 = vshrl.u32 %v4381, 16
    %v4894 = vshrl.u32 %v4382, 16
    %v4895 = vshrl.u32 %v4383, 16
    %v4896 = vshrl.u32 %v4384, 16
    %v4897 = vshrl.u32 %v4385, 16
    %v4898 = vshrl.u32 %v4386, 16
    %v4899 = vshrl.u32 %v4387, 16
    %v4900 = vshrl.u32 %v4388, 16
    %v4901 = vshrl.u32 %v4389, 16
    %v4902 = vshrl.u32 %v4390, 16
    %v4903 = vshrl.u32 %v4391, 16
    %v4904 = vshrl.u32 %v4392, 16
    %v4905 = vshrl.u32 %v4393, 16
    %v4906 = vshrl.u32 %v4394, 16
    %v4907 = vshrl.u32 %v4395, 16
    %v4908 = vshrl.u32 %v4396, 16
    %v4909 = vshrl.u32 %v4397, 16
    %v4910 = vshrl.u32 %v4398, 16
    %v4911 = vshrl.u32 %v4399, 16
    %v4912 = vshrl.u32 %v4400, 16
    %v4913 = vshrl.u32 %v4401, 16
    %v4914 = vshrl.u32 %v4402, 16
    %v4915 = vshrl.u32 %v4403, 16
    %v4916 = vshrl.u32 %v4404, 16
    %v4917 = vshrl.u32 %v4405, 16
    %v4918 = vshrl.u32 %v4406, 16
    %v4919 = vshrl.u32 %v4407, 16
    %v4920 = vshrl.u32 %v4408, 16
    %v4921 = vshrl.u32 %v4409, 16
    %v4922 = vshrl.u32 %v4410, 16
    %v4923 = vshrl.u32 %v4411, 16
    %v4924 = vshrl.u32 %v4412, 16
    %v4925 = vshrl.u32 %v4413, 16
    %v4926 = vshrl.u32 %v4414, 16
    %v4927 = vshrl.u32 %v4415, 16
    %v4928 = vshrl.u32 %v4416, 16
    %v4929 = vshrl.u32 %v4417, 16
    %v4930 = vshrl.u32 %v4418, 16
    %v4931 = vshrl.u32 %v4419, 16
    %v4932 = vshrl.u32 %v4420, 16
    %v4933 = vshrl.u32 %v4421, 16
    %v4934 = vshrl.u32 %v4422, 16
    %v4935 = vshrl.u32 %v4423, 16
    %v4936 = vshrl.u32 %v4424, 16
    %v4937 = vshrl.u32 %v4425, 16
    %v4938 = vshrl.u32 %v4426, 16
    %v4939 = vshrl.u32 %v4427, 16
    %v4940 = vshrl.u32 %v4428, 16
    %v4941 = vshrl.u32 %v4429, 16
    %v4942 = vshrl.u32 %v4430, 16
    %v4943 = vshrl.u32 %v4431, 16
    %v4944 = vshrl.u32 %v4432, 16
    %v4945 = vshrl.u32 %v4433, 16
    %v4946 = vshrl.u32 %v4434, 16
    %v4947 = vshrl.u32 %v4435, 16
    %v4948 = vshrl.u32 %v4436, 16
    %v4949 = vshrl.u32 %v4437, 16
    %v4950 = vshrl.u32 %v4438, 16
    %v4951 = vshrl.u32 %v4439, 16
    %v4952 = vshrl.u32 %v4440, 16
    %v4953 = vshrl.u32 %v4441, 16
    %v4954 = vshrl.u32 %v4442, 16
    %v4955 = vshrl.u32 %v4443, 16
    %v4956 = vshrl.u32 %v4444, 16
    %v4957 = vshrl.u32 %v4445, 16
    %v4958 = vshrl.u32 %v4446, 16
    %v4959 = vshrl.u32 %v4447, 16
    %v4960 = vshrl.u32 %v4448, 16
    %v4961 = vshrl.u32 %v4449, 16
    %v4962 = vshrl.u32 %v4450, 16
    %v4963 = vshrl.u32 %v4451, 16
    %v4964 = vshrl.u32 %v4452, 16
    %v4965 = vshrl.u32 %v4453, 16
    %v4966 = vshrl.u32 %v4454, 16
    %v4967 = vshrl.u32 %v4455, 16
    %v4968 = vshrl.u32 %v4456, 16
    %v4969 = vshrl.u32 %v4457, 16
    %v4970 = vshrl.u32 %v4458, 16
    %v4971 = vshrl.u32 %v4459, 16
    %v4972 = vshrl.u32 %v4460, 16
    %v4973 = vshrl.u32 %v4461, 16
    %v4974 = vshrl.u32 %v4462, 16
    %v4975 = vshrl.u32 %v4463, 16
    %v4976 = vshrl.u32 %v4464, 16
    %v4977 = vshrl.u32 %v4465, 16
    %v4978 = vshrl.u32 %v4466, 16
    %v4979 = vshrl.u32 %v4467, 16
    %v4980 = vshrl.u32 %v4468, 16
    %v4981 = vshrl.u32 %v4469, 16
    %v4982 = vshrl.u32 %v4470, 16
    %v4983 = vshrl.u32 %v4471, 16
    %v4984 = vshrl.u32 %v4472, 16
    %v4985 = vshrl.u32 %v4473, 16
    %v4986 = vshrl.u32 %v4474, 16
    %v4987 = vshrl.u32 %v4475, 16
    %v4988 = vshrl.u32 %v4476, 16
    %v4989 = vshrl.u32 %v4477, 16
    %v4990 = vshrl.u32 %v4478, 16
    %v4991 = vshrl.u32 %v4479, 16
    %v4992 = vshrl.u32 %v4480, 16
    %v4993 = vshrl.u32 %v4481, 16
    %v4994 = vshrl.u32 %v4482, 16
    %v4995 = vshrl.u32 %v4483, 16
    %v4996 = vshrl.u32 %v4484, 16
    %v4997 = vshrl.u32 %v4485, 16
    %v4998 = vshrl.u32 %v4486, 16
    %v4999 = vshrl.u32 %v4487, 16
    %v5000 = vshrl.u32 %v4488, 16
    %v5001 = vshrl.u32 %v4489, 16
    %v5002 = vshrl.u32 %v4490, 16
    %v5003 = vshrl.u32 %v4491, 16
    %v5004 = vshrl.u32 %v4492, 16
    %v5005 = vshrl.u32 %v4493, 16
    %v5006 = vshrl.u32 %v4494, 16
    %v5007 = vshrl.u32 %v4495, 16
    %v5008 = vshrl.u32 %v4496, 16
    %v5009 = vshrl.u32 %v4497, 16
    %v5010 = vshrl.u32 %v4498, 16
    %v5011 = vshrl.u32 %v4499, 16
    %v5012 = vshrl.u32 %v4500, 16
    %v5013 = vshrl.u32 %v4501, 16
    %v5014 = vshrl.u32 %v4502, 16
    %v5015 = vshrl.u32 %v4503, 16
    %v5016 = vshrl.u32 %v4504, 16
    %v5017 = vshrl.u32 %v4505, 16
    %v5018 = vshrl.u32 %v4506, 16
    %v5019 = vshrl.u32 %v4507, 16
    %v5020 = vshrl.u32 %v4508, 16
    %v5021 = vshrl.u32 %v4509, 16
    %v5022 = vshrl.u32 %v4510, 16
    %v5023 = vshrl.u32 %v4511, 16
    %v5024 = vshrl.u32 %v4512, 16
    %v5025 = vshrl.u32 %v4513, 16
    %v5026 = vshrl.u32 %v4514, 16
    %v5027 = vshrl.u32 %v4515, 16
    %v5028 = vshrl.u32 %v4516, 16
    %v5029 = vshrl.u32 %v4517, 16
    %v5030 = vshrl.u32 %v4518, 16
    %v5031 = vshrl.u32 %v4519, 16
    %v5032 = vshrl.u32 %v4520, 16
    %v5033 = vshrl.u32 %v4521, 16
    %v5034 = vshrl.u32 %v4522, 16
    %v5035 = vshrl.u32 %v4523, 16
    %v5036 = vshrl.u32 %v4524, 16
    %v5037 = vshrl.u32 %v4525, 16
    %v5038 = vshrl.u32 %v4526, 16
    %v5039 = vshrl.u32 %v4527, 16
    %v5040 = vshrl.u32 %v4528, 16
    %v5041 = vshrl.u32 %v4529, 16
    %v5042 = vshrl.u32 %v4530, 16
    %v5043 = vshrl.u32 %v4531, 16
    %v5044 = vshrl.u32 %v4532, 16
    %v5045 = vshrl.u32 %v4533, 16
    %v5046 = vshrl.u32 %v4534, 16
    %v5047 = vshrl.u32 %v4535, 16
    %v5048 = vshrl.u32 %v4536, 16
    %v5049 = vshrl.u32 %v4537, 16
    %v5050 = vshrl.u32 %v4538, 16
    %v5051 = vshrl.u32 %v4539, 16
    %v5052 = vshrl.u32 %v4540, 16
    %v5053 = vshrl.u32 %v4541, 16
    %v5054 = vshrl.u32 %v4542, 16
    %v5055 = vshrl.u32 %v4543, 16
    %v5056 = vshrl.u32 %v4544, 16
    %v5057 = vshrl.u32 %v4545, 16
    %v5058 = vshrl.u32 %v4546, 16
    %v5059 = vshrl.u32 %v4547, 16
    %v5060 = vshrl.u32 %v4548, 16
    %v5061 = vshrl.u32 %v4549, 16
    %v5062 = vshrl.u32 %v4550, 16
    %v5063 = vshrl.u32 %v4551, 16
    %v5064 = vshrl.u32 %v4552, 16
    %v5065 = vshrl.u32 %v4553, 16
    %v5066 = vshrl.u32 %v4554, 16
    %v5067 = vshrl.u32 %v4555, 16
    %v5068 = vshrl.u32 %v4556, 16
    %v5069 = vshrl.u32 %v4557, 16
    %v5070 = vshrl.u32 %v4558, 16
    %v5071 = vshrl.u32 %v4559, 16
    %v5072 = vshrl.u32 %v4560, 16
    %v5073 = vshrl.u32 %v4561, 16
    %v5074 = vshrl.u32 %v4562, 16
    %v5075 = vshrl.u32 %v4563, 16
    %v5076 = vshrl.u32 %v4564, 16
    %v5077 = vshrl.u32 %v4565, 16
    %v5078 = vshrl.u32 %v4566, 16
    %v5079 = vshrl.u32 %v4567, 16
    %v5080 = vshrl.u32 %v4568, 16
    %v5081 = vshrl.u32 %v4569, 16
    %v5082 = vshrl.u32 %v4570, 16
    %v5083 = vshrl.u32 %v4571, 16
    %v5084 = vshrl.u32 %v4572, 16
    %v5085 = vshrl.u32 %v4573, 16
    %v5086 = vshrl.u32 %v4574, 16
    %v5087 = vshrl.u32 %v4575, 16
    %v5088 = vshrl.u32 %v4576, 16
    %v5089 = vshrl.u32 %v4577, 16
    %v5090 = vshrl.u32 %v4578, 16
    %v5091 = vshrl.u32 %v4579, 16
    %v5092 = vshrl.u32 %v4580, 16
    %v5093 = vshrl.u32 %v4581, 16
    %v5094 = vshrl.u32 %v4582, 16
    %v5095 = vshrl.u32 %v4583, 16
    %v5096 = vshrl.u32 %v4584, 16
    %v5097 = vshrl.u32 %v4585, 16
    %v5098 = vshrl.u32 %v4586, 16
    %v5099 = vshrl.u32 %v4587, 16
    %v5100 = vshrl.u32 %v4588, 16
    %v5101 = vshrl.u32 %v4589, 16
    %v5102 = vshrl.u32 %v4590, 16
    %v5103 = vshrl.u32 %v4591, 16
    %v5104 = vshrl.u32 %v4592, 16
    %v5105 = vshrl.u32 %v4593, 16
    %v5106 = vshrl.u32 %v4594, 16
    %v5107 = vshrl.u32 %v4595, 16
    %v5108 = vshrl.u32 %v4596, 16
    %v5109 = vshrl.u32 %v4597, 16
    %v5110 = vshrl.u32 %v4598, 16
    %v5111 = vshrl.u32 %v4599, 16
    %v5112 = vshrl.u32 %v4600, 16
    %v5113 = vshrl.u32 %v4601, 16
    %v5114 = vshrl.u32 %v4602, 16
    %v5115 = vshrl.u32 %v4603, 16
    %v5116 = vshrl.u32 %v4604, 16
    %v5117 = vshrl.u32 %v4605, 16
    %v5118 = vshrl.u32 %v4606, 16
    %v5119 = vshrl.u32 %v4607, 16
    %v5120 = vshrl.u32 %v4608, 16
    %v5121 = vshrl.u32 %v4609, 16
    %v5122 = vshrl.u32 %v4610, 16
    %v5123 = vshrl.u32 %v4611, 16
    %v5124 = vshrl.u32 %v4612, 16
    %v5125 = vshrl.u32 %v4613, 16
    %v5126 = vshrl.u32 %v4614, 16
    %v5127 = vshrl.u32 %v4615, 16
    %v5128 = vshrl.u32 %v4616, 16
    %v5129 = vshrl.u32 %v4617, 16
    %v5130 = vshrl.u32 %v4618, 16
    %v5131 = vshrl.u32 %v4619, 16
    %v5132 = vshrl.u32 %v4620, 16
    %v5133 = vshrl.u32 %v4621, 16
    %v5134 = vshrl.u32 %v4622, 16
    %v5135 = vshrl.u32 %v4623, 16
    %v5136 = vshrl.u32 %v4624, 16
    %v5137 = vshrl.u32 %v4625, 16
    %v5138 = vshrl.u32 %v4626, 16
    %v5139 = vshrl.u32 %v4627, 16
    %v5140 = vshrl.u32 %v4628, 16
    %v5141 = vshrl.u32 %v4629, 16
    %v5142 = vshrl.u32 %v4630, 16
    %v5143 = vshrl.u32 %v4631, 16
    %v5144 = vshrl.u32 %v4632, 16
    %v5145 = vshrl.u32 %v4633, 16
    %v5146 = vshrl.u32 %v4634, 16
    %v5147 = vshrl.u32 %v4635, 16
    %v5148 = vshrl.u32 %v4636, 16
    %v5149 = vshrl.u32 %v4637, 16
    %v5150 = vshrl.u32 %v4638, 16
    %v5151 = vshrl.u32 %v4639, 16
    %v5152 = vshrl.u32 %v4640, 16
    %v5153 = vshrl.u32 %v4641, 16
    %v5154 = vshrl.u32 %v4642, 16
    %v5155 = vshrl.u32 %v4643, 16
    %v5156 = vshrl.u32 %v4644, 16
    %v5157 = vshrl.u32 %v4645, 16
    %v5158 = vshrl.u32 %v4646, 16
    %v5159 = vshrl.u32 %v4647, 16
    %v5160 = vshrl.u32 %v4648, 16
    %v5161 = vshrl.u32 %v4649, 16
    %v5162 = vshrl.u32 %v4650, 16
    %v5163 = vshrl.u32 %v4651, 16
    %v5164 = vshrl.u32 %v4652, 16
    %v5165 = vshrl.u32 %v4653, 16
    %v5166 = vshrl.u32 %v4654, 16
    %v5167 = vshrl.u32 %v4655, 16
    %v5168 = vshrl.u32 %v4656, 16
    %v5169 = vshrl.u32 %v4657, 16
    %v5170 = vshrl.u32 %v4658, 16
    %v5171 = vshrl.u32 %v4659, 16
    %v5172 = vshrl.u32 %v4660, 16
    %v5173 = vshrl.u32 %v4661, 16
    %v5174 = vshrl.u32 %v4662, 16
    %v5175 = vshrl.u32 %v4663, 16
    %v5176 = vshrl.u32 %v4664, 16
    %v5177 = vshrl.u32 %v4665, 16
    %v5178 = vshrl.u32 %v4666, 16
    %v5179 = vshrl.u32 %v4667, 16
    %v5180 = vshrl.u32 %v4668, 16
    %v5181 = vshrl.u32 %v4669, 16
    %v5182 = vshrl.u32 %v4670, 16
    %v5183 = vshrl.u32 %v4671, 16
    %v5184 = vshrl.u32 %v4672, 16
    %v5185 = vshrl.u32 %v4673, 16
    %v5186 = vshrl.u32 %v4674, 16
    %v5187 = vshrl.u32 %v4675, 16
    %v5188 = vshrl.u32 %v4676, 16
    %v5189 = vshrl.u32 %v4677, 16
    %v5190 = vshrl.u32 %v4678, 16
    %v5191 = vshrl.u32 %v4679, 16
    %v5192 = vshrl.u32 %v4680, 16
    %v5193 = vshrl.u32 %v4681, 16
    %v5194 = vshrl.u32 %v4682, 16
    %v5195 = vshrl.u32 %v4683, 16
    %v5196 = vshrl.u32 %v4684, 16
    %v5197 = vshrl.u32 %v4685, 16
    %v5198 = vshrl.u32 %v4686, 16
    %v5199 = vshrl.u32 %v4687, 16
    %v5200 = vshrl.u32 %v4688, 16
    %v5201 = vshrl.u32 %v4689, 16
    %v5202 = vshrl.u32 %v4690, 16
    %v5203 = vshrl.u32 %v4691, 16
    %v5204 = vshrl.u32 %v4692, 16
    %v5205 = vshrl.u32 %v4693, 16
    %v5206 = vshrl.u32 %v4694, 16
    %v5207 = vshrl.u32 %v4695, 16
    %v5208 = vshrl.u32 %v4696, 16
    %v5209 = vshrl.u32 %v4697, 16
    %v5210 = vshrl.u32 %v4698, 16
    %v5211 = vshrl.u32 %v4699, 16
    %v5212 = vshrl.u32 %v4700, 16
    %v5213 = vshrl.u32 %v4701, 16
    %v5214 = vshrl.u32 %v4702, 16
    %v5215 = vshrl.u32 %v4703, 16
    %v5216 = vshrl.u32 %v4704, 16
    %v5217 = vshrl.u32 %v4705, 16
    %v5218 = vshrl.u32 %v4706, 16
    %v5219 = vshrl.u32 %v4707, 16
    %v5220 = vshrl.u32 %v4708, 16
    %v5221 = vshrl.u32 %v4709, 16
    %v5222 = vshrl.u32 %v4710, 16
    %v5223 = vshrl.u32 %v4711, 16
    %v5224 = vshrl.u32 %v4712, 16
    %v5225 = vshrl.u32 %v4713, 16
    %v5226 = vshrl.u32 %v4714, 16
    %v5227 = vshrl.u32 %v4715, 16
    %v5228 = vshrl.u32 %v4716, 16
    %v5229 = vshrl.u32 %v4717, 16
    %v5230 = vshrl.u32 %v4718, 16
    %v5231 = vshrl.u32 %v4719, 16
    %v5232 = vshrl.u32 %v4720, 16
    %v5233 = vshrl.u32 %v4721, 16
    %v5234 = vshrl.u32 %v4722, 16
    %v5235 = vshrl.u32 %v4723, 16
    %v5236 = vshrl.u32 %v4724, 16
    %v5237 = vshrl.u32 %v4725, 16
    %v5238 = vshrl.u32 %v4726, 16
    %v5239 = vshrl.u32 %v4727, 16
    %v5240 = vshrl.u32 %v4728, 16
    %v5241 = vshrl.u32 %v4729, 16
    %v5242 = vshrl.u32 %v4730, 16
    %v5243 = vshrl.u32 %v4731, 16
    %v5244 = vshrl.u32 %v4732, 16
    %v5245 = vshrl.u32 %v4733, 16
    %v5246 = vshrl.u32 %v4734, 16
    %v5247 = vshrl.u32 %v4735, 16
    %v5248 = vshrl.u32 %v4736, 16
    %v5249 = vshrl.u32 %v4737, 16
    %v5250 = vshrl.u32 %v4738, 16
    %v5251 = vshrl.u32 %v4739, 16
    %v5252 = vshrl.u32 %v4740, 16
    %v5253 = vshrl.u32 %v4741, 16
    %v5254 = vshrl.u32 %v4742, 16
    %v5255 = vshrl.u32 %v4743, 16
    %v5256 = vshrl.u32 %v4744, 16
    %v5257 = vshrl.u32 %v4745, 16
    %v5258 = vshrl.u32 %v4746, 16
    %v5259 = vshrl.u32 %v4747, 16
    %v5260 = vshrl.u32 %v4748, 16
    %v5261 = vshrl.u32 %v4749, 16
    %v5262 = vshrl.u32 %v4750, 16
    %v5263 = vshrl.u32 %v4751, 16
    %v5264 = vshrl.u32 %v4752, 16
    %v5265 = vshrl.u32 %v4753, 16
    %v5266 = vshrl.u32 %v4754, 16
    %v5267 = vshrl.u32 %v4755, 16
    %v5268 = vshrl.u32 %v4756, 16
    %v5269 = vshrl.u32 %v4757, 16
    %v5270 = vshrl.u32 %v4758, 16
    %v5271 = vshrl.u32 %v4759, 16
    %v5272 = vshrl.u32 %v4760, 16
    %v5273 = vshrl.u32 %v4761, 16
    %v5274 = vshrl.u32 %v4762, 16
    %v5275 = vshrl.u32 %v4763, 16
    %v5276 = vshrl.u32 %v4764, 16
    %v5277 = vshrl.u32 %v4765, 16
    %v5278 = vshrl.u32 %v4766, 16
    %v5279 = vshrl.u32 %v4767, 16
    %v5280 = vshrl.u32 %v4768, 16
    %v5281 = vshrl.u32 %v4769, 16
    %v5282 = vshrl.u32 %v4770, 16
    %v5283 = vshrl.u32 %v4771, 16
    %v5284 = vshrl.u32 %v4772, 16
    %v5285 = vshrl.u32 %v4773, 16
    %v5286 = vshrl.u32 %v4774, 16
    %v5287 = vshrl.u32 %v4775, 16
    %v5288 = vshrl.u32 %v4776, 16
    %v5289 = vshrl.u32 %v4777, 16
    %v5290 = vshrl.u32 %v4778, 16
    %v5291 = vshrl.u32 %v4779, 16
    %v5292 = vshrl.u32 %v4780, 16
    %v5293 = vshrl.u32 %v4781, 16
    %v5294 = vshrl.u32 %v4782, 16
    %v5295 = vshrl.u32 %v4783, 16
    %v5296 = vshrl.u32 %v4784, 16
    %v5297 = vshrl.u32 %v4785, 16
    %v5298 = vshrl.u32 %v4786, 16
    %v5299 = vshrl.u32 %v4787, 16
    %v5300 = vshrl.u32 %v4788, 16
    %v5301 = vshrl.u32 %v4789, 16
    %v5302 = vshrl.u32 %v4790, 16
    %v5303 = vshrl.u32 %v4791, 16
    %v5304 = vshrl.u32 %v4792, 16
    %v5305 = vshrl.u32 %v4793, 16
    %v5306 = vshrl.u32 %v4794, 16
    %v5307 = vshrl.u32 %v4795, 16
    %v5308 = vshrl.u32 %v4796, 16
    %v5309 = vshrl.u32 %v4797, 16
    %v5310 = vshrl.u32 %v4798, 16
    %v5311 = vshrl.u32 %v4799, 16
    %v5312 = vshrl.u32 %v4800, 16
    %v5313 = vshrl.u32 %v4801, 16
    %v5314 = vshrl.u32 %v4802, 16
    %v5315 = vshrl.u32 %v4803, 16
    %v5316 = vshrl.u32 %v4804, 16
    %v5317 = vshrl.u32 %v4805, 16
    %v5318 = vshrl.u32 %v4806, 16
    %v5319 = vshrl.u32 %v4807, 16
    %v5320 = vshrl.u32 %v4808, 16
    %v5321 = vshrl.u32 %v4809, 16
    %v5322 = vshrl.u32 %v4810, 16
    %v5323 = vshrl.u32 %v4811, 16
    %v5324 = vshrl.u32 %v4812, 16
    %v5325 = vshrl.u32 %v4813, 16
    %v5326 = vshrl.u32 %v4814, 16
    %v5327 = vshrl.u32 %v4815, 16
    %v5328 = vshrl.u32 %v4816, 16
    %v5329 = vshrl.u32 %v4817, 16
    %v5330 = vshrl.u32 %v4818, 16
    %v5331 = vshrl.u32 %v4819, 16
    %v5332 = vshrl.u32 %v4820, 16
    %v5333 = vshrl.u32 %v4821, 16
    %v5334 = vshrl.u32 %v4822, 16
    %v5335 = vshrl.u32 %v4823, 16
    %v5336 = vshrl.u32 %v4824, 16
    %v5337 = vshrl.u32 %v4825, 16
    %v5338 = vshrl.u32 %v4826, 16
    %v5339 = vshrl.u32 %v4827, 16
    %v5340 = vshrl.u32 %v4828, 16
    %v5341 = vshrl.u32 %v4829, 16
    %v5342 = vshrl.u32 %v4830, 16
    %v5343 = vshrl.u32 %v4831, 16
    %v5344 = vshrl.u32 %v4832, 16
    %v5345 = vshrl.u32 %v4833, 16
    %v5346 = vshrl.u32 %v4834, 16
    %v5347 = vshrl.u32 %v4835, 16
    %v5348 = vshrl.u32 %v4836, 16
    %v5349 = vshrl.u32 %v4837, 16
    %v5350 = vshrl.u32 %v4838, 16
    %v5351 = vshrl.u32 %v4839, 16
    %v5352 = vxor.u32 %v4328, %v4840
    %v5353 = vxor.u32 %v4329, %v4841
    %v5354 = vxor.u32 %v4330, %v4842
    %v5355 = vxor.u32 %v4331, %v4843
    %v5356 = vxor.u32 %v4332, %v4844
    %v5357 = vxor.u32 %v4333, %v4845
    %v5358 = vxor.u32 %v4334, %v4846
    %v5359 = vxor.u32 %v4335, %v4847
    %v5360 = vxor.u32 %v4336, %v4848
    %v5361 = vxor.u32 %v4337, %v4849
    %v5362 = vxor.u32 %v4338, %v4850
    %v5363 = vxor.u32 %v4339, %v4851
    %v5364 = vxor.u32 %v4340, %v4852
    %v5365 = vxor.u32 %v4341, %v4853
    %v5366 = vxor.u32 %v4342, %v4854
    %v5367 = vxor.u32 %v4343, %v4855
    %v5368 = vxor.u32 %v4344, %v4856
    %v5369 = vxor.u32 %v4345, %v4857
    %v5370 = vxor.u32 %v4346, %v4858
    %v5371 = vxor.u32 %v4347, %v4859
    %v5372 = vxor.u32 %v4348, %v4860
    %v5373 = vxor.u32 %v4349, %v4861
    %v5374 = vxor.u32 %v4350, %v4862
    %v5375 = vxor.u32 %v4351, %v4863
    %v5376 = vxor.u32 %v4352, %v4864
    %v5377 = vxor.u32 %v4353, %v4865
    %v5378 = vxor.u32 %v4354, %v4866
    %v5379 = vxor.u32 %v4355, %v4867
    %v5380 = vxor.u32 %v4356, %v4868
    %v5381 = vxor.u32 %v4357, %v4869
    %v5382 = vxor.u32 %v4358, %v4870
    %v5383 = vxor.u32 %v4359, %v4871
    %v5384 = vxor.u32 %v4360, %v4872
    %v5385 = vxor.u32 %v4361, %v4873
    %v5386 = vxor.u32 %v4362, %v4874
    %v5387 = vxor.u32 %v4363, %v4875
    %v5388 = vxor.u32 %v4364, %v4876
    %v5389 = vxor.u32 %v4365, %v4877
    %v5390 = vxor.u32 %v4366, %v4878
    %v5391 = vxor.u32 %v4367, %v4879
    %v5392 = vxor.u32 %v4368, %v4880
    %v5393 = vxor.u32 %v4369, %v4881
    %v5394 = vxor.u32 %v4370, %v4882
    %v5395 = vxor.u32 %v4371, %v4883
    %v5396 = vxor.u32 %v4372, %v4884
    %v5397 = vxor.u32 %v4373, %v4885
    %v5398 = vxor.u32 %v4374, %v4886
    %v5399 = vxor.u32 %v4375, %v4887
    %v5400 = vxor.u32 %v4376, %v4888
    %v5401 = vxor.u32 %v4377, %v4889
    %v5402 = vxor.u32 %v4378, %v4890
    %v5403 = vxor.u32 %v4379, %v4891
    %v5404 = vxor.u32 %v4380, %v4892
    %v5405 = vxor.u32 %v4381, %v4893
    %v5406 = vxor.u32 %v4382, %v4894
    %v5407 = vxor.u32 %v4383, %v4895
    %v5408 = vxor.u32 %v4384, %v4896
    %v5409 = vxor.u32 %v4385, %v4897
    %v5410 = vxor.u32 %v4386, %v4898
    %v5411 = vxor.u32 %v4387, %v4899
    %v5412 = vxor.u32 %v4388, %v4900
    %v5413 = vxor.u32 %v4389, %v4901
    %v5414 = vxor.u32 %v4390, %v4902
    %v5415 = vxor.u32 %v4391, %v4903
    %v5416 = vxor.u32 %v4392, %v4904
    %v5417 = vxor.u32 %v4393, %v4905
    %v5418 = vxor.u32 %v4394, %v4906
    %v5419 = vxor.u32 %v4395, %v4907
    %v5420 = vxor.u32 %v4396, %v4908
    %v5421 = vxor.u32 %v4397, %v4909
    %v5422 = vxor.u32 %v4398, %v4910
    %v5423 = vxor.u32 %v4399, %v4911
    %v5424 = vxor.u32 %v4400, %v4912
    %v5425 = vxor.u32 %v4401, %v4913
    %v5426 = vxor.u32 %v4402, %v4914
    %v5427 = vxor.u32 %v4403, %v4915
    %v5428 = vxor.u32 %v4404, %v4916
    %v5429 = vxor.u32 %v4405, %v4917
    %v5430 = vxor.u32 %v4406, %v4918
    %v5431 = vxor.u32 %v4407, %v4919
    %v5432 = vxor.u32 %v4408, %v4920
    %v5433 = vxor.u32 %v4409, %v4921
    %v5434 = vxor.u32 %v4410, %v4922
    %v5435 = vxor.u32 %v4411, %v4923
    %v5436 = vxor.u32 %v4412, %v4924
    %v5437 = vxor.u32 %v4413, %v4925
    %v5438 = vxor.u32 %v4414, %v4926
    %v5439 = vxor.u32 %v4415, %v4927
    %v5440 = vxor.u32 %v4416, %v4928
    %v5441 = vxor.u32 %v4417, %v4929
    %v5442 = vxor.u32 %v4418, %v4930
    %v5443 = vxor.u32 %v4419, %v4931
    %v5444 = vxor.u32 %v4420, %v4932
    %v5445 = vxor.u32 %v4421, %v4933
    %v5446 = vxor.u32 %v4422, %v4934
    %v5447 = vxor.u32 %v4423, %v4935
    %v5448 = vxor.u32 %v4424, %v4936
    %v5449 = vxor.u32 %v4425, %v4937
    %v5450 = vxor.u32 %v4426, %v4938
    %v5451 = vxor.u32 %v4427, %v4939
    %v5452 = vxor.u32 %v4428, %v4940
    %v5453 = vxor.u32 %v4429, %v4941
    %v5454 = vxor.u32 %v4430, %v4942
    %v5455 = vxor.u32 %v4431, %v4943
    %v5456 = vxor.u32 %v4432, %v4944
    %v5457 = vxor.u32 %v4433, %v4945
    %v5458 = vxor.u32 %v4434, %v4946
    %v5459 = vxor.u32 %v4435, %v4947
    %v5460 = vxor.u32 %v4436, %v4948
    %v5461 = vxor.u32 %v4437, %v4949
    %v5462 = vxor.u32 %v4438, %v4950
    %v5463 = vxor.u32 %v4439, %v4951
    %v5464 = vxor.u32 %v4440, %v4952
    %v5465 = vxor.u32 %v4441, %v4953
    %v5466 = vxor.u32 %v4442, %v4954
    %v5467 = vxor.u32 %v4443, %v4955
    %v5468 = vxor.u32 %v4444, %v4956
    %v5469 = vxor.u32 %v4445, %v4957
    %v5470 = vxor.u32 %v4446, %v4958
    %v5471 = vxor.u32 %v4447, %v4959
    %v5472 = vxor.u32 %v4448, %v4960
    %v5473 = vxor.u32 %v4449, %v4961
    %v5474 = vxor.u32 %v4450, %v4962
    %v5475 = vxor.u32 %v4451, %v4963
    %v5476 = vxor.u32 %v4452, %v4964
    %v5477 = vxor.u32 %v4453, %v4965
    %v5478 = vxor.u32 %v4454, %v4966
    %v5479 = vxor.u32 %v4455, %v4967
    %v5480 = vxor.u32 %v4456, %v4968
    %v5481 = vxor.u32 %v4457, %v4969
    %v5482 = vxor.u32 %v4458, %v4970
    %v5483 = vxor.u32 %v4459, %v4971
    %v5484 = vxor.u32 %v4460, %v4972
    %v5485 = vxor.u32 %v4461, %v4973
    %v5486 = vxor.u32 %v4462, %v4974
    %v5487 = vxor.u32 %v4463, %v4975
    %v5488 = vxor.u32 %v4464, %v4976
    %v5489 = vxor.u32 %v4465, %v4977
    %v5490 = vxor.u32 %v4466, %v4978
    %v5491 = vxor.u32 %v4467, %v4979
    %v5492 = vxor.u32 %v4468, %v4980
    %v5493 = vxor.u32 %v4469, %v4981
    %v5494 = vxor.u32 %v4470, %v4982
    %v5495 = vxor.u32 %v4471, %v4983
    %v5496 = vxor.u32 %v4472, %v4984
    %v5497 = vxor.u32 %v4473, %v4985
    %v5498 = vxor.u32 %v4474, %v4986
    %v5499 = vxor.u32 %v4475, %v4987
    %v5500 = vxor.u32 %v4476, %v4988
    %v5501 = vxor.u32 %v4477, %v4989
    %v5502 = vxor.u32 %v4478, %v4990
    %v5503 = vxor.u32 %v4479, %v4991
    %v5504 = vxor.u32 %v4480, %v4992
    %v5505 = vxor.u32 %v4481, %v4993
    %v5506 = vxor.u32 %v4482, %v4994
    %v5507 = vxor.u32 %v4483, %v4995
    %v5508 = vxor.u32 %v4484, %v4996
    %v5509 = vxor.u32 %v4485, %v4997
    %v5510 = vxor.u32 %v4486, %v4998
    %v5511 = vxor.u32 %v4487, %v4999
    %v5512 = vxor.u32 %v4488, %v5000
    %v5513 = vxor.u32 %v4489, %v5001
    %v5514 = vxor.u32 %v4490, %v5002
    %v5515 = vxor.u32 %v4491, %v5003
    %v5516 = vxor.u32 %v4492, %v5004
    %v5517 = vxor.u32 %v4493, %v5005
    %v5518 = vxor.u32 %v4494, %v5006
    %v5519 = vxor.u32 %v4495, %v5007
    %v5520 = vxor.u32 %v4496, %v5008
    %v5521 = vxor.u32 %v4497, %v5009
    %v5522 = vxor.u32 %v4498, %v5010
    %v5523 = vxor.u32 %v4499, %v5011
    %v5524 = vxor.u32 %v4500, %v5012
    %v5525 = vxor.u32 %v4501, %v5013
    %v5526 = vxor.u32 %v4502, %v5014
    %v5527 = vxor.u32 %v4503, %v5015
    %v5528 = vxor.u32 %v4504, %v5016
    %v5529 = vxor.u32 %v4505, %v5017
    %v5530 = vxor.u32 %v4506, %v5018
    %v5531 = vxor.u32 %v4507, %v5019
    %v5532 = vxor.u32 %v4508, %v5020
    %v5533 = vxor.u32 %v4509, %v5021
    %v5534 = vxor.u32 %v4510, %v5022
    %v5535 = vxor.u32 %v4511, %v5023
    %v5536 = vxor.u32 %v4512, %v5024
    %v5537 = vxor.u32 %v4513, %v5025
    %v5538 = vxor.u32 %v4514, %v5026
    %v5539 = vxor.u32 %v4515, %v5027
    %v5540 = vxor.u32 %v4516, %v5028
    %v5541 = vxor.u32 %v4517, %v5029
    %v5542 = vxor.u32 %v4518, %v5030
    %v5543 = vxor.u32 %v4519, %v5031
    %v5544 = vxor.u32 %v4520, %v5032
    %v5545 = vxor.u32 %v4521, %v5033
    %v5546 = vxor.u32 %v4522, %v5034
    %v5547 = vxor.u32 %v4523, %v5035
    %v5548 = vxor.u32 %v4524, %v5036
    %v5549 = vxor.u32 %v4525, %v5037
    %v5550 = vxor.u32 %v4526, %v5038
    %v5551 = vxor.u32 %v4527, %v5039
    %v5552 = vxor.u32 %v4528, %v5040
    %v5553 = vxor.u32 %v4529, %v5041
    %v5554 = vxor.u32 %v4530, %v5042
    %v5555 = vxor.u32 %v4531, %v5043
    %v5556 = vxor.u32 %v4532, %v5044
    %v5557 = vxor.u32 %v4533, %v5045
    %v5558 = vxor.u32 %v4534, %v5046
    %v5559 = vxor.u32 %v4535, %v5047
    %v5560 = vxor.u32 %v4536, %v5048
    %v5561 = vxor.u32 %v4537, %v5049
    %v5562 = vxor.u32 %v4538, %v5050
    %v5563 = vxor.u32 %v4539, %v5051
    %v5564 = vxor.u32 %v4540, %v5052
    %v5565 = vxor.u32 %v4541, %v5053
    %v5566 = vxor.u32 %v4542, %v5054
    %v5567 = vxor.u32 %v4543, %v5055
    %v5568 = vxor.u32 %v4544, %v5056
    %v5569 = vxor.u32 %v4545, %v5057
    %v5570 = vxor.u32 %v4546, %v5058
    %v5571 = vxor.u32 %v4547, %v5059
    %v5572 = vxor.u32 %v4548, %v5060
    %v5573 = vxor.u32 %v4549, %v5061
    %v5574 = vxor.u32 %v4550, %v5062
    %v5575 = vxor.u32 %v4551, %v5063
    %v5576 = vxor.u32 %v4552, %v5064
    %v5577 = vxor.u32 %v4553, %v5065
    %v5578 = vxor.u32 %v4554, %v5066
    %v5579 = vxor.u32 %v4555, %v5067
    %v5580 = vxor.u32 %v4556, %v5068
    %v5581 = vxor.u32 %v4557, %v5069
    %v5582 = vxor.u32 %v4558, %v5070
    %v5583 = vxor.u32 %v4559, %v5071
    %v5584 = vxor.u32 %v4560, %v5072
    %v5585 = vxor.u32 %v4561, %v5073
    %v5586 = vxor.u32 %v4562, %v5074
    %v5587 = vxor.u32 %v4563, %v5075
    %v5588 = vxor.u32 %v4564, %v5076
    %v5589 = vxor.u32 %v4565, %v5077
    %v5590 = vxor.u32 %v4566, %v5078
    %v5591 = vxor.u32 %v4567, %v5079
    %v5592 = vxor.u32 %v4568, %v5080
    %v5593 = vxor.u32 %v4569, %v5081
    %v5594 = vxor.u32 %v4570, %v5082
    %v5595 = vxor.u32 %v4571, %v5083
    %v5596 = vxor.u32 %v4572, %v5084
    %v5597 = vxor.u32 %v4573, %v5085
    %v5598 = vxor.u32 %v4574, %v5086
    %v5599 = vxor.u32 %v4575, %v5087
    %v5600 = vxor.u32 %v4576, %v5088
    %v5601 = vxor.u32 %v4577, %v5089
    %v5602 = vxor.u32 %v4578, %v5090
    %v5603 = vxor.u32 %v4579, %v5091
    %v5604 = vxor.u32 %v4580, %v5092
    %v5605 = vxor.u32 %v4581, %v5093
    %v5606 = vxor.u32 %v4582, %v5094
    %v5607 = vxor.u32 %v4583, %v5095
    %v5608 = vxor.u32 %v4584, %v5096
    %v5609 = vxor.u32 %v4585, %v5097
    %v5610 = vxor.u32 %v4586, %v5098
    %v5611 = vxor.u32 %v4587, %v5099
    %v5612 = vxor.u32 %v4588, %v5100
    %v5613 = vxor.u32 %v4589, %v5101
    %v5614 = vxor.u32 %v4590, %v5102
    %v5615 = vxor.u32 %v4591, %v5103
    %v5616 = vxor.u32 %v4592, %v5104
    %v5617 = vxor.u32 %v4593, %v5105
    %v5618 = vxor.u32 %v4594, %v5106
    %v5619 = vxor.u32 %v4595, %v5107
    %v5620 = vxor.u32 %v4596, %v5108
    %v5621 = vxor.u32 %v4597, %v5109
    %v5622 = vxor.u32 %v4598, %v5110
    %v5623 = vxor.u32 %v4599, %v5111
    %v5624 = vxor.u32 %v4600, %v5112
    %v5625 = vxor.u32 %v4601, %v5113
    %v5626 = vxor.u32 %v4602, %v5114
    %v5627 = vxor.u32 %v4603, %v5115
    %v5628 = vxor.u32 %v4604, %v5116
    %v5629 = vxor.u32 %v4605, %v5117
    %v5630 = vxor.u32 %v4606, %v5118
    %v5631 = vxor.u32 %v4607, %v5119
    %v5632 = vxor.u32 %v4608, %v5120
    %v5633 = vxor.u32 %v4609, %v5121
    %v5634 = vxor.u32 %v4610, %v5122
    %v5635 = vxor.u32 %v4611, %v5123
    %v5636 = vxor.u32 %v4612, %v5124
    %v5637 = vxor.u32 %v4613, %v5125
    %v5638 = vxor.u32 %v4614, %v5126
    %v5639 = vxor.u32 %v4615, %v5127
    %v5640 = vxor.u32 %v4616, %v5128
    %v5641 = vxor.u32 %v4617, %v5129
    %v5642 = vxor.u32 %v4618, %v5130
    %v5643 = vxor.u32 %v4619, %v5131
    %v5644 = vxor.u32 %v4620, %v5132
    %v5645 = vxor.u32 %v4621, %v5133
    %v5646 = vxor.u32 %v4622, %v5134
    %v5647 = vxor.u32 %v4623, %v5135
    %v5648 = vxor.u32 %v4624, %v5136
    %v5649 = vxor.u32 %v4625, %v5137
    %v5650 = vxor.u32 %v4626, %v5138
    %v5651 = vxor.u32 %v4627, %v5139
    %v5652 = vxor.u32 %v4628, %v5140
    %v5653 = vxor.u32 %v4629, %v5141
    %v5654 = vxor.u32 %v4630, %v5142
    %v5655 = vxor.u32 %v4631, %v5143
    %v5656 = vxor.u32 %v4632, %v5144
    %v5657 = vxor.u32 %v4633, %v5145
    %v5658 = vxor.u32 %v4634, %v5146
    %v5659 = vxor.u32 %v4635, %v5147
    %v5660 = vxor.u32 %v4636, %v5148
    %v5661 = vxor.u32 %v4637, %v5149
    %v5662 = vxor.u32 %v4638, %v5150
    %v5663 = vxor.u32 %v4639, %v5151
    %v5664 = vxor.u32 %v4640, %v5152
    %v5665 = vxor.u32 %v4641, %v5153
    %v5666 = vxor.u32 %v4642, %v5154
    %v5667 = vxor.u32 %v4643, %v5155
    %v5668 = vxor.u32 %v4644, %v5156
    %v5669 = vxor.u32 %v4645, %v5157
    %v5670 = vxor.u32 %v4646, %v5158
    %v5671 = vxor.u32 %v4647, %v5159
    %v5672 = vxor.u32 %v4648, %v5160
    %v5673 = vxor.u32 %v4649, %v5161
    %v5674 = vxor.u32 %v4650, %v5162
    %v5675 = vxor.u32 %v4651, %v5163
    %v5676 = vxor.u32 %v4652, %v5164
    %v5677 = vxor.u32 %v4653, %v5165
    %v5678 = vxor.u32 %v4654, %v5166
    %v5679 = vxor.u32 %v4655, %v5167
    %v5680 = vxor.u32 %v4656, %v5168
    %v5681 = vxor.u32 %v4657, %v5169
    %v5682 = vxor.u32 %v4658, %v5170
    %v5683 = vxor.u32 %v4659, %v5171
    %v5684 = vxor.u32 %v4660, %v5172
    %v5685 = vxor.u32 %v4661, %v5173
    %v5686 = vxor.u32 %v4662, %v5174
    %v5687 = vxor.u32 %v4663, %v5175
    %v5688 = vxor.u32 %v4664, %v5176
    %v5689 = vxor.u32 %v4665, %v5177
    %v5690 = vxor.u32 %v4666, %v5178
    %v5691 = vxor.u32 %v4667, %v5179
    %v5692 = vxor.u32 %v4668, %v5180
    %v5693 = vxor.u32 %v4669, %v5181
    %v5694 = vxor.u32 %v4670, %v5182
    %v5695 = vxor.u32 %v4671, %v5183
    %v5696 = vxor.u32 %v4672, %v5184
    %v5697 = vxor.u32 %v4673, %v5185
    %v5698 = vxor.u32 %v4674, %v5186
    %v5699 = vxor.u32 %v4675, %v5187
    %v5700 = vxor.u32 %v4676, %v5188
    %v5701 = vxor.u32 %v4677, %v5189
    %v5702 = vxor.u32 %v4678, %v5190
    %v5703 = vxor.u32 %v4679, %v5191
    %v5704 = vxor.u32 %v4680, %v5192
    %v5705 = vxor.u32 %v4681, %v5193
    %v5706 = vxor.u32 %v4682, %v5194
    %v5707 = vxor.u32 %v4683, %v5195
    %v5708 = vxor.u32 %v4684, %v5196
    %v5709 = vxor.u32 %v4685, %v5197
    %v5710 = vxor.u32 %v4686, %v5198
    %v5711 = vxor.u32 %v4687, %v5199
    %v5712 = vxor.u32 %v4688, %v5200
    %v5713 = vxor.u32 %v4689, %v5201
    %v5714 = vxor.u32 %v4690, %v5202
    %v5715 = vxor.u32 %v4691, %v5203
    %v5716 = vxor.u32 %v4692, %v5204
    %v5717 = vxor.u32 %v4693, %v5205
    %v5718 = vxor.u32 %v4694, %v5206
    %v5719 = vxor.u32 %v4695, %v5207
    %v5720 = vxor.u32 %v4696, %v5208
    %v5721 = vxor.u32 %v4697, %v5209
    %v5722 = vxor.u32 %v4698, %v5210
    %v5723 = vxor.u32 %v4699, %v5211
    %v5724 = vxor.u32 %v4700, %v5212
    %v5725 = vxor.u32 %v4701, %v5213
    %v5726 = vxor.u32 %v4702, %v5214
    %v5727 = vxor.u32 %v4703, %v5215
    %v5728 = vxor.u32 %v4704, %v5216
    %v5729 = vxor.u32 %v4705, %v5217
    %v5730 = vxor.u32 %v4706, %v5218
    %v5731 = vxor.u32 %v4707, %v5219
    %v5732 = vxor.u32 %v4708, %v5220
    %v5733 = vxor.u32 %v4709, %v5221
    %v5734 = vxor.u32 %v4710, %v5222
    %v5735 = vxor.u32 %v4711, %v5223
    %v5736 = vxor.u32 %v4712, %v5224
    %v5737 = vxor.u32 %v4713, %v5225
    %v5738 = vxor.u32 %v4714, %v5226
    %v5739 = vxor.u32 %v4715, %v5227
    %v5740 = vxor.u32 %v4716, %v5228
    %v5741 = vxor.u32 %v4717, %v5229
    %v5742 = vxor.u32 %v4718, %v5230
    %v5743 = vxor.u32 %v4719, %v5231
    %v5744 = vxor.u32 %v4720, %v5232
    %v5745 = vxor.u32 %v4721, %v5233
    %v5746 = vxor.u32 %v4722, %v5234
    %v5747 = vxor.u32 %v4723, %v5235
    %v5748 = vxor.u32 %v4724, %v5236
    %v5749 = vxor.u32 %v4725, %v5237
    %v5750 = vxor.u32 %v4726, %v5238
    %v5751 = vxor.u32 %v4727, %v5239
    %v5752 = vxor.u32 %v4728, %v5240
    %v5753 = vxor.u32 %v4729, %v5241
    %v5754 = vxor.u32 %v4730, %v5242
    %v5755 = vxor.u32 %v4731, %v5243
    %v5756 = vxor.u32 %v4732, %v5244
    %v5757 = vxor.u32 %v4733, %v5245
    %v5758 = vxor.u32 %v4734, %v5246
    %v5759 = vxor.u32 %v4735, %v5247
    %v5760 = vxor.u32 %v4736, %v5248
    %v5761 = vxor.u32 %v4737, %v5249
    %v5762 = vxor.u32 %v4738, %v5250
    %v5763 = vxor.u32 %v4739, %v5251
    %v5764 = vxor.u32 %v4740, %v5252
    %v5765 = vxor.u32 %v4741, %v5253
    %v5766 = vxor.u32 %v4742, %v5254
    %v5767 = vxor.u32 %v4743, %v5255
    %v5768 = vxor.u32 %v4744, %v5256
    %v5769 = vxor.u32 %v4745, %v5257
    %v5770 = vxor.u32 %v4746, %v5258
    %v5771 = vxor.u32 %v4747, %v5259
    %v5772 = vxor.u32 %v4748, %v5260
    %v5773 = vxor.u32 %v4749, %v5261
    %v5774 = vxor.u32 %v4750, %v5262
    %v5775 = vxor.u32 %v4751, %v5263
    %v5776 = vxor.u32 %v4752, %v5264
    %v5777 = vxor.u32 %v4753, %v5265
    %v5778 = vxor.u32 %v4754, %v5266
    %v5779 = vxor.u32 %v4755, %v5267
    %v5780 = vxor.u32 %v4756, %v5268
    %v5781 = vxor.u32 %v4757, %v5269
    %v5782 = vxor.u32 %v4758, %v5270
    %v5783 = vxor.u32 %v4759, %v5271
    %v5784 = vxor.u32 %v4760, %v5272
    %v5785 = vxor.u32 %v4761, %v5273
    %v5786 = vxor.u32 %v4762, %v5274
    %v5787 = vxor.u32 %v4763, %v5275
    %v5788 = vxor.u32 %v4764, %v5276
    %v5789 = vxor.u32 %v4765, %v5277
    %v5790 = vxor.u32 %v4766, %v5278
    %v5791 = vxor.u32 %v4767, %v5279
    %v5792 = vxor.u32 %v4768, %v5280
    %v5793 = vxor.u32 %v4769, %v5281
    %v5794 = vxor.u32 %v4770, %v5282
    %v5795 = vxor.u32 %v4771, %v5283
    %v5796 = vxor.u32 %v4772, %v5284
    %v5797 = vxor.u32 %v4773, %v5285
    %v5798 = vxor.u32 %v4774, %v5286
    %v5799 = vxor.u32 %v4775, %v5287
    %v5800 = vxor.u32 %v4776, %v5288
    %v5801 = vxor.u32 %v4777, %v5289
    %v5802 = vxor.u32 %v4778, %v5290
    %v5803 = vxor.u32 %v4779, %v5291
    %v5804 = vxor.u32 %v4780, %v5292
    %v5805 = vxor.u32 %v4781, %v5293
    %v5806 = vxor.u32 %v4782, %v5294
    %v5807 = vxor.u32 %v4783, %v5295
    %v5808 = vxor.u32 %v4784, %v5296
    %v5809 = vxor.u32 %v4785, %v5297
    %v5810 = vxor.u32 %v4786, %v5298
    %v5811 = vxor.u32 %v4787, %v5299
    %v5812 = vxor.u32 %v4788, %v5300
    %v5813 = vxor.u32 %v4789, %v5301
    %v5814 = vxor.u32 %v4790, %v5302
    %v5815 = vxor.u32 %v4791, %v5303
    %v5816 = vxor.u32 %v4792, %v5304
    %v5817 = vxor.u32 %v4793, %v5305
    %v5818 = vxor.u32 %v4794, %v5306
    %v5819 = vxor.u32 %v4795, %v5307
    %v5820 = vxor.u32 %v4796, %v5308
    %v5821 = vxor.u32 %v4797, %v5309
    %v5822 = vxor.u32 %v4798, %v5310
    %v5823 = vxor.u32 %v4799, %v5311
    %v5824 = vxor.u32 %v4800, %v5312
    %v5825 = vxor.u32 %v4801, %v5313
    %v5826 = vxor.u32 %v4802, %v5314
    %v5827 = vxor.u32 %v4803, %v5315
    %v5828 = vxor.u32 %v4804, %v5316
    %v5829 = vxor.u32 %v4805, %v5317
    %v5830 = vxor.u32 %v4806, %v5318
    %v5831 = vxor.u32 %v4807, %v5319
    %v5832 = vxor.u32 %v4808, %v5320
    %v5833 = vxor.u32 %v4809, %v5321
    %v5834 = vxor.u32 %v4810, %v5322
    %v5835 = vxor.u32 %v4811, %v5323
    %v5836 = vxor.u32 %v4812, %v5324
    %v5837 = vxor.u32 %v4813, %v5325
    %v5838 = vxor.u32 %v4814, %v5326
    %v5839 = vxor.u32 %v4815, %v5327
    %v5840 = vxor.u32 %v4816, %v5328
    %v5841 = vxor.u32 %v4817, %v5329
    %v5842 = vxor.u32 %v4818, %v5330
    %v5843 = vxor.u32 %v4819, %v5331
    %v5844 = vxor.u32 %v4820, %v5332
    %v5845 = vxor.u32 %v4821, %v5333
    %v5846 = vxor.u32 %v4822, %v5334
    %v5847 = vxor.u32 %v4823, %v5335
    %v5848 = vxor.u32 %v4824, %v5336
    %v5849 = vxor.u32 %v4825, %v5337
    %v5850 = vxor.u32 %v4826, %v5338
    %v5851 = vxor.u32 %v4827, %v5339
    %v5852 = vxor.u32 %v4828, %v5340
    %v5853 = vxor.u32 %v4829, %v5341
    %v5854 = vxor.u32 %v4830, %v5342
    %v5855 = vxor.u32 %v4831, %v5343
    %v5856 = vxor.u32 %v4832, %v5344
    %v5857 = vxor.u32 %v4833, %v5345
    %v5858 = vxor.u32 %v4834, %v5346
    %v5859 = vxor.u32 %v4835, %v5347
    %v5860 = vxor.u32 %v4836, %v5348
    %v5861 = vxor.u32 %v4837, %v5349
    %v5862 = vxor.u32 %v4838, %v5350
    %v5863 = vxor.u32 %v4839, %v5351
    %vm5864 = vcmp.lt.u32.totalorder %v5352, 429496730
    %vm5865 = vcmp.lt.u32.totalorder %v5353, 429496730
    %vm5866 = vcmp.lt.u32.totalorder %v5354, 429496730
    %vm5867 = vcmp.lt.u32.totalorder %v5355, 429496730
    %vm5868 = vcmp.lt.u32.totalorder %v5356, 429496730
    %vm5869 = vcmp.lt.u32.totalorder %v5357, 429496730
    %vm5870 = vcmp.lt.u32.totalorder %v5358, 429496730
    %vm5871 = vcmp.lt.u32.totalorder %v5359, 429496730
    %vm5872 = vcmp.lt.u32.totalorder %v5360, 429496730
    %vm5873 = vcmp.lt.u32.totalorder %v5361, 429496730
    %vm5874 = vcmp.lt.u32.totalorder %v5362, 429496730
    %vm5875 = vcmp.lt.u32.totalorder %v5363, 429496730
    %vm5876 = vcmp.lt.u32.totalorder %v5364, 429496730
    %vm5877 = vcmp.lt.u32.totalorder %v5365, 429496730
    %vm5878 = vcmp.lt.u32.totalorder %v5366, 429496730
    %vm5879 = vcmp.lt.u32.totalorder %v5367, 429496730
    %vm5880 = vcmp.lt.u32.totalorder %v5368, 429496730
    %vm5881 = vcmp.lt.u32.totalorder %v5369, 429496730
    %vm5882 = vcmp.lt.u32.totalorder %v5370, 429496730
    %vm5883 = vcmp.lt.u32.totalorder %v5371, 429496730
    %vm5884 = vcmp.lt.u32.totalorder %v5372, 429496730
    %vm5885 = vcmp.lt.u32.totalorder %v5373, 429496730
    %vm5886 = vcmp.lt.u32.totalorder %v5374, 429496730
    %vm5887 = vcmp.lt.u32.totalorder %v5375, 429496730
    %vm5888 = vcmp.lt.u32.totalorder %v5376, 429496730
    %vm5889 = vcmp.lt.u32.totalorder %v5377, 429496730
    %vm5890 = vcmp.lt.u32.totalorder %v5378, 429496730
    %vm5891 = vcmp.lt.u32.totalorder %v5379, 429496730
    %vm5892 = vcmp.lt.u32.totalorder %v5380, 429496730
    %vm5893 = vcmp.lt.u32.totalorder %v5381, 429496730
    %vm5894 = vcmp.lt.u32.totalorder %v5382, 429496730
    %vm5895 = vcmp.lt.u32.totalorder %v5383, 429496730
    %vm5896 = vcmp.lt.u32.totalorder %v5384, 429496730
    %vm5897 = vcmp.lt.u32.totalorder %v5385, 429496730
    %vm5898 = vcmp.lt.u32.totalorder %v5386, 429496730
    %vm5899 = vcmp.lt.u32.totalorder %v5387, 429496730
    %vm5900 = vcmp.lt.u32.totalorder %v5388, 429496730
    %vm5901 = vcmp.lt.u32.totalorder %v5389, 429496730
    %vm5902 = vcmp.lt.u32.totalorder %v5390, 429496730
    %vm5903 = vcmp.lt.u32.totalorder %v5391, 429496730
    %vm5904 = vcmp.lt.u32.totalorder %v5392, 429496730
    %vm5905 = vcmp.lt.u32.totalorder %v5393, 429496730
    %vm5906 = vcmp.lt.u32.totalorder %v5394, 429496730
    %vm5907 = vcmp.lt.u32.totalorder %v5395, 429496730
    %vm5908 = vcmp.lt.u32.totalorder %v5396, 429496730
    %vm5909 = vcmp.lt.u32.totalorder %v5397, 429496730
    %vm5910 = vcmp.lt.u32.totalorder %v5398, 429496730
    %vm5911 = vcmp.lt.u32.totalorder %v5399, 429496730
    %vm5912 = vcmp.lt.u32.totalorder %v5400, 429496730
    %vm5913 = vcmp.lt.u32.totalorder %v5401, 429496730
    %vm5914 = vcmp.lt.u32.totalorder %v5402, 429496730
    %vm5915 = vcmp.lt.u32.totalorder %v5403, 429496730
    %vm5916 = vcmp.lt.u32.totalorder %v5404, 429496730
    %vm5917 = vcmp.lt.u32.totalorder %v5405, 429496730
    %vm5918 = vcmp.lt.u32.totalorder %v5406, 429496730
    %vm5919 = vcmp.lt.u32.totalorder %v5407, 429496730
    %vm5920 = vcmp.lt.u32.totalorder %v5408, 429496730
    %vm5921 = vcmp.lt.u32.totalorder %v5409, 429496730
    %vm5922 = vcmp.lt.u32.totalorder %v5410, 429496730
    %vm5923 = vcmp.lt.u32.totalorder %v5411, 429496730
    %vm5924 = vcmp.lt.u32.totalorder %v5412, 429496730
    %vm5925 = vcmp.lt.u32.totalorder %v5413, 429496730
    %vm5926 = vcmp.lt.u32.totalorder %v5414, 429496730
    %vm5927 = vcmp.lt.u32.totalorder %v5415, 429496730
    %vm5928 = vcmp.lt.u32.totalorder %v5416, 429496730
    %vm5929 = vcmp.lt.u32.totalorder %v5417, 429496730
    %vm5930 = vcmp.lt.u32.totalorder %v5418, 429496730
    %vm5931 = vcmp.lt.u32.totalorder %v5419, 429496730
    %vm5932 = vcmp.lt.u32.totalorder %v5420, 429496730
    %vm5933 = vcmp.lt.u32.totalorder %v5421, 429496730
    %vm5934 = vcmp.lt.u32.totalorder %v5422, 429496730
    %vm5935 = vcmp.lt.u32.totalorder %v5423, 429496730
    %vm5936 = vcmp.lt.u32.totalorder %v5424, 429496730
    %vm5937 = vcmp.lt.u32.totalorder %v5425, 429496730
    %vm5938 = vcmp.lt.u32.totalorder %v5426, 429496730
    %vm5939 = vcmp.lt.u32.totalorder %v5427, 429496730
    %vm5940 = vcmp.lt.u32.totalorder %v5428, 429496730
    %vm5941 = vcmp.lt.u32.totalorder %v5429, 429496730
    %vm5942 = vcmp.lt.u32.totalorder %v5430, 429496730
    %vm5943 = vcmp.lt.u32.totalorder %v5431, 429496730
    %vm5944 = vcmp.lt.u32.totalorder %v5432, 429496730
    %vm5945 = vcmp.lt.u32.totalorder %v5433, 429496730
    %vm5946 = vcmp.lt.u32.totalorder %v5434, 429496730
    %vm5947 = vcmp.lt.u32.totalorder %v5435, 429496730
    %vm5948 = vcmp.lt.u32.totalorder %v5436, 429496730
    %vm5949 = vcmp.lt.u32.totalorder %v5437, 429496730
    %vm5950 = vcmp.lt.u32.totalorder %v5438, 429496730
    %vm5951 = vcmp.lt.u32.totalorder %v5439, 429496730
    %vm5952 = vcmp.lt.u32.totalorder %v5440, 429496730
    %vm5953 = vcmp.lt.u32.totalorder %v5441, 429496730
    %vm5954 = vcmp.lt.u32.totalorder %v5442, 429496730
    %vm5955 = vcmp.lt.u32.totalorder %v5443, 429496730
    %vm5956 = vcmp.lt.u32.totalorder %v5444, 429496730
    %vm5957 = vcmp.lt.u32.totalorder %v5445, 429496730
    %vm5958 = vcmp.lt.u32.totalorder %v5446, 429496730
    %vm5959 = vcmp.lt.u32.totalorder %v5447, 429496730
    %vm5960 = vcmp.lt.u32.totalorder %v5448, 429496730
    %vm5961 = vcmp.lt.u32.totalorder %v5449, 429496730
    %vm5962 = vcmp.lt.u32.totalorder %v5450, 429496730
    %vm5963 = vcmp.lt.u32.totalorder %v5451, 429496730
    %vm5964 = vcmp.lt.u32.totalorder %v5452, 429496730
    %vm5965 = vcmp.lt.u32.totalorder %v5453, 429496730
    %vm5966 = vcmp.lt.u32.totalorder %v5454, 429496730
    %vm5967 = vcmp.lt.u32.totalorder %v5455, 429496730
    %vm5968 = vcmp.lt.u32.totalorder %v5456, 429496730
    %vm5969 = vcmp.lt.u32.totalorder %v5457, 429496730
    %vm5970 = vcmp.lt.u32.totalorder %v5458, 429496730
    %vm5971 = vcmp.lt.u32.totalorder %v5459, 429496730
    %vm5972 = vcmp.lt.u32.totalorder %v5460, 429496730
    %vm5973 = vcmp.lt.u32.totalorder %v5461, 429496730
    %vm5974 = vcmp.lt.u32.totalorder %v5462, 429496730
    %vm5975 = vcmp.lt.u32.totalorder %v5463, 429496730
    %vm5976 = vcmp.lt.u32.totalorder %v5464, 429496730
    %vm5977 = vcmp.lt.u32.totalorder %v5465, 429496730
    %vm5978 = vcmp.lt.u32.totalorder %v5466, 429496730
    %vm5979 = vcmp.lt.u32.totalorder %v5467, 429496730
    %vm5980 = vcmp.lt.u32.totalorder %v5468, 429496730
    %vm5981 = vcmp.lt.u32.totalorder %v5469, 429496730
    %vm5982 = vcmp.lt.u32.totalorder %v5470, 429496730
    %vm5983 = vcmp.lt.u32.totalorder %v5471, 429496730
    %vm5984 = vcmp.lt.u32.totalorder %v5472, 429496730
    %vm5985 = vcmp.lt.u32.totalorder %v5473, 429496730
    %vm5986 = vcmp.lt.u32.totalorder %v5474, 429496730
    %vm5987 = vcmp.lt.u32.totalorder %v5475, 429496730
    %vm5988 = vcmp.lt.u32.totalorder %v5476, 429496730
    %vm5989 = vcmp.lt.u32.totalorder %v5477, 429496730
    %vm5990 = vcmp.lt.u32.totalorder %v5478, 429496730
    %vm5991 = vcmp.lt.u32.totalorder %v5479, 429496730
    %vm5992 = vcmp.lt.u32.totalorder %v5480, 429496730
    %vm5993 = vcmp.lt.u32.totalorder %v5481, 429496730
    %vm5994 = vcmp.lt.u32.totalorder %v5482, 429496730
    %vm5995 = vcmp.lt.u32.totalorder %v5483, 429496730
    %vm5996 = vcmp.lt.u32.totalorder %v5484, 429496730
    %vm5997 = vcmp.lt.u32.totalorder %v5485, 429496730
    %vm5998 = vcmp.lt.u32.totalorder %v5486, 429496730
    %vm5999 = vcmp.lt.u32.totalorder %v5487, 429496730
    %vm6000 = vcmp.lt.u32.totalorder %v5488, 429496730
    %vm6001 = vcmp.lt.u32.totalorder %v5489, 429496730
    %vm6002 = vcmp.lt.u32.totalorder %v5490, 429496730
    %vm6003 = vcmp.lt.u32.totalorder %v5491, 429496730
    %vm6004 = vcmp.lt.u32.totalorder %v5492, 429496730
    %vm6005 = vcmp.lt.u32.totalorder %v5493, 429496730
    %vm6006 = vcmp.lt.u32.totalorder %v5494, 429496730
    %vm6007 = vcmp.lt.u32.totalorder %v5495, 429496730
    %vm6008 = vcmp.lt.u32.totalorder %v5496, 429496730
    %vm6009 = vcmp.lt.u32.totalorder %v5497, 429496730
    %vm6010 = vcmp.lt.u32.totalorder %v5498, 429496730
    %vm6011 = vcmp.lt.u32.totalorder %v5499, 429496730
    %vm6012 = vcmp.lt.u32.totalorder %v5500, 429496730
    %vm6013 = vcmp.lt.u32.totalorder %v5501, 429496730
    %vm6014 = vcmp.lt.u32.totalorder %v5502, 429496730
    %vm6015 = vcmp.lt.u32.totalorder %v5503, 429496730
    %vm6016 = vcmp.lt.u32.totalorder %v5504, 429496730
    %vm6017 = vcmp.lt.u32.totalorder %v5505, 429496730
    %vm6018 = vcmp.lt.u32.totalorder %v5506, 429496730
    %vm6019 = vcmp.lt.u32.totalorder %v5507, 429496730
    %vm6020 = vcmp.lt.u32.totalorder %v5508, 429496730
    %vm6021 = vcmp.lt.u32.totalorder %v5509, 429496730
    %vm6022 = vcmp.lt.u32.totalorder %v5510, 429496730
    %vm6023 = vcmp.lt.u32.totalorder %v5511, 429496730
    %vm6024 = vcmp.lt.u32.totalorder %v5512, 429496730
    %vm6025 = vcmp.lt.u32.totalorder %v5513, 429496730
    %vm6026 = vcmp.lt.u32.totalorder %v5514, 429496730
    %vm6027 = vcmp.lt.u32.totalorder %v5515, 429496730
    %vm6028 = vcmp.lt.u32.totalorder %v5516, 429496730
    %vm6029 = vcmp.lt.u32.totalorder %v5517, 429496730
    %vm6030 = vcmp.lt.u32.totalorder %v5518, 429496730
    %vm6031 = vcmp.lt.u32.totalorder %v5519, 429496730
    %vm6032 = vcmp.lt.u32.totalorder %v5520, 429496730
    %vm6033 = vcmp.lt.u32.totalorder %v5521, 429496730
    %vm6034 = vcmp.lt.u32.totalorder %v5522, 429496730
    %vm6035 = vcmp.lt.u32.totalorder %v5523, 429496730
    %vm6036 = vcmp.lt.u32.totalorder %v5524, 429496730
    %vm6037 = vcmp.lt.u32.totalorder %v5525, 429496730
    %vm6038 = vcmp.lt.u32.totalorder %v5526, 429496730
    %vm6039 = vcmp.lt.u32.totalorder %v5527, 429496730
    %vm6040 = vcmp.lt.u32.totalorder %v5528, 429496730
    %vm6041 = vcmp.lt.u32.totalorder %v5529, 429496730
    %vm6042 = vcmp.lt.u32.totalorder %v5530, 429496730
    %vm6043 = vcmp.lt.u32.totalorder %v5531, 429496730
    %vm6044 = vcmp.lt.u32.totalorder %v5532, 429496730
    %vm6045 = vcmp.lt.u32.totalorder %v5533, 429496730
    %vm6046 = vcmp.lt.u32.totalorder %v5534, 429496730
    %vm6047 = vcmp.lt.u32.totalorder %v5535, 429496730
    %vm6048 = vcmp.lt.u32.totalorder %v5536, 429496730
    %vm6049 = vcmp.lt.u32.totalorder %v5537, 429496730
    %vm6050 = vcmp.lt.u32.totalorder %v5538, 429496730
    %vm6051 = vcmp.lt.u32.totalorder %v5539, 429496730
    %vm6052 = vcmp.lt.u32.totalorder %v5540, 429496730
    %vm6053 = vcmp.lt.u32.totalorder %v5541, 429496730
    %vm6054 = vcmp.lt.u32.totalorder %v5542, 429496730
    %vm6055 = vcmp.lt.u32.totalorder %v5543, 429496730
    %vm6056 = vcmp.lt.u32.totalorder %v5544, 429496730
    %vm6057 = vcmp.lt.u32.totalorder %v5545, 429496730
    %vm6058 = vcmp.lt.u32.totalorder %v5546, 429496730
    %vm6059 = vcmp.lt.u32.totalorder %v5547, 429496730
    %vm6060 = vcmp.lt.u32.totalorder %v5548, 429496730
    %vm6061 = vcmp.lt.u32.totalorder %v5549, 429496730
    %vm6062 = vcmp.lt.u32.totalorder %v5550, 429496730
    %vm6063 = vcmp.lt.u32.totalorder %v5551, 429496730
    %vm6064 = vcmp.lt.u32.totalorder %v5552, 429496730
    %vm6065 = vcmp.lt.u32.totalorder %v5553, 429496730
    %vm6066 = vcmp.lt.u32.totalorder %v5554, 429496730
    %vm6067 = vcmp.lt.u32.totalorder %v5555, 429496730
    %vm6068 = vcmp.lt.u32.totalorder %v5556, 429496730
    %vm6069 = vcmp.lt.u32.totalorder %v5557, 429496730
    %vm6070 = vcmp.lt.u32.totalorder %v5558, 429496730
    %vm6071 = vcmp.lt.u32.totalorder %v5559, 429496730
    %vm6072 = vcmp.lt.u32.totalorder %v5560, 429496730
    %vm6073 = vcmp.lt.u32.totalorder %v5561, 429496730
    %vm6074 = vcmp.lt.u32.totalorder %v5562, 429496730
    %vm6075 = vcmp.lt.u32.totalorder %v5563, 429496730
    %vm6076 = vcmp.lt.u32.totalorder %v5564, 429496730
    %vm6077 = vcmp.lt.u32.totalorder %v5565, 429496730
    %vm6078 = vcmp.lt.u32.totalorder %v5566, 429496730
    %vm6079 = vcmp.lt.u32.totalorder %v5567, 429496730
    %vm6080 = vcmp.lt.u32.totalorder %v5568, 429496730
    %vm6081 = vcmp.lt.u32.totalorder %v5569, 429496730
    %vm6082 = vcmp.lt.u32.totalorder %v5570, 429496730
    %vm6083 = vcmp.lt.u32.totalorder %v5571, 429496730
    %vm6084 = vcmp.lt.u32.totalorder %v5572, 429496730
    %vm6085 = vcmp.lt.u32.totalorder %v5573, 429496730
    %vm6086 = vcmp.lt.u32.totalorder %v5574, 429496730
    %vm6087 = vcmp.lt.u32.totalorder %v5575, 429496730
    %vm6088 = vcmp.lt.u32.totalorder %v5576, 429496730
    %vm6089 = vcmp.lt.u32.totalorder %v5577, 429496730
    %vm6090 = vcmp.lt.u32.totalorder %v5578, 429496730
    %vm6091 = vcmp.lt.u32.totalorder %v5579, 429496730
    %vm6092 = vcmp.lt.u32.totalorder %v5580, 429496730
    %vm6093 = vcmp.lt.u32.totalorder %v5581, 429496730
    %vm6094 = vcmp.lt.u32.totalorder %v5582, 429496730
    %vm6095 = vcmp.lt.u32.totalorder %v5583, 429496730
    %vm6096 = vcmp.lt.u32.totalorder %v5584, 429496730
    %vm6097 = vcmp.lt.u32.totalorder %v5585, 429496730
    %vm6098 = vcmp.lt.u32.totalorder %v5586, 429496730
    %vm6099 = vcmp.lt.u32.totalorder %v5587, 429496730
    %vm6100 = vcmp.lt.u32.totalorder %v5588, 429496730
    %vm6101 = vcmp.lt.u32.totalorder %v5589, 429496730
    %vm6102 = vcmp.lt.u32.totalorder %v5590, 429496730
    %vm6103 = vcmp.lt.u32.totalorder %v5591, 429496730
    %vm6104 = vcmp.lt.u32.totalorder %v5592, 429496730
    %vm6105 = vcmp.lt.u32.totalorder %v5593, 429496730
    %vm6106 = vcmp.lt.u32.totalorder %v5594, 429496730
    %vm6107 = vcmp.lt.u32.totalorder %v5595, 429496730
    %vm6108 = vcmp.lt.u32.totalorder %v5596, 429496730
    %vm6109 = vcmp.lt.u32.totalorder %v5597, 429496730
    %vm6110 = vcmp.lt.u32.totalorder %v5598, 429496730
    %vm6111 = vcmp.lt.u32.totalorder %v5599, 429496730
    %vm6112 = vcmp.lt.u32.totalorder %v5600, 429496730
    %vm6113 = vcmp.lt.u32.totalorder %v5601, 429496730
    %vm6114 = vcmp.lt.u32.totalorder %v5602, 429496730
    %vm6115 = vcmp.lt.u32.totalorder %v5603, 429496730
    %vm6116 = vcmp.lt.u32.totalorder %v5604, 429496730
    %vm6117 = vcmp.lt.u32.totalorder %v5605, 429496730
    %vm6118 = vcmp.lt.u32.totalorder %v5606, 429496730
    %vm6119 = vcmp.lt.u32.totalorder %v5607, 429496730
    %vm6120 = vcmp.lt.u32.totalorder %v5608, 429496730
    %vm6121 = vcmp.lt.u32.totalorder %v5609, 429496730
    %vm6122 = vcmp.lt.u32.totalorder %v5610, 429496730
    %vm6123 = vcmp.lt.u32.totalorder %v5611, 429496730
    %vm6124 = vcmp.lt.u32.totalorder %v5612, 429496730
    %vm6125 = vcmp.lt.u32.totalorder %v5613, 429496730
    %vm6126 = vcmp.lt.u32.totalorder %v5614, 429496730
    %vm6127 = vcmp.lt.u32.totalorder %v5615, 429496730
    %vm6128 = vcmp.lt.u32.totalorder %v5616, 429496730
    %vm6129 = vcmp.lt.u32.totalorder %v5617, 429496730
    %vm6130 = vcmp.lt.u32.totalorder %v5618, 429496730
    %vm6131 = vcmp.lt.u32.totalorder %v5619, 429496730
    %vm6132 = vcmp.lt.u32.totalorder %v5620, 429496730
    %vm6133 = vcmp.lt.u32.totalorder %v5621, 429496730
    %vm6134 = vcmp.lt.u32.totalorder %v5622, 429496730
    %vm6135 = vcmp.lt.u32.totalorder %v5623, 429496730
    %vm6136 = vcmp.lt.u32.totalorder %v5624, 429496730
    %vm6137 = vcmp.lt.u32.totalorder %v5625, 429496730
    %vm6138 = vcmp.lt.u32.totalorder %v5626, 429496730
    %vm6139 = vcmp.lt.u32.totalorder %v5627, 429496730
    %vm6140 = vcmp.lt.u32.totalorder %v5628, 429496730
    %vm6141 = vcmp.lt.u32.totalorder %v5629, 429496730
    %vm6142 = vcmp.lt.u32.totalorder %v5630, 429496730
    %vm6143 = vcmp.lt.u32.totalorder %v5631, 429496730
    %vm6144 = vcmp.lt.u32.totalorder %v5632, 429496730
    %vm6145 = vcmp.lt.u32.totalorder %v5633, 429496730
    %vm6146 = vcmp.lt.u32.totalorder %v5634, 429496730
    %vm6147 = vcmp.lt.u32.totalorder %v5635, 429496730
    %vm6148 = vcmp.lt.u32.totalorder %v5636, 429496730
    %vm6149 = vcmp.lt.u32.totalorder %v5637, 429496730
    %vm6150 = vcmp.lt.u32.totalorder %v5638, 429496730
    %vm6151 = vcmp.lt.u32.totalorder %v5639, 429496730
    %vm6152 = vcmp.lt.u32.totalorder %v5640, 429496730
    %vm6153 = vcmp.lt.u32.totalorder %v5641, 429496730
    %vm6154 = vcmp.lt.u32.totalorder %v5642, 429496730
    %vm6155 = vcmp.lt.u32.totalorder %v5643, 429496730
    %vm6156 = vcmp.lt.u32.totalorder %v5644, 429496730
    %vm6157 = vcmp.lt.u32.totalorder %v5645, 429496730
    %vm6158 = vcmp.lt.u32.totalorder %v5646, 429496730
    %vm6159 = vcmp.lt.u32.totalorder %v5647, 429496730
    %vm6160 = vcmp.lt.u32.totalorder %v5648, 429496730
    %vm6161 = vcmp.lt.u32.totalorder %v5649, 429496730
    %vm6162 = vcmp.lt.u32.totalorder %v5650, 429496730
    %vm6163 = vcmp.lt.u32.totalorder %v5651, 429496730
    %vm6164 = vcmp.lt.u32.totalorder %v5652, 429496730
    %vm6165 = vcmp.lt.u32.totalorder %v5653, 429496730
    %vm6166 = vcmp.lt.u32.totalorder %v5654, 429496730
    %vm6167 = vcmp.lt.u32.totalorder %v5655, 429496730
    %vm6168 = vcmp.lt.u32.totalorder %v5656, 429496730
    %vm6169 = vcmp.lt.u32.totalorder %v5657, 429496730
    %vm6170 = vcmp.lt.u32.totalorder %v5658, 429496730
    %vm6171 = vcmp.lt.u32.totalorder %v5659, 429496730
    %vm6172 = vcmp.lt.u32.totalorder %v5660, 429496730
    %vm6173 = vcmp.lt.u32.totalorder %v5661, 429496730
    %vm6174 = vcmp.lt.u32.totalorder %v5662, 429496730
    %vm6175 = vcmp.lt.u32.totalorder %v5663, 429496730
    %vm6176 = vcmp.lt.u32.totalorder %v5664, 429496730
    %vm6177 = vcmp.lt.u32.totalorder %v5665, 429496730
    %vm6178 = vcmp.lt.u32.totalorder %v5666, 429496730
    %vm6179 = vcmp.lt.u32.totalorder %v5667, 429496730
    %vm6180 = vcmp.lt.u32.totalorder %v5668, 429496730
    %vm6181 = vcmp.lt.u32.totalorder %v5669, 429496730
    %vm6182 = vcmp.lt.u32.totalorder %v5670, 429496730
    %vm6183 = vcmp.lt.u32.totalorder %v5671, 429496730
    %vm6184 = vcmp.lt.u32.totalorder %v5672, 429496730
    %vm6185 = vcmp.lt.u32.totalorder %v5673, 429496730
    %vm6186 = vcmp.lt.u32.totalorder %v5674, 429496730
    %vm6187 = vcmp.lt.u32.totalorder %v5675, 429496730
    %vm6188 = vcmp.lt.u32.totalorder %v5676, 429496730
    %vm6189 = vcmp.lt.u32.totalorder %v5677, 429496730
    %vm6190 = vcmp.lt.u32.totalorder %v5678, 429496730
    %vm6191 = vcmp.lt.u32.totalorder %v5679, 429496730
    %vm6192 = vcmp.lt.u32.totalorder %v5680, 429496730
    %vm6193 = vcmp.lt.u32.totalorder %v5681, 429496730
    %vm6194 = vcmp.lt.u32.totalorder %v5682, 429496730
    %vm6195 = vcmp.lt.u32.totalorder %v5683, 429496730
    %vm6196 = vcmp.lt.u32.totalorder %v5684, 429496730
    %vm6197 = vcmp.lt.u32.totalorder %v5685, 429496730
    %vm6198 = vcmp.lt.u32.totalorder %v5686, 429496730
    %vm6199 = vcmp.lt.u32.totalorder %v5687, 429496730
    %vm6200 = vcmp.lt.u32.totalorder %v5688, 429496730
    %vm6201 = vcmp.lt.u32.totalorder %v5689, 429496730
    %vm6202 = vcmp.lt.u32.totalorder %v5690, 429496730
    %vm6203 = vcmp.lt.u32.totalorder %v5691, 429496730
    %vm6204 = vcmp.lt.u32.totalorder %v5692, 429496730
    %vm6205 = vcmp.lt.u32.totalorder %v5693, 429496730
    %vm6206 = vcmp.lt.u32.totalorder %v5694, 429496730
    %vm6207 = vcmp.lt.u32.totalorder %v5695, 429496730
    %vm6208 = vcmp.lt.u32.totalorder %v5696, 429496730
    %vm6209 = vcmp.lt.u32.totalorder %v5697, 429496730
    %vm6210 = vcmp.lt.u32.totalorder %v5698, 429496730
    %vm6211 = vcmp.lt.u32.totalorder %v5699, 429496730
    %vm6212 = vcmp.lt.u32.totalorder %v5700, 429496730
    %vm6213 = vcmp.lt.u32.totalorder %v5701, 429496730
    %vm6214 = vcmp.lt.u32.totalorder %v5702, 429496730
    %vm6215 = vcmp.lt.u32.totalorder %v5703, 429496730
    %vm6216 = vcmp.lt.u32.totalorder %v5704, 429496730
    %vm6217 = vcmp.lt.u32.totalorder %v5705, 429496730
    %vm6218 = vcmp.lt.u32.totalorder %v5706, 429496730
    %vm6219 = vcmp.lt.u32.totalorder %v5707, 429496730
    %vm6220 = vcmp.lt.u32.totalorder %v5708, 429496730
    %vm6221 = vcmp.lt.u32.totalorder %v5709, 429496730
    %vm6222 = vcmp.lt.u32.totalorder %v5710, 429496730
    %vm6223 = vcmp.lt.u32.totalorder %v5711, 429496730
    %vm6224 = vcmp.lt.u32.totalorder %v5712, 429496730
    %vm6225 = vcmp.lt.u32.totalorder %v5713, 429496730
    %vm6226 = vcmp.lt.u32.totalorder %v5714, 429496730
    %vm6227 = vcmp.lt.u32.totalorder %v5715, 429496730
    %vm6228 = vcmp.lt.u32.totalorder %v5716, 429496730
    %vm6229 = vcmp.lt.u32.totalorder %v5717, 429496730
    %vm6230 = vcmp.lt.u32.totalorder %v5718, 429496730
    %vm6231 = vcmp.lt.u32.totalorder %v5719, 429496730
    %vm6232 = vcmp.lt.u32.totalorder %v5720, 429496730
    %vm6233 = vcmp.lt.u32.totalorder %v5721, 429496730
    %vm6234 = vcmp.lt.u32.totalorder %v5722, 429496730
    %vm6235 = vcmp.lt.u32.totalorder %v5723, 429496730
    %vm6236 = vcmp.lt.u32.totalorder %v5724, 429496730
    %vm6237 = vcmp.lt.u32.totalorder %v5725, 429496730
    %vm6238 = vcmp.lt.u32.totalorder %v5726, 429496730
    %vm6239 = vcmp.lt.u32.totalorder %v5727, 429496730
    %vm6240 = vcmp.lt.u32.totalorder %v5728, 429496730
    %vm6241 = vcmp.lt.u32.totalorder %v5729, 429496730
    %vm6242 = vcmp.lt.u32.totalorder %v5730, 429496730
    %vm6243 = vcmp.lt.u32.totalorder %v5731, 429496730
    %vm6244 = vcmp.lt.u32.totalorder %v5732, 429496730
    %vm6245 = vcmp.lt.u32.totalorder %v5733, 429496730
    %vm6246 = vcmp.lt.u32.totalorder %v5734, 429496730
    %vm6247 = vcmp.lt.u32.totalorder %v5735, 429496730
    %vm6248 = vcmp.lt.u32.totalorder %v5736, 429496730
    %vm6249 = vcmp.lt.u32.totalorder %v5737, 429496730
    %vm6250 = vcmp.lt.u32.totalorder %v5738, 429496730
    %vm6251 = vcmp.lt.u32.totalorder %v5739, 429496730
    %vm6252 = vcmp.lt.u32.totalorder %v5740, 429496730
    %vm6253 = vcmp.lt.u32.totalorder %v5741, 429496730
    %vm6254 = vcmp.lt.u32.totalorder %v5742, 429496730
    %vm6255 = vcmp.lt.u32.totalorder %v5743, 429496730
    %vm6256 = vcmp.lt.u32.totalorder %v5744, 429496730
    %vm6257 = vcmp.lt.u32.totalorder %v5745, 429496730
    %vm6258 = vcmp.lt.u32.totalorder %v5746, 429496730
    %vm6259 = vcmp.lt.u32.totalorder %v5747, 429496730
    %vm6260 = vcmp.lt.u32.totalorder %v5748, 429496730
    %vm6261 = vcmp.lt.u32.totalorder %v5749, 429496730
    %vm6262 = vcmp.lt.u32.totalorder %v5750, 429496730
    %vm6263 = vcmp.lt.u32.totalorder %v5751, 429496730
    %vm6264 = vcmp.lt.u32.totalorder %v5752, 429496730
    %vm6265 = vcmp.lt.u32.totalorder %v5753, 429496730
    %vm6266 = vcmp.lt.u32.totalorder %v5754, 429496730
    %vm6267 = vcmp.lt.u32.totalorder %v5755, 429496730
    %vm6268 = vcmp.lt.u32.totalorder %v5756, 429496730
    %vm6269 = vcmp.lt.u32.totalorder %v5757, 429496730
    %vm6270 = vcmp.lt.u32.totalorder %v5758, 429496730
    %vm6271 = vcmp.lt.u32.totalorder %v5759, 429496730
    %vm6272 = vcmp.lt.u32.totalorder %v5760, 429496730
    %vm6273 = vcmp.lt.u32.totalorder %v5761, 429496730
    %vm6274 = vcmp.lt.u32.totalorder %v5762, 429496730
    %vm6275 = vcmp.lt.u32.totalorder %v5763, 429496730
    %vm6276 = vcmp.lt.u32.totalorder %v5764, 429496730
    %vm6277 = vcmp.lt.u32.totalorder %v5765, 429496730
    %vm6278 = vcmp.lt.u32.totalorder %v5766, 429496730
    %vm6279 = vcmp.lt.u32.totalorder %v5767, 429496730
    %vm6280 = vcmp.lt.u32.totalorder %v5768, 429496730
    %vm6281 = vcmp.lt.u32.totalorder %v5769, 429496730
    %vm6282 = vcmp.lt.u32.totalorder %v5770, 429496730
    %vm6283 = vcmp.lt.u32.totalorder %v5771, 429496730
    %vm6284 = vcmp.lt.u32.totalorder %v5772, 429496730
    %vm6285 = vcmp.lt.u32.totalorder %v5773, 429496730
    %vm6286 = vcmp.lt.u32.totalorder %v5774, 429496730
    %vm6287 = vcmp.lt.u32.totalorder %v5775, 429496730
    %vm6288 = vcmp.lt.u32.totalorder %v5776, 429496730
    %vm6289 = vcmp.lt.u32.totalorder %v5777, 429496730
    %vm6290 = vcmp.lt.u32.totalorder %v5778, 429496730
    %vm6291 = vcmp.lt.u32.totalorder %v5779, 429496730
    %vm6292 = vcmp.lt.u32.totalorder %v5780, 429496730
    %vm6293 = vcmp.lt.u32.totalorder %v5781, 429496730
    %vm6294 = vcmp.lt.u32.totalorder %v5782, 429496730
    %vm6295 = vcmp.lt.u32.totalorder %v5783, 429496730
    %vm6296 = vcmp.lt.u32.totalorder %v5784, 429496730
    %vm6297 = vcmp.lt.u32.totalorder %v5785, 429496730
    %vm6298 = vcmp.lt.u32.totalorder %v5786, 429496730
    %vm6299 = vcmp.lt.u32.totalorder %v5787, 429496730
    %vm6300 = vcmp.lt.u32.totalorder %v5788, 429496730
    %vm6301 = vcmp.lt.u32.totalorder %v5789, 429496730
    %vm6302 = vcmp.lt.u32.totalorder %v5790, 429496730
    %vm6303 = vcmp.lt.u32.totalorder %v5791, 429496730
    %vm6304 = vcmp.lt.u32.totalorder %v5792, 429496730
    %vm6305 = vcmp.lt.u32.totalorder %v5793, 429496730
    %vm6306 = vcmp.lt.u32.totalorder %v5794, 429496730
    %vm6307 = vcmp.lt.u32.totalorder %v5795, 429496730
    %vm6308 = vcmp.lt.u32.totalorder %v5796, 429496730
    %vm6309 = vcmp.lt.u32.totalorder %v5797, 429496730
    %vm6310 = vcmp.lt.u32.totalorder %v5798, 429496730
    %vm6311 = vcmp.lt.u32.totalorder %v5799, 429496730
    %vm6312 = vcmp.lt.u32.totalorder %v5800, 429496730
    %vm6313 = vcmp.lt.u32.totalorder %v5801, 429496730
    %vm6314 = vcmp.lt.u32.totalorder %v5802, 429496730
    %vm6315 = vcmp.lt.u32.totalorder %v5803, 429496730
    %vm6316 = vcmp.lt.u32.totalorder %v5804, 429496730
    %vm6317 = vcmp.lt.u32.totalorder %v5805, 429496730
    %vm6318 = vcmp.lt.u32.totalorder %v5806, 429496730
    %vm6319 = vcmp.lt.u32.totalorder %v5807, 429496730
    %vm6320 = vcmp.lt.u32.totalorder %v5808, 429496730
    %vm6321 = vcmp.lt.u32.totalorder %v5809, 429496730
    %vm6322 = vcmp.lt.u32.totalorder %v5810, 429496730
    %vm6323 = vcmp.lt.u32.totalorder %v5811, 429496730
    %vm6324 = vcmp.lt.u32.totalorder %v5812, 429496730
    %vm6325 = vcmp.lt.u32.totalorder %v5813, 429496730
    %vm6326 = vcmp.lt.u32.totalorder %v5814, 429496730
    %vm6327 = vcmp.lt.u32.totalorder %v5815, 429496730
    %vm6328 = vcmp.lt.u32.totalorder %v5816, 429496730
    %vm6329 = vcmp.lt.u32.totalorder %v5817, 429496730
    %vm6330 = vcmp.lt.u32.totalorder %v5818, 429496730
    %vm6331 = vcmp.lt.u32.totalorder %v5819, 429496730
    %vm6332 = vcmp.lt.u32.totalorder %v5820, 429496730
    %vm6333 = vcmp.lt.u32.totalorder %v5821, 429496730
    %vm6334 = vcmp.lt.u32.totalorder %v5822, 429496730
    %vm6335 = vcmp.lt.u32.totalorder %v5823, 429496730
    %vm6336 = vcmp.lt.u32.totalorder %v5824, 429496730
    %vm6337 = vcmp.lt.u32.totalorder %v5825, 429496730
    %vm6338 = vcmp.lt.u32.totalorder %v5826, 429496730
    %vm6339 = vcmp.lt.u32.totalorder %v5827, 429496730
    %vm6340 = vcmp.lt.u32.totalorder %v5828, 429496730
    %vm6341 = vcmp.lt.u32.totalorder %v5829, 429496730
    %vm6342 = vcmp.lt.u32.totalorder %v5830, 429496730
    %vm6343 = vcmp.lt.u32.totalorder %v5831, 429496730
    %vm6344 = vcmp.lt.u32.totalorder %v5832, 429496730
    %vm6345 = vcmp.lt.u32.totalorder %v5833, 429496730
    %vm6346 = vcmp.lt.u32.totalorder %v5834, 429496730
    %vm6347 = vcmp.lt.u32.totalorder %v5835, 429496730
    %vm6348 = vcmp.lt.u32.totalorder %v5836, 429496730
    %vm6349 = vcmp.lt.u32.totalorder %v5837, 429496730
    %vm6350 = vcmp.lt.u32.totalorder %v5838, 429496730
    %vm6351 = vcmp.lt.u32.totalorder %v5839, 429496730
    %vm6352 = vcmp.lt.u32.totalorder %v5840, 429496730
    %vm6353 = vcmp.lt.u32.totalorder %v5841, 429496730
    %vm6354 = vcmp.lt.u32.totalorder %v5842, 429496730
    %vm6355 = vcmp.lt.u32.totalorder %v5843, 429496730
    %vm6356 = vcmp.lt.u32.totalorder %v5844, 429496730
    %vm6357 = vcmp.lt.u32.totalorder %v5845, 429496730
    %vm6358 = vcmp.lt.u32.totalorder %v5846, 429496730
    %vm6359 = vcmp.lt.u32.totalorder %v5847, 429496730
    %vm6360 = vcmp.lt.u32.totalorder %v5848, 429496730
    %vm6361 = vcmp.lt.u32.totalorder %v5849, 429496730
    %vm6362 = vcmp.lt.u32.totalorder %v5850, 429496730
    %vm6363 = vcmp.lt.u32.totalorder %v5851, 429496730
    %vm6364 = vcmp.lt.u32.totalorder %v5852, 429496730
    %vm6365 = vcmp.lt.u32.totalorder %v5853, 429496730
    %vm6366 = vcmp.lt.u32.totalorder %v5854, 429496730
    %vm6367 = vcmp.lt.u32.totalorder %v5855, 429496730
    %vm6368 = vcmp.lt.u32.totalorder %v5856, 429496730
    %vm6369 = vcmp.lt.u32.totalorder %v5857, 429496730
    %vm6370 = vcmp.lt.u32.totalorder %v5858, 429496730
    %vm6371 = vcmp.lt.u32.totalorder %v5859, 429496730
    %vm6372 = vcmp.lt.u32.totalorder %v5860, 429496730
    %vm6373 = vcmp.lt.u32.totalorder %v5861, 429496730
    %vm6374 = vcmp.lt.u32.totalorder %v5862, 429496730
    %vm6375 = vcmp.lt.u32.totalorder %v5863, 429496730
    %v6376 = vsel %vm5864, 0.0, %v25
    %v6377 = vsel %vm5865, 0.0, %v26
    %v6378 = vsel %vm5866, 0.0, %v27
    %v6379 = vsel %vm5867, 0.0, %v28
    %v6380 = vsel %vm5868, 0.0, %v29
    %v6381 = vsel %vm5869, 0.0, %v30
    %v6382 = vsel %vm5870, 0.0, %v31
    %v6383 = vsel %vm5871, 0.0, %v32
    %v6384 = vsel %vm5872, 0.0, %v33
    %v6385 = vsel %vm5873, 0.0, %v34
    %v6386 = vsel %vm5874, 0.0, %v35
    %v6387 = vsel %vm5875, 0.0, %v36
    %v6388 = vsel %vm5876, 0.0, %v37
    %v6389 = vsel %vm5877, 0.0, %v38
    %v6390 = vsel %vm5878, 0.0, %v39
    %v6391 = vsel %vm5879, 0.0, %v40
    %v6392 = vsel %vm5880, 0.0, %v41
    %v6393 = vsel %vm5881, 0.0, %v42
    %v6394 = vsel %vm5882, 0.0, %v43
    %v6395 = vsel %vm5883, 0.0, %v44
    %v6396 = vsel %vm5884, 0.0, %v45
    %v6397 = vsel %vm5885, 0.0, %v46
    %v6398 = vsel %vm5886, 0.0, %v47
    %v6399 = vsel %vm5887, 0.0, %v48
    %v6400 = vsel %vm5888, 0.0, %v49
    %v6401 = vsel %vm5889, 0.0, %v50
    %v6402 = vsel %vm5890, 0.0, %v51
    %v6403 = vsel %vm5891, 0.0, %v52
    %v6404 = vsel %vm5892, 0.0, %v53
    %v6405 = vsel %vm5893, 0.0, %v54
    %v6406 = vsel %vm5894, 0.0, %v55
    %v6407 = vsel %vm5895, 0.0, %v56
    %v6408 = vsel %vm5896, 0.0, %v57
    %v6409 = vsel %vm5897, 0.0, %v58
    %v6410 = vsel %vm5898, 0.0, %v59
    %v6411 = vsel %vm5899, 0.0, %v60
    %v6412 = vsel %vm5900, 0.0, %v61
    %v6413 = vsel %vm5901, 0.0, %v62
    %v6414 = vsel %vm5902, 0.0, %v63
    %v6415 = vsel %vm5903, 0.0, %v64
    %v6416 = vsel %vm5904, 0.0, %v65
    %v6417 = vsel %vm5905, 0.0, %v66
    %v6418 = vsel %vm5906, 0.0, %v67
    %v6419 = vsel %vm5907, 0.0, %v68
    %v6420 = vsel %vm5908, 0.0, %v69
    %v6421 = vsel %vm5909, 0.0, %v70
    %v6422 = vsel %vm5910, 0.0, %v71
    %v6423 = vsel %vm5911, 0.0, %v72
    %v6424 = vsel %vm5912, 0.0, %v73
    %v6425 = vsel %vm5913, 0.0, %v74
    %v6426 = vsel %vm5914, 0.0, %v75
    %v6427 = vsel %vm5915, 0.0, %v76
    %v6428 = vsel %vm5916, 0.0, %v77
    %v6429 = vsel %vm5917, 0.0, %v78
    %v6430 = vsel %vm5918, 0.0, %v79
    %v6431 = vsel %vm5919, 0.0, %v80
    %v6432 = vsel %vm5920, 0.0, %v81
    %v6433 = vsel %vm5921, 0.0, %v82
    %v6434 = vsel %vm5922, 0.0, %v83
    %v6435 = vsel %vm5923, 0.0, %v84
    %v6436 = vsel %vm5924, 0.0, %v85
    %v6437 = vsel %vm5925, 0.0, %v86
    %v6438 = vsel %vm5926, 0.0, %v87
    %v6439 = vsel %vm5927, 0.0, %v88
    %v6440 = vsel %vm5928, 0.0, %v89
    %v6441 = vsel %vm5929, 0.0, %v90
    %v6442 = vsel %vm5930, 0.0, %v91
    %v6443 = vsel %vm5931, 0.0, %v92
    %v6444 = vsel %vm5932, 0.0, %v93
    %v6445 = vsel %vm5933, 0.0, %v94
    %v6446 = vsel %vm5934, 0.0, %v95
    %v6447 = vsel %vm5935, 0.0, %v96
    %v6448 = vsel %vm5936, 0.0, %v97
    %v6449 = vsel %vm5937, 0.0, %v98
    %v6450 = vsel %vm5938, 0.0, %v99
    %v6451 = vsel %vm5939, 0.0, %v100
    %v6452 = vsel %vm5940, 0.0, %v101
    %v6453 = vsel %vm5941, 0.0, %v102
    %v6454 = vsel %vm5942, 0.0, %v103
    %v6455 = vsel %vm5943, 0.0, %v104
    %v6456 = vsel %vm5944, 0.0, %v105
    %v6457 = vsel %vm5945, 0.0, %v106
    %v6458 = vsel %vm5946, 0.0, %v107
    %v6459 = vsel %vm5947, 0.0, %v108
    %v6460 = vsel %vm5948, 0.0, %v109
    %v6461 = vsel %vm5949, 0.0, %v110
    %v6462 = vsel %vm5950, 0.0, %v111
    %v6463 = vsel %vm5951, 0.0, %v112
    %v6464 = vsel %vm5952, 0.0, %v113
    %v6465 = vsel %vm5953, 0.0, %v114
    %v6466 = vsel %vm5954, 0.0, %v115
    %v6467 = vsel %vm5955, 0.0, %v116
    %v6468 = vsel %vm5956, 0.0, %v117
    %v6469 = vsel %vm5957, 0.0, %v118
    %v6470 = vsel %vm5958, 0.0, %v119
    %v6471 = vsel %vm5959, 0.0, %v120
    %v6472 = vsel %vm5960, 0.0, %v121
    %v6473 = vsel %vm5961, 0.0, %v122
    %v6474 = vsel %vm5962, 0.0, %v123
    %v6475 = vsel %vm5963, 0.0, %v124
    %v6476 = vsel %vm5964, 0.0, %v125
    %v6477 = vsel %vm5965, 0.0, %v126
    %v6478 = vsel %vm5966, 0.0, %v127
    %v6479 = vsel %vm5967, 0.0, %v128
    %v6480 = vsel %vm5968, 0.0, %v129
    %v6481 = vsel %vm5969, 0.0, %v130
    %v6482 = vsel %vm5970, 0.0, %v131
    %v6483 = vsel %vm5971, 0.0, %v132
    %v6484 = vsel %vm5972, 0.0, %v133
    %v6485 = vsel %vm5973, 0.0, %v134
    %v6486 = vsel %vm5974, 0.0, %v135
    %v6487 = vsel %vm5975, 0.0, %v136
    %v6488 = vsel %vm5976, 0.0, %v137
    %v6489 = vsel %vm5977, 0.0, %v138
    %v6490 = vsel %vm5978, 0.0, %v139
    %v6491 = vsel %vm5979, 0.0, %v140
    %v6492 = vsel %vm5980, 0.0, %v141
    %v6493 = vsel %vm5981, 0.0, %v142
    %v6494 = vsel %vm5982, 0.0, %v143
    %v6495 = vsel %vm5983, 0.0, %v144
    %v6496 = vsel %vm5984, 0.0, %v145
    %v6497 = vsel %vm5985, 0.0, %v146
    %v6498 = vsel %vm5986, 0.0, %v147
    %v6499 = vsel %vm5987, 0.0, %v148
    %v6500 = vsel %vm5988, 0.0, %v149
    %v6501 = vsel %vm5989, 0.0, %v150
    %v6502 = vsel %vm5990, 0.0, %v151
    %v6503 = vsel %vm5991, 0.0, %v152
    %v6504 = vsel %vm5992, 0.0, %v153
    %v6505 = vsel %vm5993, 0.0, %v154
    %v6506 = vsel %vm5994, 0.0, %v155
    %v6507 = vsel %vm5995, 0.0, %v156
    %v6508 = vsel %vm5996, 0.0, %v157
    %v6509 = vsel %vm5997, 0.0, %v158
    %v6510 = vsel %vm5998, 0.0, %v159
    %v6511 = vsel %vm5999, 0.0, %v160
    %v6512 = vsel %vm6000, 0.0, %v161
    %v6513 = vsel %vm6001, 0.0, %v162
    %v6514 = vsel %vm6002, 0.0, %v163
    %v6515 = vsel %vm6003, 0.0, %v164
    %v6516 = vsel %vm6004, 0.0, %v165
    %v6517 = vsel %vm6005, 0.0, %v166
    %v6518 = vsel %vm6006, 0.0, %v167
    %v6519 = vsel %vm6007, 0.0, %v168
    %v6520 = vsel %vm6008, 0.0, %v169
    %v6521 = vsel %vm6009, 0.0, %v170
    %v6522 = vsel %vm6010, 0.0, %v171
    %v6523 = vsel %vm6011, 0.0, %v172
    %v6524 = vsel %vm6012, 0.0, %v173
    %v6525 = vsel %vm6013, 0.0, %v174
    %v6526 = vsel %vm6014, 0.0, %v175
    %v6527 = vsel %vm6015, 0.0, %v176
    %v6528 = vsel %vm6016, 0.0, %v177
    %v6529 = vsel %vm6017, 0.0, %v178
    %v6530 = vsel %vm6018, 0.0, %v179
    %v6531 = vsel %vm6019, 0.0, %v180
    %v6532 = vsel %vm6020, 0.0, %v181
    %v6533 = vsel %vm6021, 0.0, %v182
    %v6534 = vsel %vm6022, 0.0, %v183
    %v6535 = vsel %vm6023, 0.0, %v184
    %v6536 = vsel %vm6024, 0.0, %v185
    %v6537 = vsel %vm6025, 0.0, %v186
    %v6538 = vsel %vm6026, 0.0, %v187
    %v6539 = vsel %vm6027, 0.0, %v188
    %v6540 = vsel %vm6028, 0.0, %v189
    %v6541 = vsel %vm6029, 0.0, %v190
    %v6542 = vsel %vm6030, 0.0, %v191
    %v6543 = vsel %vm6031, 0.0, %v192
    %v6544 = vsel %vm6032, 0.0, %v193
    %v6545 = vsel %vm6033, 0.0, %v194
    %v6546 = vsel %vm6034, 0.0, %v195
    %v6547 = vsel %vm6035, 0.0, %v196
    %v6548 = vsel %vm6036, 0.0, %v197
    %v6549 = vsel %vm6037, 0.0, %v198
    %v6550 = vsel %vm6038, 0.0, %v199
    %v6551 = vsel %vm6039, 0.0, %v200
    %v6552 = vsel %vm6040, 0.0, %v201
    %v6553 = vsel %vm6041, 0.0, %v202
    %v6554 = vsel %vm6042, 0.0, %v203
    %v6555 = vsel %vm6043, 0.0, %v204
    %v6556 = vsel %vm6044, 0.0, %v205
    %v6557 = vsel %vm6045, 0.0, %v206
    %v6558 = vsel %vm6046, 0.0, %v207
    %v6559 = vsel %vm6047, 0.0, %v208
    %v6560 = vsel %vm6048, 0.0, %v209
    %v6561 = vsel %vm6049, 0.0, %v210
    %v6562 = vsel %vm6050, 0.0, %v211
    %v6563 = vsel %vm6051, 0.0, %v212
    %v6564 = vsel %vm6052, 0.0, %v213
    %v6565 = vsel %vm6053, 0.0, %v214
    %v6566 = vsel %vm6054, 0.0, %v215
    %v6567 = vsel %vm6055, 0.0, %v216
    %v6568 = vsel %vm6056, 0.0, %v217
    %v6569 = vsel %vm6057, 0.0, %v218
    %v6570 = vsel %vm6058, 0.0, %v219
    %v6571 = vsel %vm6059, 0.0, %v220
    %v6572 = vsel %vm6060, 0.0, %v221
    %v6573 = vsel %vm6061, 0.0, %v222
    %v6574 = vsel %vm6062, 0.0, %v223
    %v6575 = vsel %vm6063, 0.0, %v224
    %v6576 = vsel %vm6064, 0.0, %v225
    %v6577 = vsel %vm6065, 0.0, %v226
    %v6578 = vsel %vm6066, 0.0, %v227
    %v6579 = vsel %vm6067, 0.0, %v228
    %v6580 = vsel %vm6068, 0.0, %v229
    %v6581 = vsel %vm6069, 0.0, %v230
    %v6582 = vsel %vm6070, 0.0, %v231
    %v6583 = vsel %vm6071, 0.0, %v232
    %v6584 = vsel %vm6072, 0.0, %v233
    %v6585 = vsel %vm6073, 0.0, %v234
    %v6586 = vsel %vm6074, 0.0, %v235
    %v6587 = vsel %vm6075, 0.0, %v236
    %v6588 = vsel %vm6076, 0.0, %v237
    %v6589 = vsel %vm6077, 0.0, %v238
    %v6590 = vsel %vm6078, 0.0, %v239
    %v6591 = vsel %vm6079, 0.0, %v240
    %v6592 = vsel %vm6080, 0.0, %v241
    %v6593 = vsel %vm6081, 0.0, %v242
    %v6594 = vsel %vm6082, 0.0, %v243
    %v6595 = vsel %vm6083, 0.0, %v244
    %v6596 = vsel %vm6084, 0.0, %v245
    %v6597 = vsel %vm6085, 0.0, %v246
    %v6598 = vsel %vm6086, 0.0, %v247
    %v6599 = vsel %vm6087, 0.0, %v248
    %v6600 = vsel %vm6088, 0.0, %v249
    %v6601 = vsel %vm6089, 0.0, %v250
    %v6602 = vsel %vm6090, 0.0, %v251
    %v6603 = vsel %vm6091, 0.0, %v252
    %v6604 = vsel %vm6092, 0.0, %v253
    %v6605 = vsel %vm6093, 0.0, %v254
    %v6606 = vsel %vm6094, 0.0, %v255
    %v6607 = vsel %vm6095, 0.0, %v256
    %v6608 = vsel %vm6096, 0.0, %v257
    %v6609 = vsel %vm6097, 0.0, %v258
    %v6610 = vsel %vm6098, 0.0, %v259
    %v6611 = vsel %vm6099, 0.0, %v260
    %v6612 = vsel %vm6100, 0.0, %v261
    %v6613 = vsel %vm6101, 0.0, %v262
    %v6614 = vsel %vm6102, 0.0, %v263
    %v6615 = vsel %vm6103, 0.0, %v264
    %v6616 = vsel %vm6104, 0.0, %v265
    %v6617 = vsel %vm6105, 0.0, %v266
    %v6618 = vsel %vm6106, 0.0, %v267
    %v6619 = vsel %vm6107, 0.0, %v268
    %v6620 = vsel %vm6108, 0.0, %v269
    %v6621 = vsel %vm6109, 0.0, %v270
    %v6622 = vsel %vm6110, 0.0, %v271
    %v6623 = vsel %vm6111, 0.0, %v272
    %v6624 = vsel %vm6112, 0.0, %v273
    %v6625 = vsel %vm6113, 0.0, %v274
    %v6626 = vsel %vm6114, 0.0, %v275
    %v6627 = vsel %vm6115, 0.0, %v276
    %v6628 = vsel %vm6116, 0.0, %v277
    %v6629 = vsel %vm6117, 0.0, %v278
    %v6630 = vsel %vm6118, 0.0, %v279
    %v6631 = vsel %vm6119, 0.0, %v280
    %v6632 = vsel %vm6120, 0.0, %v281
    %v6633 = vsel %vm6121, 0.0, %v282
    %v6634 = vsel %vm6122, 0.0, %v283
    %v6635 = vsel %vm6123, 0.0, %v284
    %v6636 = vsel %vm6124, 0.0, %v285
    %v6637 = vsel %vm6125, 0.0, %v286
    %v6638 = vsel %vm6126, 0.0, %v287
    %v6639 = vsel %vm6127, 0.0, %v288
    %v6640 = vsel %vm6128, 0.0, %v289
    %v6641 = vsel %vm6129, 0.0, %v290
    %v6642 = vsel %vm6130, 0.0, %v291
    %v6643 = vsel %vm6131, 0.0, %v292
    %v6644 = vsel %vm6132, 0.0, %v293
    %v6645 = vsel %vm6133, 0.0, %v294
    %v6646 = vsel %vm6134, 0.0, %v295
    %v6647 = vsel %vm6135, 0.0, %v296
    %v6648 = vsel %vm6136, 0.0, %v297
    %v6649 = vsel %vm6137, 0.0, %v298
    %v6650 = vsel %vm6138, 0.0, %v299
    %v6651 = vsel %vm6139, 0.0, %v300
    %v6652 = vsel %vm6140, 0.0, %v301
    %v6653 = vsel %vm6141, 0.0, %v302
    %v6654 = vsel %vm6142, 0.0, %v303
    %v6655 = vsel %vm6143, 0.0, %v304
    %v6656 = vsel %vm6144, 0.0, %v305
    %v6657 = vsel %vm6145, 0.0, %v306
    %v6658 = vsel %vm6146, 0.0, %v307
    %v6659 = vsel %vm6147, 0.0, %v308
    %v6660 = vsel %vm6148, 0.0, %v309
    %v6661 = vsel %vm6149, 0.0, %v310
    %v6662 = vsel %vm6150, 0.0, %v311
    %v6663 = vsel %vm6151, 0.0, %v312
    %v6664 = vsel %vm6152, 0.0, %v313
    %v6665 = vsel %vm6153, 0.0, %v314
    %v6666 = vsel %vm6154, 0.0, %v315
    %v6667 = vsel %vm6155, 0.0, %v316
    %v6668 = vsel %vm6156, 0.0, %v317
    %v6669 = vsel %vm6157, 0.0, %v318
    %v6670 = vsel %vm6158, 0.0, %v319
    %v6671 = vsel %vm6159, 0.0, %v320
    %v6672 = vsel %vm6160, 0.0, %v321
    %v6673 = vsel %vm6161, 0.0, %v322
    %v6674 = vsel %vm6162, 0.0, %v323
    %v6675 = vsel %vm6163, 0.0, %v324
    %v6676 = vsel %vm6164, 0.0, %v325
    %v6677 = vsel %vm6165, 0.0, %v326
    %v6678 = vsel %vm6166, 0.0, %v327
    %v6679 = vsel %vm6167, 0.0, %v328
    %v6680 = vsel %vm6168, 0.0, %v329
    %v6681 = vsel %vm6169, 0.0, %v330
    %v6682 = vsel %vm6170, 0.0, %v331
    %v6683 = vsel %vm6171, 0.0, %v332
    %v6684 = vsel %vm6172, 0.0, %v333
    %v6685 = vsel %vm6173, 0.0, %v334
    %v6686 = vsel %vm6174, 0.0, %v335
    %v6687 = vsel %vm6175, 0.0, %v336
    %v6688 = vsel %vm6176, 0.0, %v337
    %v6689 = vsel %vm6177, 0.0, %v338
    %v6690 = vsel %vm6178, 0.0, %v339
    %v6691 = vsel %vm6179, 0.0, %v340
    %v6692 = vsel %vm6180, 0.0, %v341
    %v6693 = vsel %vm6181, 0.0, %v342
    %v6694 = vsel %vm6182, 0.0, %v343
    %v6695 = vsel %vm6183, 0.0, %v344
    %v6696 = vsel %vm6184, 0.0, %v345
    %v6697 = vsel %vm6185, 0.0, %v346
    %v6698 = vsel %vm6186, 0.0, %v347
    %v6699 = vsel %vm6187, 0.0, %v348
    %v6700 = vsel %vm6188, 0.0, %v349
    %v6701 = vsel %vm6189, 0.0, %v350
    %v6702 = vsel %vm6190, 0.0, %v351
    %v6703 = vsel %vm6191, 0.0, %v352
    %v6704 = vsel %vm6192, 0.0, %v353
    %v6705 = vsel %vm6193, 0.0, %v354
    %v6706 = vsel %vm6194, 0.0, %v355
    %v6707 = vsel %vm6195, 0.0, %v356
    %v6708 = vsel %vm6196, 0.0, %v357
    %v6709 = vsel %vm6197, 0.0, %v358
    %v6710 = vsel %vm6198, 0.0, %v359
    %v6711 = vsel %vm6199, 0.0, %v360
    %v6712 = vsel %vm6200, 0.0, %v361
    %v6713 = vsel %vm6201, 0.0, %v362
    %v6714 = vsel %vm6202, 0.0, %v363
    %v6715 = vsel %vm6203, 0.0, %v364
    %v6716 = vsel %vm6204, 0.0, %v365
    %v6717 = vsel %vm6205, 0.0, %v366
    %v6718 = vsel %vm6206, 0.0, %v367
    %v6719 = vsel %vm6207, 0.0, %v368
    %v6720 = vsel %vm6208, 0.0, %v369
    %v6721 = vsel %vm6209, 0.0, %v370
    %v6722 = vsel %vm6210, 0.0, %v371
    %v6723 = vsel %vm6211, 0.0, %v372
    %v6724 = vsel %vm6212, 0.0, %v373
    %v6725 = vsel %vm6213, 0.0, %v374
    %v6726 = vsel %vm6214, 0.0, %v375
    %v6727 = vsel %vm6215, 0.0, %v376
    %v6728 = vsel %vm6216, 0.0, %v377
    %v6729 = vsel %vm6217, 0.0, %v378
    %v6730 = vsel %vm6218, 0.0, %v379
    %v6731 = vsel %vm6219, 0.0, %v380
    %v6732 = vsel %vm6220, 0.0, %v381
    %v6733 = vsel %vm6221, 0.0, %v382
    %v6734 = vsel %vm6222, 0.0, %v383
    %v6735 = vsel %vm6223, 0.0, %v384
    %v6736 = vsel %vm6224, 0.0, %v385
    %v6737 = vsel %vm6225, 0.0, %v386
    %v6738 = vsel %vm6226, 0.0, %v387
    %v6739 = vsel %vm6227, 0.0, %v388
    %v6740 = vsel %vm6228, 0.0, %v389
    %v6741 = vsel %vm6229, 0.0, %v390
    %v6742 = vsel %vm6230, 0.0, %v391
    %v6743 = vsel %vm6231, 0.0, %v392
    %v6744 = vsel %vm6232, 0.0, %v393
    %v6745 = vsel %vm6233, 0.0, %v394
    %v6746 = vsel %vm6234, 0.0, %v395
    %v6747 = vsel %vm6235, 0.0, %v396
    %v6748 = vsel %vm6236, 0.0, %v397
    %v6749 = vsel %vm6237, 0.0, %v398
    %v6750 = vsel %vm6238, 0.0, %v399
    %v6751 = vsel %vm6239, 0.0, %v400
    %v6752 = vsel %vm6240, 0.0, %v401
    %v6753 = vsel %vm6241, 0.0, %v402
    %v6754 = vsel %vm6242, 0.0, %v403
    %v6755 = vsel %vm6243, 0.0, %v404
    %v6756 = vsel %vm6244, 0.0, %v405
    %v6757 = vsel %vm6245, 0.0, %v406
    %v6758 = vsel %vm6246, 0.0, %v407
    %v6759 = vsel %vm6247, 0.0, %v408
    %v6760 = vsel %vm6248, 0.0, %v409
    %v6761 = vsel %vm6249, 0.0, %v410
    %v6762 = vsel %vm6250, 0.0, %v411
    %v6763 = vsel %vm6251, 0.0, %v412
    %v6764 = vsel %vm6252, 0.0, %v413
    %v6765 = vsel %vm6253, 0.0, %v414
    %v6766 = vsel %vm6254, 0.0, %v415
    %v6767 = vsel %vm6255, 0.0, %v416
    %v6768 = vsel %vm6256, 0.0, %v417
    %v6769 = vsel %vm6257, 0.0, %v418
    %v6770 = vsel %vm6258, 0.0, %v419
    %v6771 = vsel %vm6259, 0.0, %v420
    %v6772 = vsel %vm6260, 0.0, %v421
    %v6773 = vsel %vm6261, 0.0, %v422
    %v6774 = vsel %vm6262, 0.0, %v423
    %v6775 = vsel %vm6263, 0.0, %v424
    %v6776 = vsel %vm6264, 0.0, %v425
    %v6777 = vsel %vm6265, 0.0, %v426
    %v6778 = vsel %vm6266, 0.0, %v427
    %v6779 = vsel %vm6267, 0.0, %v428
    %v6780 = vsel %vm6268, 0.0, %v429
    %v6781 = vsel %vm6269, 0.0, %v430
    %v6782 = vsel %vm6270, 0.0, %v431
    %v6783 = vsel %vm6271, 0.0, %v432
    %v6784 = vsel %vm6272, 0.0, %v433
    %v6785 = vsel %vm6273, 0.0, %v434
    %v6786 = vsel %vm6274, 0.0, %v435
    %v6787 = vsel %vm6275, 0.0, %v436
    %v6788 = vsel %vm6276, 0.0, %v437
    %v6789 = vsel %vm6277, 0.0, %v438
    %v6790 = vsel %vm6278, 0.0, %v439
    %v6791 = vsel %vm6279, 0.0, %v440
    %v6792 = vsel %vm6280, 0.0, %v441
    %v6793 = vsel %vm6281, 0.0, %v442
    %v6794 = vsel %vm6282, 0.0, %v443
    %v6795 = vsel %vm6283, 0.0, %v444
    %v6796 = vsel %vm6284, 0.0, %v445
    %v6797 = vsel %vm6285, 0.0, %v446
    %v6798 = vsel %vm6286, 0.0, %v447
    %v6799 = vsel %vm6287, 0.0, %v448
    %v6800 = vsel %vm6288, 0.0, %v449
    %v6801 = vsel %vm6289, 0.0, %v450
    %v6802 = vsel %vm6290, 0.0, %v451
    %v6803 = vsel %vm6291, 0.0, %v452
    %v6804 = vsel %vm6292, 0.0, %v453
    %v6805 = vsel %vm6293, 0.0, %v454
    %v6806 = vsel %vm6294, 0.0, %v455
    %v6807 = vsel %vm6295, 0.0, %v456
    %v6808 = vsel %vm6296, 0.0, %v457
    %v6809 = vsel %vm6297, 0.0, %v458
    %v6810 = vsel %vm6298, 0.0, %v459
    %v6811 = vsel %vm6299, 0.0, %v460
    %v6812 = vsel %vm6300, 0.0, %v461
    %v6813 = vsel %vm6301, 0.0, %v462
    %v6814 = vsel %vm6302, 0.0, %v463
    %v6815 = vsel %vm6303, 0.0, %v464
    %v6816 = vsel %vm6304, 0.0, %v465
    %v6817 = vsel %vm6305, 0.0, %v466
    %v6818 = vsel %vm6306, 0.0, %v467
    %v6819 = vsel %vm6307, 0.0, %v468
    %v6820 = vsel %vm6308, 0.0, %v469
    %v6821 = vsel %vm6309, 0.0, %v470
    %v6822 = vsel %vm6310, 0.0, %v471
    %v6823 = vsel %vm6311, 0.0, %v472
    %v6824 = vsel %vm6312, 0.0, %v473
    %v6825 = vsel %vm6313, 0.0, %v474
    %v6826 = vsel %vm6314, 0.0, %v475
    %v6827 = vsel %vm6315, 0.0, %v476
    %v6828 = vsel %vm6316, 0.0, %v477
    %v6829 = vsel %vm6317, 0.0, %v478
    %v6830 = vsel %vm6318, 0.0, %v479
    %v6831 = vsel %vm6319, 0.0, %v480
    %v6832 = vsel %vm6320, 0.0, %v481
    %v6833 = vsel %vm6321, 0.0, %v482
    %v6834 = vsel %vm6322, 0.0, %v483
    %v6835 = vsel %vm6323, 0.0, %v484
    %v6836 = vsel %vm6324, 0.0, %v485
    %v6837 = vsel %vm6325, 0.0, %v486
    %v6838 = vsel %vm6326, 0.0, %v487
    %v6839 = vsel %vm6327, 0.0, %v488
    %v6840 = vsel %vm6328, 0.0, %v489
    %v6841 = vsel %vm6329, 0.0, %v490
    %v6842 = vsel %vm6330, 0.0, %v491
    %v6843 = vsel %vm6331, 0.0, %v492
    %v6844 = vsel %vm6332, 0.0, %v493
    %v6845 = vsel %vm6333, 0.0, %v494
    %v6846 = vsel %vm6334, 0.0, %v495
    %v6847 = vsel %vm6335, 0.0, %v496
    %v6848 = vsel %vm6336, 0.0, %v497
    %v6849 = vsel %vm6337, 0.0, %v498
    %v6850 = vsel %vm6338, 0.0, %v499
    %v6851 = vsel %vm6339, 0.0, %v500
    %v6852 = vsel %vm6340, 0.0, %v501
    %v6853 = vsel %vm6341, 0.0, %v502
    %v6854 = vsel %vm6342, 0.0, %v503
    %v6855 = vsel %vm6343, 0.0, %v504
    %v6856 = vsel %vm6344, 0.0, %v505
    %v6857 = vsel %vm6345, 0.0, %v506
    %v6858 = vsel %vm6346, 0.0, %v507
    %v6859 = vsel %vm6347, 0.0, %v508
    %v6860 = vsel %vm6348, 0.0, %v509
    %v6861 = vsel %vm6349, 0.0, %v510
    %v6862 = vsel %vm6350, 0.0, %v511
    %v6863 = vsel %vm6351, 0.0, %v512
    %v6864 = vsel %vm6352, 0.0, %v513
    %v6865 = vsel %vm6353, 0.0, %v514
    %v6866 = vsel %vm6354, 0.0, %v515
    %v6867 = vsel %vm6355, 0.0, %v516
    %v6868 = vsel %vm6356, 0.0, %v517
    %v6869 = vsel %vm6357, 0.0, %v518
    %v6870 = vsel %vm6358, 0.0, %v519
    %v6871 = vsel %vm6359, 0.0, %v520
    %v6872 = vsel %vm6360, 0.0, %v521
    %v6873 = vsel %vm6361, 0.0, %v522
    %v6874 = vsel %vm6362, 0.0, %v523
    %v6875 = vsel %vm6363, 0.0, %v524
    %v6876 = vsel %vm6364, 0.0, %v525
    %v6877 = vsel %vm6365, 0.0, %v526
    %v6878 = vsel %vm6366, 0.0, %v527
    %v6879 = vsel %vm6367, 0.0, %v528
    %v6880 = vsel %vm6368, 0.0, %v529
    %v6881 = vsel %vm6369, 0.0, %v530
    %v6882 = vsel %vm6370, 0.0, %v531
    %v6883 = vsel %vm6371, 0.0, %v532
    %v6884 = vsel %vm6372, 0.0, %v533
    %v6885 = vsel %vm6373, 0.0, %v534
    %v6886 = vsel %vm6374, 0.0, %v535
    %v6887 = vsel %vm6375, 0.0, %v536
    %v6888 = vmul.f32 %v6376, 1.1111112
    %v6889 = vmul.f32 %v6377, 1.1111112
    %v6890 = vmul.f32 %v6378, 1.1111112
    %v6891 = vmul.f32 %v6379, 1.1111112
    %v6892 = vmul.f32 %v6380, 1.1111112
    %v6893 = vmul.f32 %v6381, 1.1111112
    %v6894 = vmul.f32 %v6382, 1.1111112
    %v6895 = vmul.f32 %v6383, 1.1111112
    %v6896 = vmul.f32 %v6384, 1.1111112
    %v6897 = vmul.f32 %v6385, 1.1111112
    %v6898 = vmul.f32 %v6386, 1.1111112
    %v6899 = vmul.f32 %v6387, 1.1111112
    %v6900 = vmul.f32 %v6388, 1.1111112
    %v6901 = vmul.f32 %v6389, 1.1111112
    %v6902 = vmul.f32 %v6390, 1.1111112
    %v6903 = vmul.f32 %v6391, 1.1111112
    %v6904 = vmul.f32 %v6392, 1.1111112
    %v6905 = vmul.f32 %v6393, 1.1111112
    %v6906 = vmul.f32 %v6394, 1.1111112
    %v6907 = vmul.f32 %v6395, 1.1111112
    %v6908 = vmul.f32 %v6396, 1.1111112
    %v6909 = vmul.f32 %v6397, 1.1111112
    %v6910 = vmul.f32 %v6398, 1.1111112
    %v6911 = vmul.f32 %v6399, 1.1111112
    %v6912 = vmul.f32 %v6400, 1.1111112
    %v6913 = vmul.f32 %v6401, 1.1111112
    %v6914 = vmul.f32 %v6402, 1.1111112
    %v6915 = vmul.f32 %v6403, 1.1111112
    %v6916 = vmul.f32 %v6404, 1.1111112
    %v6917 = vmul.f32 %v6405, 1.1111112
    %v6918 = vmul.f32 %v6406, 1.1111112
    %v6919 = vmul.f32 %v6407, 1.1111112
    %v6920 = vmul.f32 %v6408, 1.1111112
    %v6921 = vmul.f32 %v6409, 1.1111112
    %v6922 = vmul.f32 %v6410, 1.1111112
    %v6923 = vmul.f32 %v6411, 1.1111112
    %v6924 = vmul.f32 %v6412, 1.1111112
    %v6925 = vmul.f32 %v6413, 1.1111112
    %v6926 = vmul.f32 %v6414, 1.1111112
    %v6927 = vmul.f32 %v6415, 1.1111112
    %v6928 = vmul.f32 %v6416, 1.1111112
    %v6929 = vmul.f32 %v6417, 1.1111112
    %v6930 = vmul.f32 %v6418, 1.1111112
    %v6931 = vmul.f32 %v6419, 1.1111112
    %v6932 = vmul.f32 %v6420, 1.1111112
    %v6933 = vmul.f32 %v6421, 1.1111112
    %v6934 = vmul.f32 %v6422, 1.1111112
    %v6935 = vmul.f32 %v6423, 1.1111112
    %v6936 = vmul.f32 %v6424, 1.1111112
    %v6937 = vmul.f32 %v6425, 1.1111112
    %v6938 = vmul.f32 %v6426, 1.1111112
    %v6939 = vmul.f32 %v6427, 1.1111112
    %v6940 = vmul.f32 %v6428, 1.1111112
    %v6941 = vmul.f32 %v6429, 1.1111112
    %v6942 = vmul.f32 %v6430, 1.1111112
    %v6943 = vmul.f32 %v6431, 1.1111112
    %v6944 = vmul.f32 %v6432, 1.1111112
    %v6945 = vmul.f32 %v6433, 1.1111112
    %v6946 = vmul.f32 %v6434, 1.1111112
    %v6947 = vmul.f32 %v6435, 1.1111112
    %v6948 = vmul.f32 %v6436, 1.1111112
    %v6949 = vmul.f32 %v6437, 1.1111112
    %v6950 = vmul.f32 %v6438, 1.1111112
    %v6951 = vmul.f32 %v6439, 1.1111112
    %v6952 = vmul.f32 %v6440, 1.1111112
    %v6953 = vmul.f32 %v6441, 1.1111112
    %v6954 = vmul.f32 %v6442, 1.1111112
    %v6955 = vmul.f32 %v6443, 1.1111112
    %v6956 = vmul.f32 %v6444, 1.1111112
    %v6957 = vmul.f32 %v6445, 1.1111112
    %v6958 = vmul.f32 %v6446, 1.1111112
    %v6959 = vmul.f32 %v6447, 1.1111112
    %v6960 = vmul.f32 %v6448, 1.1111112
    %v6961 = vmul.f32 %v6449, 1.1111112
    %v6962 = vmul.f32 %v6450, 1.1111112
    %v6963 = vmul.f32 %v6451, 1.1111112
    %v6964 = vmul.f32 %v6452, 1.1111112
    %v6965 = vmul.f32 %v6453, 1.1111112
    %v6966 = vmul.f32 %v6454, 1.1111112
    %v6967 = vmul.f32 %v6455, 1.1111112
    %v6968 = vmul.f32 %v6456, 1.1111112
    %v6969 = vmul.f32 %v6457, 1.1111112
    %v6970 = vmul.f32 %v6458, 1.1111112
    %v6971 = vmul.f32 %v6459, 1.1111112
    %v6972 = vmul.f32 %v6460, 1.1111112
    %v6973 = vmul.f32 %v6461, 1.1111112
    %v6974 = vmul.f32 %v6462, 1.1111112
    %v6975 = vmul.f32 %v6463, 1.1111112
    %v6976 = vmul.f32 %v6464, 1.1111112
    %v6977 = vmul.f32 %v6465, 1.1111112
    %v6978 = vmul.f32 %v6466, 1.1111112
    %v6979 = vmul.f32 %v6467, 1.1111112
    %v6980 = vmul.f32 %v6468, 1.1111112
    %v6981 = vmul.f32 %v6469, 1.1111112
    %v6982 = vmul.f32 %v6470, 1.1111112
    %v6983 = vmul.f32 %v6471, 1.1111112
    %v6984 = vmul.f32 %v6472, 1.1111112
    %v6985 = vmul.f32 %v6473, 1.1111112
    %v6986 = vmul.f32 %v6474, 1.1111112
    %v6987 = vmul.f32 %v6475, 1.1111112
    %v6988 = vmul.f32 %v6476, 1.1111112
    %v6989 = vmul.f32 %v6477, 1.1111112
    %v6990 = vmul.f32 %v6478, 1.1111112
    %v6991 = vmul.f32 %v6479, 1.1111112
    %v6992 = vmul.f32 %v6480, 1.1111112
    %v6993 = vmul.f32 %v6481, 1.1111112
    %v6994 = vmul.f32 %v6482, 1.1111112
    %v6995 = vmul.f32 %v6483, 1.1111112
    %v6996 = vmul.f32 %v6484, 1.1111112
    %v6997 = vmul.f32 %v6485, 1.1111112
    %v6998 = vmul.f32 %v6486, 1.1111112
    %v6999 = vmul.f32 %v6487, 1.1111112
    %v7000 = vmul.f32 %v6488, 1.1111112
    %v7001 = vmul.f32 %v6489, 1.1111112
    %v7002 = vmul.f32 %v6490, 1.1111112
    %v7003 = vmul.f32 %v6491, 1.1111112
    %v7004 = vmul.f32 %v6492, 1.1111112
    %v7005 = vmul.f32 %v6493, 1.1111112
    %v7006 = vmul.f32 %v6494, 1.1111112
    %v7007 = vmul.f32 %v6495, 1.1111112
    %v7008 = vmul.f32 %v6496, 1.1111112
    %v7009 = vmul.f32 %v6497, 1.1111112
    %v7010 = vmul.f32 %v6498, 1.1111112
    %v7011 = vmul.f32 %v6499, 1.1111112
    %v7012 = vmul.f32 %v6500, 1.1111112
    %v7013 = vmul.f32 %v6501, 1.1111112
    %v7014 = vmul.f32 %v6502, 1.1111112
    %v7015 = vmul.f32 %v6503, 1.1111112
    %v7016 = vmul.f32 %v6504, 1.1111112
    %v7017 = vmul.f32 %v6505, 1.1111112
    %v7018 = vmul.f32 %v6506, 1.1111112
    %v7019 = vmul.f32 %v6507, 1.1111112
    %v7020 = vmul.f32 %v6508, 1.1111112
    %v7021 = vmul.f32 %v6509, 1.1111112
    %v7022 = vmul.f32 %v6510, 1.1111112
    %v7023 = vmul.f32 %v6511, 1.1111112
    %v7024 = vmul.f32 %v6512, 1.1111112
    %v7025 = vmul.f32 %v6513, 1.1111112
    %v7026 = vmul.f32 %v6514, 1.1111112
    %v7027 = vmul.f32 %v6515, 1.1111112
    %v7028 = vmul.f32 %v6516, 1.1111112
    %v7029 = vmul.f32 %v6517, 1.1111112
    %v7030 = vmul.f32 %v6518, 1.1111112
    %v7031 = vmul.f32 %v6519, 1.1111112
    %v7032 = vmul.f32 %v6520, 1.1111112
    %v7033 = vmul.f32 %v6521, 1.1111112
    %v7034 = vmul.f32 %v6522, 1.1111112
    %v7035 = vmul.f32 %v6523, 1.1111112
    %v7036 = vmul.f32 %v6524, 1.1111112
    %v7037 = vmul.f32 %v6525, 1.1111112
    %v7038 = vmul.f32 %v6526, 1.1111112
    %v7039 = vmul.f32 %v6527, 1.1111112
    %v7040 = vmul.f32 %v6528, 1.1111112
    %v7041 = vmul.f32 %v6529, 1.1111112
    %v7042 = vmul.f32 %v6530, 1.1111112
    %v7043 = vmul.f32 %v6531, 1.1111112
    %v7044 = vmul.f32 %v6532, 1.1111112
    %v7045 = vmul.f32 %v6533, 1.1111112
    %v7046 = vmul.f32 %v6534, 1.1111112
    %v7047 = vmul.f32 %v6535, 1.1111112
    %v7048 = vmul.f32 %v6536, 1.1111112
    %v7049 = vmul.f32 %v6537, 1.1111112
    %v7050 = vmul.f32 %v6538, 1.1111112
    %v7051 = vmul.f32 %v6539, 1.1111112
    %v7052 = vmul.f32 %v6540, 1.1111112
    %v7053 = vmul.f32 %v6541, 1.1111112
    %v7054 = vmul.f32 %v6542, 1.1111112
    %v7055 = vmul.f32 %v6543, 1.1111112
    %v7056 = vmul.f32 %v6544, 1.1111112
    %v7057 = vmul.f32 %v6545, 1.1111112
    %v7058 = vmul.f32 %v6546, 1.1111112
    %v7059 = vmul.f32 %v6547, 1.1111112
    %v7060 = vmul.f32 %v6548, 1.1111112
    %v7061 = vmul.f32 %v6549, 1.1111112
    %v7062 = vmul.f32 %v6550, 1.1111112
    %v7063 = vmul.f32 %v6551, 1.1111112
    %v7064 = vmul.f32 %v6552, 1.1111112
    %v7065 = vmul.f32 %v6553, 1.1111112
    %v7066 = vmul.f32 %v6554, 1.1111112
    %v7067 = vmul.f32 %v6555, 1.1111112
    %v7068 = vmul.f32 %v6556, 1.1111112
    %v7069 = vmul.f32 %v6557, 1.1111112
    %v7070 = vmul.f32 %v6558, 1.1111112
    %v7071 = vmul.f32 %v6559, 1.1111112
    %v7072 = vmul.f32 %v6560, 1.1111112
    %v7073 = vmul.f32 %v6561, 1.1111112
    %v7074 = vmul.f32 %v6562, 1.1111112
    %v7075 = vmul.f32 %v6563, 1.1111112
    %v7076 = vmul.f32 %v6564, 1.1111112
    %v7077 = vmul.f32 %v6565, 1.1111112
    %v7078 = vmul.f32 %v6566, 1.1111112
    %v7079 = vmul.f32 %v6567, 1.1111112
    %v7080 = vmul.f32 %v6568, 1.1111112
    %v7081 = vmul.f32 %v6569, 1.1111112
    %v7082 = vmul.f32 %v6570, 1.1111112
    %v7083 = vmul.f32 %v6571, 1.1111112
    %v7084 = vmul.f32 %v6572, 1.1111112
    %v7085 = vmul.f32 %v6573, 1.1111112
    %v7086 = vmul.f32 %v6574, 1.1111112
    %v7087 = vmul.f32 %v6575, 1.1111112
    %v7088 = vmul.f32 %v6576, 1.1111112
    %v7089 = vmul.f32 %v6577, 1.1111112
    %v7090 = vmul.f32 %v6578, 1.1111112
    %v7091 = vmul.f32 %v6579, 1.1111112
    %v7092 = vmul.f32 %v6580, 1.1111112
    %v7093 = vmul.f32 %v6581, 1.1111112
    %v7094 = vmul.f32 %v6582, 1.1111112
    %v7095 = vmul.f32 %v6583, 1.1111112
    %v7096 = vmul.f32 %v6584, 1.1111112
    %v7097 = vmul.f32 %v6585, 1.1111112
    %v7098 = vmul.f32 %v6586, 1.1111112
    %v7099 = vmul.f32 %v6587, 1.1111112
    %v7100 = vmul.f32 %v6588, 1.1111112
    %v7101 = vmul.f32 %v6589, 1.1111112
    %v7102 = vmul.f32 %v6590, 1.1111112
    %v7103 = vmul.f32 %v6591, 1.1111112
    %v7104 = vmul.f32 %v6592, 1.1111112
    %v7105 = vmul.f32 %v6593, 1.1111112
    %v7106 = vmul.f32 %v6594, 1.1111112
    %v7107 = vmul.f32 %v6595, 1.1111112
    %v7108 = vmul.f32 %v6596, 1.1111112
    %v7109 = vmul.f32 %v6597, 1.1111112
    %v7110 = vmul.f32 %v6598, 1.1111112
    %v7111 = vmul.f32 %v6599, 1.1111112
    %v7112 = vmul.f32 %v6600, 1.1111112
    %v7113 = vmul.f32 %v6601, 1.1111112
    %v7114 = vmul.f32 %v6602, 1.1111112
    %v7115 = vmul.f32 %v6603, 1.1111112
    %v7116 = vmul.f32 %v6604, 1.1111112
    %v7117 = vmul.f32 %v6605, 1.1111112
    %v7118 = vmul.f32 %v6606, 1.1111112
    %v7119 = vmul.f32 %v6607, 1.1111112
    %v7120 = vmul.f32 %v6608, 1.1111112
    %v7121 = vmul.f32 %v6609, 1.1111112
    %v7122 = vmul.f32 %v6610, 1.1111112
    %v7123 = vmul.f32 %v6611, 1.1111112
    %v7124 = vmul.f32 %v6612, 1.1111112
    %v7125 = vmul.f32 %v6613, 1.1111112
    %v7126 = vmul.f32 %v6614, 1.1111112
    %v7127 = vmul.f32 %v6615, 1.1111112
    %v7128 = vmul.f32 %v6616, 1.1111112
    %v7129 = vmul.f32 %v6617, 1.1111112
    %v7130 = vmul.f32 %v6618, 1.1111112
    %v7131 = vmul.f32 %v6619, 1.1111112
    %v7132 = vmul.f32 %v6620, 1.1111112
    %v7133 = vmul.f32 %v6621, 1.1111112
    %v7134 = vmul.f32 %v6622, 1.1111112
    %v7135 = vmul.f32 %v6623, 1.1111112
    %v7136 = vmul.f32 %v6624, 1.1111112
    %v7137 = vmul.f32 %v6625, 1.1111112
    %v7138 = vmul.f32 %v6626, 1.1111112
    %v7139 = vmul.f32 %v6627, 1.1111112
    %v7140 = vmul.f32 %v6628, 1.1111112
    %v7141 = vmul.f32 %v6629, 1.1111112
    %v7142 = vmul.f32 %v6630, 1.1111112
    %v7143 = vmul.f32 %v6631, 1.1111112
    %v7144 = vmul.f32 %v6632, 1.1111112
    %v7145 = vmul.f32 %v6633, 1.1111112
    %v7146 = vmul.f32 %v6634, 1.1111112
    %v7147 = vmul.f32 %v6635, 1.1111112
    %v7148 = vmul.f32 %v6636, 1.1111112
    %v7149 = vmul.f32 %v6637, 1.1111112
    %v7150 = vmul.f32 %v6638, 1.1111112
    %v7151 = vmul.f32 %v6639, 1.1111112
    %v7152 = vmul.f32 %v6640, 1.1111112
    %v7153 = vmul.f32 %v6641, 1.1111112
    %v7154 = vmul.f32 %v6642, 1.1111112
    %v7155 = vmul.f32 %v6643, 1.1111112
    %v7156 = vmul.f32 %v6644, 1.1111112
    %v7157 = vmul.f32 %v6645, 1.1111112
    %v7158 = vmul.f32 %v6646, 1.1111112
    %v7159 = vmul.f32 %v6647, 1.1111112
    %v7160 = vmul.f32 %v6648, 1.1111112
    %v7161 = vmul.f32 %v6649, 1.1111112
    %v7162 = vmul.f32 %v6650, 1.1111112
    %v7163 = vmul.f32 %v6651, 1.1111112
    %v7164 = vmul.f32 %v6652, 1.1111112
    %v7165 = vmul.f32 %v6653, 1.1111112
    %v7166 = vmul.f32 %v6654, 1.1111112
    %v7167 = vmul.f32 %v6655, 1.1111112
    %v7168 = vmul.f32 %v6656, 1.1111112
    %v7169 = vmul.f32 %v6657, 1.1111112
    %v7170 = vmul.f32 %v6658, 1.1111112
    %v7171 = vmul.f32 %v6659, 1.1111112
    %v7172 = vmul.f32 %v6660, 1.1111112
    %v7173 = vmul.f32 %v6661, 1.1111112
    %v7174 = vmul.f32 %v6662, 1.1111112
    %v7175 = vmul.f32 %v6663, 1.1111112
    %v7176 = vmul.f32 %v6664, 1.1111112
    %v7177 = vmul.f32 %v6665, 1.1111112
    %v7178 = vmul.f32 %v6666, 1.1111112
    %v7179 = vmul.f32 %v6667, 1.1111112
    %v7180 = vmul.f32 %v6668, 1.1111112
    %v7181 = vmul.f32 %v6669, 1.1111112
    %v7182 = vmul.f32 %v6670, 1.1111112
    %v7183 = vmul.f32 %v6671, 1.1111112
    %v7184 = vmul.f32 %v6672, 1.1111112
    %v7185 = vmul.f32 %v6673, 1.1111112
    %v7186 = vmul.f32 %v6674, 1.1111112
    %v7187 = vmul.f32 %v6675, 1.1111112
    %v7188 = vmul.f32 %v6676, 1.1111112
    %v7189 = vmul.f32 %v6677, 1.1111112
    %v7190 = vmul.f32 %v6678, 1.1111112
    %v7191 = vmul.f32 %v6679, 1.1111112
    %v7192 = vmul.f32 %v6680, 1.1111112
    %v7193 = vmul.f32 %v6681, 1.1111112
    %v7194 = vmul.f32 %v6682, 1.1111112
    %v7195 = vmul.f32 %v6683, 1.1111112
    %v7196 = vmul.f32 %v6684, 1.1111112
    %v7197 = vmul.f32 %v6685, 1.1111112
    %v7198 = vmul.f32 %v6686, 1.1111112
    %v7199 = vmul.f32 %v6687, 1.1111112
    %v7200 = vmul.f32 %v6688, 1.1111112
    %v7201 = vmul.f32 %v6689, 1.1111112
    %v7202 = vmul.f32 %v6690, 1.1111112
    %v7203 = vmul.f32 %v6691, 1.1111112
    %v7204 = vmul.f32 %v6692, 1.1111112
    %v7205 = vmul.f32 %v6693, 1.1111112
    %v7206 = vmul.f32 %v6694, 1.1111112
    %v7207 = vmul.f32 %v6695, 1.1111112
    %v7208 = vmul.f32 %v6696, 1.1111112
    %v7209 = vmul.f32 %v6697, 1.1111112
    %v7210 = vmul.f32 %v6698, 1.1111112
    %v7211 = vmul.f32 %v6699, 1.1111112
    %v7212 = vmul.f32 %v6700, 1.1111112
    %v7213 = vmul.f32 %v6701, 1.1111112
    %v7214 = vmul.f32 %v6702, 1.1111112
    %v7215 = vmul.f32 %v6703, 1.1111112
    %v7216 = vmul.f32 %v6704, 1.1111112
    %v7217 = vmul.f32 %v6705, 1.1111112
    %v7218 = vmul.f32 %v6706, 1.1111112
    %v7219 = vmul.f32 %v6707, 1.1111112
    %v7220 = vmul.f32 %v6708, 1.1111112
    %v7221 = vmul.f32 %v6709, 1.1111112
    %v7222 = vmul.f32 %v6710, 1.1111112
    %v7223 = vmul.f32 %v6711, 1.1111112
    %v7224 = vmul.f32 %v6712, 1.1111112
    %v7225 = vmul.f32 %v6713, 1.1111112
    %v7226 = vmul.f32 %v6714, 1.1111112
    %v7227 = vmul.f32 %v6715, 1.1111112
    %v7228 = vmul.f32 %v6716, 1.1111112
    %v7229 = vmul.f32 %v6717, 1.1111112
    %v7230 = vmul.f32 %v6718, 1.1111112
    %v7231 = vmul.f32 %v6719, 1.1111112
    %v7232 = vmul.f32 %v6720, 1.1111112
    %v7233 = vmul.f32 %v6721, 1.1111112
    %v7234 = vmul.f32 %v6722, 1.1111112
    %v7235 = vmul.f32 %v6723, 1.1111112
    %v7236 = vmul.f32 %v6724, 1.1111112
    %v7237 = vmul.f32 %v6725, 1.1111112
    %v7238 = vmul.f32 %v6726, 1.1111112
    %v7239 = vmul.f32 %v6727, 1.1111112
    %v7240 = vmul.f32 %v6728, 1.1111112
    %v7241 = vmul.f32 %v6729, 1.1111112
    %v7242 = vmul.f32 %v6730, 1.1111112
    %v7243 = vmul.f32 %v6731, 1.1111112
    %v7244 = vmul.f32 %v6732, 1.1111112
    %v7245 = vmul.f32 %v6733, 1.1111112
    %v7246 = vmul.f32 %v6734, 1.1111112
    %v7247 = vmul.f32 %v6735, 1.1111112
    %v7248 = vmul.f32 %v6736, 1.1111112
    %v7249 = vmul.f32 %v6737, 1.1111112
    %v7250 = vmul.f32 %v6738, 1.1111112
    %v7251 = vmul.f32 %v6739, 1.1111112
    %v7252 = vmul.f32 %v6740, 1.1111112
    %v7253 = vmul.f32 %v6741, 1.1111112
    %v7254 = vmul.f32 %v6742, 1.1111112
    %v7255 = vmul.f32 %v6743, 1.1111112
    %v7256 = vmul.f32 %v6744, 1.1111112
    %v7257 = vmul.f32 %v6745, 1.1111112
    %v7258 = vmul.f32 %v6746, 1.1111112
    %v7259 = vmul.f32 %v6747, 1.1111112
    %v7260 = vmul.f32 %v6748, 1.1111112
    %v7261 = vmul.f32 %v6749, 1.1111112
    %v7262 = vmul.f32 %v6750, 1.1111112
    %v7263 = vmul.f32 %v6751, 1.1111112
    %v7264 = vmul.f32 %v6752, 1.1111112
    %v7265 = vmul.f32 %v6753, 1.1111112
    %v7266 = vmul.f32 %v6754, 1.1111112
    %v7267 = vmul.f32 %v6755, 1.1111112
    %v7268 = vmul.f32 %v6756, 1.1111112
    %v7269 = vmul.f32 %v6757, 1.1111112
    %v7270 = vmul.f32 %v6758, 1.1111112
    %v7271 = vmul.f32 %v6759, 1.1111112
    %v7272 = vmul.f32 %v6760, 1.1111112
    %v7273 = vmul.f32 %v6761, 1.1111112
    %v7274 = vmul.f32 %v6762, 1.1111112
    %v7275 = vmul.f32 %v6763, 1.1111112
    %v7276 = vmul.f32 %v6764, 1.1111112
    %v7277 = vmul.f32 %v6765, 1.1111112
    %v7278 = vmul.f32 %v6766, 1.1111112
    %v7279 = vmul.f32 %v6767, 1.1111112
    %v7280 = vmul.f32 %v6768, 1.1111112
    %v7281 = vmul.f32 %v6769, 1.1111112
    %v7282 = vmul.f32 %v6770, 1.1111112
    %v7283 = vmul.f32 %v6771, 1.1111112
    %v7284 = vmul.f32 %v6772, 1.1111112
    %v7285 = vmul.f32 %v6773, 1.1111112
    %v7286 = vmul.f32 %v6774, 1.1111112
    %v7287 = vmul.f32 %v6775, 1.1111112
    %v7288 = vmul.f32 %v6776, 1.1111112
    %v7289 = vmul.f32 %v6777, 1.1111112
    %v7290 = vmul.f32 %v6778, 1.1111112
    %v7291 = vmul.f32 %v6779, 1.1111112
    %v7292 = vmul.f32 %v6780, 1.1111112
    %v7293 = vmul.f32 %v6781, 1.1111112
    %v7294 = vmul.f32 %v6782, 1.1111112
    %v7295 = vmul.f32 %v6783, 1.1111112
    %v7296 = vmul.f32 %v6784, 1.1111112
    %v7297 = vmul.f32 %v6785, 1.1111112
    %v7298 = vmul.f32 %v6786, 1.1111112
    %v7299 = vmul.f32 %v6787, 1.1111112
    %v7300 = vmul.f32 %v6788, 1.1111112
    %v7301 = vmul.f32 %v6789, 1.1111112
    %v7302 = vmul.f32 %v6790, 1.1111112
    %v7303 = vmul.f32 %v6791, 1.1111112
    %v7304 = vmul.f32 %v6792, 1.1111112
    %v7305 = vmul.f32 %v6793, 1.1111112
    %v7306 = vmul.f32 %v6794, 1.1111112
    %v7307 = vmul.f32 %v6795, 1.1111112
    %v7308 = vmul.f32 %v6796, 1.1111112
    %v7309 = vmul.f32 %v6797, 1.1111112
    %v7310 = vmul.f32 %v6798, 1.1111112
    %v7311 = vmul.f32 %v6799, 1.1111112
    %v7312 = vmul.f32 %v6800, 1.1111112
    %v7313 = vmul.f32 %v6801, 1.1111112
    %v7314 = vmul.f32 %v6802, 1.1111112
    %v7315 = vmul.f32 %v6803, 1.1111112
    %v7316 = vmul.f32 %v6804, 1.1111112
    %v7317 = vmul.f32 %v6805, 1.1111112
    %v7318 = vmul.f32 %v6806, 1.1111112
    %v7319 = vmul.f32 %v6807, 1.1111112
    %v7320 = vmul.f32 %v6808, 1.1111112
    %v7321 = vmul.f32 %v6809, 1.1111112
    %v7322 = vmul.f32 %v6810, 1.1111112
    %v7323 = vmul.f32 %v6811, 1.1111112
    %v7324 = vmul.f32 %v6812, 1.1111112
    %v7325 = vmul.f32 %v6813, 1.1111112
    %v7326 = vmul.f32 %v6814, 1.1111112
    %v7327 = vmul.f32 %v6815, 1.1111112
    %v7328 = vmul.f32 %v6816, 1.1111112
    %v7329 = vmul.f32 %v6817, 1.1111112
    %v7330 = vmul.f32 %v6818, 1.1111112
    %v7331 = vmul.f32 %v6819, 1.1111112
    %v7332 = vmul.f32 %v6820, 1.1111112
    %v7333 = vmul.f32 %v6821, 1.1111112
    %v7334 = vmul.f32 %v6822, 1.1111112
    %v7335 = vmul.f32 %v6823, 1.1111112
    %v7336 = vmul.f32 %v6824, 1.1111112
    %v7337 = vmul.f32 %v6825, 1.1111112
    %v7338 = vmul.f32 %v6826, 1.1111112
    %v7339 = vmul.f32 %v6827, 1.1111112
    %v7340 = vmul.f32 %v6828, 1.1111112
    %v7341 = vmul.f32 %v6829, 1.1111112
    %v7342 = vmul.f32 %v6830, 1.1111112
    %v7343 = vmul.f32 %v6831, 1.1111112
    %v7344 = vmul.f32 %v6832, 1.1111112
    %v7345 = vmul.f32 %v6833, 1.1111112
    %v7346 = vmul.f32 %v6834, 1.1111112
    %v7347 = vmul.f32 %v6835, 1.1111112
    %v7348 = vmul.f32 %v6836, 1.1111112
    %v7349 = vmul.f32 %v6837, 1.1111112
    %v7350 = vmul.f32 %v6838, 1.1111112
    %v7351 = vmul.f32 %v6839, 1.1111112
    %v7352 = vmul.f32 %v6840, 1.1111112
    %v7353 = vmul.f32 %v6841, 1.1111112
    %v7354 = vmul.f32 %v6842, 1.1111112
    %v7355 = vmul.f32 %v6843, 1.1111112
    %v7356 = vmul.f32 %v6844, 1.1111112
    %v7357 = vmul.f32 %v6845, 1.1111112
    %v7358 = vmul.f32 %v6846, 1.1111112
    %v7359 = vmul.f32 %v6847, 1.1111112
    %v7360 = vmul.f32 %v6848, 1.1111112
    %v7361 = vmul.f32 %v6849, 1.1111112
    %v7362 = vmul.f32 %v6850, 1.1111112
    %v7363 = vmul.f32 %v6851, 1.1111112
    %v7364 = vmul.f32 %v6852, 1.1111112
    %v7365 = vmul.f32 %v6853, 1.1111112
    %v7366 = vmul.f32 %v6854, 1.1111112
    %v7367 = vmul.f32 %v6855, 1.1111112
    %v7368 = vmul.f32 %v6856, 1.1111112
    %v7369 = vmul.f32 %v6857, 1.1111112
    %v7370 = vmul.f32 %v6858, 1.1111112
    %v7371 = vmul.f32 %v6859, 1.1111112
    %v7372 = vmul.f32 %v6860, 1.1111112
    %v7373 = vmul.f32 %v6861, 1.1111112
    %v7374 = vmul.f32 %v6862, 1.1111112
    %v7375 = vmul.f32 %v6863, 1.1111112
    %v7376 = vmul.f32 %v6864, 1.1111112
    %v7377 = vmul.f32 %v6865, 1.1111112
    %v7378 = vmul.f32 %v6866, 1.1111112
    %v7379 = vmul.f32 %v6867, 1.1111112
    %v7380 = vmul.f32 %v6868, 1.1111112
    %v7381 = vmul.f32 %v6869, 1.1111112
    %v7382 = vmul.f32 %v6870, 1.1111112
    %v7383 = vmul.f32 %v6871, 1.1111112
    %v7384 = vmul.f32 %v6872, 1.1111112
    %v7385 = vmul.f32 %v6873, 1.1111112
    %v7386 = vmul.f32 %v6874, 1.1111112
    %v7387 = vmul.f32 %v6875, 1.1111112
    %v7388 = vmul.f32 %v6876, 1.1111112
    %v7389 = vmul.f32 %v6877, 1.1111112
    %v7390 = vmul.f32 %v6878, 1.1111112
    %v7391 = vmul.f32 %v6879, 1.1111112
    %v7392 = vmul.f32 %v6880, 1.1111112
    %v7393 = vmul.f32 %v6881, 1.1111112
    %v7394 = vmul.f32 %v6882, 1.1111112
    %v7395 = vmul.f32 %v6883, 1.1111112
    %v7396 = vmul.f32 %v6884, 1.1111112
    %v7397 = vmul.f32 %v6885, 1.1111112
    %v7398 = vmul.f32 %v6886, 1.1111112
    %v7399 = vmul.f32 %v6887, 1.1111112
    %7400 = vst [vmem:[#allocation7] sm:$0xff] %v6888
    %7401 = vst [vmem:[#allocation7 + $0x8] sm:$0xff] %v6889
    %7402 = vst [vmem:[#allocation7 + $0x10] sm:$0xff] %v6890
    %7403 = vst [vmem:[#allocation7 + $0x18] sm:$0xff] %v6891
    %7404 = vst [vmem:[#allocation7 + $0x20] sm:$0xff] %v6892
    %7405 = vst [vmem:[#allocation7 + $0x28] sm:$0xff] %v6893
    %7406 = vst [vmem:[#allocation7 + $0x30] sm:$0xff] %v6894
    %7407 = vst [vmem:[#allocation7 + $0x38] sm:$0xff] %v6895
    %7408 = vst [vmem:[#allocation7 + $0x40] sm:$0xff] %v6896
    %7409 = vst [vmem:[#allocation7 + $0x48] sm:$0xff] %v6897
    %7410 = vst [vmem:[#allocation7 + $0x50] sm:$0xff] %v6898
    %7411 = vst [vmem:[#allocation7 + $0x58] sm:$0xff] %v6899
    %7412 = vst [vmem:[#allocation7 + $0x60] sm:$0xff] %v6900
    %7413 = vst [vmem:[#allocation7 + $0x68] sm:$0xff] %v6901
    %7414 = vst [vmem:[#allocation7 + $0x70] sm:$0xff] %v6902
    %7415 = vst [vmem:[#allocation7 + $0x78] sm:$0xff] %v6903
    %7416 = vst [vmem:[#allocation7 + $0x80] sm:$0xff] %v6904
    %7417 = vst [vmem:[#allocation7 + $0x88] sm:$0xff] %v6905
    %7418 = vst [vmem:[#allocation7 + $0x90] sm:$0xff] %v6906
    %7419 = vst [vmem:[#allocation7 + $0x98] sm:$0xff] %v6907
    %7420 = vst [vmem:[#allocation7 + $0xa0] sm:$0xff] %v6908
    %7421 = vst [vmem:[#allocation7 + $0xa8] sm:$0xff] %v6909
    %7422 = vst [vmem:[#allocation7 + $0xb0] sm:$0xff] %v6910
    %7423 = vst [vmem:[#allocation7 + $0xb8] sm:$0xff] %v6911
    %7424 = vst [vmem:[#allocation7 + $0xc0] sm:$0xff] %v6912
    %7425 = vst [vmem:[#allocation7 + $0xc8] sm:$0xff] %v6913
    %7426 = vst [vmem:[#allocation7 + $0xd0] sm:$0xff] %v6914
    %7427 = vst [vmem:[#allocation7 + $0xd8] sm:$0xff] %v6915
    %7428 = vst [vmem:[#allocation7 + $0xe0] sm:$0xff] %v6916
    %7429 = vst [vmem:[#allocation7 + $0xe8] sm:$0xff] %v6917
    %7430 = vst [vmem:[#allocation7 + $0xf0] sm:$0xff] %v6918
    %7431 = vst [vmem:[#allocation7 + $0xf8] sm:$0xff] %v6919
    %7432 = vst [vmem:[#allocation7 + $0x100] sm:$0xff] %v6920
    %7433 = vst [vmem:[#allocation7 + $0x108] sm:$0xff] %v6921
    %7434 = vst [vmem:[#allocation7 + $0x110] sm:$0xff] %v6922
    %7435 = vst [vmem:[#allocation7 + $0x118] sm:$0xff] %v6923
    %7436 = vst [vmem:[#allocation7 + $0x120] sm:$0xff] %v6924
    %7437 = vst [vmem:[#allocation7 + $0x128] sm:$0xff] %v6925
    %7438 = vst [vmem:[#allocation7 + $0x130] sm:$0xff] %v6926
    %7439 = vst [vmem:[#allocation7 + $0x138] sm:$0xff] %v6927
    %7440 = vst [vmem:[#allocation7 + $0x140] sm:$0xff] %v6928
    %7441 = vst [vmem:[#allocation7 + $0x148] sm:$0xff] %v6929
    %7442 = vst [vmem:[#allocation7 + $0x150] sm:$0xff] %v6930
    %7443 = vst [vmem:[#allocation7 + $0x158] sm:$0xff] %v6931
    %7444 = vst [vmem:[#allocation7 + $0x160] sm:$0xff] %v6932
    %7445 = vst [vmem:[#allocation7 + $0x168] sm:$0xff] %v6933
    %7446 = vst [vmem:[#allocation7 + $0x170] sm:$0xff] %v6934
    %7447 = vst [vmem:[#allocation7 + $0x178] sm:$0xff] %v6935
    %7448 = vst [vmem:[#allocation7 + $0x180] sm:$0xff] %v6936
    %7449 = vst [vmem:[#allocation7 + $0x188] sm:$0xff] %v6937
    %7450 = vst [vmem:[#allocation7 + $0x190] sm:$0xff] %v6938
    %7451 = vst [vmem:[#allocation7 + $0x198] sm:$0xff] %v6939
    %7452 = vst [vmem:[#allocation7 + $0x1a0] sm:$0xff] %v6940
    %7453 = vst [vmem:[#allocation7 + $0x1a8] sm:$0xff] %v6941
    %7454 = vst [vmem:[#allocation7 + $0x1b0] sm:$0xff] %v6942
    %7455 = vst [vmem:[#allocation7 + $0x1b8] sm:$0xff] %v6943
    %7456 = vst [vmem:[#allocation7 + $0x1c0] sm:$0xff] %v6944
    %7457 = vst [vmem:[#allocation7 + $0x1c8] sm:$0xff] %v6945
    %7458 = vst [vmem:[#allocation7 + $0x1d0] sm:$0xff] %v6946
    %7459 = vst [vmem:[#allocation7 + $0x1d8] sm:$0xff] %v6947
    %7460 = vst [vmem:[#allocation7 + $0x1e0] sm:$0xff] %v6948
    %7461 = vst [vmem:[#allocation7 + $0x1e8] sm:$0xff] %v6949
    %7462 = vst [vmem:[#allocation7 + $0x1f0] sm:$0xff] %v6950
    %7463 = vst [vmem:[#allocation7 + $0x1f8] sm:$0xff] %v6951
    %7464 = vst [vmem:[#allocation7 + $0x200] sm:$0xff] %v6952
    %7465 = vst [vmem:[#allocation7 + $0x208] sm:$0xff] %v6953
    %7466 = vst [vmem:[#allocation7 + $0x210] sm:$0xff] %v6954
    %7467 = vst [vmem:[#allocation7 + $0x218] sm:$0xff] %v6955
    %7468 = vst [vmem:[#allocation7 + $0x220] sm:$0xff] %v6956
    %7469 = vst [vmem:[#allocation7 + $0x228] sm:$0xff] %v6957
    %7470 = vst [vmem:[#allocation7 + $0x230] sm:$0xff] %v6958
    %7471 = vst [vmem:[#allocation7 + $0x238] sm:$0xff] %v6959
    %7472 = vst [vmem:[#allocation7 + $0x240] sm:$0xff] %v6960
    %7473 = vst [vmem:[#allocation7 + $0x248] sm:$0xff] %v6961
    %7474 = vst [vmem:[#allocation7 + $0x250] sm:$0xff] %v6962
    %7475 = vst [vmem:[#allocation7 + $0x258] sm:$0xff] %v6963
    %7476 = vst [vmem:[#allocation7 + $0x260] sm:$0xff] %v6964
    %7477 = vst [vmem:[#allocation7 + $0x268] sm:$0xff] %v6965
    %7478 = vst [vmem:[#allocation7 + $0x270] sm:$0xff] %v6966
    %7479 = vst [vmem:[#allocation7 + $0x278] sm:$0xff] %v6967
    %7480 = vst [vmem:[#allocation7 + $0x280] sm:$0xff] %v6968
    %7481 = vst [vmem:[#allocation7 + $0x288] sm:$0xff] %v6969
    %7482 = vst [vmem:[#allocation7 + $0x290] sm:$0xff] %v6970
    %7483 = vst [vmem:[#allocation7 + $0x298] sm:$0xff] %v6971
    %7484 = vst [vmem:[#allocation7 + $0x2a0] sm:$0xff] %v6972
    %7485 = vst [vmem:[#allocation7 + $0x2a8] sm:$0xff] %v6973
    %7486 = vst [vmem:[#allocation7 + $0x2b0] sm:$0xff] %v6974
    %7487 = vst [vmem:[#allocation7 + $0x2b8] sm:$0xff] %v6975
    %7488 = vst [vmem:[#allocation7 + $0x2c0] sm:$0xff] %v6976
    %7489 = vst [vmem:[#allocation7 + $0x2c8] sm:$0xff] %v6977
    %7490 = vst [vmem:[#allocation7 + $0x2d0] sm:$0xff] %v6978
    %7491 = vst [vmem:[#allocation7 + $0x2d8] sm:$0xff] %v6979
    %7492 = vst [vmem:[#allocation7 + $0x2e0] sm:$0xff] %v6980
    %7493 = vst [vmem:[#allocation7 + $0x2e8] sm:$0xff] %v6981
    %7494 = vst [vmem:[#allocation7 + $0x2f0] sm:$0xff] %v6982
    %7495 = vst [vmem:[#allocation7 + $0x2f8] sm:$0xff] %v6983
    %7496 = vst [vmem:[#allocation7 + $0x300] sm:$0xff] %v6984
    %7497 = vst [vmem:[#allocation7 + $0x308] sm:$0xff] %v6985
    %7498 = vst [vmem:[#allocation7 + $0x310] sm:$0xff] %v6986
    %7499 = vst [vmem:[#allocation7 + $0x318] sm:$0xff] %v6987
    %7500 = vst [vmem:[#allocation7 + $0x320] sm:$0xff] %v6988
    %7501 = vst [vmem:[#allocation7 + $0x328] sm:$0xff] %v6989
    %7502 = vst [vmem:[#allocation7 + $0x330] sm:$0xff] %v6990
    %7503 = vst [vmem:[#allocation7 + $0x338] sm:$0xff] %v6991
    %7504 = vst [vmem:[#allocation7 + $0x340] sm:$0xff] %v6992
    %7505 = vst [vmem:[#allocation7 + $0x348] sm:$0xff] %v6993
    %7506 = vst [vmem:[#allocation7 + $0x350] sm:$0xff] %v6994
    %7507 = vst [vmem:[#allocation7 + $0x358] sm:$0xff] %v6995
    %7508 = vst [vmem:[#allocation7 + $0x360] sm:$0xff] %v6996
    %7509 = vst [vmem:[#allocation7 + $0x368] sm:$0xff] %v6997
    %7510 = vst [vmem:[#allocation7 + $0x370] sm:$0xff] %v6998
    %7511 = vst [vmem:[#allocation7 + $0x378] sm:$0xff] %v6999
    %7512 = vst [vmem:[#allocation7 + $0x380] sm:$0xff] %v7000
    %7513 = vst [vmem:[#allocation7 + $0x388] sm:$0xff] %v7001
    %7514 = vst [vmem:[#allocation7 + $0x390] sm:$0xff] %v7002
    %7515 = vst [vmem:[#allocation7 + $0x398] sm:$0xff] %v7003
    %7516 = vst [vmem:[#allocation7 + $0x3a0] sm:$0xff] %v7004
    %7517 = vst [vmem:[#allocation7 + $0x3a8] sm:$0xff] %v7005
    %7518 = vst [vmem:[#allocation7 + $0x3b0] sm:$0xff] %v7006
    %7519 = vst [vmem:[#allocation7 + $0x3b8] sm:$0xff] %v7007
    %7520 = vst [vmem:[#allocation7 + $0x3c0] sm:$0xff] %v7008
    %7521 = vst [vmem:[#allocation7 + $0x3c8] sm:$0xff] %v7009
    %7522 = vst [vmem:[#allocation7 + $0x3d0] sm:$0xff] %v7010
    %7523 = vst [vmem:[#allocation7 + $0x3d8] sm:$0xff] %v7011
    %7524 = vst [vmem:[#allocation7 + $0x3e0] sm:$0xff] %v7012
    %7525 = vst [vmem:[#allocation7 + $0x3e8] sm:$0xff] %v7013
    %7526 = vst [vmem:[#allocation7 + $0x3f0] sm:$0xff] %v7014
    %7527 = vst [vmem:[#allocation7 + $0x3f8] sm:$0xff] %v7015
    %7528 = vst [vmem:[#allocation7 + $0x400] sm:$0xff] %v7016
    %7529 = vst [vmem:[#allocation7 + $0x408] sm:$0xff] %v7017
    %7530 = vst [vmem:[#allocation7 + $0x410] sm:$0xff] %v7018
    %7531 = vst [vmem:[#allocation7 + $0x418] sm:$0xff] %v7019
    %7532 = vst [vmem:[#allocation7 + $0x420] sm:$0xff] %v7020
    %7533 = vst [vmem:[#allocation7 + $0x428] sm:$0xff] %v7021
    %7534 = vst [vmem:[#allocation7 + $0x430] sm:$0xff] %v7022
    %7535 = vst [vmem:[#allocation7 + $0x438] sm:$0xff] %v7023
    %7536 = vst [vmem:[#allocation7 + $0x440] sm:$0xff] %v7024
    %7537 = vst [vmem:[#allocation7 + $0x448] sm:$0xff] %v7025
    %7538 = vst [vmem:[#allocation7 + $0x450] sm:$0xff] %v7026
    %7539 = vst [vmem:[#allocation7 + $0x458] sm:$0xff] %v7027
    %7540 = vst [vmem:[#allocation7 + $0x460] sm:$0xff] %v7028
    %7541 = vst [vmem:[#allocation7 + $0x468] sm:$0xff] %v7029
    %7542 = vst [vmem:[#allocation7 + $0x470] sm:$0xff] %v7030
    %7543 = vst [vmem:[#allocation7 + $0x478] sm:$0xff] %v7031
    %7544 = vst [vmem:[#allocation7 + $0x480] sm:$0xff] %v7032
    %7545 = vst [vmem:[#allocation7 + $0x488] sm:$0xff] %v7033
    %7546 = vst [vmem:[#allocation7 + $0x490] sm:$0xff] %v7034
    %7547 = vst [vmem:[#allocation7 + $0x498] sm:$0xff] %v7035
    %7548 = vst [vmem:[#allocation7 + $0x4a0] sm:$0xff] %v7036
    %7549 = vst [vmem:[#allocation7 + $0x4a8] sm:$0xff] %v7037
    %7550 = vst [vmem:[#allocation7 + $0x4b0] sm:$0xff] %v7038
    %7551 = vst [vmem:[#allocation7 + $0x4b8] sm:$0xff] %v7039
    %7552 = vst [vmem:[#allocation7 + $0x4c0] sm:$0xff] %v7040
    %7553 = vst [vmem:[#allocation7 + $0x4c8] sm:$0xff] %v7041
    %7554 = vst [vmem:[#allocation7 + $0x4d0] sm:$0xff] %v7042
    %7555 = vst [vmem:[#allocation7 + $0x4d8] sm:$0xff] %v7043
    %7556 = vst [vmem:[#allocation7 + $0x4e0] sm:$0xff] %v7044
    %7557 = vst [vmem:[#allocation7 + $0x4e8] sm:$0xff] %v7045
    %7558 = vst [vmem:[#allocation7 + $0x4f0] sm:$0xff] %v7046
    %7559 = vst [vmem:[#allocation7 + $0x4f8] sm:$0xff] %v7047
    %7560 = vst [vmem:[#allocation7 + $0x500] sm:$0xff] %v7048
    %7561 = vst [vmem:[#allocation7 + $0x508] sm:$0xff] %v7049
    %7562 = vst [vmem:[#allocation7 + $0x510] sm:$0xff] %v7050
    %7563 = vst [vmem:[#allocation7 + $0x518] sm:$0xff] %v7051
    %7564 = vst [vmem:[#allocation7 + $0x520] sm:$0xff] %v7052
    %7565 = vst [vmem:[#allocation7 + $0x528] sm:$0xff] %v7053
    %7566 = vst [vmem:[#allocation7 + $0x530] sm:$0xff] %v7054
    %7567 = vst [vmem:[#allocation7 + $0x538] sm:$0xff] %v7055
    %7568 = vst [vmem:[#allocation7 + $0x540] sm:$0xff] %v7056
    %7569 = vst [vmem:[#allocation7 + $0x548] sm:$0xff] %v7057
    %7570 = vst [vmem:[#allocation7 + $0x550] sm:$0xff] %v7058
    %7571 = vst [vmem:[#allocation7 + $0x558] sm:$0xff] %v7059
    %7572 = vst [vmem:[#allocation7 + $0x560] sm:$0xff] %v7060
    %7573 = vst [vmem:[#allocation7 + $0x568] sm:$0xff] %v7061
    %7574 = vst [vmem:[#allocation7 + $0x570] sm:$0xff] %v7062
    %7575 = vst [vmem:[#allocation7 + $0x578] sm:$0xff] %v7063
    %7576 = vst [vmem:[#allocation7 + $0x580] sm:$0xff] %v7064
    %7577 = vst [vmem:[#allocation7 + $0x588] sm:$0xff] %v7065
    %7578 = vst [vmem:[#allocation7 + $0x590] sm:$0xff] %v7066
    %7579 = vst [vmem:[#allocation7 + $0x598] sm:$0xff] %v7067
    %7580 = vst [vmem:[#allocation7 + $0x5a0] sm:$0xff] %v7068
    %7581 = vst [vmem:[#allocation7 + $0x5a8] sm:$0xff] %v7069
    %7582 = vst [vmem:[#allocation7 + $0x5b0] sm:$0xff] %v7070
    %7583 = vst [vmem:[#allocation7 + $0x5b8] sm:$0xff] %v7071
    %7584 = vst [vmem:[#allocation7 + $0x5c0] sm:$0xff] %v7072
    %7585 = vst [vmem:[#allocation7 + $0x5c8] sm:$0xff] %v7073
    %7586 = vst [vmem:[#allocation7 + $0x5d0] sm:$0xff] %v7074
    %7587 = vst [vmem:[#allocation7 + $0x5d8] sm:$0xff] %v7075
    %7588 = vst [vmem:[#allocation7 + $0x5e0] sm:$0xff] %v7076
    %7589 = vst [vmem:[#allocation7 + $0x5e8] sm:$0xff] %v7077
    %7590 = vst [vmem:[#allocation7 + $0x5f0] sm:$0xff] %v7078
    %7591 = vst [vmem:[#allocation7 + $0x5f8] sm:$0xff] %v7079
    %7592 = vst [vmem:[#allocation7 + $0x600] sm:$0xff] %v7080
    %7593 = vst [vmem:[#allocation7 + $0x608] sm:$0xff] %v7081
    %7594 = vst [vmem:[#allocation7 + $0x610] sm:$0xff] %v7082
    %7595 = vst [vmem:[#allocation7 + $0x618] sm:$0xff] %v7083
    %7596 = vst [vmem:[#allocation7 + $0x620] sm:$0xff] %v7084
    %7597 = vst [vmem:[#allocation7 + $0x628] sm:$0xff] %v7085
    %7598 = vst [vmem:[#allocation7 + $0x630] sm:$0xff] %v7086
    %7599 = vst [vmem:[#allocation7 + $0x638] sm:$0xff] %v7087
    %7600 = vst [vmem:[#allocation7 + $0x640] sm:$0xff] %v7088
    %7601 = vst [vmem:[#allocation7 + $0x648] sm:$0xff] %v7089
    %7602 = vst [vmem:[#allocation7 + $0x650] sm:$0xff] %v7090
    %7603 = vst [vmem:[#allocation7 + $0x658] sm:$0xff] %v7091
    %7604 = vst [vmem:[#allocation7 + $0x660] sm:$0xff] %v7092
    %7605 = vst [vmem:[#allocation7 + $0x668] sm:$0xff] %v7093
    %7606 = vst [vmem:[#allocation7 + $0x670] sm:$0xff] %v7094
    %7607 = vst [vmem:[#allocation7 + $0x678] sm:$0xff] %v7095
    %7608 = vst [vmem:[#allocation7 + $0x680] sm:$0xff] %v7096
    %7609 = vst [vmem:[#allocation7 + $0x688] sm:$0xff] %v7097
    %7610 = vst [vmem:[#allocation7 + $0x690] sm:$0xff] %v7098
    %7611 = vst [vmem:[#allocation7 + $0x698] sm:$0xff] %v7099
    %7612 = vst [vmem:[#allocation7 + $0x6a0] sm:$0xff] %v7100
    %7613 = vst [vmem:[#allocation7 + $0x6a8] sm:$0xff] %v7101
    %7614 = vst [vmem:[#allocation7 + $0x6b0] sm:$0xff] %v7102
    %7615 = vst [vmem:[#allocation7 + $0x6b8] sm:$0xff] %v7103
    %7616 = vst [vmem:[#allocation7 + $0x6c0] sm:$0xff] %v7104
    %7617 = vst [vmem:[#allocation7 + $0x6c8] sm:$0xff] %v7105
    %7618 = vst [vmem:[#allocation7 + $0x6d0] sm:$0xff] %v7106
    %7619 = vst [vmem:[#allocation7 + $0x6d8] sm:$0xff] %v7107
    %7620 = vst [vmem:[#allocation7 + $0x6e0] sm:$0xff] %v7108
    %7621 = vst [vmem:[#allocation7 + $0x6e8] sm:$0xff] %v7109
    %7622 = vst [vmem:[#allocation7 + $0x6f0] sm:$0xff] %v7110
    %7623 = vst [vmem:[#allocation7 + $0x6f8] sm:$0xff] %v7111
    %7624 = vst [vmem:[#allocation7 + $0x700] sm:$0xff] %v7112
    %7625 = vst [vmem:[#allocation7 + $0x708] sm:$0xff] %v7113
    %7626 = vst [vmem:[#allocation7 + $0x710] sm:$0xff] %v7114
    %7627 = vst [vmem:[#allocation7 + $0x718] sm:$0xff] %v7115
    %7628 = vst [vmem:[#allocation7 + $0x720] sm:$0xff] %v7116
    %7629 = vst [vmem:[#allocation7 + $0x728] sm:$0xff] %v7117
    %7630 = vst [vmem:[#allocation7 + $0x730] sm:$0xff] %v7118
    %7631 = vst [vmem:[#allocation7 + $0x738] sm:$0xff] %v7119
    %7632 = vst [vmem:[#allocation7 + $0x740] sm:$0xff] %v7120
    %7633 = vst [vmem:[#allocation7 + $0x748] sm:$0xff] %v7121
    %7634 = vst [vmem:[#allocation7 + $0x750] sm:$0xff] %v7122
    %7635 = vst [vmem:[#allocation7 + $0x758] sm:$0xff] %v7123
    %7636 = vst [vmem:[#allocation7 + $0x760] sm:$0xff] %v7124
    %7637 = vst [vmem:[#allocation7 + $0x768] sm:$0xff] %v7125
    %7638 = vst [vmem:[#allocation7 + $0x770] sm:$0xff] %v7126
    %7639 = vst [vmem:[#allocation7 + $0x778] sm:$0xff] %v7127
    %7640 = vst [vmem:[#allocation7 + $0x780] sm:$0xff] %v7128
    %7641 = vst [vmem:[#allocation7 + $0x788] sm:$0xff] %v7129
    %7642 = vst [vmem:[#allocation7 + $0x790] sm:$0xff] %v7130
    %7643 = vst [vmem:[#allocation7 + $0x798] sm:$0xff] %v7131
    %7644 = vst [vmem:[#allocation7 + $0x7a0] sm:$0xff] %v7132
    %7645 = vst [vmem:[#allocation7 + $0x7a8] sm:$0xff] %v7133
    %7646 = vst [vmem:[#allocation7 + $0x7b0] sm:$0xff] %v7134
    %7647 = vst [vmem:[#allocation7 + $0x7b8] sm:$0xff] %v7135
    %7648 = vst [vmem:[#allocation7 + $0x7c0] sm:$0xff] %v7136
    %7649 = vst [vmem:[#allocation7 + $0x7c8] sm:$0xff] %v7137
    %7650 = vst [vmem:[#allocation7 + $0x7d0] sm:$0xff] %v7138
    %7651 = vst [vmem:[#allocation7 + $0x7d8] sm:$0xff] %v7139
    %7652 = vst [vmem:[#allocation7 + $0x7e0] sm:$0xff] %v7140
    %7653 = vst [vmem:[#allocation7 + $0x7e8] sm:$0xff] %v7141
    %7654 = vst [vmem:[#allocation7 + $0x7f0] sm:$0xff] %v7142
    %7655 = vst [vmem:[#allocation7 + $0x7f8] sm:$0xff] %v7143
    %7656 = vst [vmem:[#allocation7 + $0x800] sm:$0xff] %v7144
    %7657 = vst [vmem:[#allocation7 + $0x808] sm:$0xff] %v7145
    %7658 = vst [vmem:[#allocation7 + $0x810] sm:$0xff] %v7146
    %7659 = vst [vmem:[#allocation7 + $0x818] sm:$0xff] %v7147
    %7660 = vst [vmem:[#allocation7 + $0x820] sm:$0xff] %v7148
    %7661 = vst [vmem:[#allocation7 + $0x828] sm:$0xff] %v7149
    %7662 = vst [vmem:[#allocation7 + $0x830] sm:$0xff] %v7150
    %7663 = vst [vmem:[#allocation7 + $0x838] sm:$0xff] %v7151
    %7664 = vst [vmem:[#allocation7 + $0x840] sm:$0xff] %v7152
    %7665 = vst [vmem:[#allocation7 + $0x848] sm:$0xff] %v7153
    %7666 = vst [vmem:[#allocation7 + $0x850] sm:$0xff] %v7154
    %7667 = vst [vmem:[#allocation7 + $0x858] sm:$0xff] %v7155
    %7668 = vst [vmem:[#allocation7 + $0x860] sm:$0xff] %v7156
    %7669 = vst [vmem:[#allocation7 + $0x868] sm:$0xff] %v7157
    %7670 = vst [vmem:[#allocation7 + $0x870] sm:$0xff] %v7158
    %7671 = vst [vmem:[#allocation7 + $0x878] sm:$0xff] %v7159
    %7672 = vst [vmem:[#allocation7 + $0x880] sm:$0xff] %v7160
    %7673 = vst [vmem:[#allocation7 + $0x888] sm:$0xff] %v7161
    %7674 = vst [vmem:[#allocation7 + $0x890] sm:$0xff] %v7162
    %7675 = vst [vmem:[#allocation7 + $0x898] sm:$0xff] %v7163
    %7676 = vst [vmem:[#allocation7 + $0x8a0] sm:$0xff] %v7164
    %7677 = vst [vmem:[#allocation7 + $0x8a8] sm:$0xff] %v7165
    %7678 = vst [vmem:[#allocation7 + $0x8b0] sm:$0xff] %v7166
    %7679 = vst [vmem:[#allocation7 + $0x8b8] sm:$0xff] %v7167
    %7680 = vst [vmem:[#allocation7 + $0x8c0] sm:$0xff] %v7168
    %7681 = vst [vmem:[#allocation7 + $0x8c8] sm:$0xff] %v7169
    %7682 = vst [vmem:[#allocation7 + $0x8d0] sm:$0xff] %v7170
    %7683 = vst [vmem:[#allocation7 + $0x8d8] sm:$0xff] %v7171
    %7684 = vst [vmem:[#allocation7 + $0x8e0] sm:$0xff] %v7172
    %7685 = vst [vmem:[#allocation7 + $0x8e8] sm:$0xff] %v7173
    %7686 = vst [vmem:[#allocation7 + $0x8f0] sm:$0xff] %v7174
    %7687 = vst [vmem:[#allocation7 + $0x8f8] sm:$0xff] %v7175
    %7688 = vst [vmem:[#allocation7 + $0x900] sm:$0xff] %v7176
    %7689 = vst [vmem:[#allocation7 + $0x908] sm:$0xff] %v7177
    %7690 = vst [vmem:[#allocation7 + $0x910] sm:$0xff] %v7178
    %7691 = vst [vmem:[#allocation7 + $0x918] sm:$0xff] %v7179
    %7692 = vst [vmem:[#allocation7 + $0x920] sm:$0xff] %v7180
    %7693 = vst [vmem:[#allocation7 + $0x928] sm:$0xff] %v7181
    %7694 = vst [vmem:[#allocation7 + $0x930] sm:$0xff] %v7182
    %7695 = vst [vmem:[#allocation7 + $0x938] sm:$0xff] %v7183
    %7696 = vst [vmem:[#allocation7 + $0x940] sm:$0xff] %v7184
    %7697 = vst [vmem:[#allocation7 + $0x948] sm:$0xff] %v7185
    %7698 = vst [vmem:[#allocation7 + $0x950] sm:$0xff] %v7186
    %7699 = vst [vmem:[#allocation7 + $0x958] sm:$0xff] %v7187
    %7700 = vst [vmem:[#allocation7 + $0x960] sm:$0xff] %v7188
    %7701 = vst [vmem:[#allocation7 + $0x968] sm:$0xff] %v7189
    %7702 = vst [vmem:[#allocation7 + $0x970] sm:$0xff] %v7190
    %7703 = vst [vmem:[#allocation7 + $0x978] sm:$0xff] %v7191
    %7704 = vst [vmem:[#allocation7 + $0x980] sm:$0xff] %v7192
    %7705 = vst [vmem:[#allocation7 + $0x988] sm:$0xff] %v7193
    %7706 = vst [vmem:[#allocation7 + $0x990] sm:$0xff] %v7194
    %7707 = vst [vmem:[#allocation7 + $0x998] sm:$0xff] %v7195
    %7708 = vst [vmem:[#allocation7 + $0x9a0] sm:$0xff] %v7196
    %7709 = vst [vmem:[#allocation7 + $0x9a8] sm:$0xff] %v7197
    %7710 = vst [vmem:[#allocation7 + $0x9b0] sm:$0xff] %v7198
    %7711 = vst [vmem:[#allocation7 + $0x9b8] sm:$0xff] %v7199
    %7712 = vst [vmem:[#allocation7 + $0x9c0] sm:$0xff] %v7200
    %7713 = vst [vmem:[#allocation7 + $0x9c8] sm:$0xff] %v7201
    %7714 = vst [vmem:[#allocation7 + $0x9d0] sm:$0xff] %v7202
    %7715 = vst [vmem:[#allocation7 + $0x9d8] sm:$0xff] %v7203
    %7716 = vst [vmem:[#allocation7 + $0x9e0] sm:$0xff] %v7204
    %7717 = vst [vmem:[#allocation7 + $0x9e8] sm:$0xff] %v7205
    %7718 = vst [vmem:[#allocation7 + $0x9f0] sm:$0xff] %v7206
    %7719 = vst [vmem:[#allocation7 + $0x9f8] sm:$0xff] %v7207
    %7720 = vst [vmem:[#allocation7 + $0xa00] sm:$0xff] %v7208
    %7721 = vst [vmem:[#allocation7 + $0xa08] sm:$0xff] %v7209
    %7722 = vst [vmem:[#allocation7 + $0xa10] sm:$0xff] %v7210
    %7723 = vst [vmem:[#allocation7 + $0xa18] sm:$0xff] %v7211
    %7724 = vst [vmem:[#allocation7 + $0xa20] sm:$0xff] %v7212
    %7725 = vst [vmem:[#allocation7 + $0xa28] sm:$0xff] %v7213
    %7726 = vst [vmem:[#allocation7 + $0xa30] sm:$0xff] %v7214
    %7727 = vst [vmem:[#allocation7 + $0xa38] sm:$0xff] %v7215
    %7728 = vst [vmem:[#allocation7 + $0xa40] sm:$0xff] %v7216
    %7729 = vst [vmem:[#allocation7 + $0xa48] sm:$0xff] %v7217
    %7730 = vst [vmem:[#allocation7 + $0xa50] sm:$0xff] %v7218
    %7731 = vst [vmem:[#allocation7 + $0xa58] sm:$0xff] %v7219
    %7732 = vst [vmem:[#allocation7 + $0xa60] sm:$0xff] %v7220
    %7733 = vst [vmem:[#allocation7 + $0xa68] sm:$0xff] %v7221
    %7734 = vst [vmem:[#allocation7 + $0xa70] sm:$0xff] %v7222
    %7735 = vst [vmem:[#allocation7 + $0xa78] sm:$0xff] %v7223
    %7736 = vst [vmem:[#allocation7 + $0xa80] sm:$0xff] %v7224
    %7737 = vst [vmem:[#allocation7 + $0xa88] sm:$0xff] %v7225
    %7738 = vst [vmem:[#allocation7 + $0xa90] sm:$0xff] %v7226
    %7739 = vst [vmem:[#allocation7 + $0xa98] sm:$0xff] %v7227
    %7740 = vst [vmem:[#allocation7 + $0xaa0] sm:$0xff] %v7228
    %7741 = vst [vmem:[#allocation7 + $0xaa8] sm:$0xff] %v7229
    %7742 = vst [vmem:[#allocation7 + $0xab0] sm:$0xff] %v7230
    %7743 = vst [vmem:[#allocation7 + $0xab8] sm:$0xff] %v7231
    %7744 = vst [vmem:[#allocation7 + $0xac0] sm:$0xff] %v7232
    %7745 = vst [vmem:[#allocation7 + $0xac8] sm:$0xff] %v7233
    %7746 = vst [vmem:[#allocation7 + $0xad0] sm:$0xff] %v7234
    %7747 = vst [vmem:[#allocation7 + $0xad8] sm:$0xff] %v7235
    %7748 = vst [vmem:[#allocation7 + $0xae0] sm:$0xff] %v7236
    %7749 = vst [vmem:[#allocation7 + $0xae8] sm:$0xff] %v7237
    %7750 = vst [vmem:[#allocation7 + $0xaf0] sm:$0xff] %v7238
    %7751 = vst [vmem:[#allocation7 + $0xaf8] sm:$0xff] %v7239
    %7752 = vst [vmem:[#allocation7 + $0xb00] sm:$0xff] %v7240
    %7753 = vst [vmem:[#allocation7 + $0xb08] sm:$0xff] %v7241
    %7754 = vst [vmem:[#allocation7 + $0xb10] sm:$0xff] %v7242
    %7755 = vst [vmem:[#allocation7 + $0xb18] sm:$0xff] %v7243
    %7756 = vst [vmem:[#allocation7 + $0xb20] sm:$0xff] %v7244
    %7757 = vst [vmem:[#allocation7 + $0xb28] sm:$0xff] %v7245
    %7758 = vst [vmem:[#allocation7 + $0xb30] sm:$0xff] %v7246
    %7759 = vst [vmem:[#allocation7 + $0xb38] sm:$0xff] %v7247
    %7760 = vst [vmem:[#allocation7 + $0xb40] sm:$0xff] %v7248
    %7761 = vst [vmem:[#allocation7 + $0xb48] sm:$0xff] %v7249
    %7762 = vst [vmem:[#allocation7 + $0xb50] sm:$0xff] %v7250
    %7763 = vst [vmem:[#allocation7 + $0xb58] sm:$0xff] %v7251
    %7764 = vst [vmem:[#allocation7 + $0xb60] sm:$0xff] %v7252
    %7765 = vst [vmem:[#allocation7 + $0xb68] sm:$0xff] %v7253
    %7766 = vst [vmem:[#allocation7 + $0xb70] sm:$0xff] %v7254
    %7767 = vst [vmem:[#allocation7 + $0xb78] sm:$0xff] %v7255
    %7768 = vst [vmem:[#allocation7 + $0xb80] sm:$0xff] %v7256
    %7769 = vst [vmem:[#allocation7 + $0xb88] sm:$0xff] %v7257
    %7770 = vst [vmem:[#allocation7 + $0xb90] sm:$0xff] %v7258
    %7771 = vst [vmem:[#allocation7 + $0xb98] sm:$0xff] %v7259
    %7772 = vst [vmem:[#allocation7 + $0xba0] sm:$0xff] %v7260
    %7773 = vst [vmem:[#allocation7 + $0xba8] sm:$0xff] %v7261
    %7774 = vst [vmem:[#allocation7 + $0xbb0] sm:$0xff] %v7262
    %7775 = vst [vmem:[#allocation7 + $0xbb8] sm:$0xff] %v7263
    %7776 = vst [vmem:[#allocation7 + $0xbc0] sm:$0xff] %v7264
    %7777 = vst [vmem:[#allocation7 + $0xbc8] sm:$0xff] %v7265
    %7778 = vst [vmem:[#allocation7 + $0xbd0] sm:$0xff] %v7266
    %7779 = vst [vmem:[#allocation7 + $0xbd8] sm:$0xff] %v7267
    %7780 = vst [vmem:[#allocation7 + $0xbe0] sm:$0xff] %v7268
    %7781 = vst [vmem:[#allocation7 + $0xbe8] sm:$0xff] %v7269
    %7782 = vst [vmem:[#allocation7 + $0xbf0] sm:$0xff] %v7270
    %7783 = vst [vmem:[#allocation7 + $0xbf8] sm:$0xff] %v7271
    %7784 = vst [vmem:[#allocation7 + $0xc00] sm:$0xff] %v7272
    %7785 = vst [vmem:[#allocation7 + $0xc08] sm:$0xff] %v7273
    %7786 = vst [vmem:[#allocation7 + $0xc10] sm:$0xff] %v7274
    %7787 = vst [vmem:[#allocation7 + $0xc18] sm:$0xff] %v7275
    %7788 = vst [vmem:[#allocation7 + $0xc20] sm:$0xff] %v7276
    %7789 = vst [vmem:[#allocation7 + $0xc28] sm:$0xff] %v7277
    %7790 = vst [vmem:[#allocation7 + $0xc30] sm:$0xff] %v7278
    %7791 = vst [vmem:[#allocation7 + $0xc38] sm:$0xff] %v7279
    %7792 = vst [vmem:[#allocation7 + $0xc40] sm:$0xff] %v7280
    %7793 = vst [vmem:[#allocation7 + $0xc48] sm:$0xff] %v7281
    %7794 = vst [vmem:[#allocation7 + $0xc50] sm:$0xff] %v7282
    %7795 = vst [vmem:[#allocation7 + $0xc58] sm:$0xff] %v7283
    %7796 = vst [vmem:[#allocation7 + $0xc60] sm:$0xff] %v7284
    %7797 = vst [vmem:[#allocation7 + $0xc68] sm:$0xff] %v7285
    %7798 = vst [vmem:[#allocation7 + $0xc70] sm:$0xff] %v7286
    %7799 = vst [vmem:[#allocation7 + $0xc78] sm:$0xff] %v7287
    %7800 = vst [vmem:[#allocation7 + $0xc80] sm:$0xff] %v7288
    %7801 = vst [vmem:[#allocation7 + $0xc88] sm:$0xff] %v7289
    %7802 = vst [vmem:[#allocation7 + $0xc90] sm:$0xff] %v7290
    %7803 = vst [vmem:[#allocation7 + $0xc98] sm:$0xff] %v7291
    %7804 = vst [vmem:[#allocation7 + $0xca0] sm:$0xff] %v7292
    %7805 = vst [vmem:[#allocation7 + $0xca8] sm:$0xff] %v7293
    %7806 = vst [vmem:[#allocation7 + $0xcb0] sm:$0xff] %v7294
    %7807 = vst [vmem:[#allocation7 + $0xcb8] sm:$0xff] %v7295
    %7808 = vst [vmem:[#allocation7 + $0xcc0] sm:$0xff] %v7296
    %7809 = vst [vmem:[#allocation7 + $0xcc8] sm:$0xff] %v7297
    %7810 = vst [vmem:[#allocation7 + $0xcd0] sm:$0xff] %v7298
    %7811 = vst [vmem:[#allocation7 + $0xcd8] sm:$0xff] %v7299
    %7812 = vst [vmem:[#allocation7 + $0xce0] sm:$0xff] %v7300
    %7813 = vst [vmem:[#allocation7 + $0xce8] sm:$0xff] %v7301
    %7814 = vst [vmem:[#allocation7 + $0xcf0] sm:$0xff] %v7302
    %7815 = vst [vmem:[#allocation7 + $0xcf8] sm:$0xff] %v7303
    %7816 = vst [vmem:[#allocation7 + $0xd00] sm:$0xff] %v7304
    %7817 = vst [vmem:[#allocation7 + $0xd08] sm:$0xff] %v7305
    %7818 = vst [vmem:[#allocation7 + $0xd10] sm:$0xff] %v7306
    %7819 = vst [vmem:[#allocation7 + $0xd18] sm:$0xff] %v7307
    %7820 = vst [vmem:[#allocation7 + $0xd20] sm:$0xff] %v7308
    %7821 = vst [vmem:[#allocation7 + $0xd28] sm:$0xff] %v7309
    %7822 = vst [vmem:[#allocation7 + $0xd30] sm:$0xff] %v7310
    %7823 = vst [vmem:[#allocation7 + $0xd38] sm:$0xff] %v7311
    %7824 = vst [vmem:[#allocation7 + $0xd40] sm:$0xff] %v7312
    %7825 = vst [vmem:[#allocation7 + $0xd48] sm:$0xff] %v7313
    %7826 = vst [vmem:[#allocation7 + $0xd50] sm:$0xff] %v7314
    %7827 = vst [vmem:[#allocation7 + $0xd58] sm:$0xff] %v7315
    %7828 = vst [vmem:[#allocation7 + $0xd60] sm:$0xff] %v7316
    %7829 = vst [vmem:[#allocation7 + $0xd68] sm:$0xff] %v7317
    %7830 = vst [vmem:[#allocation7 + $0xd70] sm:$0xff] %v7318
    %7831 = vst [vmem:[#allocation7 + $0xd78] sm:$0xff] %v7319
    %7832 = vst [vmem:[#allocation7 + $0xd80] sm:$0xff] %v7320
    %7833 = vst [vmem:[#allocation7 + $0xd88] sm:$0xff] %v7321
    %7834 = vst [vmem:[#allocation7 + $0xd90] sm:$0xff] %v7322
    %7835 = vst [vmem:[#allocation7 + $0xd98] sm:$0xff] %v7323
    %7836 = vst [vmem:[#allocation7 + $0xda0] sm:$0xff] %v7324
    %7837 = vst [vmem:[#allocation7 + $0xda8] sm:$0xff] %v7325
    %7838 = vst [vmem:[#allocation7 + $0xdb0] sm:$0xff] %v7326
    %7839 = vst [vmem:[#allocation7 + $0xdb8] sm:$0xff] %v7327
    %7840 = vst [vmem:[#allocation7 + $0xdc0] sm:$0xff] %v7328
    %7841 = vst [vmem:[#allocation7 + $0xdc8] sm:$0xff] %v7329
    %7842 = vst [vmem:[#allocation7 + $0xdd0] sm:$0xff] %v7330
    %7843 = vst [vmem:[#allocation7 + $0xdd8] sm:$0xff] %v7331
    %7844 = vst [vmem:[#allocation7 + $0xde0] sm:$0xff] %v7332
    %7845 = vst [vmem:[#allocation7 + $0xde8] sm:$0xff] %v7333
    %7846 = vst [vmem:[#allocation7 + $0xdf0] sm:$0xff] %v7334
    %7847 = vst [vmem:[#allocation7 + $0xdf8] sm:$0xff] %v7335
    %7848 = vst [vmem:[#allocation7 + $0xe00] sm:$0xff] %v7336
    %7849 = vst [vmem:[#allocation7 + $0xe08] sm:$0xff] %v7337
    %7850 = vst [vmem:[#allocation7 + $0xe10] sm:$0xff] %v7338
    %7851 = vst [vmem:[#allocation7 + $0xe18] sm:$0xff] %v7339
    %7852 = vst [vmem:[#allocation7 + $0xe20] sm:$0xff] %v7340
    %7853 = vst [vmem:[#allocation7 + $0xe28] sm:$0xff] %v7341
    %7854 = vst [vmem:[#allocation7 + $0xe30] sm:$0xff] %v7342
    %7855 = vst [vmem:[#allocation7 + $0xe38] sm:$0xff] %v7343
    %7856 = vst [vmem:[#allocation7 + $0xe40] sm:$0xff] %v7344
    %7857 = vst [vmem:[#allocation7 + $0xe48] sm:$0xff] %v7345
    %7858 = vst [vmem:[#allocation7 + $0xe50] sm:$0xff] %v7346
    %7859 = vst [vmem:[#allocation7 + $0xe58] sm:$0xff] %v7347
    %7860 = vst [vmem:[#allocation7 + $0xe60] sm:$0xff] %v7348
    %7861 = vst [vmem:[#allocation7 + $0xe68] sm:$0xff] %v7349
    %7862 = vst [vmem:[#allocation7 + $0xe70] sm:$0xff] %v7350
    %7863 = vst [vmem:[#allocation7 + $0xe78] sm:$0xff] %v7351
    %7864 = vst [vmem:[#allocation7 + $0xe80] sm:$0xff] %v7352
    %7865 = vst [vmem:[#allocation7 + $0xe88] sm:$0xff] %v7353
    %7866 = vst [vmem:[#allocation7 + $0xe90] sm:$0xff] %v7354
    %7867 = vst [vmem:[#allocation7 + $0xe98] sm:$0xff] %v7355
    %7868 = vst [vmem:[#allocation7 + $0xea0] sm:$0xff] %v7356
    %7869 = vst [vmem:[#allocation7 + $0xea8] sm:$0xff] %v7357
    %7870 = vst [vmem:[#allocation7 + $0xeb0] sm:$0xff] %v7358
    %7871 = vst [vmem:[#allocation7 + $0xeb8] sm:$0xff] %v7359
    %7872 = vst [vmem:[#allocation7 + $0xec0] sm:$0xff] %v7360
    %7873 = vst [vmem:[#allocation7 + $0xec8] sm:$0xff] %v7361
    %7874 = vst [vmem:[#allocation7 + $0xed0] sm:$0xff] %v7362
    %7875 = vst [vmem:[#allocation7 + $0xed8] sm:$0xff] %v7363
    %7876 = vst [vmem:[#allocation7 + $0xee0] sm:$0xff] %v7364
    %7877 = vst [vmem:[#allocation7 + $0xee8] sm:$0xff] %v7365
    %7878 = vst [vmem:[#allocation7 + $0xef0] sm:$0xff] %v7366
    %7879 = vst [vmem:[#allocation7 + $0xef8] sm:$0xff] %v7367
    %7880 = vst [vmem:[#allocation7 + $0xf00] sm:$0xff] %v7368
    %7881 = vst [vmem:[#allocation7 + $0xf08] sm:$0xff] %v7369
    %7882 = vst [vmem:[#allocation7 + $0xf10] sm:$0xff] %v7370
    %7883 = vst [vmem:[#allocation7 + $0xf18] sm:$0xff] %v7371
    %7884 = vst [vmem:[#allocation7 + $0xf20] sm:$0xff] %v7372
    %7885 = vst [vmem:[#allocation7 + $0xf28] sm:$0xff] %v7373
    %7886 = vst [vmem:[#allocation7 + $0xf30] sm:$0xff] %v7374
    %7887 = vst [vmem:[#allocation7 + $0xf38] sm:$0xff] %v7375
    %7888 = vst [vmem:[#allocation7 + $0xf40] sm:$0xff] %v7376
    %7889 = vst [vmem:[#allocation7 + $0xf48] sm:$0xff] %v7377
    %7890 = vst [vmem:[#allocation7 + $0xf50] sm:$0xff] %v7378
    %7891 = vst [vmem:[#allocation7 + $0xf58] sm:$0xff] %v7379
    %7892 = vst [vmem:[#allocation7 + $0xf60] sm:$0xff] %v7380
    %7893 = vst [vmem:[#allocation7 + $0xf68] sm:$0xff] %v7381
    %7894 = vst [vmem:[#allocation7 + $0xf70] sm:$0xff] %v7382
    %7895 = vst [vmem:[#allocation7 + $0xf78] sm:$0xff] %v7383
    %7896 = vst [vmem:[#allocation7 + $0xf80] sm:$0xff] %v7384
    %7897 = vst [vmem:[#allocation7 + $0xf88] sm:$0xff] %v7385
    %7898 = vst [vmem:[#allocation7 + $0xf90] sm:$0xff] %v7386
    %7899 = vst [vmem:[#allocation7 + $0xf98] sm:$0xff] %v7387
    %7900 = vst [vmem:[#allocation7 + $0xfa0] sm:$0xff] %v7388
    %7901 = vst [vmem:[#allocation7 + $0xfa8] sm:$0xff] %v7389
    %7902 = vst [vmem:[#allocation7 + $0xfb0] sm:$0xff] %v7390
    %7903 = vst [vmem:[#allocation7 + $0xfb8] sm:$0xff] %v7391
    %7904 = vst [vmem:[#allocation7 + $0xfc0] sm:$0xff] %v7392
    %7905 = vst [vmem:[#allocation7 + $0xfc8] sm:$0xff] %v7393
    %7906 = vst [vmem:[#allocation7 + $0xfd0] sm:$0xff] %v7394
    %7907 = vst [vmem:[#allocation7 + $0xfd8] sm:$0xff] %v7395
    %7908 = vst [vmem:[#allocation7 + $0xfe0] sm:$0xff] %v7396
    %7909 = vst [vmem:[#allocation7 + $0xfe8] sm:$0xff] %v7397
    %7910 = vst [vmem:[#allocation7 + $0xff0] sm:$0xff] %v7398
    %7911 = vst [vmem:[#allocation7 + $0xff8] sm:$0xff] %v7399
    // Predicated region
    $region10: #{tpu_custom_call.1} parent=1 // pred_check
      _
    $region11: #{tpu_custom_call.1} parent=1 // pred_check_branch
      %7913 = sbr.rel (0) target = $region13
    $region12: #{tpu_custom_call.1} parent=1 // pred_region
      %s7915 = ssub.s32 65536, 65536
      %7916 = vsyncadd [#allocation6], %s7915
      %s7917 = sshll.u32 [#allocation7], 4
      %s7918 = int_to_ptr.vmem [resolvable:$true] %s7917
      %7923 = dma.vmem_to_hbm [thread:$0]  %s7918, 65536, %s2, [#allocation6], 1024, 1024, 64
    $region13: #{tpu_custom_call.1} parent=1 // pred_fallthru
      _
    // Predicated region
    $region14: #{tpu_custom_call.1} parent=1 // pred_check
      _
    $region15: #{tpu_custom_call.1} parent=1 // pred_check_branch
      %7925 = sbr.rel (0) target = $region17
    $region16: #{tpu_custom_call.1} parent=1 // pred_region
      %7926 = dma.done [#allocation6], 65536
    $region17: #{tpu_custom_call.1} parent=1 // pred_fallthru
      _
    %7927 = vsyncpa [#allocation5], 1
    %7928 = vsyncpa [#allocation6], 1

</llo_original>
